<compile_context>
chip_gen: v5e
topology: v5e:2x2
jax: 0.10.0
libtpu: 0.0.40
codegen_flags: <defaults>
</compile_context>

<pallas_src>
import functools
import math

import jax
import jax.numpy as jnp
from jax.experimental import pallas as pl
from jax.experimental.pallas import tpu as pltpu

_EPS = 1e-5                    # PyTorch GroupNorm default eps
_MM_DTYPE = jnp.bfloat16       # MXU operand dtype (f32 accumulation); set to
                               # jnp.float32 for exact-f32 matmuls.


# ------------------------- fused CIMidNet Pallas kernel ------------------------ #

def _cimidnet_kernel(x_ref, c1_ref, c2_ref, wl_ref, gnl_ref, pool_ref,
                     o_ref, xs_ref, *, heads, n_layers, eps):
    """Staged fused CIMidNet forward for one batch element.

    Grid = (B, n_layers + 2); stage axis ("arbitrary"):
      stage 0            : conv1 (1x1, T -> D, bias)  -> xs_ref (VMEM resident)
      stage 1..n_layers  : one CIAttBlock layer, in place on xs_ref
      stage n_layers + 1 : conv2 (1x1, D -> T, bias)  -> o_ref

    x_ref   : (1, S, T, HW)   network input (DMA'd once per batch element)
    c1_ref  : (D, T+1)        [W1 | b1]
    c2_ref  : (T, D+1)        [W2 | b2]
    wl_ref  : (1, 4D, D)      this layer's stacked 1x1 weights [Wq; Wk; Wv; Wpost]
    gnl_ref : (1, D, 12)      this layer's GroupNorm affines
                              [gq bq gk bk gv bv gp bp g1 b1 g2 b2]
                              (gq, bq already carry the 1/sqrt(dk*hq*wq) scale)
    pool_ref: (HW, HWq)       constant 4x4 average-pool matrix
    o_ref   : (1, S, T, HW)
    xs_ref  : (S, D, HW) f32  carried activation (VMEM scratch)
    """
    stage = pl.program_id(1)
    s_frames, d_model, hw = xs_ref.shape
    hwq = pool_ref.shape[1]
    dk = d_model // heads

    def mxu_dot(a, b):
        return jnp.dot(a.astype(_MM_DTYPE), b.astype(_MM_DTYPE),
                       preferred_element_type=jnp.float32)

    def mxu_dot_t(a, b):   # a @ b.T, transpose folded into the matmul
        return jax.lax.dot_general(
            a.astype(_MM_DTYPE), b.astype(_MM_DTYPE),
            (((1,), (1,)), ((), ())), preferred_element_type=jnp.float32)

    def conv1x1(x3, w):
        # 1x1 conv over channels as one MXU matmul per frame (contraction over
        # C_in), replacing the old per-channel broadcast-MAC unroll.
        # x3: (S, Cin, D), w: (Cout, Cin) -> (S, Cout, D)
        return jnp.stack([mxu_dot(w, x3[i]) for i in range(x3.shape[0])], axis=0)

    def groupnorm(t, g):
        # GroupNorm(1, C) per frame (stats over (C, D)); single-pass:
        # var = E[x^2] - mean^2.  g: (C, 2) = [gamma | beta].
        inv_n = 1.0 / (t.shape[1] * t.shape[2])
        s1 = jnp.sum(jnp.sum(t, axis=2, keepdims=True), axis=1, keepdims=True)
        s2 = jnp.sum(jnp.sum(t * t, axis=2, keepdims=True), axis=1, keepdims=True)
        mean = s1 * inv_n
        var = s2 * inv_n - mean * mean
        tn = (t - mean) * jax.lax.rsqrt(var + eps)
        return tn * g[:, 0:1] + g[:, 1:2]

    # ------------------------- stage 0: conv1 (T -> D) ------------------------- #
    @pl.when(stage == 0)
    def _():
        x_in = x_ref[0]                                # (S, T, HW)
        t_in = x_in.shape[1]
        w1 = c1_ref[:, 0:t_in]                         # (D, T)
        b1 = c1_ref[:, t_in:t_in + 1]                  # (D, 1)
        xs_ref[...] = conv1x1(x_in, w1) + b1

    # --------------------- stages 1..n_layers: CIAttBlock ---------------------- #
    @pl.when(jnp.logical_and(stage >= 1, stage <= n_layers))
    def _():
        x3 = xs_ref[...]                               # (S, C, HW), f32
        W = wl_ref[0]                                  # (4C, C)
        G = gnl_ref[0]                                 # (C, 12)
        c = d_model

        # Fused 4x4 average pool: one MXU matmul against the constant pool
        # matrix (no wrapper round trip between layers).
        x1 = mxu_dot(x3.reshape(s_frames * c, hw),
                     pool_ref[...]).reshape(s_frames, c, hwq)      # (S, C, HWq)

        # q / k share one fused 1x1 conv on the pooled frames; v is full-res.
        qk = conv1x1(x1, W[0:2 * c, :])                            # (S, 2C, HWq)
        q = groupnorm(qk[:, 0:c, :], G[:, 0:2])     # attn scale folded into gq/bq
        k = groupnorm(qk[:, c:2 * c, :], G[:, 2:4])
        v = groupnorm(conv1x1(x3, W[2 * c:3 * c, :]), G[:, 4:6])   # (S, C, HW)

        # Per-head attention with whole-head matmuls (no per-dk loops); Wpost
        # is applied per head and accumulated, so the merged context is never
        # materialised / concatenated.
        wpost = W[3 * c:4 * c, :]                                  # (C, C)
        post_pre = jnp.zeros((s_frames, c, hw), jnp.float32)
        for hd in range(heads):
            lo = hd * dk
            qh = q[:, lo:lo + dk, :].reshape(s_frames, dk * hwq)
            kh = k[:, lo:lo + dk, :].reshape(s_frames, dk * hwq)
            vh = v[:, lo:lo + dk, :].reshape(s_frames, dk * hw)
            scores = mxu_dot_t(qh, kh)                             # (S, S)
            m = jnp.max(scores, axis=-1, keepdims=True)
            e = jnp.exp(scores - m)
            p = e * pl.reciprocal(jnp.sum(e, axis=-1, keepdims=True), approx=True)
            ctx_h = mxu_dot(p, vh).reshape(s_frames, dk, hw)       # (S, dk, HW)
            post_pre = post_pre + conv1x1(ctx_h, wpost[:, lo:lo + dk])

        # v_post_f: GroupNorm + SiLU
        post = groupnorm(post_pre, G[:, 6:8])
        post = post * jax.nn.sigmoid(post)

        # x = norm_1(x + attn)
        x_mid = groupnorm(x3 + post, G[:, 8:10])
        # x = norm_2(x + ff(x)); ff(x) = x + ff1(x), ff1 treated as zero.
        # TODO(synk): TAUSubBlock (ff1) undefined in the provided source; treated as 0.
        xs_ref[...] = groupnorm(x_mid + x_mid, G[:, 10:12])

    # ---------------------- stage n_layers + 1: conv2 (D -> T) ----------------- #
    @pl.when(stage == n_layers + 1)
    def _():
        x3 = xs_ref[...]                               # (S, D, HW)
        w2 = c2_ref[:, 0:d_model]                      # (T, D)
        b2 = c2_ref[:, d_model:d_model + 1]            # (T, 1)
        o_ref[0] = conv1x1(x3, w2) + b2


# ----------------------------------- wrapper ----------------------------------- #

def _make_pool_matrix(h, w, down):
    """(HW, HWq) matrix P with x_flat @ P == avg_pool2d(x, down, down) flattened."""
    hq, wq = h // down, w // down
    row_blk = jnp.arange(h) // down
    col_blk = jnp.arange(w) // down
    blk = (row_blk[:, None] * wq + col_blk[None, :]).reshape(h * w)   # (HW,)
    onehot = blk[:, None] == jnp.arange(hq * wq)[None, :]
    return onehot.astype(jnp.float32) / float(down * down)


def cimidnet_forward(x, params, *, heads, down=4):
    """x: (B, S, T, H, W)  -- CIMidNet names these (b, c, t, h, w)."""
    b, s, t, h, w = x.shape
    hw = h * w
    hwq = (h // down) * (w // down)
    d_model = params["conv1_wb"].shape[0]
    n_layers = params["w_layers"].shape[0]
    pool = _make_pool_matrix(h, w, down)

    kern = functools.partial(_cimidnet_kernel, heads=heads,
                             n_layers=n_layers, eps=_EPS)
    last_layer = n_layers - 1

    def layer_idx(bi, li):
        del bi
        # stage 0 / stage L+1 reuse an adjacent layer's (unused) block, so every
        # layer-weight block is DMA'd exactly once.
        return (jnp.minimum(jnp.maximum(li - 1, 0), last_layer), 0, 0)

    y = pl.pallas_call(
        kern,
        out_shape=jax.ShapeDtypeStruct((b, s, t, hw), jnp.float32),
        grid=(b, n_layers + 2),
        in_specs=[
            pl.BlockSpec((1, s, t, hw), lambda bi, li: (bi, 0, 0, 0)),
            pl.BlockSpec((d_model, t + 1), lambda bi, li: (0, 0)),
            pl.BlockSpec((t, d_model + 1), lambda bi, li: (0, 0)),
            pl.BlockSpec((1, 4 * d_model, d_model), layer_idx),
            pl.BlockSpec((1, d_model, 12), layer_idx),
            pl.BlockSpec((hw, hwq), lambda bi, li: (0, 0)),
        ],
        out_specs=pl.BlockSpec((1, s, t, hw), lambda bi, li: (bi, 0, 0, 0)),
        scratch_shapes=[pltpu.VMEM((s, d_model, hw), jnp.float32)],
        compiler_params=pltpu.CompilerParams(
            dimension_semantics=("parallel", "arbitrary"),
            vmem_limit_bytes=32 * 1024 * 1024),
    )(x.reshape(b, s, t, hw), params["conv1_wb"], params["conv2_wb"],
      params["w_layers"], params["gn_layers"], pool)
    return y.reshape(b, s, t, h, w)


# ------------------------------------ params ----------------------------------- #

def _init_conv_wb(key, c_out, c_in):
    kw, kb = jax.random.split(key)
    bound = 1.0 / math.sqrt(c_in)
    wgt = jax.random.uniform(kw, (c_out, c_in), jnp.float32, -bound, bound)
    bias = jax.random.uniform(kb, (c_out, 1), jnp.float32, -bound, bound)
    return jnp.concatenate([wgt, bias], axis=1)        # (c_out, c_in + 1)


def init_cimidnet_params(key, in_channels, d_model, n_layers, heads, h, w, down=4):
    hq, wq = h // down, w // down
    dk = d_model // heads
    inv_scale = 1.0 / math.sqrt(dk * hq * wq)          # attention_s scale
    keys = jax.random.split(key, n_layers + 2)

    std = 1.0 / math.sqrt(d_model)
    w_layers = jnp.stack([
        jnp.concatenate(
            [jax.random.normal(kk, (d_model, d_model), jnp.float32) * std
             for kk in jax.random.split(keys[2 + i], 4)], axis=0)
        for i in range(n_layers)], axis=0)             # (L, 4C, C): [Wq; Wk; Wv; Wpost]

    ones = jnp.ones((d_model,), jnp.float32)
    zeros = jnp.zeros((d_model,), jnp.float32)
    # GroupNorm affine defaults (weight=1, bias=0).  The 1/sqrt(dk*hq*wq)
    # attention scale is folded into q's GN affine (gamma AND beta): exact,
    # since the reference applies the scale after q's GroupNorm.
    gn_one = jnp.stack([ones * inv_scale, zeros * inv_scale,   # gq, bq
                        ones, zeros,                           # gk, bk
                        ones, zeros,                           # gv, bv
                        ones, zeros,                           # gp, bp
                        ones, zeros,                           # g1, b1 (norm_1)
                        ones, zeros], axis=1)                  # g2, b2 (norm_2)
    gn_layers = jnp.stack([gn_one] * n_layers, axis=0)         # (L, C, 12)

    return {"conv1_wb": _init_conv_wb(keys[0], d_model, in_channels),
            "conv2_wb": _init_conv_wb(keys[1], in_channels, d_model),
            "w_layers": w_layers,
            "gn_layers": gn_layers}


# ------------------------------------- main ------------------------------------- #

if __name__ == "__main__":
    key = jax.random.PRNGKey(0)
    k_x, k_p = jax.random.split(key)

    b, s, in_ch, h, w = 2, 8, 4, 16, 16     # CIMidNet input (b, c, t, h, w)
    d_model, heads, n_layers = 8, 2, 2

    x = jax.random.normal(k_x, (b, s, in_ch, h, w), jnp.float32)
    params = init_cimidnet_params(k_p, in_ch, d_model, n_layers, heads, h, w)

    fwd = jax.jit(functools.partial(cimidnet_forward, heads=heads, down=4))
    out = jax.block_until_ready(fwd(x, params))

    assert out.shape == (b, s, in_ch, h, w)
    assert out.dtype == jnp.float32
    assert bool(jnp.all(jnp.isfinite(out)))
    print("KERNEL_OK")
</pallas_src>

<mosaic_0001>
module attributes {stable_mosaic.version = 11 : i64} {
  func.func @_cimidnet_kernel(%arg0: i32, %arg1: i32, %arg2: memref<1x8x4x256xf32, #tpu.memory_space<vmem>>, %arg3: memref<8x5xf32, #tpu.memory_space<vmem>>, %arg4: memref<4x9xf32, #tpu.memory_space<vmem>>, %arg5: memref<1x32x8xf32, #tpu.memory_space<vmem>>, %arg6: memref<1x8x12xf32, #tpu.memory_space<vmem>>, %arg7: memref<256x16xf32, #tpu.memory_space<vmem>>, %arg8: memref<1x8x4x256xf32, #tpu.memory_space<vmem>>, %arg9: memref<8x8x256xf32, #tpu.memory_space<vmem>>) attributes {dimension_semantics = [#tpu.dimension_semantics<parallel>, #tpu.dimension_semantics<arbitrary>], iteration_bounds = array<i64: 2, 4>, scalar_prefetch = 0 : i64, scratch_operands = 1 : i64, tpu.core_type = #tpu.core_type<tc>, window_params = [{transform_indices = @transform_0, window_bounds = array<i64: 1, 8, 4, 256>}, {pipeline_mode = #tpu.pipeline_mode<synchronous>, transform_indices = @transform_1, window_bounds = array<i64: 8, 5>}, {pipeline_mode = #tpu.pipeline_mode<synchronous>, transform_indices = @transform_2, window_bounds = array<i64: 4, 9>}, {transform_indices = @transform_3, window_bounds = array<i64: 1, 32, 8>}, {transform_indices = @transform_4, window_bounds = array<i64: 1, 8, 12>}, {pipeline_mode = #tpu.pipeline_mode<synchronous>, transform_indices = @transform_5, window_bounds = array<i64: 256, 16>}, {transform_indices = @transform_6, window_bounds = array<i64: 1, 8, 4, 256>}]} {
    %c0_i32 = arith.constant 0 : i32
    %0 = arith.cmpi eq, %arg1, %c0_i32 : i32
    %1 = arith.extui %0 : i1 to i32
    %c0_i32_0 = arith.constant 0 : i32
    %2 = arith.cmpi ne, %1, %c0_i32_0 : i32
    scf.if %2 {
      %c0 = arith.constant 0 : index
      %c0_3 = arith.constant 0 : index
      %c0_4 = arith.constant 0 : index
      %c0_5 = arith.constant 0 : index
      %11 = vector.load %arg2[%c0, %c0_3, %c0_4, %c0_5] : memref<1x8x4x256xf32, #tpu.memory_space<vmem>>, vector<1x8x4x256xf32>
      %12 = vector.shape_cast %11 : vector<1x8x4x256xf32> to vector<8x4x256xf32>
      %c0_6 = arith.constant 0 : index
      %c0_7 = arith.constant 0 : index
      %13 = vector.load %arg3[%c0_6, %c0_7] : memref<8x5xf32, #tpu.memory_space<vmem>>, vector<8x4xf32>
      %c0_8 = arith.constant 0 : index
      %c4 = arith.constant 4 : index
      %14 = vector.load %arg3[%c0_8, %c4] : memref<8x5xf32, #tpu.memory_space<vmem>>, vector<8x1xf32>
      %15 = vector.extract_strided_slice %12 {offsets = [0, 0, 0], sizes = [1, 4, 256], strides = [1, 1, 1]} : vector<8x4x256xf32> to vector<1x4x256xf32>
      %16 = vector.shape_cast %15 : vector<1x4x256xf32> to vector<4x256xf32>
      %17 = arith.truncf %13 : vector<8x4xf32> to vector<8x4xbf16>
      %18 = arith.truncf %16 : vector<4x256xf32> to vector<4x256xbf16>
      %cst = arith.constant dense<0.000000e+00> : vector<8x256xf32>
      %19 = tpu.matmul %17, %18, %cst {dimension_numbers = #tpu.dot_dimension_numbers<[1], [0], [0], [1], [0, 0, 1, 1], [], []>} : vector<8x4xbf16>, vector<4x256xbf16>, vector<8x256xf32> -> vector<8x256xf32>
      %20 = vector.extract_strided_slice %12 {offsets = [1, 0, 0], sizes = [1, 4, 256], strides = [1, 1, 1]} : vector<8x4x256xf32> to vector<1x4x256xf32>
      %21 = vector.shape_cast %20 : vector<1x4x256xf32> to vector<4x256xf32>
      %22 = arith.truncf %13 : vector<8x4xf32> to vector<8x4xbf16>
      %23 = arith.truncf %21 : vector<4x256xf32> to vector<4x256xbf16>
      %cst_9 = arith.constant dense<0.000000e+00> : vector<8x256xf32>
      %24 = tpu.matmul %22, %23, %cst_9 {dimension_numbers = #tpu.dot_dimension_numbers<[1], [0], [0], [1], [0, 0, 1, 1], [], []>} : vector<8x4xbf16>, vector<4x256xbf16>, vector<8x256xf32> -> vector<8x256xf32>
      %25 = vector.extract_strided_slice %12 {offsets = [2, 0, 0], sizes = [1, 4, 256], strides = [1, 1, 1]} : vector<8x4x256xf32> to vector<1x4x256xf32>
      %26 = vector.shape_cast %25 : vector<1x4x256xf32> to vector<4x256xf32>
      %27 = arith.truncf %13 : vector<8x4xf32> to vector<8x4xbf16>
      %28 = arith.truncf %26 : vector<4x256xf32> to vector<4x256xbf16>
      %cst_10 = arith.constant dense<0.000000e+00> : vector<8x256xf32>
      %29 = tpu.matmul %27, %28, %cst_10 {dimension_numbers = #tpu.dot_dimension_numbers<[1], [0], [0], [1], [0, 0, 1, 1], [], []>} : vector<8x4xbf16>, vector<4x256xbf16>, vector<8x256xf32> -> vector<8x256xf32>
      %30 = vector.extract_strided_slice %12 {offsets = [3, 0, 0], sizes = [1, 4, 256], strides = [1, 1, 1]} : vector<8x4x256xf32> to vector<1x4x256xf32>
      %31 = vector.shape_cast %30 : vector<1x4x256xf32> to vector<4x256xf32>
      %32 = arith.truncf %13 : vector<8x4xf32> to vector<8x4xbf16>
      %33 = arith.truncf %31 : vector<4x256xf32> to vector<4x256xbf16>
      %cst_11 = arith.constant dense<0.000000e+00> : vector<8x256xf32>
      %34 = tpu.matmul %32, %33, %cst_11 {dimension_numbers = #tpu.dot_dimension_numbers<[1], [0], [0], [1], [0, 0, 1, 1], [], []>} : vector<8x4xbf16>, vector<4x256xbf16>, vector<8x256xf32> -> vector<8x256xf32>
      %35 = vector.extract_strided_slice %12 {offsets = [4, 0, 0], sizes = [1, 4, 256], strides = [1, 1, 1]} : vector<8x4x256xf32> to vector<1x4x256xf32>
      %36 = vector.shape_cast %35 : vector<1x4x256xf32> to vector<4x256xf32>
      %37 = arith.truncf %13 : vector<8x4xf32> to vector<8x4xbf16>
      %38 = arith.truncf %36 : vector<4x256xf32> to vector<4x256xbf16>
      %cst_12 = arith.constant dense<0.000000e+00> : vector<8x256xf32>
      %39 = tpu.matmul %37, %38, %cst_12 {dimension_numbers = #tpu.dot_dimension_numbers<[1], [0], [0], [1], [0, 0, 1, 1], [], []>} : vector<8x4xbf16>, vector<4x256xbf16>, vector<8x256xf32> -> vector<8x256xf32>
      %40 = vector.extract_strided_slice %12 {offsets = [5, 0, 0], sizes = [1, 4, 256], strides = [1, 1, 1]} : vector<8x4x256xf32> to vector<1x4x256xf32>
      %41 = vector.shape_cast %40 : vector<1x4x256xf32> to vector<4x256xf32>
      %42 = arith.truncf %13 : vector<8x4xf32> to vector<8x4xbf16>
      %43 = arith.truncf %41 : vector<4x256xf32> to vector<4x256xbf16>
      %cst_13 = arith.constant dense<0.000000e+00> : vector<8x256xf32>
      %44 = tpu.matmul %42, %43, %cst_13 {dimension_numbers = #tpu.dot_dimension_numbers<[1], [0], [0], [1], [0, 0, 1, 1], [], []>} : vector<8x4xbf16>, vector<4x256xbf16>, vector<8x256xf32> -> vector<8x256xf32>
      %45 = vector.extract_strided_slice %12 {offsets = [6, 0, 0], sizes = [1, 4, 256], strides = [1, 1, 1]} : vector<8x4x256xf32> to vector<1x4x256xf32>
      %46 = vector.shape_cast %45 : vector<1x4x256xf32> to vector<4x256xf32>
      %47 = arith.truncf %13 : vector<8x4xf32> to vector<8x4xbf16>
      %48 = arith.truncf %46 : vector<4x256xf32> to vector<4x256xbf16>
      %cst_14 = arith.constant dense<0.000000e+00> : vector<8x256xf32>
      %49 = tpu.matmul %47, %48, %cst_14 {dimension_numbers = #tpu.dot_dimension_numbers<[1], [0], [0], [1], [0, 0, 1, 1], [], []>} : vector<8x4xbf16>, vector<4x256xbf16>, vector<8x256xf32> -> vector<8x256xf32>
      %50 = vector.extract_strided_slice %12 {offsets = [7, 0, 0], sizes = [1, 4, 256], strides = [1, 1, 1]} : vector<8x4x256xf32> to vector<1x4x256xf32>
      %51 = vector.shape_cast %50 : vector<1x4x256xf32> to vector<4x256xf32>
      %52 = arith.truncf %13 : vector<8x4xf32> to vector<8x4xbf16>
      %53 = arith.truncf %51 : vector<4x256xf32> to vector<4x256xbf16>
      %cst_15 = arith.constant dense<0.000000e+00> : vector<8x256xf32>
      %54 = tpu.matmul %52, %53, %cst_15 {dimension_numbers = #tpu.dot_dimension_numbers<[1], [0], [0], [1], [0, 0, 1, 1], [], []>} : vector<8x4xbf16>, vector<4x256xbf16>, vector<8x256xf32> -> vector<8x256xf32>
      %55 = vector.shape_cast %19 : vector<8x256xf32> to vector<1x8x256xf32>
      %56 = vector.shape_cast %24 : vector<8x256xf32> to vector<1x8x256xf32>
      %57 = vector.shape_cast %29 : vector<8x256xf32> to vector<1x8x256xf32>
      %58 = vector.shape_cast %34 : vector<8x256xf32> to vector<1x8x256xf32>
      %59 = vector.shape_cast %39 : vector<8x256xf32> to vector<1x8x256xf32>
      %60 = vector.shape_cast %44 : vector<8x256xf32> to vector<1x8x256xf32>
      %61 = vector.shape_cast %49 : vector<8x256xf32> to vector<1x8x256xf32>
      %62 = vector.shape_cast %54 : vector<8x256xf32> to vector<1x8x256xf32>
      %63 = tpu.concatenate %55, %56, %57, %58, %59, %60, %61, %62 in 0 : vector<1x8x256xf32>, vector<1x8x256xf32>, vector<1x8x256xf32>, vector<1x8x256xf32>, vector<1x8x256xf32>, vector<1x8x256xf32>, vector<1x8x256xf32>, vector<1x8x256xf32> -> vector<8x8x256xf32>
      %64 = vector.shape_cast %14 : vector<8x1xf32> to vector<1x8x1xf32>
      %65 = vector.broadcast %64 : vector<1x8x1xf32> to vector<8x8x256xf32>
      %66 = arith.addf %63, %65 : vector<8x8x256xf32>
      %c0_16 = arith.constant 0 : index
      %c0_17 = arith.constant 0 : index
      %c0_18 = arith.constant 0 : index
      %67 = vector.load %arg9[%c0_16, %c0_17, %c0_18] : memref<8x8x256xf32, #tpu.memory_space<vmem>>, vector<8x8x256xf32>
      tpu.vector_store %arg9[%c0_16, %c0_17, %c0_18], %66 {strides = array<i32>} : memref<8x8x256xf32, #tpu.memory_space<vmem>>, vector<8x8x256xf32>,
    } else {
    }
    %c1_i32 = arith.constant 1 : i32
    %3 = arith.cmpi sge, %arg1, %c1_i32 : i32
    %c2_i32 = arith.constant 2 : i32
    %4 = arith.cmpi sle, %arg1, %c2_i32 : i32
    %5 = arith.andi %3, %4 : i1
    %6 = arith.extui %5 : i1 to i32
    %c0_i32_1 = arith.constant 0 : i32
    %7 = arith.cmpi ne, %6, %c0_i32_1 : i32
    scf.if %7 {
      %c0 = arith.constant 0 : index
      %c0_3 = arith.constant 0 : index
      %c0_4 = arith.constant 0 : index
      %11 = vector.load %arg9[%c0, %c0_3, %c0_4] : memref<8x8x256xf32, #tpu.memory_space<vmem>>, vector<8x8x256xf32>
      %c0_5 = arith.constant 0 : index
      %c0_6 = arith.constant 0 : index
      %c0_7 = arith.constant 0 : index
      %12 = vector.load %arg5[%c0_5, %c0_6, %c0_7] : memref<1x32x8xf32, #tpu.memory_space<vmem>>, vector<1x32x8xf32>
      %13 = vector.shape_cast %12 : vector<1x32x8xf32> to vector<32x8xf32>
      %c0_8 = arith.constant 0 : index
      %c0_9 = arith.constant 0 : index
      %c0_10 = arith.constant 0 : index
      %14 = vector.load %arg6[%c0_8, %c0_9, %c0_10] : memref<1x8x12xf32, #tpu.memory_space<vmem>>, vector<1x8x12xf32>
      %15 = vector.shape_cast %14 : vector<1x8x12xf32> to vector<8x12xf32>
      %16 = vector.shape_cast %11 : vector<8x8x256xf32> to vector<64x256xf32>
      %c0_11 = arith.constant 0 : index
      %c0_12 = arith.constant 0 : index
      %17 = vector.load %arg7[%c0_11, %c0_12] : memref<256x16xf32, #tpu.memory_space<vmem>>, vector<256x16xf32>
      %18 = arith.truncf %16 : vector<64x256xf32> to vector<64x256xbf16>
      %19 = arith.truncf %17 : vector<256x16xf32> to vector<256x16xbf16>
      %cst = arith.constant dense<0.000000e+00> : vector<64x16xf32>
      %20 = tpu.matmul %18, %19, %cst {dimension_numbers = #tpu.dot_dimension_numbers<[1], [0], [0], [1], [0, 0, 1, 1], [], []>} : vector<64x256xbf16>, vector<256x16xbf16>, vector<64x16xf32> -> vector<64x16xf32>
      %21 = vector.shape_cast %20 : vector<64x16xf32> to vector<8x8x16xf32>
      %22 = vector.extract_strided_slice %13 {offsets = [0, 0], sizes = [16, 8], strides = [1, 1]} : vector<32x8xf32> to vector<16x8xf32>
      %23 = vector.extract_strided_slice %21 {offsets = [0, 0, 0], sizes = [1, 8, 16], strides = [1, 1, 1]} : vector<8x8x16xf32> to vector<1x8x16xf32>
      %24 = vector.shape_cast %23 : vector<1x8x16xf32> to vector<8x16xf32>
      %25 = arith.truncf %22 : vector<16x8xf32> to vector<16x8xbf16>
      %26 = arith.truncf %24 : vector<8x16xf32> to vector<8x16xbf16>
      %cst_13 = arith.constant dense<0.000000e+00> : vector<16x16xf32>
      %27 = tpu.matmul %25, %26, %cst_13 {dimension_numbers = #tpu.dot_dimension_numbers<[1], [0], [0], [1], [0, 0, 1, 1], [], []>} : vector<16x8xbf16>, vector<8x16xbf16>, vector<16x16xf32> -> vector<16x16xf32>
      %28 = vector.extract_strided_slice %21 {offsets = [1, 0, 0], sizes = [1, 8, 16], strides = [1, 1, 1]} : vector<8x8x16xf32> to vector<1x8x16xf32>
      %29 = vector.shape_cast %28 : vector<1x8x16xf32> to vector<8x16xf32>
      %30 = arith.truncf %22 : vector<16x8xf32> to vector<16x8xbf16>
      %31 = arith.truncf %29 : vector<8x16xf32> to vector<8x16xbf16>
      %cst_14 = arith.constant dense<0.000000e+00> : vector<16x16xf32>
      %32 = tpu.matmul %30, %31, %cst_14 {dimension_numbers = #tpu.dot_dimension_numbers<[1], [0], [0], [1], [0, 0, 1, 1], [], []>} : vector<16x8xbf16>, vector<8x16xbf16>, vector<16x16xf32> -> vector<16x16xf32>
      %33 = vector.extract_strided_slice %21 {offsets = [2, 0, 0], sizes = [1, 8, 16], strides = [1, 1, 1]} : vector<8x8x16xf32> to vector<1x8x16xf32>
      %34 = vector.shape_cast %33 : vector<1x8x16xf32> to vector<8x16xf32>
      %35 = arith.truncf %22 : vector<16x8xf32> to vector<16x8xbf16>
      %36 = arith.truncf %34 : vector<8x16xf32> to vector<8x16xbf16>
      %cst_15 = arith.constant dense<0.000000e+00> : vector<16x16xf32>
      %37 = tpu.matmul %35, %36, %cst_15 {dimension_numbers = #tpu.dot_dimension_numbers<[1], [0], [0], [1], [0, 0, 1, 1], [], []>} : vector<16x8xbf16>, vector<8x16xbf16>, vector<16x16xf32> -> vector<16x16xf32>
      %38 = vector.extract_strided_slice %21 {offsets = [3, 0, 0], sizes = [1, 8, 16], strides = [1, 1, 1]} : vector<8x8x16xf32> to vector<1x8x16xf32>
      %39 = vector.shape_cast %38 : vector<1x8x16xf32> to vector<8x16xf32>
      %40 = arith.truncf %22 : vector<16x8xf32> to vector<16x8xbf16>
      %41 = arith.truncf %39 : vector<8x16xf32> to vector<8x16xbf16>
      %cst_16 = arith.constant dense<0.000000e+00> : vector<16x16xf32>
      %42 = tpu.matmul %40, %41, %cst_16 {dimension_numbers = #tpu.dot_dimension_numbers<[1], [0], [0], [1], [0, 0, 1, 1], [], []>} : vector<16x8xbf16>, vector<8x16xbf16>, vector<16x16xf32> -> vector<16x16xf32>
      %43 = vector.extract_strided_slice %21 {offsets = [4, 0, 0], sizes = [1, 8, 16], strides = [1, 1, 1]} : vector<8x8x16xf32> to vector<1x8x16xf32>
      %44 = vector.shape_cast %43 : vector<1x8x16xf32> to vector<8x16xf32>
      %45 = arith.truncf %22 : vector<16x8xf32> to vector<16x8xbf16>
      %46 = arith.truncf %44 : vector<8x16xf32> to vector<8x16xbf16>
      %cst_17 = arith.constant dense<0.000000e+00> : vector<16x16xf32>
      %47 = tpu.matmul %45, %46, %cst_17 {dimension_numbers = #tpu.dot_dimension_numbers<[1], [0], [0], [1], [0, 0, 1, 1], [], []>} : vector<16x8xbf16>, vector<8x16xbf16>, vector<16x16xf32> -> vector<16x16xf32>
      %48 = vector.extract_strided_slice %21 {offsets = [5, 0, 0], sizes = [1, 8, 16], strides = [1, 1, 1]} : vector<8x8x16xf32> to vector<1x8x16xf32>
      %49 = vector.shape_cast %48 : vector<1x8x16xf32> to vector<8x16xf32>
      %50 = arith.truncf %22 : vector<16x8xf32> to vector<16x8xbf16>
      %51 = arith.truncf %49 : vector<8x16xf32> to vector<8x16xbf16>
      %cst_18 = arith.constant dense<0.000000e+00> : vector<16x16xf32>
      %52 = tpu.matmul %50, %51, %cst_18 {dimension_numbers = #tpu.dot_dimension_numbers<[1], [0], [0], [1], [0, 0, 1, 1], [], []>} : vector<16x8xbf16>, vector<8x16xbf16>, vector<16x16xf32> -> vector<16x16xf32>
      %53 = vector.extract_strided_slice %21 {offsets = [6, 0, 0], sizes = [1, 8, 16], strides = [1, 1, 1]} : vector<8x8x16xf32> to vector<1x8x16xf32>
      %54 = vector.shape_cast %53 : vector<1x8x16xf32> to vector<8x16xf32>
      %55 = arith.truncf %22 : vector<16x8xf32> to vector<16x8xbf16>
      %56 = arith.truncf %54 : vector<8x16xf32> to vector<8x16xbf16>
      %cst_19 = arith.constant dense<0.000000e+00> : vector<16x16xf32>
      %57 = tpu.matmul %55, %56, %cst_19 {dimension_numbers = #tpu.dot_dimension_numbers<[1], [0], [0], [1], [0, 0, 1, 1], [], []>} : vector<16x8xbf16>, vector<8x16xbf16>, vector<16x16xf32> -> vector<16x16xf32>
      %58 = vector.extract_strided_slice %21 {offsets = [7, 0, 0], sizes = [1, 8, 16], strides = [1, 1, 1]} : vector<8x8x16xf32> to vector<1x8x16xf32>
      %59 = vector.shape_cast %58 : vector<1x8x16xf32> to vector<8x16xf32>
      %60 = arith.truncf %22 : vector<16x8xf32> to vector<16x8xbf16>
      %61 = arith.truncf %59 : vector<8x16xf32> to vector<8x16xbf16>
      %cst_20 = arith.constant dense<0.000000e+00> : vector<16x16xf32>
      %62 = tpu.matmul %60, %61, %cst_20 {dimension_numbers = #tpu.dot_dimension_numbers<[1], [0], [0], [1], [0, 0, 1, 1], [], []>} : vector<16x8xbf16>, vector<8x16xbf16>, vector<16x16xf32> -> vector<16x16xf32>
      %63 = vector.shape_cast %27 : vector<16x16xf32> to vector<1x16x16xf32>
      %64 = vector.shape_cast %32 : vector<16x16xf32> to vector<1x16x16xf32>
      %65 = vector.shape_cast %37 : vector<16x16xf32> to vector<1x16x16xf32>
      %66 = vector.shape_cast %42 : vector<16x16xf32> to vector<1x16x16xf32>
      %67 = vector.shape_cast %47 : vector<16x16xf32> to vector<1x16x16xf32>
      %68 = vector.shape_cast %52 : vector<16x16xf32> to vector<1x16x16xf32>
      %69 = vector.shape_cast %57 : vector<16x16xf32> to vector<1x16x16xf32>
      %70 = vector.shape_cast %62 : vector<16x16xf32> to vector<1x16x16xf32>
      %71 = tpu.concatenate %63, %64, %65, %66, %67, %68, %69, %70 in 0 : vector<1x16x16xf32>, vector<1x16x16xf32>, vector<1x16x16xf32>, vector<1x16x16xf32>, vector<1x16x16xf32>, vector<1x16x16xf32>, vector<1x16x16xf32>, vector<1x16x16xf32> -> vector<8x16x16xf32>
      %72 = vector.extract_strided_slice %71 {offsets = [0, 0, 0], sizes = [8, 8, 16], strides = [1, 1, 1]} : vector<8x16x16xf32> to vector<8x8x16xf32>
      %73 = vector.extract_strided_slice %15 {offsets = [0, 0], sizes = [8, 2], strides = [1, 1]} : vector<8x12xf32> to vector<8x2xf32>
      %cst_21 = arith.constant dense<0.000000e+00> : vector<8x8xf32>
      %74 = vector.multi_reduction <add>, %72, %cst_21 [2] : vector<8x8x16xf32> to vector<8x8xf32>
      %75 = vector.shape_cast %74 : vector<8x8xf32> to vector<8x8x1xf32>
      %cst_22 = arith.constant dense<0.000000e+00> : vector<8x1xf32>
      %76 = vector.multi_reduction <add>, %75, %cst_22 [1] : vector<8x8x1xf32> to vector<8x1xf32>
      %77 = vector.shape_cast %76 : vector<8x1xf32> to vector<8x1x1xf32>
      %78 = arith.mulf %72, %72 : vector<8x8x16xf32>
      %cst_23 = arith.constant dense<0.000000e+00> : vector<8x8xf32>
      %79 = vector.multi_reduction <add>, %78, %cst_23 [2] : vector<8x8x16xf32> to vector<8x8xf32>
      %80 = vector.shape_cast %79 : vector<8x8xf32> to vector<8x8x1xf32>
      %cst_24 = arith.constant dense<0.000000e+00> : vector<8x1xf32>
      %81 = vector.multi_reduction <add>, %80, %cst_24 [1] : vector<8x8x1xf32> to vector<8x1xf32>
      %82 = vector.shape_cast %81 : vector<8x1xf32> to vector<8x1x1xf32>
      %cst_25 = arith.constant 7.812500e-03 : f32
      %83 = vector.broadcast %cst_25 : f32 to vector<8x1x1xf32>
      %84 = arith.mulf %77, %83 : vector<8x1x1xf32>
      %cst_26 = arith.constant 7.812500e-03 : f32
      %85 = vector.broadcast %cst_26 : f32 to vector<8x1x1xf32>
      %86 = arith.mulf %82, %85 : vector<8x1x1xf32>
      %87 = arith.mulf %84, %84 : vector<8x1x1xf32>
      %88 = arith.subf %86, %87 : vector<8x1x1xf32>
      %89 = vector.broadcast %84 : vector<8x1x1xf32> to vector<8x8x16xf32>
      %90 = arith.subf %72, %89 : vector<8x8x16xf32>
      %cst_27 = arith.constant 9.99999974E-6 : f32
      %91 = vector.broadcast %cst_27 : f32 to vector<8x1x1xf32>
      %92 = arith.addf %88, %91 : vector<8x1x1xf32>
      %93 = math.rsqrt %92 : vector<8x1x1xf32>
      %94 = vector.broadcast %93 : vector<8x1x1xf32> to vector<8x8x16xf32>
      %95 = arith.mulf %90, %94 : vector<8x8x16xf32>
      %96 = vector.extract_strided_slice %73 {offsets = [0, 0], sizes = [8, 1], strides = [1, 1]} : vector<8x2xf32> to vector<8x1xf32>
      %97 = vector.shape_cast %96 : vector<8x1xf32> to vector<1x8x1xf32>
      %98 = vector.broadcast %97 : vector<1x8x1xf32> to vector<8x8x16xf32>
      %99 = arith.mulf %95, %98 : vector<8x8x16xf32>
      %100 = vector.extract_strided_slice %73 {offsets = [0, 1], sizes = [8, 1], strides = [1, 1]} : vector<8x2xf32> to vector<8x1xf32>
      %101 = vector.shape_cast %100 : vector<8x1xf32> to vector<1x8x1xf32>
      %102 = vector.broadcast %101 : vector<1x8x1xf32> to vector<8x8x16xf32>
      %103 = arith.addf %99, %102 : vector<8x8x16xf32>
      %104 = vector.extract_strided_slice %71 {offsets = [0, 8, 0], sizes = [8, 8, 16], strides = [1, 1, 1]} : vector<8x16x16xf32> to vector<8x8x16xf32>
      %105 = vector.extract_strided_slice %15 {offsets = [0, 2], sizes = [8, 2], strides = [1, 1]} : vector<8x12xf32> to vector<8x2xf32>
      %cst_28 = arith.constant dense<0.000000e+00> : vector<8x8xf32>
      %106 = vector.multi_reduction <add>, %104, %cst_28 [2] : vector<8x8x16xf32> to vector<8x8xf32>
      %107 = vector.shape_cast %106 : vector<8x8xf32> to vector<8x8x1xf32>
      %cst_29 = arith.constant dense<0.000000e+00> : vector<8x1xf32>
      %108 = vector.multi_reduction <add>, %107, %cst_29 [1] : vector<8x8x1xf32> to vector<8x1xf32>
      %109 = vector.shape_cast %108 : vector<8x1xf32> to vector<8x1x1xf32>
      %110 = arith.mulf %104, %104 : vector<8x8x16xf32>
      %cst_30 = arith.constant dense<0.000000e+00> : vector<8x8xf32>
      %111 = vector.multi_reduction <add>, %110, %cst_30 [2] : vector<8x8x16xf32> to vector<8x8xf32>
      %112 = vector.shape_cast %111 : vector<8x8xf32> to vector<8x8x1xf32>
      %cst_31 = arith.constant dense<0.000000e+00> : vector<8x1xf32>
      %113 = vector.multi_reduction <add>, %112, %cst_31 [1] : vector<8x8x1xf32> to vector<8x1xf32>
      %114 = vector.shape_cast %113 : vector<8x1xf32> to vector<8x1x1xf32>
      %cst_32 = arith.constant 7.812500e-03 : f32
      %115 = vector.broadcast %cst_32 : f32 to vector<8x1x1xf32>
      %116 = arith.mulf %109, %115 : vector<8x1x1xf32>
      %cst_33 = arith.constant 7.812500e-03 : f32
      %117 = vector.broadcast %cst_33 : f32 to vector<8x1x1xf32>
      %118 = arith.mulf %114, %117 : vector<8x1x1xf32>
      %119 = arith.mulf %116, %116 : vector<8x1x1xf32>
      %120 = arith.subf %118, %119 : vector<8x1x1xf32>
      %121 = vector.broadcast %116 : vector<8x1x1xf32> to vector<8x8x16xf32>
      %122 = arith.subf %104, %121 : vector<8x8x16xf32>
      %cst_34 = arith.constant 9.99999974E-6 : f32
      %123 = vector.broadcast %cst_34 : f32 to vector<8x1x1xf32>
      %124 = arith.addf %120, %123 : vector<8x1x1xf32>
      %125 = math.rsqrt %124 : vector<8x1x1xf32>
      %126 = vector.broadcast %125 : vector<8x1x1xf32> to vector<8x8x16xf32>
      %127 = arith.mulf %122, %126 : vector<8x8x16xf32>
      %128 = vector.extract_strided_slice %105 {offsets = [0, 0], sizes = [8, 1], strides = [1, 1]} : vector<8x2xf32> to vector<8x1xf32>
      %129 = vector.shape_cast %128 : vector<8x1xf32> to vector<1x8x1xf32>
      %130 = vector.broadcast %129 : vector<1x8x1xf32> to vector<8x8x16xf32>
      %131 = arith.mulf %127, %130 : vector<8x8x16xf32>
      %132 = vector.extract_strided_slice %105 {offsets = [0, 1], sizes = [8, 1], strides = [1, 1]} : vector<8x2xf32> to vector<8x1xf32>
      %133 = vector.shape_cast %132 : vector<8x1xf32> to vector<1x8x1xf32>
      %134 = vector.broadcast %133 : vector<1x8x1xf32> to vector<8x8x16xf32>
      %135 = arith.addf %131, %134 : vector<8x8x16xf32>
      %136 = vector.extract_strided_slice %13 {offsets = [16, 0], sizes = [8, 8], strides = [1, 1]} : vector<32x8xf32> to vector<8x8xf32>
      %137 = vector.extract_strided_slice %11 {offsets = [0, 0, 0], sizes = [1, 8, 256], strides = [1, 1, 1]} : vector<8x8x256xf32> to vector<1x8x256xf32>
      %138 = vector.shape_cast %137 : vector<1x8x256xf32> to vector<8x256xf32>
      %139 = arith.truncf %136 : vector<8x8xf32> to vector<8x8xbf16>
      %140 = arith.truncf %138 : vector<8x256xf32> to vector<8x256xbf16>
      %cst_35 = arith.constant dense<0.000000e+00> : vector<8x256xf32>
      %141 = tpu.matmul %139, %140, %cst_35 {dimension_numbers = #tpu.dot_dimension_numbers<[1], [0], [0], [1], [0, 0, 1, 1], [], []>} : vector<8x8xbf16>, vector<8x256xbf16>, vector<8x256xf32> -> vector<8x256xf32>
      %142 = vector.extract_strided_slice %11 {offsets = [1, 0, 0], sizes = [1, 8, 256], strides = [1, 1, 1]} : vector<8x8x256xf32> to vector<1x8x256xf32>
      %143 = vector.shape_cast %142 : vector<1x8x256xf32> to vector<8x256xf32>
      %144 = arith.truncf %136 : vector<8x8xf32> to vector<8x8xbf16>
      %145 = arith.truncf %143 : vector<8x256xf32> to vector<8x256xbf16>
      %cst_36 = arith.constant dense<0.000000e+00> : vector<8x256xf32>
      %146 = tpu.matmul %144, %145, %cst_36 {dimension_numbers = #tpu.dot_dimension_numbers<[1], [0], [0], [1], [0, 0, 1, 1], [], []>} : vector<8x8xbf16>, vector<8x256xbf16>, vector<8x256xf32> -> vector<8x256xf32>
      %147 = vector.extract_strided_slice %11 {offsets = [2, 0, 0], sizes = [1, 8, 256], strides = [1, 1, 1]} : vector<8x8x256xf32> to vector<1x8x256xf32>
      %148 = vector.shape_cast %147 : vector<1x8x256xf32> to vector<8x256xf32>
      %149 = arith.truncf %136 : vector<8x8xf32> to vector<8x8xbf16>
      %150 = arith.truncf %148 : vector<8x256xf32> to vector<8x256xbf16>
      %cst_37 = arith.constant dense<0.000000e+00> : vector<8x256xf32>
      %151 = tpu.matmul %149, %150, %cst_37 {dimension_numbers = #tpu.dot_dimension_numbers<[1], [0], [0], [1], [0, 0, 1, 1], [], []>} : vector<8x8xbf16>, vector<8x256xbf16>, vector<8x256xf32> -> vector<8x256xf32>
      %152 = vector.extract_strided_slice %11 {offsets = [3, 0, 0], sizes = [1, 8, 256], strides = [1, 1, 1]} : vector<8x8x256xf32> to vector<1x8x256xf32>
      %153 = vector.shape_cast %152 : vector<1x8x256xf32> to vector<8x256xf32>
      %154 = arith.truncf %136 : vector<8x8xf32> to vector<8x8xbf16>
      %155 = arith.truncf %153 : vector<8x256xf32> to vector<8x256xbf16>
      %cst_38 = arith.constant dense<0.000000e+00> : vector<8x256xf32>
      %156 = tpu.matmul %154, %155, %cst_38 {dimension_numbers = #tpu.dot_dimension_numbers<[1], [0], [0], [1], [0, 0, 1, 1], [], []>} : vector<8x8xbf16>, vector<8x256xbf16>, vector<8x256xf32> -> vector<8x256xf32>
      %157 = vector.extract_strided_slice %11 {offsets = [4, 0, 0], sizes = [1, 8, 256], strides = [1, 1, 1]} : vector<8x8x256xf32> to vector<1x8x256xf32>
      %158 = vector.shape_cast %157 : vector<1x8x256xf32> to vector<8x256xf32>
      %159 = arith.truncf %136 : vector<8x8xf32> to vector<8x8xbf16>
      %160 = arith.truncf %158 : vector<8x256xf32> to vector<8x256xbf16>
      %cst_39 = arith.constant dense<0.000000e+00> : vector<8x256xf32>
      %161 = tpu.matmul %159, %160, %cst_39 {dimension_numbers = #tpu.dot_dimension_numbers<[1], [0], [0], [1], [0, 0, 1, 1], [], []>} : vector<8x8xbf16>, vector<8x256xbf16>, vector<8x256xf32> -> vector<8x256xf32>
      %162 = vector.extract_strided_slice %11 {offsets = [5, 0, 0], sizes = [1, 8, 256], strides = [1, 1, 1]} : vector<8x8x256xf32> to vector<1x8x256xf32>
      %163 = vector.shape_cast %162 : vector<1x8x256xf32> to vector<8x256xf32>
      %164 = arith.truncf %136 : vector<8x8xf32> to vector<8x8xbf16>
      %165 = arith.truncf %163 : vector<8x256xf32> to vector<8x256xbf16>
      %cst_40 = arith.constant dense<0.000000e+00> : vector<8x256xf32>
      %166 = tpu.matmul %164, %165, %cst_40 {dimension_numbers = #tpu.dot_dimension_numbers<[1], [0], [0], [1], [0, 0, 1, 1], [], []>} : vector<8x8xbf16>, vector<8x256xbf16>, vector<8x256xf32> -> vector<8x256xf32>
      %167 = vector.extract_strided_slice %11 {offsets = [6, 0, 0], sizes = [1, 8, 256], strides = [1, 1, 1]} : vector<8x8x256xf32> to vector<1x8x256xf32>
      %168 = vector.shape_cast %167 : vector<1x8x256xf32> to vector<8x256xf32>
      %169 = arith.truncf %136 : vector<8x8xf32> to vector<8x8xbf16>
      %170 = arith.truncf %168 : vector<8x256xf32> to vector<8x256xbf16>
      %cst_41 = arith.constant dense<0.000000e+00> : vector<8x256xf32>
      %171 = tpu.matmul %169, %170, %cst_41 {dimension_numbers = #tpu.dot_dimension_numbers<[1], [0], [0], [1], [0, 0, 1, 1], [], []>} : vector<8x8xbf16>, vector<8x256xbf16>, vector<8x256xf32> -> vector<8x256xf32>
      %172 = vector.extract_strided_slice %11 {offsets = [7, 0, 0], sizes = [1, 8, 256], strides = [1, 1, 1]} : vector<8x8x256xf32> to vector<1x8x256xf32>
      %173 = vector.shape_cast %172 : vector<1x8x256xf32> to vector<8x256xf32>
      %174 = arith.truncf %136 : vector<8x8xf32> to vector<8x8xbf16>
      %175 = arith.truncf %173 : vector<8x256xf32> to vector<8x256xbf16>
      %cst_42 = arith.constant dense<0.000000e+00> : vector<8x256xf32>
      %176 = tpu.matmul %174, %175, %cst_42 {dimension_numbers = #tpu.dot_dimension_numbers<[1], [0], [0], [1], [0, 0, 1, 1], [], []>} : vector<8x8xbf16>, vector<8x256xbf16>, vector<8x256xf32> -> vector<8x256xf32>
      %177 = vector.shape_cast %141 : vector<8x256xf32> to vector<1x8x256xf32>
      %178 = vector.shape_cast %146 : vector<8x256xf32> to vector<1x8x256xf32>
      %179 = vector.shape_cast %151 : vector<8x256xf32> to vector<1x8x256xf32>
      %180 = vector.shape_cast %156 : vector<8x256xf32> to vector<1x8x256xf32>
      %181 = vector.shape_cast %161 : vector<8x256xf32> to vector<1x8x256xf32>
      %182 = vector.shape_cast %166 : vector<8x256xf32> to vector<1x8x256xf32>
      %183 = vector.shape_cast %171 : vector<8x256xf32> to vector<1x8x256xf32>
      %184 = vector.shape_cast %176 : vector<8x256xf32> to vector<1x8x256xf32>
      %185 = tpu.concatenate %177, %178, %179, %180, %181, %182, %183, %184 in 0 : vector<1x8x256xf32>, vector<1x8x256xf32>, vector<1x8x256xf32>, vector<1x8x256xf32>, vector<1x8x256xf32>, vector<1x8x256xf32>, vector<1x8x256xf32>, vector<1x8x256xf32> -> vector<8x8x256xf32>
      %186 = vector.extract_strided_slice %15 {offsets = [0, 4], sizes = [8, 2], strides = [1, 1]} : vector<8x12xf32> to vector<8x2xf32>
      %cst_43 = arith.constant dense<0.000000e+00> : vector<8x8xf32>
      %187 = vector.multi_reduction <add>, %185, %cst_43 [2] : vector<8x8x256xf32> to vector<8x8xf32>
      %188 = vector.shape_cast %187 : vector<8x8xf32> to vector<8x8x1xf32>
      %cst_44 = arith.constant dense<0.000000e+00> : vector<8x1xf32>
      %189 = vector.multi_reduction <add>, %188, %cst_44 [1] : vector<8x8x1xf32> to vector<8x1xf32>
      %190 = vector.shape_cast %189 : vector<8x1xf32> to vector<8x1x1xf32>
      %191 = arith.mulf %185, %185 : vector<8x8x256xf32>
      %cst_45 = arith.constant dense<0.000000e+00> : vector<8x8xf32>
      %192 = vector.multi_reduction <add>, %191, %cst_45 [2] : vector<8x8x256xf32> to vector<8x8xf32>
      %193 = vector.shape_cast %192 : vector<8x8xf32> to vector<8x8x1xf32>
      %cst_46 = arith.constant dense<0.000000e+00> : vector<8x1xf32>
      %194 = vector.multi_reduction <add>, %193, %cst_46 [1] : vector<8x8x1xf32> to vector<8x1xf32>
      %195 = vector.shape_cast %194 : vector<8x1xf32> to vector<8x1x1xf32>
      %cst_47 = arith.constant 4.8828125E-4 : f32
      %196 = vector.broadcast %cst_47 : f32 to vector<8x1x1xf32>
      %197 = arith.mulf %190, %196 : vector<8x1x1xf32>
      %cst_48 = arith.constant 4.8828125E-4 : f32
      %198 = vector.broadcast %cst_48 : f32 to vector<8x1x1xf32>
      %199 = arith.mulf %195, %198 : vector<8x1x1xf32>
      %200 = arith.mulf %197, %197 : vector<8x1x1xf32>
      %201 = arith.subf %199, %200 : vector<8x1x1xf32>
      %202 = vector.broadcast %197 : vector<8x1x1xf32> to vector<8x8x256xf32>
      %203 = arith.subf %185, %202 : vector<8x8x256xf32>
      %cst_49 = arith.constant 9.99999974E-6 : f32
      %204 = vector.broadcast %cst_49 : f32 to vector<8x1x1xf32>
      %205 = arith.addf %201, %204 : vector<8x1x1xf32>
      %206 = math.rsqrt %205 : vector<8x1x1xf32>
      %207 = vector.broadcast %206 : vector<8x1x1xf32> to vector<8x8x256xf32>
      %208 = arith.mulf %203, %207 : vector<8x8x256xf32>
      %209 = vector.extract_strided_slice %186 {offsets = [0, 0], sizes = [8, 1], strides = [1, 1]} : vector<8x2xf32> to vector<8x1xf32>
      %210 = vector.shape_cast %209 : vector<8x1xf32> to vector<1x8x1xf32>
      %211 = vector.broadcast %210 : vector<1x8x1xf32> to vector<8x8x256xf32>
      %212 = arith.mulf %208, %211 : vector<8x8x256xf32>
      %213 = vector.extract_strided_slice %186 {offsets = [0, 1], sizes = [8, 1], strides = [1, 1]} : vector<8x2xf32> to vector<8x1xf32>
      %214 = vector.shape_cast %213 : vector<8x1xf32> to vector<1x8x1xf32>
      %215 = vector.broadcast %214 : vector<1x8x1xf32> to vector<8x8x256xf32>
      %216 = arith.addf %212, %215 : vector<8x8x256xf32>
      %217 = vector.extract_strided_slice %13 {offsets = [24, 0], sizes = [8, 8], strides = [1, 1]} : vector<32x8xf32> to vector<8x8xf32>
      %cst_50 = arith.constant 0.000000e+00 : f32
      %218 = vector.broadcast %cst_50 : f32 to vector<8x8x256xf32>
      %219 = vector.extract_strided_slice %103 {offsets = [0, 0, 0], sizes = [8, 4, 16], strides = [1, 1, 1]} : vector<8x8x16xf32> to vector<8x4x16xf32>
      %220 = vector.shape_cast %219 : vector<8x4x16xf32> to vector<8x64xf32>
      %221 = vector.extract_strided_slice %135 {offsets = [0, 0, 0], sizes = [8, 4, 16], strides = [1, 1, 1]} : vector<8x8x16xf32> to vector<8x4x16xf32>
      %222 = vector.shape_cast %221 : vector<8x4x16xf32> to vector<8x64xf32>
      %223 = vector.extract_strided_slice %216 {offsets = [0, 0, 0], sizes = [8, 4, 256], strides = [1, 1, 1]} : vector<8x8x256xf32> to vector<8x4x256xf32>
      %224 = vector.shape_cast %223 : vector<8x4x256xf32> to vector<8x1024xf32>
      %225 = arith.truncf %220 : vector<8x64xf32> to vector<8x64xbf16>
      %226 = arith.truncf %222 : vector<8x64xf32> to vector<8x64xbf16>
      %cst_51 = arith.constant dense<0.000000e+00> : vector<8x8xf32>
      %227 = tpu.matmul %225, %226, %cst_51 {dimension_numbers = #tpu.dot_dimension_numbers<[1], [1], [0], [0], [0, 0, 1, 0], [], []>} : vector<8x64xbf16>, vector<8x64xbf16>, vector<8x8xf32> -> vector<8x8xf32>
      %cst_52 = arith.constant dense<0xFF800000> : vector<8xf32>
      %228 = vector.multi_reduction <maximumf>, %227, %cst_52 [1] : vector<8x8xf32> to vector<8xf32>
      %229 = vector.shape_cast %228 : vector<8xf32> to vector<8x1xf32>
      %230 = vector.broadcast %229 : vector<8x1xf32> to vector<8x8xf32>
      %231 = arith.subf %227, %230 : vector<8x8xf32>
      %232 = math.exp %231 : vector<8x8xf32>
      %cst_53 = arith.constant dense<0.000000e+00> : vector<8xf32>
      %233 = vector.multi_reduction <add>, %232, %cst_53 [1] : vector<8x8xf32> to vector<8xf32>
      %234 = vector.shape_cast %233 : vector<8xf32> to vector<8x1xf32>
      %235 = tpu.reciprocal %234 {approx = true} : vector<8x1xf32> -> vector<8x1xf32>
      %236 = vector.broadcast %235 : vector<8x1xf32> to vector<8x8xf32>
      %237 = arith.mulf %232, %236 : vector<8x8xf32>
      %238 = arith.truncf %237 : vector<8x8xf32> to vector<8x8xbf16>
      %239 = arith.truncf %224 : vector<8x1024xf32> to vector<8x1024xbf16>
      %cst_54 = arith.constant dense<0.000000e+00> : vector<8x1024xf32>
      %240 = tpu.matmul %238, %239, %cst_54 {dimension_numbers = #tpu.dot_dimension_numbers<[1], [0], [0], [1], [0, 0, 1, 1], [], []>} : vector<8x8xbf16>, vector<8x1024xbf16>, vector<8x1024xf32> -> vector<8x1024xf32>
      %241 = vector.shape_cast %240 : vector<8x1024xf32> to vector<8x4x256xf32>
      %242 = vector.extract_strided_slice %217 {offsets = [0, 0], sizes = [8, 4], strides = [1, 1]} : vector<8x8xf32> to vector<8x4xf32>
      %243 = vector.extract_strided_slice %241 {offsets = [0, 0, 0], sizes = [1, 4, 256], strides = [1, 1, 1]} : vector<8x4x256xf32> to vector<1x4x256xf32>
      %244 = vector.shape_cast %243 : vector<1x4x256xf32> to vector<4x256xf32>
      %245 = arith.truncf %242 : vector<8x4xf32> to vector<8x4xbf16>
      %246 = arith.truncf %244 : vector<4x256xf32> to vector<4x256xbf16>
      %cst_55 = arith.constant dense<0.000000e+00> : vector<8x256xf32>
      %247 = tpu.matmul %245, %246, %cst_55 {dimension_numbers = #tpu.dot_dimension_numbers<[1], [0], [0], [1], [0, 0, 1, 1], [], []>} : vector<8x4xbf16>, vector<4x256xbf16>, vector<8x256xf32> -> vector<8x256xf32>
      %248 = vector.extract_strided_slice %241 {offsets = [1, 0, 0], sizes = [1, 4, 256], strides = [1, 1, 1]} : vector<8x4x256xf32> to vector<1x4x256xf32>
      %249 = vector.shape_cast %248 : vector<1x4x256xf32> to vector<4x256xf32>
      %250 = arith.truncf %242 : vector<8x4xf32> to vector<8x4xbf16>
      %251 = arith.truncf %249 : vector<4x256xf32> to vector<4x256xbf16>
      %cst_56 = arith.constant dense<0.000000e+00> : vector<8x256xf32>
      %252 = tpu.matmul %250, %251, %cst_56 {dimension_numbers = #tpu.dot_dimension_numbers<[1], [0], [0], [1], [0, 0, 1, 1], [], []>} : vector<8x4xbf16>, vector<4x256xbf16>, vector<8x256xf32> -> vector<8x256xf32>
      %253 = vector.extract_strided_slice %241 {offsets = [2, 0, 0], sizes = [1, 4, 256], strides = [1, 1, 1]} : vector<8x4x256xf32> to vector<1x4x256xf32>
      %254 = vector.shape_cast %253 : vector<1x4x256xf32> to vector<4x256xf32>
      %255 = arith.truncf %242 : vector<8x4xf32> to vector<8x4xbf16>
      %256 = arith.truncf %254 : vector<4x256xf32> to vector<4x256xbf16>
      %cst_57 = arith.constant dense<0.000000e+00> : vector<8x256xf32>
      %257 = tpu.matmul %255, %256, %cst_57 {dimension_numbers = #tpu.dot_dimension_numbers<[1], [0], [0], [1], [0, 0, 1, 1], [], []>} : vector<8x4xbf16>, vector<4x256xbf16>, vector<8x256xf32> -> vector<8x256xf32>
      %258 = vector.extract_strided_slice %241 {offsets = [3, 0, 0], sizes = [1, 4, 256], strides = [1, 1, 1]} : vector<8x4x256xf32> to vector<1x4x256xf32>
      %259 = vector.shape_cast %258 : vector<1x4x256xf32> to vector<4x256xf32>
      %260 = arith.truncf %242 : vector<8x4xf32> to vector<8x4xbf16>
      %261 = arith.truncf %259 : vector<4x256xf32> to vector<4x256xbf16>
      %cst_58 = arith.constant dense<0.000000e+00> : vector<8x256xf32>
      %262 = tpu.matmul %260, %261, %cst_58 {dimension_numbers = #tpu.dot_dimension_numbers<[1], [0], [0], [1], [0, 0, 1, 1], [], []>} : vector<8x4xbf16>, vector<4x256xbf16>, vector<8x256xf32> -> vector<8x256xf32>
      %263 = vector.extract_strided_slice %241 {offsets = [4, 0, 0], sizes = [1, 4, 256], strides = [1, 1, 1]} : vector<8x4x256xf32> to vector<1x4x256xf32>
      %264 = vector.shape_cast %263 : vector<1x4x256xf32> to vector<4x256xf32>
      %265 = arith.truncf %242 : vector<8x4xf32> to vector<8x4xbf16>
      %266 = arith.truncf %264 : vector<4x256xf32> to vector<4x256xbf16>
      %cst_59 = arith.constant dense<0.000000e+00> : vector<8x256xf32>
      %267 = tpu.matmul %265, %266, %cst_59 {dimension_numbers = #tpu.dot_dimension_numbers<[1], [0], [0], [1], [0, 0, 1, 1], [], []>} : vector<8x4xbf16>, vector<4x256xbf16>, vector<8x256xf32> -> vector<8x256xf32>
      %268 = vector.extract_strided_slice %241 {offsets = [5, 0, 0], sizes = [1, 4, 256], strides = [1, 1, 1]} : vector<8x4x256xf32> to vector<1x4x256xf32>
      %269 = vector.shape_cast %268 : vector<1x4x256xf32> to vector<4x256xf32>
      %270 = arith.truncf %242 : vector<8x4xf32> to vector<8x4xbf16>
      %271 = arith.truncf %269 : vector<4x256xf32> to vector<4x256xbf16>
      %cst_60 = arith.constant dense<0.000000e+00> : vector<8x256xf32>
      %272 = tpu.matmul %270, %271, %cst_60 {dimension_numbers = #tpu.dot_dimension_numbers<[1], [0], [0], [1], [0, 0, 1, 1], [], []>} : vector<8x4xbf16>, vector<4x256xbf16>, vector<8x256xf32> -> vector<8x256xf32>
      %273 = vector.extract_strided_slice %241 {offsets = [6, 0, 0], sizes = [1, 4, 256], strides = [1, 1, 1]} : vector<8x4x256xf32> to vector<1x4x256xf32>
      %274 = vector.shape_cast %273 : vector<1x4x256xf32> to vector<4x256xf32>
      %275 = arith.truncf %242 : vector<8x4xf32> to vector<8x4xbf16>
      %276 = arith.truncf %274 : vector<4x256xf32> to vector<4x256xbf16>
      %cst_61 = arith.constant dense<0.000000e+00> : vector<8x256xf32>
      %277 = tpu.matmul %275, %276, %cst_61 {dimension_numbers = #tpu.dot_dimension_numbers<[1], [0], [0], [1], [0, 0, 1, 1], [], []>} : vector<8x4xbf16>, vector<4x256xbf16>, vector<8x256xf32> -> vector<8x256xf32>
      %278 = vector.extract_strided_slice %241 {offsets = [7, 0, 0], sizes = [1, 4, 256], strides = [1, 1, 1]} : vector<8x4x256xf32> to vector<1x4x256xf32>
      %279 = vector.shape_cast %278 : vector<1x4x256xf32> to vector<4x256xf32>
      %280 = arith.truncf %242 : vector<8x4xf32> to vector<8x4xbf16>
      %281 = arith.truncf %279 : vector<4x256xf32> to vector<4x256xbf16>
      %cst_62 = arith.constant dense<0.000000e+00> : vector<8x256xf32>
      %282 = tpu.matmul %280, %281, %cst_62 {dimension_numbers = #tpu.dot_dimension_numbers<[1], [0], [0], [1], [0, 0, 1, 1], [], []>} : vector<8x4xbf16>, vector<4x256xbf16>, vector<8x256xf32> -> vector<8x256xf32>
      %283 = vector.shape_cast %247 : vector<8x256xf32> to vector<1x8x256xf32>
      %284 = vector.shape_cast %252 : vector<8x256xf32> to vector<1x8x256xf32>
      %285 = vector.shape_cast %257 : vector<8x256xf32> to vector<1x8x256xf32>
      %286 = vector.shape_cast %262 : vector<8x256xf32> to vector<1x8x256xf32>
      %287 = vector.shape_cast %267 : vector<8x256xf32> to vector<1x8x256xf32>
      %288 = vector.shape_cast %272 : vector<8x256xf32> to vector<1x8x256xf32>
      %289 = vector.shape_cast %277 : vector<8x256xf32> to vector<1x8x256xf32>
      %290 = vector.shape_cast %282 : vector<8x256xf32> to vector<1x8x256xf32>
      %291 = tpu.concatenate %283, %284, %285, %286, %287, %288, %289, %290 in 0 : vector<1x8x256xf32>, vector<1x8x256xf32>, vector<1x8x256xf32>, vector<1x8x256xf32>, vector<1x8x256xf32>, vector<1x8x256xf32>, vector<1x8x256xf32>, vector<1x8x256xf32> -> vector<8x8x256xf32>
      %292 = arith.addf %218, %291 : vector<8x8x256xf32>
      %293 = vector.extract_strided_slice %103 {offsets = [0, 4, 0], sizes = [8, 4, 16], strides = [1, 1, 1]} : vector<8x8x16xf32> to vector<8x4x16xf32>
      %294 = vector.shape_cast %293 : vector<8x4x16xf32> to vector<8x64xf32>
      %295 = vector.extract_strided_slice %135 {offsets = [0, 4, 0], sizes = [8, 4, 16], strides = [1, 1, 1]} : vector<8x8x16xf32> to vector<8x4x16xf32>
      %296 = vector.shape_cast %295 : vector<8x4x16xf32> to vector<8x64xf32>
      %297 = vector.extract_strided_slice %216 {offsets = [0, 4, 0], sizes = [8, 4, 256], strides = [1, 1, 1]} : vector<8x8x256xf32> to vector<8x4x256xf32>
      %298 = vector.shape_cast %297 : vector<8x4x256xf32> to vector<8x1024xf32>
      %299 = arith.truncf %294 : vector<8x64xf32> to vector<8x64xbf16>
      %300 = arith.truncf %296 : vector<8x64xf32> to vector<8x64xbf16>
      %cst_63 = arith.constant dense<0.000000e+00> : vector<8x8xf32>
      %301 = tpu.matmul %299, %300, %cst_63 {dimension_numbers = #tpu.dot_dimension_numbers<[1], [1], [0], [0], [0, 0, 1, 0], [], []>} : vector<8x64xbf16>, vector<8x64xbf16>, vector<8x8xf32> -> vector<8x8xf32>
      %cst_64 = arith.constant dense<0xFF800000> : vector<8xf32>
      %302 = vector.multi_reduction <maximumf>, %301, %cst_64 [1] : vector<8x8xf32> to vector<8xf32>
      %303 = vector.shape_cast %302 : vector<8xf32> to vector<8x1xf32>
      %304 = vector.broadcast %303 : vector<8x1xf32> to vector<8x8xf32>
      %305 = arith.subf %301, %304 : vector<8x8xf32>
      %306 = math.exp %305 : vector<8x8xf32>
      %cst_65 = arith.constant dense<0.000000e+00> : vector<8xf32>
      %307 = vector.multi_reduction <add>, %306, %cst_65 [1] : vector<8x8xf32> to vector<8xf32>
      %308 = vector.shape_cast %307 : vector<8xf32> to vector<8x1xf32>
      %309 = tpu.reciprocal %308 {approx = true} : vector<8x1xf32> -> vector<8x1xf32>
      %310 = vector.broadcast %309 : vector<8x1xf32> to vector<8x8xf32>
      %311 = arith.mulf %306, %310 : vector<8x8xf32>
      %312 = arith.truncf %311 : vector<8x8xf32> to vector<8x8xbf16>
      %313 = arith.truncf %298 : vector<8x1024xf32> to vector<8x1024xbf16>
      %cst_66 = arith.constant dense<0.000000e+00> : vector<8x1024xf32>
      %314 = tpu.matmul %312, %313, %cst_66 {dimension_numbers = #tpu.dot_dimension_numbers<[1], [0], [0], [1], [0, 0, 1, 1], [], []>} : vector<8x8xbf16>, vector<8x1024xbf16>, vector<8x1024xf32> -> vector<8x1024xf32>
      %315 = vector.shape_cast %314 : vector<8x1024xf32> to vector<8x4x256xf32>
      %316 = vector.extract_strided_slice %217 {offsets = [0, 4], sizes = [8, 4], strides = [1, 1]} : vector<8x8xf32> to vector<8x4xf32>
      %317 = vector.extract_strided_slice %315 {offsets = [0, 0, 0], sizes = [1, 4, 256], strides = [1, 1, 1]} : vector<8x4x256xf32> to vector<1x4x256xf32>
      %318 = vector.shape_cast %317 : vector<1x4x256xf32> to vector<4x256xf32>
      %319 = arith.truncf %316 : vector<8x4xf32> to vector<8x4xbf16>
      %320 = arith.truncf %318 : vector<4x256xf32> to vector<4x256xbf16>
      %cst_67 = arith.constant dense<0.000000e+00> : vector<8x256xf32>
      %321 = tpu.matmul %319, %320, %cst_67 {dimension_numbers = #tpu.dot_dimension_numbers<[1], [0], [0], [1], [0, 0, 1, 1], [], []>} : vector<8x4xbf16>, vector<4x256xbf16>, vector<8x256xf32> -> vector<8x256xf32>
      %322 = vector.extract_strided_slice %315 {offsets = [1, 0, 0], sizes = [1, 4, 256], strides = [1, 1, 1]} : vector<8x4x256xf32> to vector<1x4x256xf32>
      %323 = vector.shape_cast %322 : vector<1x4x256xf32> to vector<4x256xf32>
      %324 = arith.truncf %316 : vector<8x4xf32> to vector<8x4xbf16>
      %325 = arith.truncf %323 : vector<4x256xf32> to vector<4x256xbf16>
      %cst_68 = arith.constant dense<0.000000e+00> : vector<8x256xf32>
      %326 = tpu.matmul %324, %325, %cst_68 {dimension_numbers = #tpu.dot_dimension_numbers<[1], [0], [0], [1], [0, 0, 1, 1], [], []>} : vector<8x4xbf16>, vector<4x256xbf16>, vector<8x256xf32> -> vector<8x256xf32>
      %327 = vector.extract_strided_slice %315 {offsets = [2, 0, 0], sizes = [1, 4, 256], strides = [1, 1, 1]} : vector<8x4x256xf32> to vector<1x4x256xf32>
      %328 = vector.shape_cast %327 : vector<1x4x256xf32> to vector<4x256xf32>
      %329 = arith.truncf %316 : vector<8x4xf32> to vector<8x4xbf16>
      %330 = arith.truncf %328 : vector<4x256xf32> to vector<4x256xbf16>
      %cst_69 = arith.constant dense<0.000000e+00> : vector<8x256xf32>
      %331 = tpu.matmul %329, %330, %cst_69 {dimension_numbers = #tpu.dot_dimension_numbers<[1], [0], [0], [1], [0, 0, 1, 1], [], []>} : vector<8x4xbf16>, vector<4x256xbf16>, vector<8x256xf32> -> vector<8x256xf32>
      %332 = vector.extract_strided_slice %315 {offsets = [3, 0, 0], sizes = [1, 4, 256], strides = [1, 1, 1]} : vector<8x4x256xf32> to vector<1x4x256xf32>
      %333 = vector.shape_cast %332 : vector<1x4x256xf32> to vector<4x256xf32>
      %334 = arith.truncf %316 : vector<8x4xf32> to vector<8x4xbf16>
      %335 = arith.truncf %333 : vector<4x256xf32> to vector<4x256xbf16>
      %cst_70 = arith.constant dense<0.000000e+00> : vector<8x256xf32>
      %336 = tpu.matmul %334, %335, %cst_70 {dimension_numbers = #tpu.dot_dimension_numbers<[1], [0], [0], [1], [0, 0, 1, 1], [], []>} : vector<8x4xbf16>, vector<4x256xbf16>, vector<8x256xf32> -> vector<8x256xf32>
      %337 = vector.extract_strided_slice %315 {offsets = [4, 0, 0], sizes = [1, 4, 256], strides = [1, 1, 1]} : vector<8x4x256xf32> to vector<1x4x256xf32>
      %338 = vector.shape_cast %337 : vector<1x4x256xf32> to vector<4x256xf32>
      %339 = arith.truncf %316 : vector<8x4xf32> to vector<8x4xbf16>
      %340 = arith.truncf %338 : vector<4x256xf32> to vector<4x256xbf16>
      %cst_71 = arith.constant dense<0.000000e+00> : vector<8x256xf32>
      %341 = tpu.matmul %339, %340, %cst_71 {dimension_numbers = #tpu.dot_dimension_numbers<[1], [0], [0], [1], [0, 0, 1, 1], [], []>} : vector<8x4xbf16>, vector<4x256xbf16>, vector<8x256xf32> -> vector<8x256xf32>
      %342 = vector.extract_strided_slice %315 {offsets = [5, 0, 0], sizes = [1, 4, 256], strides = [1, 1, 1]} : vector<8x4x256xf32> to vector<1x4x256xf32>
      %343 = vector.shape_cast %342 : vector<1x4x256xf32> to vector<4x256xf32>
      %344 = arith.truncf %316 : vector<8x4xf32> to vector<8x4xbf16>
      %345 = arith.truncf %343 : vector<4x256xf32> to vector<4x256xbf16>
      %cst_72 = arith.constant dense<0.000000e+00> : vector<8x256xf32>
      %346 = tpu.matmul %344, %345, %cst_72 {dimension_numbers = #tpu.dot_dimension_numbers<[1], [0], [0], [1], [0, 0, 1, 1], [], []>} : vector<8x4xbf16>, vector<4x256xbf16>, vector<8x256xf32> -> vector<8x256xf32>
      %347 = vector.extract_strided_slice %315 {offsets = [6, 0, 0], sizes = [1, 4, 256], strides = [1, 1, 1]} : vector<8x4x256xf32> to vector<1x4x256xf32>
      %348 = vector.shape_cast %347 : vector<1x4x256xf32> to vector<4x256xf32>
      %349 = arith.truncf %316 : vector<8x4xf32> to vector<8x4xbf16>
      %350 = arith.truncf %348 : vector<4x256xf32> to vector<4x256xbf16>
      %cst_73 = arith.constant dense<0.000000e+00> : vector<8x256xf32>
      %351 = tpu.matmul %349, %350, %cst_73 {dimension_numbers = #tpu.dot_dimension_numbers<[1], [0], [0], [1], [0, 0, 1, 1], [], []>} : vector<8x4xbf16>, vector<4x256xbf16>, vector<8x256xf32> -> vector<8x256xf32>
      %352 = vector.extract_strided_slice %315 {offsets = [7, 0, 0], sizes = [1, 4, 256], strides = [1, 1, 1]} : vector<8x4x256xf32> to vector<1x4x256xf32>
      %353 = vector.shape_cast %352 : vector<1x4x256xf32> to vector<4x256xf32>
      %354 = arith.truncf %316 : vector<8x4xf32> to vector<8x4xbf16>
      %355 = arith.truncf %353 : vector<4x256xf32> to vector<4x256xbf16>
      %cst_74 = arith.constant dense<0.000000e+00> : vector<8x256xf32>
      %356 = tpu.matmul %354, %355, %cst_74 {dimension_numbers = #tpu.dot_dimension_numbers<[1], [0], [0], [1], [0, 0, 1, 1], [], []>} : vector<8x4xbf16>, vector<4x256xbf16>, vector<8x256xf32> -> vector<8x256xf32>
      %357 = vector.shape_cast %321 : vector<8x256xf32> to vector<1x8x256xf32>
      %358 = vector.shape_cast %326 : vector<8x256xf32> to vector<1x8x256xf32>
      %359 = vector.shape_cast %331 : vector<8x256xf32> to vector<1x8x256xf32>
      %360 = vector.shape_cast %336 : vector<8x256xf32> to vector<1x8x256xf32>
      %361 = vector.shape_cast %341 : vector<8x256xf32> to vector<1x8x256xf32>
      %362 = vector.shape_cast %346 : vector<8x256xf32> to vector<1x8x256xf32>
      %363 = vector.shape_cast %351 : vector<8x256xf32> to vector<1x8x256xf32>
      %364 = vector.shape_cast %356 : vector<8x256xf32> to vector<1x8x256xf32>
      %365 = tpu.concatenate %357, %358, %359, %360, %361, %362, %363, %364 in 0 : vector<1x8x256xf32>, vector<1x8x256xf32>, vector<1x8x256xf32>, vector<1x8x256xf32>, vector<1x8x256xf32>, vector<1x8x256xf32>, vector<1x8x256xf32>, vector<1x8x256xf32> -> vector<8x8x256xf32>
      %366 = arith.addf %292, %365 : vector<8x8x256xf32>
      %367 = vector.extract_strided_slice %15 {offsets = [0, 6], sizes = [8, 2], strides = [1, 1]} : vector<8x12xf32> to vector<8x2xf32>
      %cst_75 = arith.constant dense<0.000000e+00> : vector<8x8xf32>
      %368 = vector.multi_reduction <add>, %366, %cst_75 [2] : vector<8x8x256xf32> to vector<8x8xf32>
      %369 = vector.shape_cast %368 : vector<8x8xf32> to vector<8x8x1xf32>
      %cst_76 = arith.constant dense<0.000000e+00> : vector<8x1xf32>
      %370 = vector.multi_reduction <add>, %369, %cst_76 [1] : vector<8x8x1xf32> to vector<8x1xf32>
      %371 = vector.shape_cast %370 : vector<8x1xf32> to vector<8x1x1xf32>
      %372 = arith.mulf %366, %366 : vector<8x8x256xf32>
      %cst_77 = arith.constant dense<0.000000e+00> : vector<8x8xf32>
      %373 = vector.multi_reduction <add>, %372, %cst_77 [2] : vector<8x8x256xf32> to vector<8x8xf32>
      %374 = vector.shape_cast %373 : vector<8x8xf32> to vector<8x8x1xf32>
      %cst_78 = arith.constant dense<0.000000e+00> : vector<8x1xf32>
      %375 = vector.multi_reduction <add>, %374, %cst_78 [1] : vector<8x8x1xf32> to vector<8x1xf32>
      %376 = vector.shape_cast %375 : vector<8x1xf32> to vector<8x1x1xf32>
      %cst_79 = arith.constant 4.8828125E-4 : f32
      %377 = vector.broadcast %cst_79 : f32 to vector<8x1x1xf32>
      %378 = arith.mulf %371, %377 : vector<8x1x1xf32>
      %cst_80 = arith.constant 4.8828125E-4 : f32
      %379 = vector.broadcast %cst_80 : f32 to vector<8x1x1xf32>
      %380 = arith.mulf %376, %379 : vector<8x1x1xf32>
      %381 = arith.mulf %378, %378 : vector<8x1x1xf32>
      %382 = arith.subf %380, %381 : vector<8x1x1xf32>
      %383 = vector.broadcast %378 : vector<8x1x1xf32> to vector<8x8x256xf32>
      %384 = arith.subf %366, %383 : vector<8x8x256xf32>
      %cst_81 = arith.constant 9.99999974E-6 : f32
      %385 = vector.broadcast %cst_81 : f32 to vector<8x1x1xf32>
      %386 = arith.addf %382, %385 : vector<8x1x1xf32>
      %387 = math.rsqrt %386 : vector<8x1x1xf32>
      %388 = vector.broadcast %387 : vector<8x1x1xf32> to vector<8x8x256xf32>
      %389 = arith.mulf %384, %388 : vector<8x8x256xf32>
      %390 = vector.extract_strided_slice %367 {offsets = [0, 0], sizes = [8, 1], strides = [1, 1]} : vector<8x2xf32> to vector<8x1xf32>
      %391 = vector.shape_cast %390 : vector<8x1xf32> to vector<1x8x1xf32>
      %392 = vector.broadcast %391 : vector<1x8x1xf32> to vector<8x8x256xf32>
      %393 = arith.mulf %389, %392 : vector<8x8x256xf32>
      %394 = vector.extract_strided_slice %367 {offsets = [0, 1], sizes = [8, 1], strides = [1, 1]} : vector<8x2xf32> to vector<8x1xf32>
      %395 = vector.shape_cast %394 : vector<8x1xf32> to vector<1x8x1xf32>
      %396 = vector.broadcast %395 : vector<1x8x1xf32> to vector<8x8x256xf32>
      %397 = arith.addf %393, %396 : vector<8x8x256xf32>
      %398 = arith.negf %397 : vector<8x8x256xf32>
      %399 = math.exp %398 : vector<8x8x256xf32>
      %cst_82 = arith.constant 1.000000e+00 : f32
      %400 = vector.broadcast %cst_82 : f32 to vector<8x8x256xf32>
      %401 = arith.addf %400, %399 : vector<8x8x256xf32>
      %402 = arith.divf %400, %401 : vector<8x8x256xf32>
      %403 = arith.mulf %397, %402 : vector<8x8x256xf32>
      %404 = arith.addf %11, %403 : vector<8x8x256xf32>
      %405 = vector.extract_strided_slice %15 {offsets = [0, 8], sizes = [8, 2], strides = [1, 1]} : vector<8x12xf32> to vector<8x2xf32>
      %cst_83 = arith.constant dense<0.000000e+00> : vector<8x8xf32>
      %406 = vector.multi_reduction <add>, %404, %cst_83 [2] : vector<8x8x256xf32> to vector<8x8xf32>
      %407 = vector.shape_cast %406 : vector<8x8xf32> to vector<8x8x1xf32>
      %cst_84 = arith.constant dense<0.000000e+00> : vector<8x1xf32>
      %408 = vector.multi_reduction <add>, %407, %cst_84 [1] : vector<8x8x1xf32> to vector<8x1xf32>
      %409 = vector.shape_cast %408 : vector<8x1xf32> to vector<8x1x1xf32>
      %410 = arith.mulf %404, %404 : vector<8x8x256xf32>
      %cst_85 = arith.constant dense<0.000000e+00> : vector<8x8xf32>
      %411 = vector.multi_reduction <add>, %410, %cst_85 [2] : vector<8x8x256xf32> to vector<8x8xf32>
      %412 = vector.shape_cast %411 : vector<8x8xf32> to vector<8x8x1xf32>
      %cst_86 = arith.constant dense<0.000000e+00> : vector<8x1xf32>
      %413 = vector.multi_reduction <add>, %412, %cst_86 [1] : vector<8x8x1xf32> to vector<8x1xf32>
      %414 = vector.shape_cast %413 : vector<8x1xf32> to vector<8x1x1xf32>
      %cst_87 = arith.constant 4.8828125E-4 : f32
      %415 = vector.broadcast %cst_87 : f32 to vector<8x1x1xf32>
      %416 = arith.mulf %409, %415 : vector<8x1x1xf32>
      %cst_88 = arith.constant 4.8828125E-4 : f32
      %417 = vector.broadcast %cst_88 : f32 to vector<8x1x1xf32>
      %418 = arith.mulf %414, %417 : vector<8x1x1xf32>
      %419 = arith.mulf %416, %416 : vector<8x1x1xf32>
      %420 = arith.subf %418, %419 : vector<8x1x1xf32>
      %421 = vector.broadcast %416 : vector<8x1x1xf32> to vector<8x8x256xf32>
      %422 = arith.subf %404, %421 : vector<8x8x256xf32>
      %cst_89 = arith.constant 9.99999974E-6 : f32
      %423 = vector.broadcast %cst_89 : f32 to vector<8x1x1xf32>
      %424 = arith.addf %420, %423 : vector<8x1x1xf32>
      %425 = math.rsqrt %424 : vector<8x1x1xf32>
      %426 = vector.broadcast %425 : vector<8x1x1xf32> to vector<8x8x256xf32>
      %427 = arith.mulf %422, %426 : vector<8x8x256xf32>
      %428 = vector.extract_strided_slice %405 {offsets = [0, 0], sizes = [8, 1], strides = [1, 1]} : vector<8x2xf32> to vector<8x1xf32>
      %429 = vector.shape_cast %428 : vector<8x1xf32> to vector<1x8x1xf32>
      %430 = vector.broadcast %429 : vector<1x8x1xf32> to vector<8x8x256xf32>
      %431 = arith.mulf %427, %430 : vector<8x8x256xf32>
      %432 = vector.extract_strided_slice %405 {offsets = [0, 1], sizes = [8, 1], strides = [1, 1]} : vector<8x2xf32> to vector<8x1xf32>
      %433 = vector.shape_cast %432 : vector<8x1xf32> to vector<1x8x1xf32>
      %434 = vector.broadcast %433 : vector<1x8x1xf32> to vector<8x8x256xf32>
      %435 = arith.addf %431, %434 : vector<8x8x256xf32>
      %436 = arith.addf %435, %435 : vector<8x8x256xf32>
      %437 = vector.extract_strided_slice %15 {offsets = [0, 10], sizes = [8, 2], strides = [1, 1]} : vector<8x12xf32> to vector<8x2xf32>
      %cst_90 = arith.constant dense<0.000000e+00> : vector<8x8xf32>
      %438 = vector.multi_reduction <add>, %436, %cst_90 [2] : vector<8x8x256xf32> to vector<8x8xf32>
      %439 = vector.shape_cast %438 : vector<8x8xf32> to vector<8x8x1xf32>
      %cst_91 = arith.constant dense<0.000000e+00> : vector<8x1xf32>
      %440 = vector.multi_reduction <add>, %439, %cst_91 [1] : vector<8x8x1xf32> to vector<8x1xf32>
      %441 = vector.shape_cast %440 : vector<8x1xf32> to vector<8x1x1xf32>
      %442 = arith.mulf %436, %436 : vector<8x8x256xf32>
      %cst_92 = arith.constant dense<0.000000e+00> : vector<8x8xf32>
      %443 = vector.multi_reduction <add>, %442, %cst_92 [2] : vector<8x8x256xf32> to vector<8x8xf32>
      %444 = vector.shape_cast %443 : vector<8x8xf32> to vector<8x8x1xf32>
      %cst_93 = arith.constant dense<0.000000e+00> : vector<8x1xf32>
      %445 = vector.multi_reduction <add>, %444, %cst_93 [1] : vector<8x8x1xf32> to vector<8x1xf32>
      %446 = vector.shape_cast %445 : vector<8x1xf32> to vector<8x1x1xf32>
      %cst_94 = arith.constant 4.8828125E-4 : f32
      %447 = vector.broadcast %cst_94 : f32 to vector<8x1x1xf32>
      %448 = arith.mulf %441, %447 : vector<8x1x1xf32>
      %cst_95 = arith.constant 4.8828125E-4 : f32
      %449 = vector.broadcast %cst_95 : f32 to vector<8x1x1xf32>
      %450 = arith.mulf %446, %449 : vector<8x1x1xf32>
      %451 = arith.mulf %448, %448 : vector<8x1x1xf32>
      %452 = arith.subf %450, %451 : vector<8x1x1xf32>
      %453 = vector.broadcast %448 : vector<8x1x1xf32> to vector<8x8x256xf32>
      %454 = arith.subf %436, %453 : vector<8x8x256xf32>
      %cst_96 = arith.constant 9.99999974E-6 : f32
      %455 = vector.broadcast %cst_96 : f32 to vector<8x1x1xf32>
      %456 = arith.addf %452, %455 : vector<8x1x1xf32>
      %457 = math.rsqrt %456 : vector<8x1x1xf32>
      %458 = vector.broadcast %457 : vector<8x1x1xf32> to vector<8x8x256xf32>
      %459 = arith.mulf %454, %458 : vector<8x8x256xf32>
      %460 = vector.extract_strided_slice %437 {offsets = [0, 0], sizes = [8, 1], strides = [1, 1]} : vector<8x2xf32> to vector<8x1xf32>
      %461 = vector.shape_cast %460 : vector<8x1xf32> to vector<1x8x1xf32>
      %462 = vector.broadcast %461 : vector<1x8x1xf32> to vector<8x8x256xf32>
      %463 = arith.mulf %459, %462 : vector<8x8x256xf32>
      %464 = vector.extract_strided_slice %437 {offsets = [0, 1], sizes = [8, 1], strides = [1, 1]} : vector<8x2xf32> to vector<8x1xf32>
      %465 = vector.shape_cast %464 : vector<8x1xf32> to vector<1x8x1xf32>
      %466 = vector.broadcast %465 : vector<1x8x1xf32> to vector<8x8x256xf32>
      %467 = arith.addf %463, %466 : vector<8x8x256xf32>
      %c0_97 = arith.constant 0 : index
      %c0_98 = arith.constant 0 : index
      %c0_99 = arith.constant 0 : index
      %468 = vector.load %arg9[%c0_97, %c0_98, %c0_99] : memref<8x8x256xf32, #tpu.memory_space<vmem>>, vector<8x8x256xf32>
      tpu.vector_store %arg9[%c0_97, %c0_98, %c0_99], %467 {strides = array<i32>} : memref<8x8x256xf32, #tpu.memory_space<vmem>>, vector<8x8x256xf32>,
    } else {
    }
    %c3_i32 = arith.constant 3 : i32
    %8 = arith.cmpi eq, %arg1, %c3_i32 : i32
    %9 = arith.extui %8 : i1 to i32
    %c0_i32_2 = arith.constant 0 : i32
    %10 = arith.cmpi ne, %9, %c0_i32_2 : i32
    scf.if %10 {
      %c0 = arith.constant 0 : index
      %c0_3 = arith.constant 0 : index
      %c0_4 = arith.constant 0 : index
      %11 = vector.load %arg9[%c0, %c0_3, %c0_4] : memref<8x8x256xf32, #tpu.memory_space<vmem>>, vector<8x8x256xf32>
      %c0_5 = arith.constant 0 : index
      %c0_6 = arith.constant 0 : index
      %12 = vector.load %arg4[%c0_5, %c0_6] : memref<4x9xf32, #tpu.memory_space<vmem>>, vector<4x8xf32>
      %c0_7 = arith.constant 0 : index
      %c8 = arith.constant 8 : index
      %13 = vector.load %arg4[%c0_7, %c8] : memref<4x9xf32, #tpu.memory_space<vmem>>, vector<4x1xf32>
      %14 = vector.extract_strided_slice %11 {offsets = [0, 0, 0], sizes = [1, 8, 256], strides = [1, 1, 1]} : vector<8x8x256xf32> to vector<1x8x256xf32>
      %15 = vector.shape_cast %14 : vector<1x8x256xf32> to vector<8x256xf32>
      %16 = arith.truncf %12 : vector<4x8xf32> to vector<4x8xbf16>
      %17 = arith.truncf %15 : vector<8x256xf32> to vector<8x256xbf16>
      %cst = arith.constant dense<0.000000e+00> : vector<4x256xf32>
      %18 = tpu.matmul %16, %17, %cst {dimension_numbers = #tpu.dot_dimension_numbers<[1], [0], [0], [1], [0, 0, 1, 1], [], []>} : vector<4x8xbf16>, vector<8x256xbf16>, vector<4x256xf32> -> vector<4x256xf32>
      %19 = vector.extract_strided_slice %11 {offsets = [1, 0, 0], sizes = [1, 8, 256], strides = [1, 1, 1]} : vector<8x8x256xf32> to vector<1x8x256xf32>
      %20 = vector.shape_cast %19 : vector<1x8x256xf32> to vector<8x256xf32>
      %21 = arith.truncf %12 : vector<4x8xf32> to vector<4x8xbf16>
      %22 = arith.truncf %20 : vector<8x256xf32> to vector<8x256xbf16>
      %cst_8 = arith.constant dense<0.000000e+00> : vector<4x256xf32>
      %23 = tpu.matmul %21, %22, %cst_8 {dimension_numbers = #tpu.dot_dimension_numbers<[1], [0], [0], [1], [0, 0, 1, 1], [], []>} : vector<4x8xbf16>, vector<8x256xbf16>, vector<4x256xf32> -> vector<4x256xf32>
      %24 = vector.extract_strided_slice %11 {offsets = [2, 0, 0], sizes = [1, 8, 256], strides = [1, 1, 1]} : vector<8x8x256xf32> to vector<1x8x256xf32>
      %25 = vector.shape_cast %24 : vector<1x8x256xf32> to vector<8x256xf32>
      %26 = arith.truncf %12 : vector<4x8xf32> to vector<4x8xbf16>
      %27 = arith.truncf %25 : vector<8x256xf32> to vector<8x256xbf16>
      %cst_9 = arith.constant dense<0.000000e+00> : vector<4x256xf32>
      %28 = tpu.matmul %26, %27, %cst_9 {dimension_numbers = #tpu.dot_dimension_numbers<[1], [0], [0], [1], [0, 0, 1, 1], [], []>} : vector<4x8xbf16>, vector<8x256xbf16>, vector<4x256xf32> -> vector<4x256xf32>
      %29 = vector.extract_strided_slice %11 {offsets = [3, 0, 0], sizes = [1, 8, 256], strides = [1, 1, 1]} : vector<8x8x256xf32> to vector<1x8x256xf32>
      %30 = vector.shape_cast %29 : vector<1x8x256xf32> to vector<8x256xf32>
      %31 = arith.truncf %12 : vector<4x8xf32> to vector<4x8xbf16>
      %32 = arith.truncf %30 : vector<8x256xf32> to vector<8x256xbf16>
      %cst_10 = arith.constant dense<0.000000e+00> : vector<4x256xf32>
      %33 = tpu.matmul %31, %32, %cst_10 {dimension_numbers = #tpu.dot_dimension_numbers<[1], [0], [0], [1], [0, 0, 1, 1], [], []>} : vector<4x8xbf16>, vector<8x256xbf16>, vector<4x256xf32> -> vector<4x256xf32>
      %34 = vector.extract_strided_slice %11 {offsets = [4, 0, 0], sizes = [1, 8, 256], strides = [1, 1, 1]} : vector<8x8x256xf32> to vector<1x8x256xf32>
      %35 = vector.shape_cast %34 : vector<1x8x256xf32> to vector<8x256xf32>
      %36 = arith.truncf %12 : vector<4x8xf32> to vector<4x8xbf16>
      %37 = arith.truncf %35 : vector<8x256xf32> to vector<8x256xbf16>
      %cst_11 = arith.constant dense<0.000000e+00> : vector<4x256xf32>
      %38 = tpu.matmul %36, %37, %cst_11 {dimension_numbers = #tpu.dot_dimension_numbers<[1], [0], [0], [1], [0, 0, 1, 1], [], []>} : vector<4x8xbf16>, vector<8x256xbf16>, vector<4x256xf32> -> vector<4x256xf32>
      %39 = vector.extract_strided_slice %11 {offsets = [5, 0, 0], sizes = [1, 8, 256], strides = [1, 1, 1]} : vector<8x8x256xf32> to vector<1x8x256xf32>
      %40 = vector.shape_cast %39 : vector<1x8x256xf32> to vector<8x256xf32>
      %41 = arith.truncf %12 : vector<4x8xf32> to vector<4x8xbf16>
      %42 = arith.truncf %40 : vector<8x256xf32> to vector<8x256xbf16>
      %cst_12 = arith.constant dense<0.000000e+00> : vector<4x256xf32>
      %43 = tpu.matmul %41, %42, %cst_12 {dimension_numbers = #tpu.dot_dimension_numbers<[1], [0], [0], [1], [0, 0, 1, 1], [], []>} : vector<4x8xbf16>, vector<8x256xbf16>, vector<4x256xf32> -> vector<4x256xf32>
      %44 = vector.extract_strided_slice %11 {offsets = [6, 0, 0], sizes = [1, 8, 256], strides = [1, 1, 1]} : vector<8x8x256xf32> to vector<1x8x256xf32>
      %45 = vector.shape_cast %44 : vector<1x8x256xf32> to vector<8x256xf32>
      %46 = arith.truncf %12 : vector<4x8xf32> to vector<4x8xbf16>
      %47 = arith.truncf %45 : vector<8x256xf32> to vector<8x256xbf16>
      %cst_13 = arith.constant dense<0.000000e+00> : vector<4x256xf32>
      %48 = tpu.matmul %46, %47, %cst_13 {dimension_numbers = #tpu.dot_dimension_numbers<[1], [0], [0], [1], [0, 0, 1, 1], [], []>} : vector<4x8xbf16>, vector<8x256xbf16>, vector<4x256xf32> -> vector<4x256xf32>
      %49 = vector.extract_strided_slice %11 {offsets = [7, 0, 0], sizes = [1, 8, 256], strides = [1, 1, 1]} : vector<8x8x256xf32> to vector<1x8x256xf32>
      %50 = vector.shape_cast %49 : vector<1x8x256xf32> to vector<8x256xf32>
      %51 = arith.truncf %12 : vector<4x8xf32> to vector<4x8xbf16>
      %52 = arith.truncf %50 : vector<8x256xf32> to vector<8x256xbf16>
      %cst_14 = arith.constant dense<0.000000e+00> : vector<4x256xf32>
      %53 = tpu.matmul %51, %52, %cst_14 {dimension_numbers = #tpu.dot_dimension_numbers<[1], [0], [0], [1], [0, 0, 1, 1], [], []>} : vector<4x8xbf16>, vector<8x256xbf16>, vector<4x256xf32> -> vector<4x256xf32>
      %54 = vector.shape_cast %18 : vector<4x256xf32> to vector<1x4x256xf32>
      %55 = vector.shape_cast %23 : vector<4x256xf32> to vector<1x4x256xf32>
      %56 = vector.shape_cast %28 : vector<4x256xf32> to vector<1x4x256xf32>
      %57 = vector.shape_cast %33 : vector<4x256xf32> to vector<1x4x256xf32>
      %58 = vector.shape_cast %38 : vector<4x256xf32> to vector<1x4x256xf32>
      %59 = vector.shape_cast %43 : vector<4x256xf32> to vector<1x4x256xf32>
      %60 = vector.shape_cast %48 : vector<4x256xf32> to vector<1x4x256xf32>
      %61 = vector.shape_cast %53 : vector<4x256xf32> to vector<1x4x256xf32>
      %62 = tpu.concatenate %54, %55, %56, %57, %58, %59, %60, %61 in 0 : vector<1x4x256xf32>, vector<1x4x256xf32>, vector<1x4x256xf32>, vector<1x4x256xf32>, vector<1x4x256xf32>, vector<1x4x256xf32>, vector<1x4x256xf32>, vector<1x4x256xf32> -> vector<8x4x256xf32>
      %63 = vector.shape_cast %13 : vector<4x1xf32> to vector<1x4x1xf32>
      %64 = vector.broadcast %63 : vector<1x4x1xf32> to vector<8x4x256xf32>
      %65 = arith.addf %62, %64 : vector<8x4x256xf32>
      %c0_15 = arith.constant 0 : index
      %c0_16 = arith.constant 0 : index
      %c0_17 = arith.constant 0 : index
      %c0_18 = arith.constant 0 : index
      %66 = vector.load %arg8[%c0_15, %c0_16, %c0_17, %c0_18] : memref<1x8x4x256xf32, #tpu.memory_space<vmem>>, vector<1x8x4x256xf32>
      %67 = vector.shape_cast %66 : vector<1x8x4x256xf32> to vector<8x4x256xf32>
      %68 = vector.shape_cast %65 : vector<8x4x256xf32> to vector<1x8x4x256xf32>
      tpu.vector_store %arg8[%c0_15, %c0_16, %c0_17, %c0_18], %68 {strides = array<i32>} : memref<1x8x4x256xf32, #tpu.memory_space<vmem>>, vector<1x8x4x256xf32>,
    } else {
    }
    return
  }
  func.func @transform_0(%arg0: i32, %arg1: i32) -> (i32, i32, i32, i32) {
    %c0_i32 = arith.constant 0 : i32
    %c0_i32_0 = arith.constant 0 : i32
    %c0_i32_1 = arith.constant 0 : i32
    %c0_i32_2 = arith.constant 0 : i32
    return %arg0, %c0_i32, %c0_i32_0, %c0_i32_1 : i32, i32, i32, i32
  }
  func.func @transform_1(%arg0: i32, %arg1: i32) -> (i32, i32) {
    %c0_i32 = arith.constant 0 : i32
    %c0_i32_0 = arith.constant 0 : i32
    %c0_i32_1 = arith.constant 0 : i32
    return %c0_i32, %c0_i32_0 : i32, i32
  }
  func.func @transform_2(%arg0: i32, %arg1: i32) -> (i32, i32) {
    %c0_i32 = arith.constant 0 : i32
    %c0_i32_0 = arith.constant 0 : i32
    %c0_i32_1 = arith.constant 0 : i32
    return %c0_i32, %c0_i32_0 : i32, i32
  }
  func.func @transform_3(%arg0: i32, %arg1: i32) -> (i32, i32, i32) {
    %c1_i32 = arith.constant 1 : i32
    %0 = arith.subi %arg1, %c1_i32 : i32
    %c0_i32 = arith.constant 0 : i32
    %1 = arith.maxsi %0, %c0_i32 : i32
    %c1_i32_0 = arith.constant 1 : i32
    %2 = arith.minsi %1, %c1_i32_0 : i32
    %c0_i32_1 = arith.constant 0 : i32
    %c0_i32_2 = arith.constant 0 : i32
    %c0_i32_3 = arith.constant 0 : i32
    return %2, %c0_i32_1, %c0_i32_2 : i32, i32, i32
  }
  func.func @transform_4(%arg0: i32, %arg1: i32) -> (i32, i32, i32) {
    %c1_i32 = arith.constant 1 : i32
    %0 = arith.subi %arg1, %c1_i32 : i32
    %c0_i32 = arith.constant 0 : i32
    %1 = arith.maxsi %0, %c0_i32 : i32
    %c1_i32_0 = arith.constant 1 : i32
    %2 = arith.minsi %1, %c1_i32_0 : i32
    %c0_i32_1 = arith.constant 0 : i32
    %c0_i32_2 = arith.constant 0 : i32
    %c0_i32_3 = arith.constant 0 : i32
    return %2, %c0_i32_1, %c0_i32_2 : i32, i32, i32
  }
  func.func @transform_5(%arg0: i32, %arg1: i32) -> (i32, i32) {
    %c0_i32 = arith.constant 0 : i32
    %c0_i32_0 = arith.constant 0 : i32
    %c0_i32_1 = arith.constant 0 : i32
    return %c0_i32, %c0_i32_0 : i32, i32
  }
  func.func @transform_6(%arg0: i32, %arg1: i32) -> (i32, i32, i32, i32) {
    %c0_i32 = arith.constant 0 : i32
    %c0_i32_0 = arith.constant 0 : i32
    %c0_i32_1 = arith.constant 0 : i32
    %c0_i32_2 = arith.constant 0 : i32
    return %arg0, %c0_i32, %c0_i32_0, %c0_i32_1 : i32, i32, i32, i32
  }
}

</mosaic_0001>

<llo_original>
// kernel: cimidnet_forward.1
$region0: #{cimidnet_forward.1}
  #allocation0 [shape = 'u32[]', space=smem, size = 0x4, offset = 0x4, fixed_abs, tag = 'smem constant byte address 0x4 - core index']
  #allocation1 [shape = 'u32[72,128]{1,0:T(1,128)}', space=vmem, size = 0x9000, scoped, tag = 'internal scratch']
  #allocation2 [shape = 'f32[8,8,256]{2,1,0:T(8,128)}', space=vmem, size = 0x10000, scoped, tag = 'scratch operand']
  %s0 = inlined_call_operand.vmem [shape: f32[2,8,4,256], index: 0, kind: input, shape index: {}]
  %s1 = inlined_call_operand.vmem [shape: f32[8,5], index: 1, kind: input, shape index: {}]
  %s2 = inlined_call_operand.vmem [shape: f32[4,9], index: 2, kind: input, shape index: {}]
  %s3 = inlined_call_operand.vmem [shape: f32[2,32,8], index: 3, kind: input, shape index: {}]
  %s4 = inlined_call_operand.vmem [shape: f32[2,8,12], index: 4, kind: input, shape index: {}]
  %s5 = inlined_call_operand.vmem [shape: f32[256,16], index: 5, kind: input, shape index: {}]
  %s6 = inlined_call_operand.vmem [shape: f32[2,8,4,256], index: 6, kind: output, shape index: {}]
  %s7 = sld [smem:[#allocation0]]
  $region69: #{cimidnet_forward.1} parent=0
    _
  %s9 = ssub.s32 1, %s7
  %s10 = scalar_select 0, %s9, %s7
  loop: start=0, step=1, limit=10
  $region2: #{cimidnet_forward.1} parent=0 // loop_pre_header
    _
  $region3: #{cimidnet_forward.1} parent=0 // loop_header
    %s12 = sphi 0, %s16
    %p13 = scmp.ge.s32.totalorder %s12, 10
    %s19 = sphi 0, %s31
    %s20 = sphi 0, %s27
    %s21 = sphi 0, %s19
    %s22 = sphi 0, %s20
    %s23 = sphi 0, %s21
    %s24 = sphi 0, %s22
    %s34 = sphi 0, %s36
    %s37 = sphi 0, %s34
    %s38 = sphi 0, %s37
    %s54 = sphi 0, %s38
    %s58 = sphi 0, %s58
    %s60 = sphi 0, %s58
    %s61 = sphi 0, %s60
    %s75 = sphi 0, %s61
    %s79 = sphi 0, %s79
    %s81 = sphi 0, %s79
    %s82 = sphi 0, %s81
    %s96 = sphi 0, %s82
    %s112 = sphi 0, %s114
    %s115 = sphi 0, %s112
    %s116 = sphi 0, %s115
    %s132 = sphi 0, %s116
    %s148 = sphi 0, %s150
    %s151 = sphi 0, %s148
    %s152 = sphi 0, %s151
    %s168 = sphi 0, %s152
    %s172 = sphi 0, %s172
    %s174 = sphi 0, %s172
    %s175 = sphi 0, %s174
    %s189 = sphi 0, %s175
    %s195 = sphi 0, %s197
    %s198 = sphi 0, %s195
    %s199 = sphi 0, %s198
    %s215 = sphi 0, %s199
  $region4: #{cimidnet_forward.1} parent=0 // loop_header_branch
    %15 = sbr.rel (%p13) target = $region8
  $region5: #{cimidnet_forward.1} parent=0 // loop_body
    %s17 = ssub.s32 %s12, 1
    %s18 = ssub.s32 %s12, 2
    %s25 = sadd.s32 1, %s20
    %p26 = scmp.ge.s32.totalorder %s25, 4
    %s27 = scalar_select %p26, 0, %s25
    %s28 = sadd.s32 1, %s19
    %s29 = scalar_select %p26, %s28, %s19
    %p30 = scmp.ge.s32.totalorder %s29, 2
    %s31 = scalar_select %p30, 0, %s29
    %s32 = ssub.s32 %s19, %s31
    %p33 = scmp.eq.s32.totalorder %s32, 0
    %s35 = sadd.s32 %s34, 1
    %s36 = scalar_select %p33, %s34, %s35
    %p39 = pneg %p33
    %p40 = scmp.eq.s32.totalorder %s12, 7
    %p41 = por %p39, %p40
    %p42 = scmp.ne.s32.totalorder %s34, %s37
    %p43 = scmp.eq.s32.totalorder %s12, 0
    %p44 = por %p42, %p43
    %p45 = scmp.ne.s32.totalorder %s34, %s37
    %p46 = scmp.eq.s32.totalorder %s17, 7
    %p47 = por %p45, %p46
    %p48 = scmp.ne.s32.totalorder %s37, %s38
    %p49 = scmp.eq.s32.totalorder %s17, 0
    %p50 = por %p48, %p49
    %p51 = scmp.ne.s32.totalorder %s37, %s38
    %p52 = scmp.eq.s32.totalorder %s18, 7
    %p53 = por %p51, %p52
    %p55 = scmp.ne.s32.totalorder %s38, %s54
    %p56 = scmp.eq.s32.totalorder %s18, 0
    %p57 = por %p55, %p56
    %s59 = sadd.s32 %s58, 1
    %p62 = scmp.eq.s32.totalorder %s12, 7
    %p63 = scmp.ne.s32.totalorder %s58, %s60
    %p64 = scmp.eq.s32.totalorder %s12, 0
    %p65 = por %p63, %p64
    %p66 = scmp.ne.s32.totalorder %s58, %s60
    %p67 = scmp.eq.s32.totalorder %s17, 7
    %p68 = por %p66, %p67
    %p69 = scmp.ne.s32.totalorder %s60, %s61
    %p70 = scmp.eq.s32.totalorder %s17, 0
    %p71 = por %p69, %p70
    %p72 = scmp.ne.s32.totalorder %s60, %s61
    %p73 = scmp.eq.s32.totalorder %s18, 7
    %p74 = por %p72, %p73
    %p76 = scmp.ne.s32.totalorder %s61, %s75
    %p77 = scmp.eq.s32.totalorder %s18, 0
    %p78 = por %p76, %p77
    %s80 = sadd.s32 %s79, 1
    %p83 = scmp.eq.s32.totalorder %s12, 7
    %p84 = scmp.ne.s32.totalorder %s79, %s81
    %p85 = scmp.eq.s32.totalorder %s12, 0
    %p86 = por %p84, %p85
    %p87 = scmp.ne.s32.totalorder %s79, %s81
    %p88 = scmp.eq.s32.totalorder %s17, 7
    %p89 = por %p87, %p88
    %p90 = scmp.ne.s32.totalorder %s81, %s82
    %p91 = scmp.eq.s32.totalorder %s17, 0
    %p92 = por %p90, %p91
    %p93 = scmp.ne.s32.totalorder %s81, %s82
    %p94 = scmp.eq.s32.totalorder %s18, 7
    %p95 = por %p93, %p94
    %p97 = scmp.ne.s32.totalorder %s82, %s96
    %p98 = scmp.eq.s32.totalorder %s18, 0
    %p99 = por %p97, %p98
    %s100 = ssub.s32 %s20, 1
    %p101 = scmp.gt.s32.totalorder %s100, 0
    %s102 = scalar_select %p101, %s100, 0
    %p103 = scmp.lt.s32.totalorder %s102, 1
    %s104 = scalar_select %p103, %s102, 1
    %s105 = ssub.s32 %s27, 1
    %p106 = scmp.gt.s32.totalorder %s105, 0
    %s107 = scalar_select %p106, %s105, 0
    %p108 = scmp.lt.s32.totalorder %s107, 1
    %s109 = scalar_select %p108, %s107, 1
    %s110 = ssub.s32 %s104, %s109
    %p111 = scmp.eq.s32.totalorder %s110, 0
    %s113 = sadd.s32 %s112, 1
    %s114 = scalar_select %p111, %s112, %s113
    %p117 = pneg %p111
    %p118 = scmp.eq.s32.totalorder %s12, 7
    %p119 = por %p117, %p118
    %p120 = scmp.ne.s32.totalorder %s112, %s115
    %p121 = scmp.eq.s32.totalorder %s12, 0
    %p122 = por %p120, %p121
    %p123 = scmp.ne.s32.totalorder %s112, %s115
    %p124 = scmp.eq.s32.totalorder %s17, 7
    %p125 = por %p123, %p124
    %p126 = scmp.ne.s32.totalorder %s115, %s116
    %p127 = scmp.eq.s32.totalorder %s17, 0
    %p128 = por %p126, %p127
    %p129 = scmp.ne.s32.totalorder %s115, %s116
    %p130 = scmp.eq.s32.totalorder %s18, 7
    %p131 = por %p129, %p130
    %p133 = scmp.ne.s32.totalorder %s116, %s132
    %p134 = scmp.eq.s32.totalorder %s18, 0
    %p135 = por %p133, %p134
    %s136 = ssub.s32 %s20, 1
    %p137 = scmp.gt.s32.totalorder %s136, 0
    %s138 = scalar_select %p137, %s136, 0
    %p139 = scmp.lt.s32.totalorder %s138, 1
    %s140 = scalar_select %p139, %s138, 1
    %s141 = ssub.s32 %s27, 1
    %p142 = scmp.gt.s32.totalorder %s141, 0
    %s143 = scalar_select %p142, %s141, 0
    %p144 = scmp.lt.s32.totalorder %s143, 1
    %s145 = scalar_select %p144, %s143, 1
    %s146 = ssub.s32 %s140, %s145
    %p147 = scmp.eq.s32.totalorder %s146, 0
    %s149 = sadd.s32 %s148, 1
    %s150 = scalar_select %p147, %s148, %s149
    %p153 = pneg %p147
    %p154 = scmp.eq.s32.totalorder %s12, 7
    %p155 = por %p153, %p154
    %p156 = scmp.ne.s32.totalorder %s148, %s151
    %p157 = scmp.eq.s32.totalorder %s12, 0
    %p158 = por %p156, %p157
    %p159 = scmp.ne.s32.totalorder %s148, %s151
    %p160 = scmp.eq.s32.totalorder %s17, 7
    %p161 = por %p159, %p160
    %p162 = scmp.ne.s32.totalorder %s151, %s152
    %p163 = scmp.eq.s32.totalorder %s17, 0
    %p164 = por %p162, %p163
    %p165 = scmp.ne.s32.totalorder %s151, %s152
    %p166 = scmp.eq.s32.totalorder %s18, 7
    %p167 = por %p165, %p166
    %p169 = scmp.ne.s32.totalorder %s152, %s168
    %p170 = scmp.eq.s32.totalorder %s18, 0
    %p171 = por %p169, %p170
    %s173 = sadd.s32 %s172, 1
    %p176 = scmp.eq.s32.totalorder %s12, 7
    %p177 = scmp.ne.s32.totalorder %s172, %s174
    %p178 = scmp.eq.s32.totalorder %s12, 0
    %p179 = por %p177, %p178
    %p180 = scmp.ne.s32.totalorder %s172, %s174
    %p181 = scmp.eq.s32.totalorder %s17, 7
    %p182 = por %p180, %p181
    %p183 = scmp.ne.s32.totalorder %s174, %s175
    %p184 = scmp.eq.s32.totalorder %s17, 0
    %p185 = por %p183, %p184
    %p186 = scmp.ne.s32.totalorder %s174, %s175
    %p187 = scmp.eq.s32.totalorder %s18, 7
    %p188 = por %p186, %p187
    %p190 = scmp.ne.s32.totalorder %s175, %s189
    %p191 = scmp.eq.s32.totalorder %s18, 0
    %p192 = por %p190, %p191
    %s193 = ssub.s32 %s19, %s31
    %p194 = scmp.eq.s32.totalorder %s193, 0
    %s196 = sadd.s32 %s195, 1
    %s197 = scalar_select %p194, %s195, %s196
    %p200 = pneg %p194
    %p201 = scmp.eq.s32.totalorder %s12, 7
    %p202 = por %p200, %p201
    %p203 = scmp.ne.s32.totalorder %s195, %s198
    %p204 = scmp.eq.s32.totalorder %s12, 0
    %p205 = por %p203, %p204
    %p206 = scmp.ne.s32.totalorder %s195, %s198
    %p207 = scmp.eq.s32.totalorder %s17, 7
    %p208 = por %p206, %p207
    %p209 = scmp.ne.s32.totalorder %s198, %s199
    %p210 = scmp.eq.s32.totalorder %s17, 0
    %p211 = por %p209, %p210
    %p212 = scmp.ne.s32.totalorder %s198, %s199
    %p213 = scmp.eq.s32.totalorder %s18, 7
    %p214 = por %p212, %p213
    %p216 = scmp.ne.s32.totalorder %s199, %s215
    %p217 = scmp.eq.s32.totalorder %s18, 0
    %p218 = por %p216, %p217
    %p219 = scmp.le.s32.totalorder 1, %s12
    %p220 = scmp.lt.s32.totalorder %s12, 9
    %p221 = pnand %p219, %p220
    %p222 = pneg %p221
    // Predicated region
    $region9: #{cimidnet_forward.1} parent=5 // pred_check
      _
    $region10: #{cimidnet_forward.1} parent=5 // pred_check_branch
      %224 = sbr.rel (%p221) target = $region12
    $region11: #{cimidnet_forward.1} parent=5 // pred_region
      %s225 = ssub.s32 %s12, 1
      // Predicated region
      $region13: #{cimidnet_forward.1} parent=11 // pred_check
        %p226 = pneg %p71
      $region14: #{cimidnet_forward.1} parent=11 // pred_check_branch
        %228 = sbr.rel (%p226) target = $region16
      $region15: #{cimidnet_forward.1} parent=11 // pred_region
        _
      $region16: #{cimidnet_forward.1} parent=11 // pred_fallthru
        _
      // Predicated region
      $region17: #{cimidnet_forward.1} parent=11 // pred_check
        %p229 = pneg %p92
      $region18: #{cimidnet_forward.1} parent=11 // pred_check_branch
        %231 = sbr.rel (%p229) target = $region20
      $region19: #{cimidnet_forward.1} parent=11 // pred_region
        _
      $region20: #{cimidnet_forward.1} parent=11 // pred_fallthru
        _
      // Predicated region
      $region21: #{cimidnet_forward.1} parent=11 // pred_check
        %p232 = pneg %p185
      $region22: #{cimidnet_forward.1} parent=11 // pred_check_branch
        %234 = sbr.rel (%p232) target = $region24
      $region23: #{cimidnet_forward.1} parent=11 // pred_region
        _
      $region24: #{cimidnet_forward.1} parent=11 // pred_fallthru
        _
    $region12: #{cimidnet_forward.1} parent=5 // pred_fallthru
      _
    %p235 = scmp.lt.s32.totalorder %s12, 8
    // Predicated region
    $region25: #{cimidnet_forward.1} parent=5 // pred_check
      %p236 = pneg %p235
    $region26: #{cimidnet_forward.1} parent=5 // pred_check_branch
      %238 = sbr.rel (%p236) target = $region28
    $region27: #{cimidnet_forward.1} parent=5 // pred_region
      // Predicated region
      $region29: #{cimidnet_forward.1} parent=27 // pred_check
        %p239 = pneg %p44
      $region30: #{cimidnet_forward.1} parent=27 // pred_check_branch
        %241 = sbr.rel (%p239) target = $region32
      $region31: #{cimidnet_forward.1} parent=27 // pred_region
        %p242 = scmp.lt.s32.totalorder %s19, 1
        %s243 = scalar_select %p242, %s19, 1
        %s244 = smul.addr %s243, 16
        %s245 = smul.addr %s244, 4
        %s246 = scalar_lea.vmem %s0, %s245
      $region32: #{cimidnet_forward.1} parent=27 // pred_fallthru
        _
      // Predicated region
      $region33: #{cimidnet_forward.1} parent=27 // pred_check
        %p247 = pneg %p122
      $region34: #{cimidnet_forward.1} parent=27 // pred_check_branch
        %249 = sbr.rel (%p247) target = $region36
      $region35: #{cimidnet_forward.1} parent=27 // pred_region
        %s250 = ssub.s32 %s20, 1
        %p251 = scmp.gt.s32.totalorder %s250, 0
        %s252 = scalar_select %p251, %s250, 0
        %p253 = scmp.lt.s32.totalorder %s252, 1
        %s254 = scalar_select %p253, %s252, 1
        %p255 = scmp.lt.s32.totalorder %s254, 1
        %s256 = scalar_select %p255, %s254, 1
        %s257 = smul.addr %s256, 4
        %s258 = smul.addr %s257, 8
        %s259 = scalar_lea.vmem %s3, %s258
        %s260 = ssub.s32 %s20, 1
        %p261 = scmp.gt.s32.totalorder %s260, 0
        %s262 = scalar_select %p261, %s260, 0
        %p263 = scmp.lt.s32.totalorder %s262, 1
        %s264 = scalar_select %p263, %s262, 1
      $region36: #{cimidnet_forward.1} parent=27 // pred_fallthru
        _
      // Predicated region
      $region37: #{cimidnet_forward.1} parent=27 // pred_check
        %p265 = pneg %p158
      $region38: #{cimidnet_forward.1} parent=27 // pred_check_branch
        %267 = sbr.rel (%p265) target = $region40
      $region39: #{cimidnet_forward.1} parent=27 // pred_region
        %s268 = ssub.s32 %s20, 1
        %p269 = scmp.gt.s32.totalorder %s268, 0
        %s270 = scalar_select %p269, %s268, 0
        %p271 = scmp.lt.s32.totalorder %s270, 1
        %s272 = scalar_select %p271, %s270, 1
        %p273 = scmp.lt.s32.totalorder %s272, 1
        %s274 = scalar_select %p273, %s272, 1
        %s275 = smul.addr %s274, 8
        %s276 = scalar_lea.vmem %s4, %s275
        %s277 = ssub.s32 %s20, 1
        %p278 = scmp.gt.s32.totalorder %s277, 0
        %s279 = scalar_select %p278, %s277, 0
        %p280 = scmp.lt.s32.totalorder %s279, 1
        %s281 = scalar_select %p280, %s279, 1
      $region40: #{cimidnet_forward.1} parent=27 // pred_fallthru
        _
    $region28: #{cimidnet_forward.1} parent=5 // pred_fallthru
      _
    %p282 = scmp.le.s32.totalorder 1, %s12
    %p283 = scmp.lt.s32.totalorder %s12, 9
    %p284 = pnand %p282, %p283
    %p285 = pneg %p284
    // Predicated region
    $region41: #{cimidnet_forward.1} parent=5 // pred_check
      _
    $region42: #{cimidnet_forward.1} parent=5 // pred_check_branch
      %287 = sbr.rel (%p284) target = $region44
    $region43: #{cimidnet_forward.1} parent=5 // pred_region
      %s288 = ssub.s32 %s12, 1
      %p289 = scmp.lt.s32.totalorder %s21, 1
      %s290 = scalar_select %p289, %s21, 1
      %s291 = smul.addr %s290, 16
      %s292 = smul.addr %s291, 4
      %s293 = scalar_lea.vmem %s0, %s292
      %p294 = pneg %p50
      %p295 = pneg %p47
      %p296 = pneg %p71
      %p297 = pneg %p68
      %p298 = pneg %p92
      %p299 = pneg %p89
      %s300 = ssub.s32 %s22, 1
      %p301 = scmp.gt.s32.totalorder %s300, 0
      %s302 = scalar_select %p301, %s300, 0
      %p303 = scmp.lt.s32.totalorder %s302, 1
      %s304 = scalar_select %p303, %s302, 1
      %p305 = scmp.lt.s32.totalorder %s304, 1
      %s306 = scalar_select %p305, %s304, 1
      %s307 = smul.addr %s306, 4
      %s308 = smul.addr %s307, 8
      %s309 = scalar_lea.vmem %s3, %s308
      %p310 = pneg %p128
      %p311 = pneg %p125
      %s312 = ssub.s32 %s22, 1
      %p313 = scmp.gt.s32.totalorder %s312, 0
      %s314 = scalar_select %p313, %s312, 0
      %p315 = scmp.lt.s32.totalorder %s314, 1
      %s316 = scalar_select %p315, %s314, 1
      %p317 = scmp.lt.s32.totalorder %s316, 1
      %s318 = scalar_select %p317, %s316, 1
      %s319 = smul.addr %s318, 8
      %s320 = scalar_lea.vmem %s4, %s319
      %p321 = pneg %p164
      %p322 = pneg %p161
      %p323 = pneg %p185
      %p324 = pneg %p182
      %p325 = pneg %p211
      %p326 = pneg %p208
      %p327 = scmp.lt.s32.totalorder %s21, 1
      %s328 = scalar_select %p327, %s21, 1
      %s329 = smul.addr %s328, 16
      %s330 = smul.addr %s329, 4
      %s331 = scalar_lea.vmem %s6, %s330
      %p332 = scmp.lt.s32.totalorder %s21, 1
      %s333 = scalar_select %p332, %s21, 1
      %s334 = smul.addr %s333, 16
      %s335 = smul.addr %s334, 4
      %s336 = scalar_lea.vmem %s0, %s335
      %s337 = ssub.s32 %s22, 1
      %p338 = scmp.gt.s32.totalorder %s337, 0
      %s339 = scalar_select %p338, %s337, 0
      %p340 = scmp.lt.s32.totalorder %s339, 1
      %s341 = scalar_select %p340, %s339, 1
      %p342 = scmp.lt.s32.totalorder %s341, 1
      %s343 = scalar_select %p342, %s341, 1
      %s344 = smul.addr %s343, 4
      %s345 = smul.addr %s344, 8
      %s346 = scalar_lea.vmem %s3, %s345
      %s347 = ssub.s32 %s22, 1
      %p348 = scmp.gt.s32.totalorder %s347, 0
      %s349 = scalar_select %p348, %s347, 0
      %p350 = scmp.lt.s32.totalorder %s349, 1
      %s351 = scalar_select %p350, %s349, 1
      %s352 = ssub.s32 %s22, 1
      %p353 = scmp.gt.s32.totalorder %s352, 0
      %s354 = scalar_select %p353, %s352, 0
      %p355 = scmp.lt.s32.totalorder %s354, 1
      %s356 = scalar_select %p355, %s354, 1
      %p357 = scmp.lt.s32.totalorder %s356, 1
      %s358 = scalar_select %p357, %s356, 1
      %s359 = smul.addr %s358, 8
      %s360 = scalar_lea.vmem %s4, %s359
      %s361 = ssub.s32 %s22, 1
      %p362 = scmp.gt.s32.totalorder %s361, 0
      %s363 = scalar_select %p362, %s361, 0
      %p364 = scmp.lt.s32.totalorder %s363, 1
      %s365 = scalar_select %p364, %s363, 1
      %p366 = scmp.lt.s32.totalorder %s21, 1
      %s367 = scalar_select %p366, %s21, 1
      %s368 = smul.addr %s367, 16
      %s369 = smul.addr %s368, 4
      %s370 = scalar_lea.vmem %s6, %s369
      %p372 = scmp.eq.s32.totalorder %s22, 0
      // Predicated region
      $region45: #{cimidnet_forward.1} parent=43 // pred_check
        %p373 = pneg %p372
      $region46: #{cimidnet_forward.1} parent=43 // pred_check_branch
        %375 = sbr.rel (%p373) target = $region48
      $region47: #{cimidnet_forward.1} parent=43 // pred_region
        %v376 = vld [vmem:[%s336] sm:$0xff]
        %v377 = vld [vmem:[%s336 + $0x8] sm:$0xff]
        %v378 = vld [vmem:[%s336 + $0x10] sm:$0xff]
        %v379 = vld [vmem:[%s336 + $0x18] sm:$0xff]
        %v380 = vld [vmem:[%s336 + $0x20] sm:$0xff]
        %v381 = vld [vmem:[%s336 + $0x28] sm:$0xff]
        %v382 = vld [vmem:[%s336 + $0x30] sm:$0xff]
        %v383 = vld [vmem:[%s336 + $0x38] sm:$0xff]
        %v384 = vld [vmem:[%s1] sm:$0xff]
        %v385 = vpack.c.bf16 %v384, %v384
        %387 = vst [vmem:[#allocation1] ss:$2 sm:$0xff] %v376
        %v388 = vld.sshfl [vmem:[#allocation1] sm:$0xff pattern:$0x75316420]
        %v389 = vld.sshfl [vmem:[#allocation1 + $0x8] sm:$0xff pattern:$0x75316420]
        %v392 = vpack.c.bf16 %v388, %v388
        %v393 = vpack.c.bf16 %v389, %v389
        %vm394 = vcmask 31744
        %v396 = vsel %vm394, %v385, 0
        %vm398 = vcmask 1041408
        %v400 = vsel %vm398, %v392, 0
        %v403 = vsel %vm398, %v393, 0
        %405 = vmatpush.bf16.msra.mxu0 0
        %406 = vmatpush.bf16.msra.mxu0 0
        %407 = vmatpush.bf16.msra.mxu0 0
        %408 = vmatpush.bf16.msra.mxu0 0
        %409 = vmatpush.bf16.msra.mxu0 0
        %410 = vmatpush.bf16.msra.mxu0 0
        %411 = vmatpush.bf16.msra.mxu0 0
        %412 = vmatpush.bf16.msra.mxu0 %v400
        %413 = vmatmul.bf16.gmra.mxu0 %v396
        %v414 = vpop.f32.mrf.mxu0
        %v415 = vadd.f32 0.0, %v414
        %v416 = vpop.f32.mrf.mxu0
        %417 = vdwg.mxu0
        %418 = vmatpush.bf16.msra.mxu0 0
        %419 = vmatpush.bf16.msra.mxu0 0
        %420 = vmatpush.bf16.msra.mxu0 0
        %421 = vmatpush.bf16.msra.mxu0 0
        %422 = vmatpush.bf16.msra.mxu0 0
        %423 = vmatpush.bf16.msra.mxu0 0
        %424 = vmatpush.bf16.msra.mxu0 0
        %425 = vmatpush.bf16.msra.mxu0 %v403
        %426 = vmatmul.bf16.gmra.mxu0 %v396
        %v427 = vpop.f32.mrf.mxu0
        %v428 = vadd.f32 0.0, %v427
        %v429 = vpop.f32.mrf.mxu0
        %430 = vdwg.mxu0
        %432 = vst [vmem:[#allocation1] ss:$2 sm:$0xff] %v377
        %v433 = vld.sshfl [vmem:[#allocation1] sm:$0xff pattern:$0x75316420]
        %v434 = vld.sshfl [vmem:[#allocation1 + $0x8] sm:$0xff pattern:$0x75316420]
        %v437 = vpack.c.bf16 %v433, %v433
        %v438 = vpack.c.bf16 %v434, %v434
        %v440 = vsel %vm398, %v437, 0
        %v443 = vsel %vm398, %v438, 0
        %445 = vmatpush.bf16.msra.mxu0 0
        %446 = vmatpush.bf16.msra.mxu0 0
        %447 = vmatpush.bf16.msra.mxu0 0
        %448 = vmatpush.bf16.msra.mxu0 0
        %449 = vmatpush.bf16.msra.mxu0 0
        %450 = vmatpush.bf16.msra.mxu0 0
        %451 = vmatpush.bf16.msra.mxu0 0
        %452 = vmatpush.bf16.msra.mxu0 %v440
        %453 = vmatmul.bf16.gmra.mxu0 %v396
        %v454 = vpop.f32.mrf.mxu0
        %v455 = vadd.f32 0.0, %v454
        %v456 = vpop.f32.mrf.mxu0
        %457 = vdwg.mxu0
        %458 = vmatpush.bf16.msra.mxu0 0
        %459 = vmatpush.bf16.msra.mxu0 0
        %460 = vmatpush.bf16.msra.mxu0 0
        %461 = vmatpush.bf16.msra.mxu0 0
        %462 = vmatpush.bf16.msra.mxu0 0
        %463 = vmatpush.bf16.msra.mxu0 0
        %464 = vmatpush.bf16.msra.mxu0 0
        %465 = vmatpush.bf16.msra.mxu0 %v443
        %466 = vmatmul.bf16.gmra.mxu0 %v396
        %v467 = vpop.f32.mrf.mxu0
        %v468 = vadd.f32 0.0, %v467
        %v469 = vpop.f32.mrf.mxu0
        %470 = vdwg.mxu0
        %472 = vst [vmem:[#allocation1] ss:$2 sm:$0xff] %v378
        %v473 = vld.sshfl [vmem:[#allocation1] sm:$0xff pattern:$0x75316420]
        %v474 = vld.sshfl [vmem:[#allocation1 + $0x8] sm:$0xff pattern:$0x75316420]
        %v477 = vpack.c.bf16 %v473, %v473
        %v478 = vpack.c.bf16 %v474, %v474
        %v480 = vsel %vm398, %v477, 0
        %v483 = vsel %vm398, %v478, 0
        %485 = vmatpush.bf16.msra.mxu0 0
        %486 = vmatpush.bf16.msra.mxu0 0
        %487 = vmatpush.bf16.msra.mxu0 0
        %488 = vmatpush.bf16.msra.mxu0 0
        %489 = vmatpush.bf16.msra.mxu0 0
        %490 = vmatpush.bf16.msra.mxu0 0
        %491 = vmatpush.bf16.msra.mxu0 0
        %492 = vmatpush.bf16.msra.mxu0 %v480
        %493 = vmatmul.bf16.gmra.mxu0 %v396
        %v494 = vpop.f32.mrf.mxu0
        %v495 = vadd.f32 0.0, %v494
        %v496 = vpop.f32.mrf.mxu0
        %497 = vdwg.mxu0
        %498 = vmatpush.bf16.msra.mxu0 0
        %499 = vmatpush.bf16.msra.mxu0 0
        %500 = vmatpush.bf16.msra.mxu0 0
        %501 = vmatpush.bf16.msra.mxu0 0
        %502 = vmatpush.bf16.msra.mxu0 0
        %503 = vmatpush.bf16.msra.mxu0 0
        %504 = vmatpush.bf16.msra.mxu0 0
        %505 = vmatpush.bf16.msra.mxu0 %v483
        %506 = vmatmul.bf16.gmra.mxu0 %v396
        %v507 = vpop.f32.mrf.mxu0
        %v508 = vadd.f32 0.0, %v507
        %v509 = vpop.f32.mrf.mxu0
        %510 = vdwg.mxu0
        %512 = vst [vmem:[#allocation1] ss:$2 sm:$0xff] %v379
        %v513 = vld.sshfl [vmem:[#allocation1] sm:$0xff pattern:$0x75316420]
        %v514 = vld.sshfl [vmem:[#allocation1 + $0x8] sm:$0xff pattern:$0x75316420]
        %v517 = vpack.c.bf16 %v513, %v513
        %v518 = vpack.c.bf16 %v514, %v514
        %v520 = vsel %vm398, %v517, 0
        %v523 = vsel %vm398, %v518, 0
        %525 = vmatpush.bf16.msra.mxu0 0
        %526 = vmatpush.bf16.msra.mxu0 0
        %527 = vmatpush.bf16.msra.mxu0 0
        %528 = vmatpush.bf16.msra.mxu0 0
        %529 = vmatpush.bf16.msra.mxu0 0
        %530 = vmatpush.bf16.msra.mxu0 0
        %531 = vmatpush.bf16.msra.mxu0 0
        %532 = vmatpush.bf16.msra.mxu0 %v520
        %533 = vmatmul.bf16.gmra.mxu0 %v396
        %v534 = vpop.f32.mrf.mxu0
        %v535 = vadd.f32 0.0, %v534
        %v536 = vpop.f32.mrf.mxu0
        %537 = vdwg.mxu0
        %538 = vmatpush.bf16.msra.mxu0 0
        %539 = vmatpush.bf16.msra.mxu0 0
        %540 = vmatpush.bf16.msra.mxu0 0
        %541 = vmatpush.bf16.msra.mxu0 0
        %542 = vmatpush.bf16.msra.mxu0 0
        %543 = vmatpush.bf16.msra.mxu0 0
        %544 = vmatpush.bf16.msra.mxu0 0
        %545 = vmatpush.bf16.msra.mxu0 %v523
        %546 = vmatmul.bf16.gmra.mxu0 %v396
        %v547 = vpop.f32.mrf.mxu0
        %v548 = vadd.f32 0.0, %v547
        %v549 = vpop.f32.mrf.mxu0
        %550 = vdwg.mxu0
        %552 = vst [vmem:[#allocation1] ss:$2 sm:$0xff] %v380
        %v553 = vld.sshfl [vmem:[#allocation1] sm:$0xff pattern:$0x75316420]
        %v554 = vld.sshfl [vmem:[#allocation1 + $0x8] sm:$0xff pattern:$0x75316420]
        %v557 = vpack.c.bf16 %v553, %v553
        %v558 = vpack.c.bf16 %v554, %v554
        %v560 = vsel %vm398, %v557, 0
        %v563 = vsel %vm398, %v558, 0
        %565 = vmatpush.bf16.msra.mxu0 0
        %566 = vmatpush.bf16.msra.mxu0 0
        %567 = vmatpush.bf16.msra.mxu0 0
        %568 = vmatpush.bf16.msra.mxu0 0
        %569 = vmatpush.bf16.msra.mxu0 0
        %570 = vmatpush.bf16.msra.mxu0 0
        %571 = vmatpush.bf16.msra.mxu0 0
        %572 = vmatpush.bf16.msra.mxu0 %v560
        %573 = vmatmul.bf16.gmra.mxu0 %v396
        %v574 = vpop.f32.mrf.mxu0
        %v575 = vadd.f32 0.0, %v574
        %v576 = vpop.f32.mrf.mxu0
        %577 = vdwg.mxu0
        %578 = vmatpush.bf16.msra.mxu0 0
        %579 = vmatpush.bf16.msra.mxu0 0
        %580 = vmatpush.bf16.msra.mxu0 0
        %581 = vmatpush.bf16.msra.mxu0 0
        %582 = vmatpush.bf16.msra.mxu0 0
        %583 = vmatpush.bf16.msra.mxu0 0
        %584 = vmatpush.bf16.msra.mxu0 0
        %585 = vmatpush.bf16.msra.mxu0 %v563
        %586 = vmatmul.bf16.gmra.mxu0 %v396
        %v587 = vpop.f32.mrf.mxu0
        %v588 = vadd.f32 0.0, %v587
        %v589 = vpop.f32.mrf.mxu0
        %590 = vdwg.mxu0
        %592 = vst [vmem:[#allocation1] ss:$2 sm:$0xff] %v381
        %v593 = vld.sshfl [vmem:[#allocation1] sm:$0xff pattern:$0x75316420]
        %v594 = vld.sshfl [vmem:[#allocation1 + $0x8] sm:$0xff pattern:$0x75316420]
        %v597 = vpack.c.bf16 %v593, %v593
        %v598 = vpack.c.bf16 %v594, %v594
        %v600 = vsel %vm398, %v597, 0
        %v603 = vsel %vm398, %v598, 0
        %605 = vmatpush.bf16.msra.mxu0 0
        %606 = vmatpush.bf16.msra.mxu0 0
        %607 = vmatpush.bf16.msra.mxu0 0
        %608 = vmatpush.bf16.msra.mxu0 0
        %609 = vmatpush.bf16.msra.mxu0 0
        %610 = vmatpush.bf16.msra.mxu0 0
        %611 = vmatpush.bf16.msra.mxu0 0
        %612 = vmatpush.bf16.msra.mxu0 %v600
        %613 = vmatmul.bf16.gmra.mxu0 %v396
        %v614 = vpop.f32.mrf.mxu0
        %v615 = vadd.f32 0.0, %v614
        %v616 = vpop.f32.mrf.mxu0
        %617 = vdwg.mxu0
        %618 = vmatpush.bf16.msra.mxu0 0
        %619 = vmatpush.bf16.msra.mxu0 0
        %620 = vmatpush.bf16.msra.mxu0 0
        %621 = vmatpush.bf16.msra.mxu0 0
        %622 = vmatpush.bf16.msra.mxu0 0
        %623 = vmatpush.bf16.msra.mxu0 0
        %624 = vmatpush.bf16.msra.mxu0 0
        %625 = vmatpush.bf16.msra.mxu0 %v603
        %626 = vmatmul.bf16.gmra.mxu0 %v396
        %v627 = vpop.f32.mrf.mxu0
        %v628 = vadd.f32 0.0, %v627
        %v629 = vpop.f32.mrf.mxu0
        %630 = vdwg.mxu0
        %632 = vst [vmem:[#allocation1] ss:$2 sm:$0xff] %v382
        %v633 = vld.sshfl [vmem:[#allocation1] sm:$0xff pattern:$0x75316420]
        %v634 = vld.sshfl [vmem:[#allocation1 + $0x8] sm:$0xff pattern:$0x75316420]
        %v637 = vpack.c.bf16 %v633, %v633
        %v638 = vpack.c.bf16 %v634, %v634
        %v640 = vsel %vm398, %v637, 0
        %v643 = vsel %vm398, %v638, 0
        %645 = vmatpush.bf16.msra.mxu0 0
        %646 = vmatpush.bf16.msra.mxu0 0
        %647 = vmatpush.bf16.msra.mxu0 0
        %648 = vmatpush.bf16.msra.mxu0 0
        %649 = vmatpush.bf16.msra.mxu0 0
        %650 = vmatpush.bf16.msra.mxu0 0
        %651 = vmatpush.bf16.msra.mxu0 0
        %652 = vmatpush.bf16.msra.mxu0 %v640
        %653 = vmatmul.bf16.gmra.mxu0 %v396
        %v654 = vpop.f32.mrf.mxu0
        %v655 = vadd.f32 0.0, %v654
        %v656 = vpop.f32.mrf.mxu0
        %657 = vdwg.mxu0
        %658 = vmatpush.bf16.msra.mxu0 0
        %659 = vmatpush.bf16.msra.mxu0 0
        %660 = vmatpush.bf16.msra.mxu0 0
        %661 = vmatpush.bf16.msra.mxu0 0
        %662 = vmatpush.bf16.msra.mxu0 0
        %663 = vmatpush.bf16.msra.mxu0 0
        %664 = vmatpush.bf16.msra.mxu0 0
        %665 = vmatpush.bf16.msra.mxu0 %v643
        %666 = vmatmul.bf16.gmra.mxu0 %v396
        %v667 = vpop.f32.mrf.mxu0
        %v668 = vadd.f32 0.0, %v667
        %v669 = vpop.f32.mrf.mxu0
        %670 = vdwg.mxu0
        %672 = vst [vmem:[#allocation1] ss:$2 sm:$0xff] %v383
        %v673 = vld.sshfl [vmem:[#allocation1] sm:$0xff pattern:$0x75316420]
        %v674 = vld.sshfl [vmem:[#allocation1 + $0x8] sm:$0xff pattern:$0x75316420]
        %v677 = vpack.c.bf16 %v673, %v673
        %v678 = vpack.c.bf16 %v674, %v674
        %v680 = vsel %vm398, %v677, 0
        %v683 = vsel %vm398, %v678, 0
        %685 = vmatpush.bf16.msra.mxu0 0
        %686 = vmatpush.bf16.msra.mxu0 0
        %687 = vmatpush.bf16.msra.mxu0 0
        %688 = vmatpush.bf16.msra.mxu0 0
        %689 = vmatpush.bf16.msra.mxu0 0
        %690 = vmatpush.bf16.msra.mxu0 0
        %691 = vmatpush.bf16.msra.mxu0 0
        %692 = vmatpush.bf16.msra.mxu0 %v680
        %693 = vmatmul.bf16.gmra.mxu0 %v396
        %v694 = vpop.f32.mrf.mxu0
        %v695 = vadd.f32 0.0, %v694
        %v696 = vpop.f32.mrf.mxu0
        %697 = vdwg.mxu0
        %698 = vmatpush.bf16.msra.mxu0 0
        %699 = vmatpush.bf16.msra.mxu0 0
        %700 = vmatpush.bf16.msra.mxu0 0
        %701 = vmatpush.bf16.msra.mxu0 0
        %702 = vmatpush.bf16.msra.mxu0 0
        %703 = vmatpush.bf16.msra.mxu0 0
        %704 = vmatpush.bf16.msra.mxu0 0
        %705 = vmatpush.bf16.msra.mxu0 %v683
        %706 = vmatmul.bf16.gmra.mxu0 %v396
        %v707 = vpop.f32.mrf.mxu0
        %v708 = vadd.f32 0.0, %v707
        %v709 = vpop.f32.mrf.mxu0
        %710 = vdwg.mxu0
        %712 = vset.pattern.permute.xlu0 4
        %713 = vperm.xlu0 %712, %v384
        %v714 = vpop.permute.xlu0 %713
        %v716 = vadd.f32 %v415, %v714
        %v717 = vadd.f32 %v428, %v714
        %v718 = vadd.f32 %v455, %v714
        %v719 = vadd.f32 %v468, %v714
        %v720 = vadd.f32 %v495, %v714
        %v721 = vadd.f32 %v508, %v714
        %v722 = vadd.f32 %v535, %v714
        %v723 = vadd.f32 %v548, %v714
        %v724 = vadd.f32 %v575, %v714
        %v725 = vadd.f32 %v588, %v714
        %v726 = vadd.f32 %v615, %v714
        %v727 = vadd.f32 %v628, %v714
        %v728 = vadd.f32 %v655, %v714
        %v729 = vadd.f32 %v668, %v714
        %v730 = vadd.f32 %v695, %v714
        %v731 = vadd.f32 %v708, %v714
        %732 = vst [vmem:[#allocation2] sm:$0xff] %v716
        %733 = vst [vmem:[#allocation2 + $0x8] sm:$0xff] %v717
        %734 = vst [vmem:[#allocation2 + $0x10] sm:$0xff] %v718
        %735 = vst [vmem:[#allocation2 + $0x18] sm:$0xff] %v719
        %736 = vst [vmem:[#allocation2 + $0x20] sm:$0xff] %v720
        %737 = vst [vmem:[#allocation2 + $0x28] sm:$0xff] %v721
        %738 = vst [vmem:[#allocation2 + $0x30] sm:$0xff] %v722
        %739 = vst [vmem:[#allocation2 + $0x38] sm:$0xff] %v723
        %740 = vst [vmem:[#allocation2 + $0x40] sm:$0xff] %v724
        %741 = vst [vmem:[#allocation2 + $0x48] sm:$0xff] %v725
        %742 = vst [vmem:[#allocation2 + $0x50] sm:$0xff] %v726
        %743 = vst [vmem:[#allocation2 + $0x58] sm:$0xff] %v727
        %744 = vst [vmem:[#allocation2 + $0x60] sm:$0xff] %v728
        %745 = vst [vmem:[#allocation2 + $0x68] sm:$0xff] %v729
        %746 = vst [vmem:[#allocation2 + $0x70] sm:$0xff] %v730
        %747 = vst [vmem:[#allocation2 + $0x78] sm:$0xff] %v731
      $region48: #{cimidnet_forward.1} parent=43 // pred_fallthru
        _
      %p748 = scmp.ge.s32.totalorder %s22, 1
      %p749 = scmp.le.s32.totalorder %s22, 2
      %p750 = pnand %p748, %p749
      %p751 = pneg %p750
      // Predicated region
      $region49: #{cimidnet_forward.1} parent=43 // pred_check
        _
      $region50: #{cimidnet_forward.1} parent=43 // pred_check_branch
        %753 = sbr.rel (%p750) target = $region52
      $region51: #{cimidnet_forward.1} parent=43 // pred_region
        %v754 = vld [vmem:[#allocation2] sm:$0xff]
        %v755 = vld [vmem:[#allocation2 + $0x8] sm:$0xff]
        %v756 = vld [vmem:[#allocation2 + $0x10] sm:$0xff]
        %v757 = vld [vmem:[#allocation2 + $0x18] sm:$0xff]
        %v758 = vld [vmem:[#allocation2 + $0x20] sm:$0xff]
        %v759 = vld [vmem:[#allocation2 + $0x28] sm:$0xff]
        %v760 = vld [vmem:[#allocation2 + $0x30] sm:$0xff]
        %v761 = vld [vmem:[#allocation2 + $0x38] sm:$0xff]
        %v762 = vld [vmem:[#allocation2 + $0x40] sm:$0xff]
        %v763 = vld [vmem:[#allocation2 + $0x48] sm:$0xff]
        %v764 = vld [vmem:[#allocation2 + $0x50] sm:$0xff]
        %v765 = vld [vmem:[#allocation2 + $0x58] sm:$0xff]
        %v766 = vld [vmem:[#allocation2 + $0x60] sm:$0xff]
        %v767 = vld [vmem:[#allocation2 + $0x68] sm:$0xff]
        %v768 = vld [vmem:[#allocation2 + $0x70] sm:$0xff]
        %v769 = vld [vmem:[#allocation2 + $0x78] sm:$0xff]
        %v770 = vld [vmem:[%s346] sm:$0xff]
        %v771 = vld [vmem:[%s346 + $0x8] sm:$0xff]
        %v772 = vld [vmem:[%s346 + $0x10] sm:$0xff]
        %v773 = vld [vmem:[%s346 + $0x18] sm:$0xff]
        %v774 = vld [vmem:[%s360] sm:$0xff]
        %v775 = vld [vmem:[%s5] sm:$0xff]
        %v776 = vld [vmem:[%s5 + $0x8] sm:$0xff]
        %v777 = vld [vmem:[%s5 + $0x10] sm:$0xff]
        %v778 = vld [vmem:[%s5 + $0x18] sm:$0xff]
        %v779 = vld [vmem:[%s5 + $0x20] sm:$0xff]
        %v780 = vld [vmem:[%s5 + $0x28] sm:$0xff]
        %v781 = vld [vmem:[%s5 + $0x30] sm:$0xff]
        %v782 = vld [vmem:[%s5 + $0x38] sm:$0xff]
        %v783 = vld [vmem:[%s5 + $0x40] sm:$0xff]
        %v784 = vld [vmem:[%s5 + $0x48] sm:$0xff]
        %v785 = vld [vmem:[%s5 + $0x50] sm:$0xff]
        %v786 = vld [vmem:[%s5 + $0x58] sm:$0xff]
        %v787 = vld [vmem:[%s5 + $0x60] sm:$0xff]
        %v788 = vld [vmem:[%s5 + $0x68] sm:$0xff]
        %v789 = vld [vmem:[%s5 + $0x70] sm:$0xff]
        %v790 = vld [vmem:[%s5 + $0x78] sm:$0xff]
        %v791 = vld [vmem:[%s5 + $0x80] sm:$0xff]
        %v792 = vld [vmem:[%s5 + $0x88] sm:$0xff]
        %v793 = vld [vmem:[%s5 + $0x90] sm:$0xff]
        %v794 = vld [vmem:[%s5 + $0x98] sm:$0xff]
        %v795 = vld [vmem:[%s5 + $0xa0] sm:$0xff]
        %v796 = vld [vmem:[%s5 + $0xa8] sm:$0xff]
        %v797 = vld [vmem:[%s5 + $0xb0] sm:$0xff]
        %v798 = vld [vmem:[%s5 + $0xb8] sm:$0xff]
        %v799 = vld [vmem:[%s5 + $0xc0] sm:$0xff]
        %v800 = vld [vmem:[%s5 + $0xc8] sm:$0xff]
        %v801 = vld [vmem:[%s5 + $0xd0] sm:$0xff]
        %v802 = vld [vmem:[%s5 + $0xd8] sm:$0xff]
        %v803 = vld [vmem:[%s5 + $0xe0] sm:$0xff]
        %v804 = vld [vmem:[%s5 + $0xe8] sm:$0xff]
        %v805 = vld [vmem:[%s5 + $0xf0] sm:$0xff]
        %v806 = vld [vmem:[%s5 + $0xf8] sm:$0xff]
        %v807 = vpack.c.bf16 %v756, %v754
        %v808 = vpack.c.bf16 %v757, %v755
        %v809 = vpack.c.bf16 %v760, %v758
        %v810 = vpack.c.bf16 %v761, %v759
        %v811 = vpack.c.bf16 %v764, %v762
        %v812 = vpack.c.bf16 %v765, %v763
        %v813 = vpack.c.bf16 %v768, %v766
        %v814 = vpack.c.bf16 %v769, %v767
        %v815 = vpack.c.bf16 %v776, %v775
        %v816 = vpack.c.bf16 %v778, %v777
        %v817 = vpack.c.bf16 %v780, %v779
        %v818 = vpack.c.bf16 %v782, %v781
        %v819 = vpack.c.bf16 %v784, %v783
        %v820 = vpack.c.bf16 %v786, %v785
        %v821 = vpack.c.bf16 %v788, %v787
        %v822 = vpack.c.bf16 %v790, %v789
        %v823 = vpack.c.bf16 %v792, %v791
        %v824 = vpack.c.bf16 %v794, %v793
        %v825 = vpack.c.bf16 %v796, %v795
        %v826 = vpack.c.bf16 %v798, %v797
        %v827 = vpack.c.bf16 %v800, %v799
        %v828 = vpack.c.bf16 %v802, %v801
        %v829 = vpack.c.bf16 %v804, %v803
        %v830 = vpack.c.bf16 %v806, %v805
        %831 = vmatpush.bf16.msra.mxu0 %v822
        %832 = vmatpush.bf16.msra.mxu0 %v821
        %833 = vmatpush.bf16.msra.mxu0 %v820
        %834 = vmatpush.bf16.msra.mxu0 %v819
        %835 = vmatpush.bf16.msra.mxu0 %v818
        %836 = vmatpush.bf16.msra.mxu0 %v817
        %837 = vmatpush.bf16.msra.mxu0 %v816
        %838 = vmatpush.bf16.msra.mxu0 %v815
        %839 = vmatmul.bf16.gmra.mxu0 %v807
        %v840 = vpop.f32.mrf.mxu0
        %v841 = vadd.f32 0.0, %v840
        %v842 = vpop.f32.mrf.mxu0
        %v843 = vadd.f32 0.0, %v842
        %844 = vmatmul.bf16.gmra.mxu0 %v809
        %v845 = vpop.f32.mrf.mxu0
        %v846 = vadd.f32 0.0, %v845
        %v847 = vpop.f32.mrf.mxu0
        %v848 = vadd.f32 0.0, %v847
        %849 = vmatmul.bf16.gmra.mxu0 %v811
        %v850 = vpop.f32.mrf.mxu0
        %v851 = vadd.f32 0.0, %v850
        %v852 = vpop.f32.mrf.mxu0
        %v853 = vadd.f32 0.0, %v852
        %854 = vmatmul.bf16.gmra.mxu0 %v813
        %v855 = vpop.f32.mrf.mxu0
        %v856 = vadd.f32 0.0, %v855
        %v857 = vpop.f32.mrf.mxu0
        %v858 = vadd.f32 0.0, %v857
        %859 = vdwg.mxu0
        %860 = vmatpush.bf16.msra.mxu0 %v830
        %861 = vmatpush.bf16.msra.mxu0 %v829
        %862 = vmatpush.bf16.msra.mxu0 %v828
        %863 = vmatpush.bf16.msra.mxu0 %v827
        %864 = vmatpush.bf16.msra.mxu0 %v826
        %865 = vmatpush.bf16.msra.mxu0 %v825
        %866 = vmatpush.bf16.msra.mxu0 %v824
        %867 = vmatpush.bf16.msra.mxu0 %v823
        %868 = vmatmul.bf16.gmra.mxu0 %v808
        %v869 = vpop.f32.mrf.mxu0
        %v870 = vadd.f32 %v841, %v869
        %v871 = vpop.f32.mrf.mxu0
        %v872 = vadd.f32 %v843, %v871
        %873 = vmatmul.bf16.gmra.mxu0 %v810
        %v874 = vpop.f32.mrf.mxu0
        %v875 = vadd.f32 %v846, %v874
        %v876 = vpop.f32.mrf.mxu0
        %v877 = vadd.f32 %v848, %v876
        %878 = vmatmul.bf16.gmra.mxu0 %v812
        %v879 = vpop.f32.mrf.mxu0
        %v880 = vadd.f32 %v851, %v879
        %v881 = vpop.f32.mrf.mxu0
        %v882 = vadd.f32 %v853, %v881
        %883 = vmatmul.bf16.gmra.mxu0 %v814
        %v884 = vpop.f32.mrf.mxu0
        %v885 = vadd.f32 %v856, %v884
        %v886 = vpop.f32.mrf.mxu0
        %v887 = vadd.f32 %v858, %v886
        %888 = vdwg.mxu0
        %v889 = vpack.c.bf16 %v771, %v770
        %v890 = vpack.c.bf16 %v870, %v870
        %vm891 = vcmask 64512
        %v893 = vsel %vm891, %v889, 0
        %vm895 = vcmask 1043456
        %v897 = vsel %vm895, %v890, 0
        %899 = vmatpush.bf16.msra.mxu0 0
        %900 = vmatpush.bf16.msra.mxu0 0
        %901 = vmatpush.bf16.msra.mxu0 0
        %902 = vmatpush.bf16.msra.mxu0 0
        %903 = vmatpush.bf16.msra.mxu0 0
        %904 = vmatpush.bf16.msra.mxu0 0
        %905 = vmatpush.bf16.msra.mxu0 0
        %906 = vmatpush.bf16.msra.mxu0 %v897
        %907 = vmatmul.bf16.gmra.mxu0 %v893
        %v908 = vpop.f32.mrf.mxu0
        %v909 = vadd.f32 0.0, %v908
        %v910 = vpop.f32.mrf.mxu0
        %v911 = vadd.f32 0.0, %v910
        %912 = vdwg.mxu0
        %v913 = vpack.c.bf16 %v872, %v872
        %v915 = vsel %vm895, %v913, 0
        %917 = vmatpush.bf16.msra.mxu0 0
        %918 = vmatpush.bf16.msra.mxu0 0
        %919 = vmatpush.bf16.msra.mxu0 0
        %920 = vmatpush.bf16.msra.mxu0 0
        %921 = vmatpush.bf16.msra.mxu0 0
        %922 = vmatpush.bf16.msra.mxu0 0
        %923 = vmatpush.bf16.msra.mxu0 0
        %924 = vmatpush.bf16.msra.mxu0 %v915
        %925 = vmatmul.bf16.gmra.mxu0 %v893
        %v926 = vpop.f32.mrf.mxu0
        %v927 = vadd.f32 0.0, %v926
        %v928 = vpop.f32.mrf.mxu0
        %v929 = vadd.f32 0.0, %v928
        %930 = vdwg.mxu0
        %v931 = vpack.c.bf16 %v875, %v875
        %v933 = vsel %vm895, %v931, 0
        %935 = vmatpush.bf16.msra.mxu0 0
        %936 = vmatpush.bf16.msra.mxu0 0
        %937 = vmatpush.bf16.msra.mxu0 0
        %938 = vmatpush.bf16.msra.mxu0 0
        %939 = vmatpush.bf16.msra.mxu0 0
        %940 = vmatpush.bf16.msra.mxu0 0
        %941 = vmatpush.bf16.msra.mxu0 0
        %942 = vmatpush.bf16.msra.mxu0 %v933
        %943 = vmatmul.bf16.gmra.mxu0 %v893
        %v944 = vpop.f32.mrf.mxu0
        %v945 = vadd.f32 0.0, %v944
        %v946 = vpop.f32.mrf.mxu0
        %v947 = vadd.f32 0.0, %v946
        %948 = vdwg.mxu0
        %v949 = vpack.c.bf16 %v877, %v877
        %v951 = vsel %vm895, %v949, 0
        %953 = vmatpush.bf16.msra.mxu0 0
        %954 = vmatpush.bf16.msra.mxu0 0
        %955 = vmatpush.bf16.msra.mxu0 0
        %956 = vmatpush.bf16.msra.mxu0 0
        %957 = vmatpush.bf16.msra.mxu0 0
        %958 = vmatpush.bf16.msra.mxu0 0
        %959 = vmatpush.bf16.msra.mxu0 0
        %960 = vmatpush.bf16.msra.mxu0 %v951
        %961 = vmatmul.bf16.gmra.mxu0 %v893
        %v962 = vpop.f32.mrf.mxu0
        %v963 = vadd.f32 0.0, %v962
        %v964 = vpop.f32.mrf.mxu0
        %v965 = vadd.f32 0.0, %v964
        %966 = vdwg.mxu0
        %v967 = vpack.c.bf16 %v880, %v880
        %v969 = vsel %vm895, %v967, 0
        %971 = vmatpush.bf16.msra.mxu0 0
        %972 = vmatpush.bf16.msra.mxu0 0
        %973 = vmatpush.bf16.msra.mxu0 0
        %974 = vmatpush.bf16.msra.mxu0 0
        %975 = vmatpush.bf16.msra.mxu0 0
        %976 = vmatpush.bf16.msra.mxu0 0
        %977 = vmatpush.bf16.msra.mxu0 0
        %978 = vmatpush.bf16.msra.mxu0 %v969
        %979 = vmatmul.bf16.gmra.mxu0 %v893
        %v980 = vpop.f32.mrf.mxu0
        %v981 = vadd.f32 0.0, %v980
        %v982 = vpop.f32.mrf.mxu0
        %v983 = vadd.f32 0.0, %v982
        %984 = vdwg.mxu0
        %v985 = vpack.c.bf16 %v882, %v882
        %v987 = vsel %vm895, %v985, 0
        %989 = vmatpush.bf16.msra.mxu0 0
        %990 = vmatpush.bf16.msra.mxu0 0
        %991 = vmatpush.bf16.msra.mxu0 0
        %992 = vmatpush.bf16.msra.mxu0 0
        %993 = vmatpush.bf16.msra.mxu0 0
        %994 = vmatpush.bf16.msra.mxu0 0
        %995 = vmatpush.bf16.msra.mxu0 0
        %996 = vmatpush.bf16.msra.mxu0 %v987
        %997 = vmatmul.bf16.gmra.mxu0 %v893
        %v998 = vpop.f32.mrf.mxu0
        %v999 = vadd.f32 0.0, %v998
        %v1000 = vpop.f32.mrf.mxu0
        %v1001 = vadd.f32 0.0, %v1000
        %1002 = vdwg.mxu0
        %v1003 = vpack.c.bf16 %v885, %v885
        %v1005 = vsel %vm895, %v1003, 0
        %1007 = vmatpush.bf16.msra.mxu0 0
        %1008 = vmatpush.bf16.msra.mxu0 0
        %1009 = vmatpush.bf16.msra.mxu0 0
        %1010 = vmatpush.bf16.msra.mxu0 0
        %1011 = vmatpush.bf16.msra.mxu0 0
        %1012 = vmatpush.bf16.msra.mxu0 0
        %1013 = vmatpush.bf16.msra.mxu0 0
        %1014 = vmatpush.bf16.msra.mxu0 %v1005
        %1015 = vmatmul.bf16.gmra.mxu0 %v893
        %v1016 = vpop.f32.mrf.mxu0
        %v1017 = vadd.f32 0.0, %v1016
        %v1018 = vpop.f32.mrf.mxu0
        %v1019 = vadd.f32 0.0, %v1018
        %1020 = vdwg.mxu0
        %v1021 = vpack.c.bf16 %v887, %v887
        %v1023 = vsel %vm895, %v1021, 0
        %1025 = vmatpush.bf16.msra.mxu0 0
        %1026 = vmatpush.bf16.msra.mxu0 0
        %1027 = vmatpush.bf16.msra.mxu0 0
        %1028 = vmatpush.bf16.msra.mxu0 0
        %1029 = vmatpush.bf16.msra.mxu0 0
        %1030 = vmatpush.bf16.msra.mxu0 0
        %1031 = vmatpush.bf16.msra.mxu0 0
        %1032 = vmatpush.bf16.msra.mxu0 %v1023
        %1033 = vmatmul.bf16.gmra.mxu0 %v893
        %v1034 = vpop.f32.mrf.mxu0
        %v1035 = vadd.f32 0.0, %v1034
        %v1036 = vpop.f32.mrf.mxu0
        %v1037 = vadd.f32 0.0, %v1036
        %1038 = vdwg.mxu0
        %vm1039 = vcmask 130048
        %v1040 = vsel %vm1039, %v909, 0.0
        %1041 = vadd.xlane.f32.xlu0 %v1040
        %v1042 = vpop.xlane.xlu0 %1041
        %v1043 = vsel %vm1039, %v927, 0.0
        %1044 = vadd.xlane.f32.xlu0 %v1043
        %v1045 = vpop.xlane.xlu0 %1044
        %v1046 = vsel %vm1039, %v945, 0.0
        %1047 = vadd.xlane.f32.xlu0 %v1046
        %v1048 = vpop.xlane.xlu0 %1047
        %v1049 = vsel %vm1039, %v963, 0.0
        %1050 = vadd.xlane.f32.xlu0 %v1049
        %v1051 = vpop.xlane.xlu0 %1050
        %v1052 = vsel %vm1039, %v981, 0.0
        %1053 = vadd.xlane.f32.xlu0 %v1052
        %v1054 = vpop.xlane.xlu0 %1053
        %v1055 = vsel %vm1039, %v999, 0.0
        %1056 = vadd.xlane.f32.xlu0 %v1055
        %v1057 = vpop.xlane.xlu0 %1056
        %v1058 = vsel %vm1039, %v1017, 0.0
        %1059 = vadd.xlane.f32.xlu0 %v1058
        %v1060 = vpop.xlane.xlu0 %1059
        %v1061 = vsel %vm1039, %v1035, 0.0
        %1062 = vadd.xlane.f32.xlu0 %v1061
        %v1063 = vpop.xlane.xlu0 %1062
        %v1064 = vrot.slane %v1042, 4
        %v1065 = vadd.f32 %v1042, %v1064
        %v1066 = vrot.slane %v1065, 2
        %v1067 = vadd.f32 %v1065, %v1066
        %v1068 = vrot.slane %v1067, 1
        %v1069 = vadd.f32 %v1067, %v1068
        %v1070 = vrot.slane %v1045, 4
        %v1071 = vadd.f32 %v1045, %v1070
        %v1072 = vrot.slane %v1071, 2
        %v1073 = vadd.f32 %v1071, %v1072
        %v1074 = vrot.slane %v1073, 1
        %v1075 = vadd.f32 %v1073, %v1074
        %v1076 = vrot.slane %v1048, 4
        %v1077 = vadd.f32 %v1048, %v1076
        %v1078 = vrot.slane %v1077, 2
        %v1079 = vadd.f32 %v1077, %v1078
        %v1080 = vrot.slane %v1079, 1
        %v1081 = vadd.f32 %v1079, %v1080
        %v1082 = vrot.slane %v1051, 4
        %v1083 = vadd.f32 %v1051, %v1082
        %v1084 = vrot.slane %v1083, 2
        %v1085 = vadd.f32 %v1083, %v1084
        %v1086 = vrot.slane %v1085, 1
        %v1087 = vadd.f32 %v1085, %v1086
        %v1088 = vrot.slane %v1054, 4
        %v1089 = vadd.f32 %v1054, %v1088
        %v1090 = vrot.slane %v1089, 2
        %v1091 = vadd.f32 %v1089, %v1090
        %v1092 = vrot.slane %v1091, 1
        %v1093 = vadd.f32 %v1091, %v1092
        %v1094 = vrot.slane %v1057, 4
        %v1095 = vadd.f32 %v1057, %v1094
        %v1096 = vrot.slane %v1095, 2
        %v1097 = vadd.f32 %v1095, %v1096
        %v1098 = vrot.slane %v1097, 1
        %v1099 = vadd.f32 %v1097, %v1098
        %v1100 = vrot.slane %v1060, 4
        %v1101 = vadd.f32 %v1060, %v1100
        %v1102 = vrot.slane %v1101, 2
        %v1103 = vadd.f32 %v1101, %v1102
        %v1104 = vrot.slane %v1103, 1
        %v1105 = vadd.f32 %v1103, %v1104
        %v1106 = vrot.slane %v1063, 4
        %v1107 = vadd.f32 %v1063, %v1106
        %v1108 = vrot.slane %v1107, 2
        %v1109 = vadd.f32 %v1107, %v1108
        %v1110 = vrot.slane %v1109, 1
        %v1111 = vadd.f32 %v1109, %v1110
        %v1112 = vmul.f32 %v909, %v909
        %v1113 = vmul.f32 %v927, %v927
        %v1114 = vmul.f32 %v945, %v945
        %v1115 = vmul.f32 %v963, %v963
        %v1116 = vmul.f32 %v981, %v981
        %v1117 = vmul.f32 %v999, %v999
        %v1118 = vmul.f32 %v1017, %v1017
        %v1119 = vmul.f32 %v1035, %v1035
        %v1120 = vsel %vm1039, %v1112, 0.0
        %1121 = vadd.xlane.f32.xlu0 %v1120
        %v1122 = vpop.xlane.xlu0 %1121
        %v1123 = vsel %vm1039, %v1113, 0.0
        %1124 = vadd.xlane.f32.xlu0 %v1123
        %v1125 = vpop.xlane.xlu0 %1124
        %v1126 = vsel %vm1039, %v1114, 0.0
        %1127 = vadd.xlane.f32.xlu0 %v1126
        %v1128 = vpop.xlane.xlu0 %1127
        %v1129 = vsel %vm1039, %v1115, 0.0
        %1130 = vadd.xlane.f32.xlu0 %v1129
        %v1131 = vpop.xlane.xlu0 %1130
        %v1132 = vsel %vm1039, %v1116, 0.0
        %1133 = vadd.xlane.f32.xlu0 %v1132
        %v1134 = vpop.xlane.xlu0 %1133
        %v1135 = vsel %vm1039, %v1117, 0.0
        %1136 = vadd.xlane.f32.xlu0 %v1135
        %v1137 = vpop.xlane.xlu0 %1136
        %v1138 = vsel %vm1039, %v1118, 0.0
        %1139 = vadd.xlane.f32.xlu0 %v1138
        %v1140 = vpop.xlane.xlu0 %1139
        %v1141 = vsel %vm1039, %v1119, 0.0
        %1142 = vadd.xlane.f32.xlu0 %v1141
        %v1143 = vpop.xlane.xlu0 %1142
        %v1144 = vrot.slane %v1122, 4
        %v1145 = vadd.f32 %v1122, %v1144
        %v1146 = vrot.slane %v1145, 2
        %v1147 = vadd.f32 %v1145, %v1146
        %v1148 = vrot.slane %v1147, 1
        %v1149 = vadd.f32 %v1147, %v1148
        %v1150 = vrot.slane %v1125, 4
        %v1151 = vadd.f32 %v1125, %v1150
        %v1152 = vrot.slane %v1151, 2
        %v1153 = vadd.f32 %v1151, %v1152
        %v1154 = vrot.slane %v1153, 1
        %v1155 = vadd.f32 %v1153, %v1154
        %v1156 = vrot.slane %v1128, 4
        %v1157 = vadd.f32 %v1128, %v1156
        %v1158 = vrot.slane %v1157, 2
        %v1159 = vadd.f32 %v1157, %v1158
        %v1160 = vrot.slane %v1159, 1
        %v1161 = vadd.f32 %v1159, %v1160
        %v1162 = vrot.slane %v1131, 4
        %v1163 = vadd.f32 %v1131, %v1162
        %v1164 = vrot.slane %v1163, 2
        %v1165 = vadd.f32 %v1163, %v1164
        %v1166 = vrot.slane %v1165, 1
        %v1167 = vadd.f32 %v1165, %v1166
        %v1168 = vrot.slane %v1134, 4
        %v1169 = vadd.f32 %v1134, %v1168
        %v1170 = vrot.slane %v1169, 2
        %v1171 = vadd.f32 %v1169, %v1170
        %v1172 = vrot.slane %v1171, 1
        %v1173 = vadd.f32 %v1171, %v1172
        %v1174 = vrot.slane %v1137, 4
        %v1175 = vadd.f32 %v1137, %v1174
        %v1176 = vrot.slane %v1175, 2
        %v1177 = vadd.f32 %v1175, %v1176
        %v1178 = vrot.slane %v1177, 1
        %v1179 = vadd.f32 %v1177, %v1178
        %v1180 = vrot.slane %v1140, 4
        %v1181 = vadd.f32 %v1140, %v1180
        %v1182 = vrot.slane %v1181, 2
        %v1183 = vadd.f32 %v1181, %v1182
        %v1184 = vrot.slane %v1183, 1
        %v1185 = vadd.f32 %v1183, %v1184
        %v1186 = vrot.slane %v1143, 4
        %v1187 = vadd.f32 %v1143, %v1186
        %v1188 = vrot.slane %v1187, 2
        %v1189 = vadd.f32 %v1187, %v1188
        %v1190 = vrot.slane %v1189, 1
        %v1191 = vadd.f32 %v1189, %v1190
        %v1192 = vmul.f32 %v1069, 0.0078125
        %v1193 = vmul.f32 %v1075, 0.0078125
        %v1194 = vmul.f32 %v1081, 0.0078125
        %v1195 = vmul.f32 %v1087, 0.0078125
        %v1196 = vmul.f32 %v1093, 0.0078125
        %v1197 = vmul.f32 %v1099, 0.0078125
        %v1198 = vmul.f32 %v1105, 0.0078125
        %v1199 = vmul.f32 %v1111, 0.0078125
        %v1200 = vmul.f32 %v1149, 0.0078125
        %v1201 = vmul.f32 %v1155, 0.0078125
        %v1202 = vmul.f32 %v1161, 0.0078125
        %v1203 = vmul.f32 %v1167, 0.0078125
        %v1204 = vmul.f32 %v1173, 0.0078125
        %v1205 = vmul.f32 %v1179, 0.0078125
        %v1206 = vmul.f32 %v1185, 0.0078125
        %v1207 = vmul.f32 %v1191, 0.0078125
        %v1208 = vmul.f32 %v1192, %v1192
        %v1209 = vmul.f32 %v1193, %v1193
        %v1210 = vmul.f32 %v1194, %v1194
        %v1211 = vmul.f32 %v1195, %v1195
        %v1212 = vmul.f32 %v1196, %v1196
        %v1213 = vmul.f32 %v1197, %v1197
        %v1214 = vmul.f32 %v1198, %v1198
        %v1215 = vmul.f32 %v1199, %v1199
        %v1216 = vsub.f32 %v1200, %v1208
        %v1217 = vsub.f32 %v1201, %v1209
        %v1218 = vsub.f32 %v1202, %v1210
        %v1219 = vsub.f32 %v1203, %v1211
        %v1220 = vsub.f32 %v1204, %v1212
        %v1221 = vsub.f32 %v1205, %v1213
        %v1222 = vsub.f32 %v1206, %v1214
        %v1223 = vsub.f32 %v1207, %v1215
        %v1224 = vsub.f32 %v909, %v1192
        %v1225 = vsub.f32 %v927, %v1193
        %v1226 = vsub.f32 %v945, %v1194
        %v1227 = vsub.f32 %v963, %v1195
        %v1228 = vsub.f32 %v981, %v1196
        %v1229 = vsub.f32 %v999, %v1197
        %v1230 = vsub.f32 %v1017, %v1198
        %v1231 = vsub.f32 %v1035, %v1199
        %v1232 = vadd.f32 %v1216, 1e-05
        %v1233 = vadd.f32 %v1217, 1e-05
        %v1234 = vadd.f32 %v1218, 1e-05
        %v1235 = vadd.f32 %v1219, 1e-05
        %v1236 = vadd.f32 %v1220, 1e-05
        %v1237 = vadd.f32 %v1221, 1e-05
        %v1238 = vadd.f32 %v1222, 1e-05
        %v1239 = vadd.f32 %v1223, 1e-05
        %v1240 = vrsqrt.pop %v1232
        %v1241 = vmul.f32 %v1240, %v1232
        %v1242 = vmul.f32 %v1241, %v1240
        %v1243 = vmul.f32 0.5, %v1242
        %v1244 = vsub.f32 1.5, %v1243
        %v1245 = vmul.f32 %v1240, %v1244
        %vm1246 = vweird.f32 %v1232
        %vm1247 = vweird.f32 %v1240
        %vm1248 = vmor %vm1246, %vm1247
        %v1249 = vsel %vm1248, %v1240, %v1245
        %v1250 = vrsqrt.pop %v1233
        %v1251 = vmul.f32 %v1250, %v1233
        %v1252 = vmul.f32 %v1251, %v1250
        %v1253 = vmul.f32 0.5, %v1252
        %v1254 = vsub.f32 1.5, %v1253
        %v1255 = vmul.f32 %v1250, %v1254
        %vm1256 = vweird.f32 %v1233
        %vm1257 = vweird.f32 %v1250
        %vm1258 = vmor %vm1256, %vm1257
        %v1259 = vsel %vm1258, %v1250, %v1255
        %v1260 = vrsqrt.pop %v1234
        %v1261 = vmul.f32 %v1260, %v1234
        %v1262 = vmul.f32 %v1261, %v1260
        %v1263 = vmul.f32 0.5, %v1262
        %v1264 = vsub.f32 1.5, %v1263
        %v1265 = vmul.f32 %v1260, %v1264
        %vm1266 = vweird.f32 %v1234
        %vm1267 = vweird.f32 %v1260
        %vm1268 = vmor %vm1266, %vm1267
        %v1269 = vsel %vm1268, %v1260, %v1265
        %v1270 = vrsqrt.pop %v1235
        %v1271 = vmul.f32 %v1270, %v1235
        %v1272 = vmul.f32 %v1271, %v1270
        %v1273 = vmul.f32 0.5, %v1272
        %v1274 = vsub.f32 1.5, %v1273
        %v1275 = vmul.f32 %v1270, %v1274
        %vm1276 = vweird.f32 %v1235
        %vm1277 = vweird.f32 %v1270
        %vm1278 = vmor %vm1276, %vm1277
        %v1279 = vsel %vm1278, %v1270, %v1275
        %v1280 = vrsqrt.pop %v1236
        %v1281 = vmul.f32 %v1280, %v1236
        %v1282 = vmul.f32 %v1281, %v1280
        %v1283 = vmul.f32 0.5, %v1282
        %v1284 = vsub.f32 1.5, %v1283
        %v1285 = vmul.f32 %v1280, %v1284
        %vm1286 = vweird.f32 %v1236
        %vm1287 = vweird.f32 %v1280
        %vm1288 = vmor %vm1286, %vm1287
        %v1289 = vsel %vm1288, %v1280, %v1285
        %v1290 = vrsqrt.pop %v1237
        %v1291 = vmul.f32 %v1290, %v1237
        %v1292 = vmul.f32 %v1291, %v1290
        %v1293 = vmul.f32 0.5, %v1292
        %v1294 = vsub.f32 1.5, %v1293
        %v1295 = vmul.f32 %v1290, %v1294
        %vm1296 = vweird.f32 %v1237
        %vm1297 = vweird.f32 %v1290
        %vm1298 = vmor %vm1296, %vm1297
        %v1299 = vsel %vm1298, %v1290, %v1295
        %v1300 = vrsqrt.pop %v1238
        %v1301 = vmul.f32 %v1300, %v1238
        %v1302 = vmul.f32 %v1301, %v1300
        %v1303 = vmul.f32 0.5, %v1302
        %v1304 = vsub.f32 1.5, %v1303
        %v1305 = vmul.f32 %v1300, %v1304
        %vm1306 = vweird.f32 %v1238
        %vm1307 = vweird.f32 %v1300
        %vm1308 = vmor %vm1306, %vm1307
        %v1309 = vsel %vm1308, %v1300, %v1305
        %v1310 = vrsqrt.pop %v1239
        %v1311 = vmul.f32 %v1310, %v1239
        %v1312 = vmul.f32 %v1311, %v1310
        %v1313 = vmul.f32 0.5, %v1312
        %v1314 = vsub.f32 1.5, %v1313
        %v1315 = vmul.f32 %v1310, %v1314
        %vm1316 = vweird.f32 %v1239
        %vm1317 = vweird.f32 %v1310
        %vm1318 = vmor %vm1316, %vm1317
        %v1319 = vsel %vm1318, %v1310, %v1315
        %v1320 = vmul.f32 %v1224, %v1249
        %v1321 = vmul.f32 %v1225, %v1259
        %v1322 = vmul.f32 %v1226, %v1269
        %v1323 = vmul.f32 %v1227, %v1279
        %v1324 = vmul.f32 %v1228, %v1289
        %v1325 = vmul.f32 %v1229, %v1299
        %v1326 = vmul.f32 %v1230, %v1309
        %v1327 = vmul.f32 %v1231, %v1319
        %1329 = vset.pattern.permute.xlu0 0
        %1330 = vperm.xlu0 %1329, %v774
        %v1331 = vpop.permute.xlu0 %1330
        %v1333 = vmul.f32 %v1320, %v1331
        %v1334 = vmul.f32 %v1321, %v1331
        %v1335 = vmul.f32 %v1322, %v1331
        %v1336 = vmul.f32 %v1323, %v1331
        %v1337 = vmul.f32 %v1324, %v1331
        %v1338 = vmul.f32 %v1325, %v1331
        %v1339 = vmul.f32 %v1326, %v1331
        %v1340 = vmul.f32 %v1327, %v1331
        %1341 = vset.pattern.permute.xlu0 1
        %1342 = vperm.xlu0 %1341, %v774
        %v1343 = vpop.permute.xlu0 %1342
        %v1345 = vadd.f32 %v1333, %v1343
        %v1346 = vadd.f32 %v1334, %v1343
        %v1347 = vadd.f32 %v1335, %v1343
        %v1348 = vadd.f32 %v1336, %v1343
        %v1349 = vadd.f32 %v1337, %v1343
        %v1350 = vadd.f32 %v1338, %v1343
        %v1351 = vadd.f32 %v1339, %v1343
        %v1352 = vadd.f32 %v1340, %v1343
        %v1353 = vsel %vm1039, %v911, 0.0
        %1354 = vadd.xlane.f32.xlu0 %v1353
        %v1355 = vpop.xlane.xlu0 %1354
        %v1356 = vsel %vm1039, %v929, 0.0
        %1357 = vadd.xlane.f32.xlu0 %v1356
        %v1358 = vpop.xlane.xlu0 %1357
        %v1359 = vsel %vm1039, %v947, 0.0
        %1360 = vadd.xlane.f32.xlu0 %v1359
        %v1361 = vpop.xlane.xlu0 %1360
        %v1362 = vsel %vm1039, %v965, 0.0
        %1363 = vadd.xlane.f32.xlu0 %v1362
        %v1364 = vpop.xlane.xlu0 %1363
        %v1365 = vsel %vm1039, %v983, 0.0
        %1366 = vadd.xlane.f32.xlu0 %v1365
        %v1367 = vpop.xlane.xlu0 %1366
        %v1368 = vsel %vm1039, %v1001, 0.0
        %1369 = vadd.xlane.f32.xlu0 %v1368
        %v1370 = vpop.xlane.xlu0 %1369
        %v1371 = vsel %vm1039, %v1019, 0.0
        %1372 = vadd.xlane.f32.xlu0 %v1371
        %v1373 = vpop.xlane.xlu0 %1372
        %v1374 = vsel %vm1039, %v1037, 0.0
        %1375 = vadd.xlane.f32.xlu0 %v1374
        %v1376 = vpop.xlane.xlu0 %1375
        %v1377 = vrot.slane %v1355, 4
        %v1378 = vadd.f32 %v1355, %v1377
        %v1379 = vrot.slane %v1378, 2
        %v1380 = vadd.f32 %v1378, %v1379
        %v1381 = vrot.slane %v1380, 1
        %v1382 = vadd.f32 %v1380, %v1381
        %v1383 = vrot.slane %v1358, 4
        %v1384 = vadd.f32 %v1358, %v1383
        %v1385 = vrot.slane %v1384, 2
        %v1386 = vadd.f32 %v1384, %v1385
        %v1387 = vrot.slane %v1386, 1
        %v1388 = vadd.f32 %v1386, %v1387
        %v1389 = vrot.slane %v1361, 4
        %v1390 = vadd.f32 %v1361, %v1389
        %v1391 = vrot.slane %v1390, 2
        %v1392 = vadd.f32 %v1390, %v1391
        %v1393 = vrot.slane %v1392, 1
        %v1394 = vadd.f32 %v1392, %v1393
        %v1395 = vrot.slane %v1364, 4
        %v1396 = vadd.f32 %v1364, %v1395
        %v1397 = vrot.slane %v1396, 2
        %v1398 = vadd.f32 %v1396, %v1397
        %v1399 = vrot.slane %v1398, 1
        %v1400 = vadd.f32 %v1398, %v1399
        %v1401 = vrot.slane %v1367, 4
        %v1402 = vadd.f32 %v1367, %v1401
        %v1403 = vrot.slane %v1402, 2
        %v1404 = vadd.f32 %v1402, %v1403
        %v1405 = vrot.slane %v1404, 1
        %v1406 = vadd.f32 %v1404, %v1405
        %v1407 = vrot.slane %v1370, 4
        %v1408 = vadd.f32 %v1370, %v1407
        %v1409 = vrot.slane %v1408, 2
        %v1410 = vadd.f32 %v1408, %v1409
        %v1411 = vrot.slane %v1410, 1
        %v1412 = vadd.f32 %v1410, %v1411
        %v1413 = vrot.slane %v1373, 4
        %v1414 = vadd.f32 %v1373, %v1413
        %v1415 = vrot.slane %v1414, 2
        %v1416 = vadd.f32 %v1414, %v1415
        %v1417 = vrot.slane %v1416, 1
        %v1418 = vadd.f32 %v1416, %v1417
        %v1419 = vrot.slane %v1376, 4
        %v1420 = vadd.f32 %v1376, %v1419
        %v1421 = vrot.slane %v1420, 2
        %v1422 = vadd.f32 %v1420, %v1421
        %v1423 = vrot.slane %v1422, 1
        %v1424 = vadd.f32 %v1422, %v1423
        %v1425 = vmul.f32 %v911, %v911
        %v1426 = vmul.f32 %v929, %v929
        %v1427 = vmul.f32 %v947, %v947
        %v1428 = vmul.f32 %v965, %v965
        %v1429 = vmul.f32 %v983, %v983
        %v1430 = vmul.f32 %v1001, %v1001
        %v1431 = vmul.f32 %v1019, %v1019
        %v1432 = vmul.f32 %v1037, %v1037
        %v1433 = vsel %vm1039, %v1425, 0.0
        %1434 = vadd.xlane.f32.xlu0 %v1433
        %v1435 = vpop.xlane.xlu0 %1434
        %v1436 = vsel %vm1039, %v1426, 0.0
        %1437 = vadd.xlane.f32.xlu0 %v1436
        %v1438 = vpop.xlane.xlu0 %1437
        %v1439 = vsel %vm1039, %v1427, 0.0
        %1440 = vadd.xlane.f32.xlu0 %v1439
        %v1441 = vpop.xlane.xlu0 %1440
        %v1442 = vsel %vm1039, %v1428, 0.0
        %1443 = vadd.xlane.f32.xlu0 %v1442
        %v1444 = vpop.xlane.xlu0 %1443
        %v1445 = vsel %vm1039, %v1429, 0.0
        %1446 = vadd.xlane.f32.xlu0 %v1445
        %v1447 = vpop.xlane.xlu0 %1446
        %v1448 = vsel %vm1039, %v1430, 0.0
        %1449 = vadd.xlane.f32.xlu0 %v1448
        %v1450 = vpop.xlane.xlu0 %1449
        %v1451 = vsel %vm1039, %v1431, 0.0
        %1452 = vadd.xlane.f32.xlu0 %v1451
        %v1453 = vpop.xlane.xlu0 %1452
        %v1454 = vsel %vm1039, %v1432, 0.0
        %1455 = vadd.xlane.f32.xlu0 %v1454
        %v1456 = vpop.xlane.xlu0 %1455
        %v1457 = vrot.slane %v1435, 4
        %v1458 = vadd.f32 %v1435, %v1457
        %v1459 = vrot.slane %v1458, 2
        %v1460 = vadd.f32 %v1458, %v1459
        %v1461 = vrot.slane %v1460, 1
        %v1462 = vadd.f32 %v1460, %v1461
        %v1463 = vrot.slane %v1438, 4
        %v1464 = vadd.f32 %v1438, %v1463
        %v1465 = vrot.slane %v1464, 2
        %v1466 = vadd.f32 %v1464, %v1465
        %v1467 = vrot.slane %v1466, 1
        %v1468 = vadd.f32 %v1466, %v1467
        %v1469 = vrot.slane %v1441, 4
        %v1470 = vadd.f32 %v1441, %v1469
        %v1471 = vrot.slane %v1470, 2
        %v1472 = vadd.f32 %v1470, %v1471
        %v1473 = vrot.slane %v1472, 1
        %v1474 = vadd.f32 %v1472, %v1473
        %v1475 = vrot.slane %v1444, 4
        %v1476 = vadd.f32 %v1444, %v1475
        %v1477 = vrot.slane %v1476, 2
        %v1478 = vadd.f32 %v1476, %v1477
        %v1479 = vrot.slane %v1478, 1
        %v1480 = vadd.f32 %v1478, %v1479
        %v1481 = vrot.slane %v1447, 4
        %v1482 = vadd.f32 %v1447, %v1481
        %v1483 = vrot.slane %v1482, 2
        %v1484 = vadd.f32 %v1482, %v1483
        %v1485 = vrot.slane %v1484, 1
        %v1486 = vadd.f32 %v1484, %v1485
        %v1487 = vrot.slane %v1450, 4
        %v1488 = vadd.f32 %v1450, %v1487
        %v1489 = vrot.slane %v1488, 2
        %v1490 = vadd.f32 %v1488, %v1489
        %v1491 = vrot.slane %v1490, 1
        %v1492 = vadd.f32 %v1490, %v1491
        %v1493 = vrot.slane %v1453, 4
        %v1494 = vadd.f32 %v1453, %v1493
        %v1495 = vrot.slane %v1494, 2
        %v1496 = vadd.f32 %v1494, %v1495
        %v1497 = vrot.slane %v1496, 1
        %v1498 = vadd.f32 %v1496, %v1497
        %v1499 = vrot.slane %v1456, 4
        %v1500 = vadd.f32 %v1456, %v1499
        %v1501 = vrot.slane %v1500, 2
        %v1502 = vadd.f32 %v1500, %v1501
        %v1503 = vrot.slane %v1502, 1
        %v1504 = vadd.f32 %v1502, %v1503
        %v1505 = vmul.f32 %v1382, 0.0078125
        %v1506 = vmul.f32 %v1388, 0.0078125
        %v1507 = vmul.f32 %v1394, 0.0078125
        %v1508 = vmul.f32 %v1400, 0.0078125
        %v1509 = vmul.f32 %v1406, 0.0078125
        %v1510 = vmul.f32 %v1412, 0.0078125
        %v1511 = vmul.f32 %v1418, 0.0078125
        %v1512 = vmul.f32 %v1424, 0.0078125
        %v1513 = vmul.f32 %v1462, 0.0078125
        %v1514 = vmul.f32 %v1468, 0.0078125
        %v1515 = vmul.f32 %v1474, 0.0078125
        %v1516 = vmul.f32 %v1480, 0.0078125
        %v1517 = vmul.f32 %v1486, 0.0078125
        %v1518 = vmul.f32 %v1492, 0.0078125
        %v1519 = vmul.f32 %v1498, 0.0078125
        %v1520 = vmul.f32 %v1504, 0.0078125
        %v1521 = vmul.f32 %v1505, %v1505
        %v1522 = vmul.f32 %v1506, %v1506
        %v1523 = vmul.f32 %v1507, %v1507
        %v1524 = vmul.f32 %v1508, %v1508
        %v1525 = vmul.f32 %v1509, %v1509
        %v1526 = vmul.f32 %v1510, %v1510
        %v1527 = vmul.f32 %v1511, %v1511
        %v1528 = vmul.f32 %v1512, %v1512
        %v1529 = vsub.f32 %v1513, %v1521
        %v1530 = vsub.f32 %v1514, %v1522
        %v1531 = vsub.f32 %v1515, %v1523
        %v1532 = vsub.f32 %v1516, %v1524
        %v1533 = vsub.f32 %v1517, %v1525
        %v1534 = vsub.f32 %v1518, %v1526
        %v1535 = vsub.f32 %v1519, %v1527
        %v1536 = vsub.f32 %v1520, %v1528
        %v1537 = vsub.f32 %v911, %v1505
        %v1538 = vsub.f32 %v929, %v1506
        %v1539 = vsub.f32 %v947, %v1507
        %v1540 = vsub.f32 %v965, %v1508
        %v1541 = vsub.f32 %v983, %v1509
        %v1542 = vsub.f32 %v1001, %v1510
        %v1543 = vsub.f32 %v1019, %v1511
        %v1544 = vsub.f32 %v1037, %v1512
        %v1545 = vadd.f32 %v1529, 1e-05
        %v1546 = vadd.f32 %v1530, 1e-05
        %v1547 = vadd.f32 %v1531, 1e-05
        %v1548 = vadd.f32 %v1532, 1e-05
        %v1549 = vadd.f32 %v1533, 1e-05
        %v1550 = vadd.f32 %v1534, 1e-05
        %v1551 = vadd.f32 %v1535, 1e-05
        %v1552 = vadd.f32 %v1536, 1e-05
        %v1553 = vrsqrt.pop %v1545
        %v1554 = vmul.f32 %v1553, %v1545
        %v1555 = vmul.f32 %v1554, %v1553
        %v1556 = vmul.f32 0.5, %v1555
        %v1557 = vsub.f32 1.5, %v1556
        %v1558 = vmul.f32 %v1553, %v1557
        %vm1559 = vweird.f32 %v1545
        %vm1560 = vweird.f32 %v1553
        %vm1561 = vmor %vm1559, %vm1560
        %v1562 = vsel %vm1561, %v1553, %v1558
        %v1563 = vrsqrt.pop %v1546
        %v1564 = vmul.f32 %v1563, %v1546
        %v1565 = vmul.f32 %v1564, %v1563
        %v1566 = vmul.f32 0.5, %v1565
        %v1567 = vsub.f32 1.5, %v1566
        %v1568 = vmul.f32 %v1563, %v1567
        %vm1569 = vweird.f32 %v1546
        %vm1570 = vweird.f32 %v1563
        %vm1571 = vmor %vm1569, %vm1570
        %v1572 = vsel %vm1571, %v1563, %v1568
        %v1573 = vrsqrt.pop %v1547
        %v1574 = vmul.f32 %v1573, %v1547
        %v1575 = vmul.f32 %v1574, %v1573
        %v1576 = vmul.f32 0.5, %v1575
        %v1577 = vsub.f32 1.5, %v1576
        %v1578 = vmul.f32 %v1573, %v1577
        %vm1579 = vweird.f32 %v1547
        %vm1580 = vweird.f32 %v1573
        %vm1581 = vmor %vm1579, %vm1580
        %v1582 = vsel %vm1581, %v1573, %v1578
        %v1583 = vrsqrt.pop %v1548
        %v1584 = vmul.f32 %v1583, %v1548
        %v1585 = vmul.f32 %v1584, %v1583
        %v1586 = vmul.f32 0.5, %v1585
        %v1587 = vsub.f32 1.5, %v1586
        %v1588 = vmul.f32 %v1583, %v1587
        %vm1589 = vweird.f32 %v1548
        %vm1590 = vweird.f32 %v1583
        %vm1591 = vmor %vm1589, %vm1590
        %v1592 = vsel %vm1591, %v1583, %v1588
        %v1593 = vrsqrt.pop %v1549
        %v1594 = vmul.f32 %v1593, %v1549
        %v1595 = vmul.f32 %v1594, %v1593
        %v1596 = vmul.f32 0.5, %v1595
        %v1597 = vsub.f32 1.5, %v1596
        %v1598 = vmul.f32 %v1593, %v1597
        %vm1599 = vweird.f32 %v1549
        %vm1600 = vweird.f32 %v1593
        %vm1601 = vmor %vm1599, %vm1600
        %v1602 = vsel %vm1601, %v1593, %v1598
        %v1603 = vrsqrt.pop %v1550
        %v1604 = vmul.f32 %v1603, %v1550
        %v1605 = vmul.f32 %v1604, %v1603
        %v1606 = vmul.f32 0.5, %v1605
        %v1607 = vsub.f32 1.5, %v1606
        %v1608 = vmul.f32 %v1603, %v1607
        %vm1609 = vweird.f32 %v1550
        %vm1610 = vweird.f32 %v1603
        %vm1611 = vmor %vm1609, %vm1610
        %v1612 = vsel %vm1611, %v1603, %v1608
        %v1613 = vrsqrt.pop %v1551
        %v1614 = vmul.f32 %v1613, %v1551
        %v1615 = vmul.f32 %v1614, %v1613
        %v1616 = vmul.f32 0.5, %v1615
        %v1617 = vsub.f32 1.5, %v1616
        %v1618 = vmul.f32 %v1613, %v1617
        %vm1619 = vweird.f32 %v1551
        %vm1620 = vweird.f32 %v1613
        %vm1621 = vmor %vm1619, %vm1620
        %v1622 = vsel %vm1621, %v1613, %v1618
        %v1623 = vrsqrt.pop %v1552
        %v1624 = vmul.f32 %v1623, %v1552
        %v1625 = vmul.f32 %v1624, %v1623
        %v1626 = vmul.f32 0.5, %v1625
        %v1627 = vsub.f32 1.5, %v1626
        %v1628 = vmul.f32 %v1623, %v1627
        %vm1629 = vweird.f32 %v1552
        %vm1630 = vweird.f32 %v1623
        %vm1631 = vmor %vm1629, %vm1630
        %v1632 = vsel %vm1631, %v1623, %v1628
        %v1633 = vmul.f32 %v1537, %v1562
        %v1634 = vmul.f32 %v1538, %v1572
        %v1635 = vmul.f32 %v1539, %v1582
        %v1636 = vmul.f32 %v1540, %v1592
        %v1637 = vmul.f32 %v1541, %v1602
        %v1638 = vmul.f32 %v1542, %v1612
        %v1639 = vmul.f32 %v1543, %v1622
        %v1640 = vmul.f32 %v1544, %v1632
        %1641 = vset.pattern.permute.xlu0 2
        %1642 = vperm.xlu0 %1641, %v774
        %v1643 = vpop.permute.xlu0 %1642
        %v1645 = vmul.f32 %v1633, %v1643
        %v1646 = vmul.f32 %v1634, %v1643
        %v1647 = vmul.f32 %v1635, %v1643
        %v1648 = vmul.f32 %v1636, %v1643
        %v1649 = vmul.f32 %v1637, %v1643
        %v1650 = vmul.f32 %v1638, %v1643
        %v1651 = vmul.f32 %v1639, %v1643
        %v1652 = vmul.f32 %v1640, %v1643
        %1653 = vset.pattern.permute.xlu0 3
        %1654 = vperm.xlu0 %1653, %v774
        %v1655 = vpop.permute.xlu0 %1654
        %v1657 = vadd.f32 %v1645, %v1655
        %v1658 = vadd.f32 %v1646, %v1655
        %v1659 = vadd.f32 %v1647, %v1655
        %v1660 = vadd.f32 %v1648, %v1655
        %v1661 = vadd.f32 %v1649, %v1655
        %v1662 = vadd.f32 %v1650, %v1655
        %v1663 = vadd.f32 %v1651, %v1655
        %v1664 = vadd.f32 %v1652, %v1655
        %v1665 = vpack.c.bf16 %v772, %v772
        %v1666 = vpack.c.bf16 %v754, %v754
        %v1667 = vpack.c.bf16 %v755, %v755
        %v1669 = vsel %vm891, %v1665, 0
        %v1672 = vsel %vm895, %v1666, 0
        %v1675 = vsel %vm895, %v1667, 0
        %1677 = vmatpush.bf16.msra.mxu0 0
        %1678 = vmatpush.bf16.msra.mxu0 0
        %1679 = vmatpush.bf16.msra.mxu0 0
        %1680 = vmatpush.bf16.msra.mxu0 0
        %1681 = vmatpush.bf16.msra.mxu0 0
        %1682 = vmatpush.bf16.msra.mxu0 0
        %1683 = vmatpush.bf16.msra.mxu0 0
        %1684 = vmatpush.bf16.msra.mxu0 %v1672
        %1685 = vmatmul.bf16.gmra.mxu0 %v1669
        %v1686 = vpop.f32.mrf.mxu0
        %v1687 = vadd.f32 0.0, %v1686
        %v1688 = vpop.f32.mrf.mxu0
        %1689 = vdwg.mxu0
        %1690 = vmatpush.bf16.msra.mxu0 0
        %1691 = vmatpush.bf16.msra.mxu0 0
        %1692 = vmatpush.bf16.msra.mxu0 0
        %1693 = vmatpush.bf16.msra.mxu0 0
        %1694 = vmatpush.bf16.msra.mxu0 0
        %1695 = vmatpush.bf16.msra.mxu0 0
        %1696 = vmatpush.bf16.msra.mxu0 0
        %1697 = vmatpush.bf16.msra.mxu0 %v1675
        %1698 = vmatmul.bf16.gmra.mxu0 %v1669
        %v1699 = vpop.f32.mrf.mxu0
        %v1700 = vadd.f32 0.0, %v1699
        %v1701 = vpop.f32.mrf.mxu0
        %1702 = vdwg.mxu0
        %v1703 = vpack.c.bf16 %v756, %v756
        %v1704 = vpack.c.bf16 %v757, %v757
        %v1706 = vsel %vm895, %v1703, 0
        %v1709 = vsel %vm895, %v1704, 0
        %1711 = vmatpush.bf16.msra.mxu0 0
        %1712 = vmatpush.bf16.msra.mxu0 0
        %1713 = vmatpush.bf16.msra.mxu0 0
        %1714 = vmatpush.bf16.msra.mxu0 0
        %1715 = vmatpush.bf16.msra.mxu0 0
        %1716 = vmatpush.bf16.msra.mxu0 0
        %1717 = vmatpush.bf16.msra.mxu0 0
        %1718 = vmatpush.bf16.msra.mxu0 %v1706
        %1719 = vmatmul.bf16.gmra.mxu0 %v1669
        %v1720 = vpop.f32.mrf.mxu0
        %v1721 = vadd.f32 0.0, %v1720
        %v1722 = vpop.f32.mrf.mxu0
        %1723 = vdwg.mxu0
        %1724 = vmatpush.bf16.msra.mxu0 0
        %1725 = vmatpush.bf16.msra.mxu0 0
        %1726 = vmatpush.bf16.msra.mxu0 0
        %1727 = vmatpush.bf16.msra.mxu0 0
        %1728 = vmatpush.bf16.msra.mxu0 0
        %1729 = vmatpush.bf16.msra.mxu0 0
        %1730 = vmatpush.bf16.msra.mxu0 0
        %1731 = vmatpush.bf16.msra.mxu0 %v1709
        %1732 = vmatmul.bf16.gmra.mxu0 %v1669
        %v1733 = vpop.f32.mrf.mxu0
        %v1734 = vadd.f32 0.0, %v1733
        %v1735 = vpop.f32.mrf.mxu0
        %1736 = vdwg.mxu0
        %v1737 = vpack.c.bf16 %v758, %v758
        %v1738 = vpack.c.bf16 %v759, %v759
        %v1740 = vsel %vm895, %v1737, 0
        %v1743 = vsel %vm895, %v1738, 0
        %1745 = vmatpush.bf16.msra.mxu0 0
        %1746 = vmatpush.bf16.msra.mxu0 0
        %1747 = vmatpush.bf16.msra.mxu0 0
        %1748 = vmatpush.bf16.msra.mxu0 0
        %1749 = vmatpush.bf16.msra.mxu0 0
        %1750 = vmatpush.bf16.msra.mxu0 0
        %1751 = vmatpush.bf16.msra.mxu0 0
        %1752 = vmatpush.bf16.msra.mxu0 %v1740
        %1753 = vmatmul.bf16.gmra.mxu0 %v1669
        %v1754 = vpop.f32.mrf.mxu0
        %v1755 = vadd.f32 0.0, %v1754
        %v1756 = vpop.f32.mrf.mxu0
        %1757 = vdwg.mxu0
        %1758 = vmatpush.bf16.msra.mxu0 0
        %1759 = vmatpush.bf16.msra.mxu0 0
        %1760 = vmatpush.bf16.msra.mxu0 0
        %1761 = vmatpush.bf16.msra.mxu0 0
        %1762 = vmatpush.bf16.msra.mxu0 0
        %1763 = vmatpush.bf16.msra.mxu0 0
        %1764 = vmatpush.bf16.msra.mxu0 0
        %1765 = vmatpush.bf16.msra.mxu0 %v1743
        %1766 = vmatmul.bf16.gmra.mxu0 %v1669
        %v1767 = vpop.f32.mrf.mxu0
        %v1768 = vadd.f32 0.0, %v1767
        %v1769 = vpop.f32.mrf.mxu0
        %1770 = vdwg.mxu0
        %v1771 = vpack.c.bf16 %v760, %v760
        %v1772 = vpack.c.bf16 %v761, %v761
        %v1774 = vsel %vm895, %v1771, 0
        %v1777 = vsel %vm895, %v1772, 0
        %1779 = vmatpush.bf16.msra.mxu0 0
        %1780 = vmatpush.bf16.msra.mxu0 0
        %1781 = vmatpush.bf16.msra.mxu0 0
        %1782 = vmatpush.bf16.msra.mxu0 0
        %1783 = vmatpush.bf16.msra.mxu0 0
        %1784 = vmatpush.bf16.msra.mxu0 0
        %1785 = vmatpush.bf16.msra.mxu0 0
        %1786 = vmatpush.bf16.msra.mxu0 %v1774
        %1787 = vmatmul.bf16.gmra.mxu0 %v1669
        %v1788 = vpop.f32.mrf.mxu0
        %v1789 = vadd.f32 0.0, %v1788
        %v1790 = vpop.f32.mrf.mxu0
        %1791 = vdwg.mxu0
        %1792 = vmatpush.bf16.msra.mxu0 0
        %1793 = vmatpush.bf16.msra.mxu0 0
        %1794 = vmatpush.bf16.msra.mxu0 0
        %1795 = vmatpush.bf16.msra.mxu0 0
        %1796 = vmatpush.bf16.msra.mxu0 0
        %1797 = vmatpush.bf16.msra.mxu0 0
        %1798 = vmatpush.bf16.msra.mxu0 0
        %1799 = vmatpush.bf16.msra.mxu0 %v1777
        %1800 = vmatmul.bf16.gmra.mxu0 %v1669
        %v1801 = vpop.f32.mrf.mxu0
        %v1802 = vadd.f32 0.0, %v1801
        %v1803 = vpop.f32.mrf.mxu0
        %1804 = vdwg.mxu0
        %v1805 = vpack.c.bf16 %v762, %v762
        %v1806 = vpack.c.bf16 %v763, %v763
        %v1808 = vsel %vm895, %v1805, 0
        %v1811 = vsel %vm895, %v1806, 0
        %1813 = vmatpush.bf16.msra.mxu0 0
        %1814 = vmatpush.bf16.msra.mxu0 0
        %1815 = vmatpush.bf16.msra.mxu0 0
        %1816 = vmatpush.bf16.msra.mxu0 0
        %1817 = vmatpush.bf16.msra.mxu0 0
        %1818 = vmatpush.bf16.msra.mxu0 0
        %1819 = vmatpush.bf16.msra.mxu0 0
        %1820 = vmatpush.bf16.msra.mxu0 %v1808
        %1821 = vmatmul.bf16.gmra.mxu0 %v1669
        %v1822 = vpop.f32.mrf.mxu0
        %v1823 = vadd.f32 0.0, %v1822
        %v1824 = vpop.f32.mrf.mxu0
        %1825 = vdwg.mxu0
        %1826 = vmatpush.bf16.msra.mxu0 0
        %1827 = vmatpush.bf16.msra.mxu0 0
        %1828 = vmatpush.bf16.msra.mxu0 0
        %1829 = vmatpush.bf16.msra.mxu0 0
        %1830 = vmatpush.bf16.msra.mxu0 0
        %1831 = vmatpush.bf16.msra.mxu0 0
        %1832 = vmatpush.bf16.msra.mxu0 0
        %1833 = vmatpush.bf16.msra.mxu0 %v1811
        %1834 = vmatmul.bf16.gmra.mxu0 %v1669
        %v1835 = vpop.f32.mrf.mxu0
        %v1836 = vadd.f32 0.0, %v1835
        %v1837 = vpop.f32.mrf.mxu0
        %1838 = vdwg.mxu0
        %v1839 = vpack.c.bf16 %v764, %v764
        %v1840 = vpack.c.bf16 %v765, %v765
        %v1842 = vsel %vm895, %v1839, 0
        %v1845 = vsel %vm895, %v1840, 0
        %1847 = vmatpush.bf16.msra.mxu0 0
        %1848 = vmatpush.bf16.msra.mxu0 0
        %1849 = vmatpush.bf16.msra.mxu0 0
        %1850 = vmatpush.bf16.msra.mxu0 0
        %1851 = vmatpush.bf16.msra.mxu0 0
        %1852 = vmatpush.bf16.msra.mxu0 0
        %1853 = vmatpush.bf16.msra.mxu0 0
        %1854 = vmatpush.bf16.msra.mxu0 %v1842
        %1855 = vmatmul.bf16.gmra.mxu0 %v1669
        %v1856 = vpop.f32.mrf.mxu0
        %v1857 = vadd.f32 0.0, %v1856
        %v1858 = vpop.f32.mrf.mxu0
        %1859 = vdwg.mxu0
        %1860 = vmatpush.bf16.msra.mxu0 0
        %1861 = vmatpush.bf16.msra.mxu0 0
        %1862 = vmatpush.bf16.msra.mxu0 0
        %1863 = vmatpush.bf16.msra.mxu0 0
        %1864 = vmatpush.bf16.msra.mxu0 0
        %1865 = vmatpush.bf16.msra.mxu0 0
        %1866 = vmatpush.bf16.msra.mxu0 0
        %1867 = vmatpush.bf16.msra.mxu0 %v1845
        %1868 = vmatmul.bf16.gmra.mxu0 %v1669
        %v1869 = vpop.f32.mrf.mxu0
        %v1870 = vadd.f32 0.0, %v1869
        %v1871 = vpop.f32.mrf.mxu0
        %1872 = vdwg.mxu0
        %v1873 = vpack.c.bf16 %v766, %v766
        %v1874 = vpack.c.bf16 %v767, %v767
        %v1876 = vsel %vm895, %v1873, 0
        %v1879 = vsel %vm895, %v1874, 0
        %1881 = vmatpush.bf16.msra.mxu0 0
        %1882 = vmatpush.bf16.msra.mxu0 0
        %1883 = vmatpush.bf16.msra.mxu0 0
        %1884 = vmatpush.bf16.msra.mxu0 0
        %1885 = vmatpush.bf16.msra.mxu0 0
        %1886 = vmatpush.bf16.msra.mxu0 0
        %1887 = vmatpush.bf16.msra.mxu0 0
        %1888 = vmatpush.bf16.msra.mxu0 %v1876
        %1889 = vmatmul.bf16.gmra.mxu0 %v1669
        %v1890 = vpop.f32.mrf.mxu0
        %v1891 = vadd.f32 0.0, %v1890
        %v1892 = vpop.f32.mrf.mxu0
        %1893 = vdwg.mxu0
        %1894 = vmatpush.bf16.msra.mxu0 0
        %1895 = vmatpush.bf16.msra.mxu0 0
        %1896 = vmatpush.bf16.msra.mxu0 0
        %1897 = vmatpush.bf16.msra.mxu0 0
        %1898 = vmatpush.bf16.msra.mxu0 0
        %1899 = vmatpush.bf16.msra.mxu0 0
        %1900 = vmatpush.bf16.msra.mxu0 0
        %1901 = vmatpush.bf16.msra.mxu0 %v1879
        %1902 = vmatmul.bf16.gmra.mxu0 %v1669
        %v1903 = vpop.f32.mrf.mxu0
        %v1904 = vadd.f32 0.0, %v1903
        %v1905 = vpop.f32.mrf.mxu0
        %1906 = vdwg.mxu0
        %v1907 = vpack.c.bf16 %v768, %v768
        %v1908 = vpack.c.bf16 %v769, %v769
        %v1910 = vsel %vm895, %v1907, 0
        %v1913 = vsel %vm895, %v1908, 0
        %1915 = vmatpush.bf16.msra.mxu0 0
        %1916 = vmatpush.bf16.msra.mxu0 0
        %1917 = vmatpush.bf16.msra.mxu0 0
        %1918 = vmatpush.bf16.msra.mxu0 0
        %1919 = vmatpush.bf16.msra.mxu0 0
        %1920 = vmatpush.bf16.msra.mxu0 0
        %1921 = vmatpush.bf16.msra.mxu0 0
        %1922 = vmatpush.bf16.msra.mxu0 %v1910
        %1923 = vmatmul.bf16.gmra.mxu0 %v1669
        %v1924 = vpop.f32.mrf.mxu0
        %v1925 = vadd.f32 0.0, %v1924
        %v1926 = vpop.f32.mrf.mxu0
        %1927 = vdwg.mxu0
        %1928 = vmatpush.bf16.msra.mxu0 0
        %1929 = vmatpush.bf16.msra.mxu0 0
        %1930 = vmatpush.bf16.msra.mxu0 0
        %1931 = vmatpush.bf16.msra.mxu0 0
        %1932 = vmatpush.bf16.msra.mxu0 0
        %1933 = vmatpush.bf16.msra.mxu0 0
        %1934 = vmatpush.bf16.msra.mxu0 0
        %1935 = vmatpush.bf16.msra.mxu0 %v1913
        %1936 = vmatmul.bf16.gmra.mxu0 %v1669
        %v1937 = vpop.f32.mrf.mxu0
        %v1938 = vadd.f32 0.0, %v1937
        %v1939 = vpop.f32.mrf.mxu0
        %1940 = vdwg.mxu0
        %v1941 = vadd.f32 %v1687, %v1700
        %1942 = vadd.xlane.f32.xlu0 %v1941
        %v1943 = vpop.xlane.xlu0 %1942
        %v1944 = vadd.f32 %v1721, %v1734
        %1945 = vadd.xlane.f32.xlu0 %v1944
        %v1946 = vpop.xlane.xlu0 %1945
        %v1947 = vadd.f32 %v1755, %v1768
        %1948 = vadd.xlane.f32.xlu0 %v1947
        %v1949 = vpop.xlane.xlu0 %1948
        %v1950 = vadd.f32 %v1789, %v1802
        %1951 = vadd.xlane.f32.xlu0 %v1950
        %v1952 = vpop.xlane.xlu0 %1951
        %v1953 = vadd.f32 %v1823, %v1836
        %1954 = vadd.xlane.f32.xlu0 %v1953
        %v1955 = vpop.xlane.xlu0 %1954
        %v1956 = vadd.f32 %v1857, %v1870
        %1957 = vadd.xlane.f32.xlu0 %v1956
        %v1958 = vpop.xlane.xlu0 %1957
        %v1959 = vadd.f32 %v1891, %v1904
        %1960 = vadd.xlane.f32.xlu0 %v1959
        %v1961 = vpop.xlane.xlu0 %1960
        %v1962 = vadd.f32 %v1925, %v1938
        %1963 = vadd.xlane.f32.xlu0 %v1962
        %v1964 = vpop.xlane.xlu0 %1963
        %v1965 = vrot.slane %v1943, 4
        %v1966 = vadd.f32 %v1943, %v1965
        %v1967 = vrot.slane %v1966, 2
        %v1968 = vadd.f32 %v1966, %v1967
        %v1969 = vrot.slane %v1968, 1
        %v1970 = vadd.f32 %v1968, %v1969
        %v1971 = vrot.slane %v1946, 4
        %v1972 = vadd.f32 %v1946, %v1971
        %v1973 = vrot.slane %v1972, 2
        %v1974 = vadd.f32 %v1972, %v1973
        %v1975 = vrot.slane %v1974, 1
        %v1976 = vadd.f32 %v1974, %v1975
        %v1977 = vrot.slane %v1949, 4
        %v1978 = vadd.f32 %v1949, %v1977
        %v1979 = vrot.slane %v1978, 2
        %v1980 = vadd.f32 %v1978, %v1979
        %v1981 = vrot.slane %v1980, 1
        %v1982 = vadd.f32 %v1980, %v1981
        %v1983 = vrot.slane %v1952, 4
        %v1984 = vadd.f32 %v1952, %v1983
        %v1985 = vrot.slane %v1984, 2
        %v1986 = vadd.f32 %v1984, %v1985
        %v1987 = vrot.slane %v1986, 1
        %v1988 = vadd.f32 %v1986, %v1987
        %v1989 = vrot.slane %v1955, 4
        %v1990 = vadd.f32 %v1955, %v1989
        %v1991 = vrot.slane %v1990, 2
        %v1992 = vadd.f32 %v1990, %v1991
        %v1993 = vrot.slane %v1992, 1
        %v1994 = vadd.f32 %v1992, %v1993
        %v1995 = vrot.slane %v1958, 4
        %v1996 = vadd.f32 %v1958, %v1995
        %v1997 = vrot.slane %v1996, 2
        %v1998 = vadd.f32 %v1996, %v1997
        %v1999 = vrot.slane %v1998, 1
        %v2000 = vadd.f32 %v1998, %v1999
        %v2001 = vrot.slane %v1961, 4
        %v2002 = vadd.f32 %v1961, %v2001
        %v2003 = vrot.slane %v2002, 2
        %v2004 = vadd.f32 %v2002, %v2003
        %v2005 = vrot.slane %v2004, 1
        %v2006 = vadd.f32 %v2004, %v2005
        %v2007 = vrot.slane %v1964, 4
        %v2008 = vadd.f32 %v1964, %v2007
        %v2009 = vrot.slane %v2008, 2
        %v2010 = vadd.f32 %v2008, %v2009
        %v2011 = vrot.slane %v2010, 1
        %v2012 = vadd.f32 %v2010, %v2011
        %v2013 = vmul.f32 %v1687, %v1687
        %v2014 = vmul.f32 %v1700, %v1700
        %v2015 = vmul.f32 %v1721, %v1721
        %v2016 = vmul.f32 %v1734, %v1734
        %v2017 = vmul.f32 %v1755, %v1755
        %v2018 = vmul.f32 %v1768, %v1768
        %v2019 = vmul.f32 %v1789, %v1789
        %v2020 = vmul.f32 %v1802, %v1802
        %v2021 = vmul.f32 %v1823, %v1823
        %v2022 = vmul.f32 %v1836, %v1836
        %v2023 = vmul.f32 %v1857, %v1857
        %v2024 = vmul.f32 %v1870, %v1870
        %v2025 = vmul.f32 %v1891, %v1891
        %v2026 = vmul.f32 %v1904, %v1904
        %v2027 = vmul.f32 %v1925, %v1925
        %v2028 = vmul.f32 %v1938, %v1938
        %v2029 = vadd.f32 %v2013, %v2014
        %2030 = vadd.xlane.f32.xlu0 %v2029
        %v2031 = vpop.xlane.xlu0 %2030
        %v2032 = vadd.f32 %v2015, %v2016
        %2033 = vadd.xlane.f32.xlu0 %v2032
        %v2034 = vpop.xlane.xlu0 %2033
        %v2035 = vadd.f32 %v2017, %v2018
        %2036 = vadd.xlane.f32.xlu0 %v2035
        %v2037 = vpop.xlane.xlu0 %2036
        %v2038 = vadd.f32 %v2019, %v2020
        %2039 = vadd.xlane.f32.xlu0 %v2038
        %v2040 = vpop.xlane.xlu0 %2039
        %v2041 = vadd.f32 %v2021, %v2022
        %2042 = vadd.xlane.f32.xlu0 %v2041
        %v2043 = vpop.xlane.xlu0 %2042
        %v2044 = vadd.f32 %v2023, %v2024
        %2045 = vadd.xlane.f32.xlu0 %v2044
        %v2046 = vpop.xlane.xlu0 %2045
        %v2047 = vadd.f32 %v2025, %v2026
        %2048 = vadd.xlane.f32.xlu0 %v2047
        %v2049 = vpop.xlane.xlu0 %2048
        %v2050 = vadd.f32 %v2027, %v2028
        %2051 = vadd.xlane.f32.xlu0 %v2050
        %v2052 = vpop.xlane.xlu0 %2051
        %v2053 = vrot.slane %v2031, 4
        %v2054 = vadd.f32 %v2031, %v2053
        %v2055 = vrot.slane %v2054, 2
        %v2056 = vadd.f32 %v2054, %v2055
        %v2057 = vrot.slane %v2056, 1
        %v2058 = vadd.f32 %v2056, %v2057
        %v2059 = vrot.slane %v2034, 4
        %v2060 = vadd.f32 %v2034, %v2059
        %v2061 = vrot.slane %v2060, 2
        %v2062 = vadd.f32 %v2060, %v2061
        %v2063 = vrot.slane %v2062, 1
        %v2064 = vadd.f32 %v2062, %v2063
        %v2065 = vrot.slane %v2037, 4
        %v2066 = vadd.f32 %v2037, %v2065
        %v2067 = vrot.slane %v2066, 2
        %v2068 = vadd.f32 %v2066, %v2067
        %v2069 = vrot.slane %v2068, 1
        %v2070 = vadd.f32 %v2068, %v2069
        %v2071 = vrot.slane %v2040, 4
        %v2072 = vadd.f32 %v2040, %v2071
        %v2073 = vrot.slane %v2072, 2
        %v2074 = vadd.f32 %v2072, %v2073
        %v2075 = vrot.slane %v2074, 1
        %v2076 = vadd.f32 %v2074, %v2075
        %v2077 = vrot.slane %v2043, 4
        %v2078 = vadd.f32 %v2043, %v2077
        %v2079 = vrot.slane %v2078, 2
        %v2080 = vadd.f32 %v2078, %v2079
        %v2081 = vrot.slane %v2080, 1
        %v2082 = vadd.f32 %v2080, %v2081
        %v2083 = vrot.slane %v2046, 4
        %v2084 = vadd.f32 %v2046, %v2083
        %v2085 = vrot.slane %v2084, 2
        %v2086 = vadd.f32 %v2084, %v2085
        %v2087 = vrot.slane %v2086, 1
        %v2088 = vadd.f32 %v2086, %v2087
        %v2089 = vrot.slane %v2049, 4
        %v2090 = vadd.f32 %v2049, %v2089
        %v2091 = vrot.slane %v2090, 2
        %v2092 = vadd.f32 %v2090, %v2091
        %v2093 = vrot.slane %v2092, 1
        %v2094 = vadd.f32 %v2092, %v2093
        %v2095 = vrot.slane %v2052, 4
        %v2096 = vadd.f32 %v2052, %v2095
        %v2097 = vrot.slane %v2096, 2
        %v2098 = vadd.f32 %v2096, %v2097
        %v2099 = vrot.slane %v2098, 1
        %v2100 = vadd.f32 %v2098, %v2099
        %v2101 = vmul.f32 %v1970, 0.00048828125
        %v2102 = vmul.f32 %v1976, 0.00048828125
        %v2103 = vmul.f32 %v1982, 0.00048828125
        %v2104 = vmul.f32 %v1988, 0.00048828125
        %v2105 = vmul.f32 %v1994, 0.00048828125
        %v2106 = vmul.f32 %v2000, 0.00048828125
        %v2107 = vmul.f32 %v2006, 0.00048828125
        %v2108 = vmul.f32 %v2012, 0.00048828125
        %v2109 = vmul.f32 %v2058, 0.00048828125
        %v2110 = vmul.f32 %v2064, 0.00048828125
        %v2111 = vmul.f32 %v2070, 0.00048828125
        %v2112 = vmul.f32 %v2076, 0.00048828125
        %v2113 = vmul.f32 %v2082, 0.00048828125
        %v2114 = vmul.f32 %v2088, 0.00048828125
        %v2115 = vmul.f32 %v2094, 0.00048828125
        %v2116 = vmul.f32 %v2100, 0.00048828125
        %v2117 = vmul.f32 %v2101, %v2101
        %v2118 = vmul.f32 %v2102, %v2102
        %v2119 = vmul.f32 %v2103, %v2103
        %v2120 = vmul.f32 %v2104, %v2104
        %v2121 = vmul.f32 %v2105, %v2105
        %v2122 = vmul.f32 %v2106, %v2106
        %v2123 = vmul.f32 %v2107, %v2107
        %v2124 = vmul.f32 %v2108, %v2108
        %v2125 = vsub.f32 %v2109, %v2117
        %v2126 = vsub.f32 %v2110, %v2118
        %v2127 = vsub.f32 %v2111, %v2119
        %v2128 = vsub.f32 %v2112, %v2120
        %v2129 = vsub.f32 %v2113, %v2121
        %v2130 = vsub.f32 %v2114, %v2122
        %v2131 = vsub.f32 %v2115, %v2123
        %v2132 = vsub.f32 %v2116, %v2124
        %v2133 = vsub.f32 %v1687, %v2101
        %v2134 = vsub.f32 %v1700, %v2101
        %v2135 = vsub.f32 %v1721, %v2102
        %v2136 = vsub.f32 %v1734, %v2102
        %v2137 = vsub.f32 %v1755, %v2103
        %v2138 = vsub.f32 %v1768, %v2103
        %v2139 = vsub.f32 %v1789, %v2104
        %v2140 = vsub.f32 %v1802, %v2104
        %v2141 = vsub.f32 %v1823, %v2105
        %v2142 = vsub.f32 %v1836, %v2105
        %v2143 = vsub.f32 %v1857, %v2106
        %v2144 = vsub.f32 %v1870, %v2106
        %v2145 = vsub.f32 %v1891, %v2107
        %v2146 = vsub.f32 %v1904, %v2107
        %v2147 = vsub.f32 %v1925, %v2108
        %v2148 = vsub.f32 %v1938, %v2108
        %v2149 = vadd.f32 %v2125, 1e-05
        %v2150 = vadd.f32 %v2126, 1e-05
        %v2151 = vadd.f32 %v2127, 1e-05
        %v2152 = vadd.f32 %v2128, 1e-05
        %v2153 = vadd.f32 %v2129, 1e-05
        %v2154 = vadd.f32 %v2130, 1e-05
        %v2155 = vadd.f32 %v2131, 1e-05
        %v2156 = vadd.f32 %v2132, 1e-05
        %v2157 = vrsqrt.pop %v2149
        %v2158 = vmul.f32 %v2157, %v2149
        %v2159 = vmul.f32 %v2158, %v2157
        %v2160 = vmul.f32 0.5, %v2159
        %v2161 = vsub.f32 1.5, %v2160
        %v2162 = vmul.f32 %v2157, %v2161
        %vm2163 = vweird.f32 %v2149
        %vm2164 = vweird.f32 %v2157
        %vm2165 = vmor %vm2163, %vm2164
        %v2166 = vsel %vm2165, %v2157, %v2162
        %v2167 = vrsqrt.pop %v2150
        %v2168 = vmul.f32 %v2167, %v2150
        %v2169 = vmul.f32 %v2168, %v2167
        %v2170 = vmul.f32 0.5, %v2169
        %v2171 = vsub.f32 1.5, %v2170
        %v2172 = vmul.f32 %v2167, %v2171
        %vm2173 = vweird.f32 %v2150
        %vm2174 = vweird.f32 %v2167
        %vm2175 = vmor %vm2173, %vm2174
        %v2176 = vsel %vm2175, %v2167, %v2172
        %v2177 = vrsqrt.pop %v2151
        %v2178 = vmul.f32 %v2177, %v2151
        %v2179 = vmul.f32 %v2178, %v2177
        %v2180 = vmul.f32 0.5, %v2179
        %v2181 = vsub.f32 1.5, %v2180
        %v2182 = vmul.f32 %v2177, %v2181
        %vm2183 = vweird.f32 %v2151
        %vm2184 = vweird.f32 %v2177
        %vm2185 = vmor %vm2183, %vm2184
        %v2186 = vsel %vm2185, %v2177, %v2182
        %v2187 = vrsqrt.pop %v2152
        %v2188 = vmul.f32 %v2187, %v2152
        %v2189 = vmul.f32 %v2188, %v2187
        %v2190 = vmul.f32 0.5, %v2189
        %v2191 = vsub.f32 1.5, %v2190
        %v2192 = vmul.f32 %v2187, %v2191
        %vm2193 = vweird.f32 %v2152
        %vm2194 = vweird.f32 %v2187
        %vm2195 = vmor %vm2193, %vm2194
        %v2196 = vsel %vm2195, %v2187, %v2192
        %v2197 = vrsqrt.pop %v2153
        %v2198 = vmul.f32 %v2197, %v2153
        %v2199 = vmul.f32 %v2198, %v2197
        %v2200 = vmul.f32 0.5, %v2199
        %v2201 = vsub.f32 1.5, %v2200
        %v2202 = vmul.f32 %v2197, %v2201
        %vm2203 = vweird.f32 %v2153
        %vm2204 = vweird.f32 %v2197
        %vm2205 = vmor %vm2203, %vm2204
        %v2206 = vsel %vm2205, %v2197, %v2202
        %v2207 = vrsqrt.pop %v2154
        %v2208 = vmul.f32 %v2207, %v2154
        %v2209 = vmul.f32 %v2208, %v2207
        %v2210 = vmul.f32 0.5, %v2209
        %v2211 = vsub.f32 1.5, %v2210
        %v2212 = vmul.f32 %v2207, %v2211
        %vm2213 = vweird.f32 %v2154
        %vm2214 = vweird.f32 %v2207
        %vm2215 = vmor %vm2213, %vm2214
        %v2216 = vsel %vm2215, %v2207, %v2212
        %v2217 = vrsqrt.pop %v2155
        %v2218 = vmul.f32 %v2217, %v2155
        %v2219 = vmul.f32 %v2218, %v2217
        %v2220 = vmul.f32 0.5, %v2219
        %v2221 = vsub.f32 1.5, %v2220
        %v2222 = vmul.f32 %v2217, %v2221
        %vm2223 = vweird.f32 %v2155
        %vm2224 = vweird.f32 %v2217
        %vm2225 = vmor %vm2223, %vm2224
        %v2226 = vsel %vm2225, %v2217, %v2222
        %v2227 = vrsqrt.pop %v2156
        %v2228 = vmul.f32 %v2227, %v2156
        %v2229 = vmul.f32 %v2228, %v2227
        %v2230 = vmul.f32 0.5, %v2229
        %v2231 = vsub.f32 1.5, %v2230
        %v2232 = vmul.f32 %v2227, %v2231
        %vm2233 = vweird.f32 %v2156
        %vm2234 = vweird.f32 %v2227
        %vm2235 = vmor %vm2233, %vm2234
        %v2236 = vsel %vm2235, %v2227, %v2232
        %v2237 = vmul.f32 %v2133, %v2166
        %v2238 = vmul.f32 %v2134, %v2166
        %v2239 = vmul.f32 %v2135, %v2176
        %v2240 = vmul.f32 %v2136, %v2176
        %v2241 = vmul.f32 %v2137, %v2186
        %v2242 = vmul.f32 %v2138, %v2186
        %v2243 = vmul.f32 %v2139, %v2196
        %v2244 = vmul.f32 %v2140, %v2196
        %v2245 = vmul.f32 %v2141, %v2206
        %v2246 = vmul.f32 %v2142, %v2206
        %v2247 = vmul.f32 %v2143, %v2216
        %v2248 = vmul.f32 %v2144, %v2216
        %v2249 = vmul.f32 %v2145, %v2226
        %v2250 = vmul.f32 %v2146, %v2226
        %v2251 = vmul.f32 %v2147, %v2236
        %v2252 = vmul.f32 %v2148, %v2236
        %2253 = vset.pattern.permute.xlu0 4
        %2254 = vperm.xlu0 %2253, %v774
        %v2255 = vpop.permute.xlu0 %2254
        %v2257 = vmul.f32 %v2237, %v2255
        %v2258 = vmul.f32 %v2238, %v2255
        %v2259 = vmul.f32 %v2239, %v2255
        %v2260 = vmul.f32 %v2240, %v2255
        %v2261 = vmul.f32 %v2241, %v2255
        %v2262 = vmul.f32 %v2242, %v2255
        %v2263 = vmul.f32 %v2243, %v2255
        %v2264 = vmul.f32 %v2244, %v2255
        %v2265 = vmul.f32 %v2245, %v2255
        %v2266 = vmul.f32 %v2246, %v2255
        %v2267 = vmul.f32 %v2247, %v2255
        %v2268 = vmul.f32 %v2248, %v2255
        %v2269 = vmul.f32 %v2249, %v2255
        %v2270 = vmul.f32 %v2250, %v2255
        %v2271 = vmul.f32 %v2251, %v2255
        %v2272 = vmul.f32 %v2252, %v2255
        %2273 = vset.pattern.permute.xlu0 5
        %2274 = vperm.xlu0 %2273, %v774
        %v2275 = vpop.permute.xlu0 %2274
        %v2277 = vadd.f32 %v2257, %v2275
        %v2278 = vadd.f32 %v2258, %v2275
        %v2279 = vadd.f32 %v2259, %v2275
        %v2280 = vadd.f32 %v2260, %v2275
        %v2281 = vadd.f32 %v2261, %v2275
        %v2282 = vadd.f32 %v2262, %v2275
        %v2283 = vadd.f32 %v2263, %v2275
        %v2284 = vadd.f32 %v2264, %v2275
        %v2285 = vadd.f32 %v2265, %v2275
        %v2286 = vadd.f32 %v2266, %v2275
        %v2287 = vadd.f32 %v2267, %v2275
        %v2288 = vadd.f32 %v2268, %v2275
        %v2289 = vadd.f32 %v2269, %v2275
        %v2290 = vadd.f32 %v2270, %v2275
        %v2291 = vadd.f32 %v2271, %v2275
        %v2292 = vadd.f32 %v2272, %v2275
        %v2293 = vrot.slane %v1347, 4
        %vm2294 = vcmask 1047556
        %v2295 = vsel %vm2294, %v2293, %v1345
        %v2297 = vunpack.c.l.s4 1983009808
        %v2298 = vunpack.c.0.s8 %v2297
        %v2299 = vperm.slane %v2295, %v2298
        %v2300 = vrot.slane %v1348, 4
        %v2301 = vsel %vm2294, %v2300, %v1346
        %v2303 = vunpack.c.l.s4 1983009808
        %v2304 = vunpack.c.0.s8 %v2303
        %v2305 = vperm.slane %v2301, %v2304
        %v2306 = vrot.slane %v1351, 4
        %v2307 = vsel %vm2294, %v2306, %v1349
        %v2309 = vunpack.c.l.s4 1983009808
        %v2310 = vunpack.c.0.s8 %v2309
        %v2311 = vperm.slane %v2307, %v2310
        %v2312 = vrot.slane %v1352, 4
        %v2313 = vsel %vm2294, %v2312, %v1350
        %v2315 = vunpack.c.l.s4 1983009808
        %v2316 = vunpack.c.0.s8 %v2315
        %v2317 = vperm.slane %v2313, %v2316
        %v2318 = vrot.slane %v2305, 4
        %v2319 = vsel %vm2294, %v2318, %v2299
        %v2320 = vrot.slane %v2299, 4
        %v2321 = vsel %vm2294, %v2305, %v2320
        %v2323 = vunpack.c.l.s4 1934713408
        %v2324 = vunpack.c.0.s8 %v2323
        %v2325 = vperm.slane %v2319, %v2324
        %v2327 = vunpack.c.l.s4 1934713408
        %v2328 = vunpack.c.0.s8 %v2327
        %v2329 = vperm.slane %v2321, %v2328
        %v2330 = vrot.slane %v2317, 4
        %v2331 = vsel %vm2294, %v2330, %v2311
        %v2332 = vrot.slane %v2311, 4
        %v2333 = vsel %vm2294, %v2317, %v2332
        %v2335 = vunpack.c.l.s4 1934713408
        %v2336 = vunpack.c.0.s8 %v2335
        %v2337 = vperm.slane %v2331, %v2336
        %v2339 = vunpack.c.l.s4 1934713408
        %v2340 = vunpack.c.0.s8 %v2339
        %v2341 = vperm.slane %v2333, %v2340
        %v2342 = vrot.slane %v2337, 4
        %v2343 = vsel %vm2294, %v2342, %v2325
        %v2344 = vrot.slane %v2325, 4
        %v2345 = vsel %vm2294, %v2337, %v2344
        %v2346 = vrot.slane %v2341, 4
        %v2347 = vsel %vm2294, %v2346, %v2329
        %v2348 = vrot.slane %v2329, 4
        %v2349 = vsel %vm2294, %v2341, %v2348
        %2351 = vrot.lane.b32.xlu0 %v2345, 16
        %v2352 = vpop.permute.xlu0 %2351
        %2355 = vrot.lane.b32.xlu0 %v2347, 32
        %v2356 = vpop.permute.xlu0 %2355
        %2359 = vrot.lane.b32.xlu0 %v2349, 48
        %v2360 = vpop.permute.xlu0 %2359
        %v2362 = vsel %vm1039, %v2343, %v2352
        %vm2363 = vcmask 261120
        %v2364 = vsel %vm2363, %v2362, %v2356
        %vm2365 = vcmask 392192
        %v2366 = vsel %vm2365, %v2364, %v2360
        %v2367 = vrot.slane %v1659, 4
        %v2368 = vsel %vm2294, %v2367, %v1657
        %v2370 = vunpack.c.l.s4 1983009808
        %v2371 = vunpack.c.0.s8 %v2370
        %v2372 = vperm.slane %v2368, %v2371
        %v2373 = vrot.slane %v1660, 4
        %v2374 = vsel %vm2294, %v2373, %v1658
        %v2376 = vunpack.c.l.s4 1983009808
        %v2377 = vunpack.c.0.s8 %v2376
        %v2378 = vperm.slane %v2374, %v2377
        %v2379 = vrot.slane %v1663, 4
        %v2380 = vsel %vm2294, %v2379, %v1661
        %v2382 = vunpack.c.l.s4 1983009808
        %v2383 = vunpack.c.0.s8 %v2382
        %v2384 = vperm.slane %v2380, %v2383
        %v2385 = vrot.slane %v1664, 4
        %v2386 = vsel %vm2294, %v2385, %v1662
        %v2388 = vunpack.c.l.s4 1983009808
        %v2389 = vunpack.c.0.s8 %v2388
        %v2390 = vperm.slane %v2386, %v2389
        %v2391 = vrot.slane %v2378, 4
        %v2392 = vsel %vm2294, %v2391, %v2372
        %v2393 = vrot.slane %v2372, 4
        %v2394 = vsel %vm2294, %v2378, %v2393
        %v2396 = vunpack.c.l.s4 1934713408
        %v2397 = vunpack.c.0.s8 %v2396
        %v2398 = vperm.slane %v2392, %v2397
        %v2400 = vunpack.c.l.s4 1934713408
        %v2401 = vunpack.c.0.s8 %v2400
        %v2402 = vperm.slane %v2394, %v2401
        %v2403 = vrot.slane %v2390, 4
        %v2404 = vsel %vm2294, %v2403, %v2384
        %v2405 = vrot.slane %v2384, 4
        %v2406 = vsel %vm2294, %v2390, %v2405
        %v2408 = vunpack.c.l.s4 1934713408
        %v2409 = vunpack.c.0.s8 %v2408
        %v2410 = vperm.slane %v2404, %v2409
        %v2412 = vunpack.c.l.s4 1934713408
        %v2413 = vunpack.c.0.s8 %v2412
        %v2414 = vperm.slane %v2406, %v2413
        %v2415 = vrot.slane %v2410, 4
        %v2416 = vsel %vm2294, %v2415, %v2398
        %v2417 = vrot.slane %v2398, 4
        %v2418 = vsel %vm2294, %v2410, %v2417
        %v2419 = vrot.slane %v2414, 4
        %v2420 = vsel %vm2294, %v2419, %v2402
        %v2421 = vrot.slane %v2402, 4
        %v2422 = vsel %vm2294, %v2414, %v2421
        %2424 = vrot.lane.b32.xlu0 %v2418, 16
        %v2425 = vpop.permute.xlu0 %2424
        %2428 = vrot.lane.b32.xlu0 %v2420, 32
        %v2429 = vpop.permute.xlu0 %2428
        %2432 = vrot.lane.b32.xlu0 %v2422, 48
        %v2433 = vpop.permute.xlu0 %2432
        %v2435 = vsel %vm1039, %v2416, %v2425
        %v2436 = vsel %vm2363, %v2435, %v2429
        %v2437 = vsel %vm2365, %v2436, %v2433
        %v2454 = vrot.slane %v2278, 4
        %v2455 = vrot.slane %v2280, 4
        %v2456 = vrot.slane %v2282, 4
        %v2457 = vrot.slane %v2284, 4
        %v2458 = vrot.slane %v2286, 4
        %v2459 = vrot.slane %v2288, 4
        %v2460 = vrot.slane %v2290, 4
        %v2461 = vrot.slane %v2292, 4
        %v2462 = vsel %vm895, %v2277, %v2454
        %v2463 = vsel %vm895, %v2279, %v2455
        %v2464 = vsel %vm895, %v2281, %v2456
        %v2465 = vsel %vm895, %v2283, %v2457
        %v2466 = vsel %vm895, %v2285, %v2458
        %v2467 = vsel %vm895, %v2287, %v2459
        %v2468 = vsel %vm895, %v2289, %v2460
        %v2469 = vsel %vm895, %v2291, %v2461
        %v2478 = vrot.slane %v2464, 4
        %v2479 = vsel %vm2294, %v2478, %v2462
        %v2480 = vrot.slane %v2462, 4
        %v2481 = vsel %vm2294, %v2464, %v2480
        %v2483 = vunpack.c.l.s4 1983009808
        %v2484 = vunpack.c.0.s8 %v2483
        %v2485 = vperm.slane %v2479, %v2484
        %v2487 = vunpack.c.l.s4 1983009808
        %v2488 = vunpack.c.0.s8 %v2487
        %v2489 = vperm.slane %v2481, %v2488
        %v2490 = vrot.slane %v2465, 4
        %v2491 = vsel %vm2294, %v2490, %v2463
        %v2492 = vrot.slane %v2463, 4
        %v2493 = vsel %vm2294, %v2465, %v2492
        %v2495 = vunpack.c.l.s4 1983009808
        %v2496 = vunpack.c.0.s8 %v2495
        %v2497 = vperm.slane %v2491, %v2496
        %v2499 = vunpack.c.l.s4 1983009808
        %v2500 = vunpack.c.0.s8 %v2499
        %v2501 = vperm.slane %v2493, %v2500
        %v2502 = vrot.slane %v2497, 4
        %v2503 = vsel %vm2294, %v2502, %v2485
        %v2504 = vrot.slane %v2485, 4
        %v2505 = vsel %vm2294, %v2497, %v2504
        %v2507 = vunpack.c.l.s4 1934713408
        %v2508 = vunpack.c.0.s8 %v2507
        %v2509 = vperm.slane %v2503, %v2508
        %v2511 = vunpack.c.l.s4 1934713408
        %v2512 = vunpack.c.0.s8 %v2511
        %v2513 = vperm.slane %v2505, %v2512
        %v2514 = vrot.slane %v2501, 4
        %v2515 = vsel %vm2294, %v2514, %v2489
        %v2516 = vrot.slane %v2489, 4
        %v2517 = vsel %vm2294, %v2501, %v2516
        %v2519 = vunpack.c.l.s4 1934713408
        %v2520 = vunpack.c.0.s8 %v2519
        %v2521 = vperm.slane %v2515, %v2520
        %v2523 = vunpack.c.l.s4 1934713408
        %v2524 = vunpack.c.0.s8 %v2523
        %v2525 = vperm.slane %v2517, %v2524
        %v2526 = vrot.slane %v2521, 4
        %v2527 = vsel %vm2294, %v2526, %v2509
        %v2528 = vrot.slane %v2509, 4
        %v2529 = vsel %vm2294, %v2521, %v2528
        %v2530 = vrot.slane %v2525, 4
        %v2531 = vsel %vm2294, %v2530, %v2513
        %v2532 = vrot.slane %v2513, 4
        %v2533 = vsel %vm2294, %v2525, %v2532
        %v2534 = vrot.slane %v2468, 4
        %v2535 = vsel %vm2294, %v2534, %v2466
        %v2536 = vrot.slane %v2466, 4
        %v2537 = vsel %vm2294, %v2468, %v2536
        %v2539 = vunpack.c.l.s4 1983009808
        %v2540 = vunpack.c.0.s8 %v2539
        %v2541 = vperm.slane %v2535, %v2540
        %v2543 = vunpack.c.l.s4 1983009808
        %v2544 = vunpack.c.0.s8 %v2543
        %v2545 = vperm.slane %v2537, %v2544
        %v2546 = vrot.slane %v2469, 4
        %v2547 = vsel %vm2294, %v2546, %v2467
        %v2548 = vrot.slane %v2467, 4
        %v2549 = vsel %vm2294, %v2469, %v2548
        %v2551 = vunpack.c.l.s4 1983009808
        %v2552 = vunpack.c.0.s8 %v2551
        %v2553 = vperm.slane %v2547, %v2552
        %v2555 = vunpack.c.l.s4 1983009808
        %v2556 = vunpack.c.0.s8 %v2555
        %v2557 = vperm.slane %v2549, %v2556
        %v2558 = vrot.slane %v2553, 4
        %v2559 = vsel %vm2294, %v2558, %v2541
        %v2560 = vrot.slane %v2541, 4
        %v2561 = vsel %vm2294, %v2553, %v2560
        %v2563 = vunpack.c.l.s4 1934713408
        %v2564 = vunpack.c.0.s8 %v2563
        %v2565 = vperm.slane %v2559, %v2564
        %v2567 = vunpack.c.l.s4 1934713408
        %v2568 = vunpack.c.0.s8 %v2567
        %v2569 = vperm.slane %v2561, %v2568
        %v2570 = vrot.slane %v2557, 4
        %v2571 = vsel %vm2294, %v2570, %v2545
        %v2572 = vrot.slane %v2545, 4
        %v2573 = vsel %vm2294, %v2557, %v2572
        %v2575 = vunpack.c.l.s4 1934713408
        %v2576 = vunpack.c.0.s8 %v2575
        %v2577 = vperm.slane %v2571, %v2576
        %v2579 = vunpack.c.l.s4 1934713408
        %v2580 = vunpack.c.0.s8 %v2579
        %v2581 = vperm.slane %v2573, %v2580
        %v2582 = vrot.slane %v2577, 4
        %v2583 = vsel %vm2294, %v2582, %v2565
        %v2584 = vrot.slane %v2565, 4
        %v2585 = vsel %vm2294, %v2577, %v2584
        %v2586 = vrot.slane %v2581, 4
        %v2587 = vsel %vm2294, %v2586, %v2569
        %v2588 = vrot.slane %v2569, 4
        %v2589 = vsel %vm2294, %v2581, %v2588
        %2592 = vst [vmem:[#allocation1] ss:$2 sm:$0xff] %v2527
        %s2593 = scalar_lea.vmem [#allocation1], 1
        %2594 = vst [vmem:[%s2593] ss:$2 sm:$0xff] %v2583
        %v2595 = vld.sshfl [vmem:[#allocation1] sm:$0xff pattern:$0x75316420]
        %v2596 = vld.sshfl [vmem:[#allocation1 + $0x8] sm:$0xff pattern:$0x75316420]
        %2601 = vst [vmem:[#allocation1] ss:$2 sm:$0xff] %v2529
        %s2602 = scalar_lea.vmem [#allocation1], 1
        %2603 = vst [vmem:[%s2602] ss:$2 sm:$0xff] %v2585
        %v2604 = vld.sshfl [vmem:[#allocation1] sm:$0xff pattern:$0x75316420]
        %v2605 = vld.sshfl [vmem:[#allocation1 + $0x8] sm:$0xff pattern:$0x75316420]
        %2610 = vst [vmem:[#allocation1] ss:$2 sm:$0xff] %v2531
        %s2611 = scalar_lea.vmem [#allocation1], 1
        %2612 = vst [vmem:[%s2611] ss:$2 sm:$0xff] %v2587
        %v2613 = vld.sshfl [vmem:[#allocation1] sm:$0xff pattern:$0x75316420]
        %v2614 = vld.sshfl [vmem:[#allocation1 + $0x8] sm:$0xff pattern:$0x75316420]
        %2619 = vst [vmem:[#allocation1] ss:$2 sm:$0xff] %v2533
        %s2620 = scalar_lea.vmem [#allocation1], 1
        %2621 = vst [vmem:[%s2620] ss:$2 sm:$0xff] %v2589
        %v2622 = vld.sshfl [vmem:[#allocation1] sm:$0xff pattern:$0x75316420]
        %v2623 = vld.sshfl [vmem:[#allocation1 + $0x8] sm:$0xff pattern:$0x75316420]
        %v2626 = vpack.c.bf16 %v2366, %v2366
        %v2627 = vpack.c.bf16 %v2437, %v2437
        %vm2628 = vcmask 523264
        %v2630 = vsel %vm2628, %v2626, 0
        %v2633 = vsel %vm2628, %v2627, 0
        %2635 = vmatpush.bf16.xpose.msra.mxu0 0
        %2636 = vmatpush.bf16.xpose.msra.mxu0 0
        %2637 = vmatpush.bf16.xpose.msra.mxu0 0
        %2638 = vmatpush.bf16.xpose.msra.mxu0 0
        %2639 = vmatpush.bf16.xpose.msra.mxu0 0
        %2640 = vmatpush.bf16.xpose.msra.mxu0 0
        %2641 = vmatpush.bf16.xpose.msra.mxu0 0
        %2642 = vmatpush.bf16.xpose.msra.mxu0 %v2633
        %2643 = vmatmul.bf16.gmra.mxu0 %v2630
        %v2644 = vpop.f32.mrf.mxu0
        %v2645 = vadd.f32 0.0, %v2644
        %v2646 = vpop.f32.mrf.mxu0
        %2647 = vdwg.mxu0
        %v2648 = vsel %vm891, %v2645, -inf
        %2649 = vmax.xlane.f32.xlu0 %v2648
        %v2650 = vpop.xlane.xlu0 %2649
        %v2651 = vsub.f32 %v2645, %v2650
        %v2652 = vmul.f32 %v2651, 1.442695
        %v2653 = vpow.pop %v2652
        %v2654 = vsel %vm891, %v2653, 0.0
        %2655 = vadd.xlane.f32.xlu0 %v2654
        %v2656 = vpop.xlane.xlu0 %2655
        %v2657 = vrcp.pop %v2656
        %v2658 = vmul.f32 %v2653, %v2657
        %v2659 = vpack.c.bf16 %v2658, %v2658
        %v2660 = vpack.c.bf16 %v2595, %v2595
        %v2661 = vpack.c.bf16 %v2596, %v2596
        %v2662 = vpack.c.bf16 %v2604, %v2604
        %v2663 = vpack.c.bf16 %v2605, %v2605
        %v2664 = vpack.c.bf16 %v2613, %v2613
        %v2665 = vpack.c.bf16 %v2614, %v2614
        %v2666 = vpack.c.bf16 %v2622, %v2622
        %v2667 = vpack.c.bf16 %v2623, %v2623
        %v2669 = vsel %vm891, %v2659, 0
        %v2672 = vsel %vm895, %v2660, 0
        %v2675 = vsel %vm895, %v2661, 0
        %v2678 = vsel %vm895, %v2662, 0
        %v2681 = vsel %vm895, %v2663, 0
        %v2684 = vsel %vm895, %v2664, 0
        %v2687 = vsel %vm895, %v2665, 0
        %v2690 = vsel %vm895, %v2666, 0
        %v2693 = vsel %vm895, %v2667, 0
        %2695 = vmatpush.bf16.msra.mxu0 0
        %2696 = vmatpush.bf16.msra.mxu0 0
        %2697 = vmatpush.bf16.msra.mxu0 0
        %2698 = vmatpush.bf16.msra.mxu0 0
        %2699 = vmatpush.bf16.msra.mxu0 0
        %2700 = vmatpush.bf16.msra.mxu0 0
        %2701 = vmatpush.bf16.msra.mxu0 0
        %2702 = vmatpush.bf16.msra.mxu0 %v2672
        %2703 = vmatmul.bf16.gmra.mxu0 %v2669
        %v2704 = vpop.f32.mrf.mxu0
        %v2705 = vadd.f32 0.0, %v2704
        %v2706 = vpop.f32.mrf.mxu0
        %2707 = vdwg.mxu0
        %2708 = vmatpush.bf16.msra.mxu0 0
        %2709 = vmatpush.bf16.msra.mxu0 0
        %2710 = vmatpush.bf16.msra.mxu0 0
        %2711 = vmatpush.bf16.msra.mxu0 0
        %2712 = vmatpush.bf16.msra.mxu0 0
        %2713 = vmatpush.bf16.msra.mxu0 0
        %2714 = vmatpush.bf16.msra.mxu0 0
        %2715 = vmatpush.bf16.msra.mxu0 %v2675
        %2716 = vmatmul.bf16.gmra.mxu0 %v2669
        %v2717 = vpop.f32.mrf.mxu0
        %v2718 = vadd.f32 0.0, %v2717
        %v2719 = vpop.f32.mrf.mxu0
        %2720 = vdwg.mxu0
        %2721 = vmatpush.bf16.msra.mxu0 0
        %2722 = vmatpush.bf16.msra.mxu0 0
        %2723 = vmatpush.bf16.msra.mxu0 0
        %2724 = vmatpush.bf16.msra.mxu0 0
        %2725 = vmatpush.bf16.msra.mxu0 0
        %2726 = vmatpush.bf16.msra.mxu0 0
        %2727 = vmatpush.bf16.msra.mxu0 0
        %2728 = vmatpush.bf16.msra.mxu0 %v2678
        %2729 = vmatmul.bf16.gmra.mxu0 %v2669
        %v2730 = vpop.f32.mrf.mxu0
        %v2731 = vadd.f32 0.0, %v2730
        %v2732 = vpop.f32.mrf.mxu0
        %2733 = vdwg.mxu0
        %2734 = vmatpush.bf16.msra.mxu0 0
        %2735 = vmatpush.bf16.msra.mxu0 0
        %2736 = vmatpush.bf16.msra.mxu0 0
        %2737 = vmatpush.bf16.msra.mxu0 0
        %2738 = vmatpush.bf16.msra.mxu0 0
        %2739 = vmatpush.bf16.msra.mxu0 0
        %2740 = vmatpush.bf16.msra.mxu0 0
        %2741 = vmatpush.bf16.msra.mxu0 %v2681
        %2742 = vmatmul.bf16.gmra.mxu0 %v2669
        %v2743 = vpop.f32.mrf.mxu0
        %v2744 = vadd.f32 0.0, %v2743
        %v2745 = vpop.f32.mrf.mxu0
        %2746 = vdwg.mxu0
        %2747 = vmatpush.bf16.msra.mxu0 0
        %2748 = vmatpush.bf16.msra.mxu0 0
        %2749 = vmatpush.bf16.msra.mxu0 0
        %2750 = vmatpush.bf16.msra.mxu0 0
        %2751 = vmatpush.bf16.msra.mxu0 0
        %2752 = vmatpush.bf16.msra.mxu0 0
        %2753 = vmatpush.bf16.msra.mxu0 0
        %2754 = vmatpush.bf16.msra.mxu0 %v2684
        %2755 = vmatmul.bf16.gmra.mxu0 %v2669
        %v2756 = vpop.f32.mrf.mxu0
        %v2757 = vadd.f32 0.0, %v2756
        %v2758 = vpop.f32.mrf.mxu0
        %2759 = vdwg.mxu0
        %2760 = vmatpush.bf16.msra.mxu0 0
        %2761 = vmatpush.bf16.msra.mxu0 0
        %2762 = vmatpush.bf16.msra.mxu0 0
        %2763 = vmatpush.bf16.msra.mxu0 0
        %2764 = vmatpush.bf16.msra.mxu0 0
        %2765 = vmatpush.bf16.msra.mxu0 0
        %2766 = vmatpush.bf16.msra.mxu0 0
        %2767 = vmatpush.bf16.msra.mxu0 %v2687
        %2768 = vmatmul.bf16.gmra.mxu0 %v2669
        %v2769 = vpop.f32.mrf.mxu0
        %v2770 = vadd.f32 0.0, %v2769
        %v2771 = vpop.f32.mrf.mxu0
        %2772 = vdwg.mxu0
        %2773 = vmatpush.bf16.msra.mxu0 0
        %2774 = vmatpush.bf16.msra.mxu0 0
        %2775 = vmatpush.bf16.msra.mxu0 0
        %2776 = vmatpush.bf16.msra.mxu0 0
        %2777 = vmatpush.bf16.msra.mxu0 0
        %2778 = vmatpush.bf16.msra.mxu0 0
        %2779 = vmatpush.bf16.msra.mxu0 0
        %2780 = vmatpush.bf16.msra.mxu0 %v2690
        %2781 = vmatmul.bf16.gmra.mxu0 %v2669
        %v2782 = vpop.f32.mrf.mxu0
        %v2783 = vadd.f32 0.0, %v2782
        %v2784 = vpop.f32.mrf.mxu0
        %2785 = vdwg.mxu0
        %2786 = vmatpush.bf16.msra.mxu0 0
        %2787 = vmatpush.bf16.msra.mxu0 0
        %2788 = vmatpush.bf16.msra.mxu0 0
        %2789 = vmatpush.bf16.msra.mxu0 0
        %2790 = vmatpush.bf16.msra.mxu0 0
        %2791 = vmatpush.bf16.msra.mxu0 0
        %2792 = vmatpush.bf16.msra.mxu0 0
        %2793 = vmatpush.bf16.msra.mxu0 %v2693
        %2794 = vmatmul.bf16.gmra.mxu0 %v2669
        %v2795 = vpop.f32.mrf.mxu0
        %v2796 = vadd.f32 0.0, %v2795
        %v2797 = vpop.f32.mrf.mxu0
        %2798 = vdwg.mxu0
        %v2807 = vrot.slane %v2718, 4
        %v2808 = vrot.slane %v2744, 4
        %v2809 = vrot.slane %v2770, 4
        %v2810 = vrot.slane %v2796, 4
        %v2811 = vsel %vm895, %v2705, %v2807
        %v2812 = vsel %vm895, %v2807, %v2705
        %v2813 = vrot.slane %v2812, 4
        %v2814 = vsel %vm895, %v2731, %v2808
        %v2815 = vsel %vm895, %v2808, %v2731
        %v2816 = vrot.slane %v2815, 4
        %v2817 = vsel %vm895, %v2757, %v2809
        %v2818 = vsel %vm895, %v2809, %v2757
        %v2819 = vrot.slane %v2818, 4
        %v2820 = vsel %vm895, %v2783, %v2810
        %v2821 = vsel %vm895, %v2810, %v2783
        %v2822 = vrot.slane %v2821, 4
        %v2831 = vrot.slane %v2817, 4
        %v2832 = vsel %vm2294, %v2831, %v2811
        %v2833 = vrot.slane %v2811, 4
        %v2834 = vsel %vm2294, %v2817, %v2833
        %v2836 = vunpack.c.l.s4 1983009808
        %v2837 = vunpack.c.0.s8 %v2836
        %v2838 = vperm.slane %v2832, %v2837
        %v2840 = vunpack.c.l.s4 1983009808
        %v2841 = vunpack.c.0.s8 %v2840
        %v2842 = vperm.slane %v2834, %v2841
        %v2843 = vrot.slane %v2820, 4
        %v2844 = vsel %vm2294, %v2843, %v2814
        %v2845 = vrot.slane %v2814, 4
        %v2846 = vsel %vm2294, %v2820, %v2845
        %v2848 = vunpack.c.l.s4 1983009808
        %v2849 = vunpack.c.0.s8 %v2848
        %v2850 = vperm.slane %v2844, %v2849
        %v2852 = vunpack.c.l.s4 1983009808
        %v2853 = vunpack.c.0.s8 %v2852
        %v2854 = vperm.slane %v2846, %v2853
        %v2855 = vrot.slane %v2850, 4
        %v2856 = vsel %vm2294, %v2855, %v2838
        %v2857 = vrot.slane %v2838, 4
        %v2858 = vsel %vm2294, %v2850, %v2857
        %v2860 = vunpack.c.l.s4 1934713408
        %v2861 = vunpack.c.0.s8 %v2860
        %v2862 = vperm.slane %v2856, %v2861
        %v2864 = vunpack.c.l.s4 1934713408
        %v2865 = vunpack.c.0.s8 %v2864
        %v2866 = vperm.slane %v2858, %v2865
        %v2867 = vrot.slane %v2854, 4
        %v2868 = vsel %vm2294, %v2867, %v2842
        %v2869 = vrot.slane %v2842, 4
        %v2870 = vsel %vm2294, %v2854, %v2869
        %v2872 = vunpack.c.l.s4 1934713408
        %v2873 = vunpack.c.0.s8 %v2872
        %v2874 = vperm.slane %v2868, %v2873
        %v2876 = vunpack.c.l.s4 1934713408
        %v2877 = vunpack.c.0.s8 %v2876
        %v2878 = vperm.slane %v2870, %v2877
        %v2879 = vrot.slane %v2874, 4
        %v2880 = vsel %vm2294, %v2879, %v2862
        %v2881 = vrot.slane %v2862, 4
        %v2882 = vsel %vm2294, %v2874, %v2881
        %v2883 = vrot.slane %v2878, 4
        %v2884 = vsel %vm2294, %v2883, %v2866
        %v2885 = vrot.slane %v2866, 4
        %v2886 = vsel %vm2294, %v2878, %v2885
        %v2887 = vrot.slane %v2819, 4
        %v2888 = vsel %vm2294, %v2887, %v2813
        %v2889 = vrot.slane %v2813, 4
        %v2890 = vsel %vm2294, %v2819, %v2889
        %v2892 = vunpack.c.l.s4 1983009808
        %v2893 = vunpack.c.0.s8 %v2892
        %v2894 = vperm.slane %v2888, %v2893
        %v2896 = vunpack.c.l.s4 1983009808
        %v2897 = vunpack.c.0.s8 %v2896
        %v2898 = vperm.slane %v2890, %v2897
        %v2899 = vrot.slane %v2822, 4
        %v2900 = vsel %vm2294, %v2899, %v2816
        %v2901 = vrot.slane %v2816, 4
        %v2902 = vsel %vm2294, %v2822, %v2901
        %v2904 = vunpack.c.l.s4 1983009808
        %v2905 = vunpack.c.0.s8 %v2904
        %v2906 = vperm.slane %v2900, %v2905
        %v2908 = vunpack.c.l.s4 1983009808
        %v2909 = vunpack.c.0.s8 %v2908
        %v2910 = vperm.slane %v2902, %v2909
        %v2911 = vrot.slane %v2906, 4
        %v2912 = vsel %vm2294, %v2911, %v2894
        %v2913 = vrot.slane %v2894, 4
        %v2914 = vsel %vm2294, %v2906, %v2913
        %v2916 = vunpack.c.l.s4 1934713408
        %v2917 = vunpack.c.0.s8 %v2916
        %v2918 = vperm.slane %v2912, %v2917
        %v2920 = vunpack.c.l.s4 1934713408
        %v2921 = vunpack.c.0.s8 %v2920
        %v2922 = vperm.slane %v2914, %v2921
        %v2923 = vrot.slane %v2910, 4
        %v2924 = vsel %vm2294, %v2923, %v2898
        %v2925 = vrot.slane %v2898, 4
        %v2926 = vsel %vm2294, %v2910, %v2925
        %v2928 = vunpack.c.l.s4 1934713408
        %v2929 = vunpack.c.0.s8 %v2928
        %v2930 = vperm.slane %v2924, %v2929
        %v2932 = vunpack.c.l.s4 1934713408
        %v2933 = vunpack.c.0.s8 %v2932
        %v2934 = vperm.slane %v2926, %v2933
        %v2935 = vrot.slane %v2930, 4
        %v2936 = vsel %vm2294, %v2935, %v2918
        %v2937 = vrot.slane %v2918, 4
        %v2938 = vsel %vm2294, %v2930, %v2937
        %v2939 = vrot.slane %v2934, 4
        %v2940 = vsel %vm2294, %v2939, %v2922
        %v2941 = vrot.slane %v2922, 4
        %v2942 = vsel %vm2294, %v2934, %v2941
        %v2943 = vpack.c.bf16 %v773, %v773
        %2945 = vst [vmem:[#allocation1] ss:$2 sm:$0xff] %v2880
        %v2946 = vld.sshfl [vmem:[#allocation1] sm:$0xff pattern:$0x75316420]
        %v2947 = vld.sshfl [vmem:[#allocation1 + $0x8] sm:$0xff pattern:$0x75316420]
        %v2950 = vpack.c.bf16 %v2946, %v2946
        %v2951 = vpack.c.bf16 %v2947, %v2947
        %vm2952 = vcmask 31744
        %v2954 = vsel %vm2952, %v2943, 0
        %vm2956 = vcmask 1041408
        %v2958 = vsel %vm2956, %v2950, 0
        %v2961 = vsel %vm2956, %v2951, 0
        %2963 = vmatpush.bf16.msra.mxu0 0
        %2964 = vmatpush.bf16.msra.mxu0 0
        %2965 = vmatpush.bf16.msra.mxu0 0
        %2966 = vmatpush.bf16.msra.mxu0 0
        %2967 = vmatpush.bf16.msra.mxu0 0
        %2968 = vmatpush.bf16.msra.mxu0 0
        %2969 = vmatpush.bf16.msra.mxu0 0
        %2970 = vmatpush.bf16.msra.mxu0 %v2958
        %2971 = vmatmul.bf16.gmra.mxu0 %v2954
        %v2972 = vpop.f32.mrf.mxu0
        %v2973 = vadd.f32 0.0, %v2972
        %v2974 = vpop.f32.mrf.mxu0
        %2975 = vdwg.mxu0
        %2976 = vmatpush.bf16.msra.mxu0 0
        %2977 = vmatpush.bf16.msra.mxu0 0
        %2978 = vmatpush.bf16.msra.mxu0 0
        %2979 = vmatpush.bf16.msra.mxu0 0
        %2980 = vmatpush.bf16.msra.mxu0 0
        %2981 = vmatpush.bf16.msra.mxu0 0
        %2982 = vmatpush.bf16.msra.mxu0 0
        %2983 = vmatpush.bf16.msra.mxu0 %v2961
        %2984 = vmatmul.bf16.gmra.mxu0 %v2954
        %v2985 = vpop.f32.mrf.mxu0
        %v2986 = vadd.f32 0.0, %v2985
        %v2987 = vpop.f32.mrf.mxu0
        %2988 = vdwg.mxu0
        %2990 = vst [vmem:[#allocation1] ss:$2 sm:$0xff] %v2882
        %v2991 = vld.sshfl [vmem:[#allocation1] sm:$0xff pattern:$0x75316420]
        %v2992 = vld.sshfl [vmem:[#allocation1 + $0x8] sm:$0xff pattern:$0x75316420]
        %v2995 = vpack.c.bf16 %v2991, %v2991
        %v2996 = vpack.c.bf16 %v2992, %v2992
        %v2998 = vsel %vm2956, %v2995, 0
        %v3001 = vsel %vm2956, %v2996, 0
        %3003 = vmatpush.bf16.msra.mxu0 0
        %3004 = vmatpush.bf16.msra.mxu0 0
        %3005 = vmatpush.bf16.msra.mxu0 0
        %3006 = vmatpush.bf16.msra.mxu0 0
        %3007 = vmatpush.bf16.msra.mxu0 0
        %3008 = vmatpush.bf16.msra.mxu0 0
        %3009 = vmatpush.bf16.msra.mxu0 0
        %3010 = vmatpush.bf16.msra.mxu0 %v2998
        %3011 = vmatmul.bf16.gmra.mxu0 %v2954
        %v3012 = vpop.f32.mrf.mxu0
        %v3013 = vadd.f32 0.0, %v3012
        %v3014 = vpop.f32.mrf.mxu0
        %3015 = vdwg.mxu0
        %3016 = vmatpush.bf16.msra.mxu0 0
        %3017 = vmatpush.bf16.msra.mxu0 0
        %3018 = vmatpush.bf16.msra.mxu0 0
        %3019 = vmatpush.bf16.msra.mxu0 0
        %3020 = vmatpush.bf16.msra.mxu0 0
        %3021 = vmatpush.bf16.msra.mxu0 0
        %3022 = vmatpush.bf16.msra.mxu0 0
        %3023 = vmatpush.bf16.msra.mxu0 %v3001
        %3024 = vmatmul.bf16.gmra.mxu0 %v2954
        %v3025 = vpop.f32.mrf.mxu0
        %v3026 = vadd.f32 0.0, %v3025
        %v3027 = vpop.f32.mrf.mxu0
        %3028 = vdwg.mxu0
        %3030 = vst [vmem:[#allocation1] ss:$2 sm:$0xff] %v2884
        %v3031 = vld.sshfl [vmem:[#allocation1] sm:$0xff pattern:$0x75316420]
        %v3032 = vld.sshfl [vmem:[#allocation1 + $0x8] sm:$0xff pattern:$0x75316420]
        %v3035 = vpack.c.bf16 %v3031, %v3031
        %v3036 = vpack.c.bf16 %v3032, %v3032
        %v3038 = vsel %vm2956, %v3035, 0
        %v3041 = vsel %vm2956, %v3036, 0
        %3043 = vmatpush.bf16.msra.mxu0 0
        %3044 = vmatpush.bf16.msra.mxu0 0
        %3045 = vmatpush.bf16.msra.mxu0 0
        %3046 = vmatpush.bf16.msra.mxu0 0
        %3047 = vmatpush.bf16.msra.mxu0 0
        %3048 = vmatpush.bf16.msra.mxu0 0
        %3049 = vmatpush.bf16.msra.mxu0 0
        %3050 = vmatpush.bf16.msra.mxu0 %v3038
        %3051 = vmatmul.bf16.gmra.mxu0 %v2954
        %v3052 = vpop.f32.mrf.mxu0
        %v3053 = vadd.f32 0.0, %v3052
        %v3054 = vpop.f32.mrf.mxu0
        %3055 = vdwg.mxu0
        %3056 = vmatpush.bf16.msra.mxu0 0
        %3057 = vmatpush.bf16.msra.mxu0 0
        %3058 = vmatpush.bf16.msra.mxu0 0
        %3059 = vmatpush.bf16.msra.mxu0 0
        %3060 = vmatpush.bf16.msra.mxu0 0
        %3061 = vmatpush.bf16.msra.mxu0 0
        %3062 = vmatpush.bf16.msra.mxu0 0
        %3063 = vmatpush.bf16.msra.mxu0 %v3041
        %3064 = vmatmul.bf16.gmra.mxu0 %v2954
        %v3065 = vpop.f32.mrf.mxu0
        %v3066 = vadd.f32 0.0, %v3065
        %v3067 = vpop.f32.mrf.mxu0
        %3068 = vdwg.mxu0
        %3070 = vst [vmem:[#allocation1] ss:$2 sm:$0xff] %v2886
        %v3071 = vld.sshfl [vmem:[#allocation1] sm:$0xff pattern:$0x75316420]
        %v3072 = vld.sshfl [vmem:[#allocation1 + $0x8] sm:$0xff pattern:$0x75316420]
        %v3075 = vpack.c.bf16 %v3071, %v3071
        %v3076 = vpack.c.bf16 %v3072, %v3072
        %v3078 = vsel %vm2956, %v3075, 0
        %v3081 = vsel %vm2956, %v3076, 0
        %3083 = vmatpush.bf16.msra.mxu0 0
        %3084 = vmatpush.bf16.msra.mxu0 0
        %3085 = vmatpush.bf16.msra.mxu0 0
        %3086 = vmatpush.bf16.msra.mxu0 0
        %3087 = vmatpush.bf16.msra.mxu0 0
        %3088 = vmatpush.bf16.msra.mxu0 0
        %3089 = vmatpush.bf16.msra.mxu0 0
        %3090 = vmatpush.bf16.msra.mxu0 %v3078
        %3091 = vmatmul.bf16.gmra.mxu0 %v2954
        %v3092 = vpop.f32.mrf.mxu0
        %v3093 = vadd.f32 0.0, %v3092
        %v3094 = vpop.f32.mrf.mxu0
        %3095 = vdwg.mxu0
        %3096 = vmatpush.bf16.msra.mxu0 0
        %3097 = vmatpush.bf16.msra.mxu0 0
        %3098 = vmatpush.bf16.msra.mxu0 0
        %3099 = vmatpush.bf16.msra.mxu0 0
        %3100 = vmatpush.bf16.msra.mxu0 0
        %3101 = vmatpush.bf16.msra.mxu0 0
        %3102 = vmatpush.bf16.msra.mxu0 0
        %3103 = vmatpush.bf16.msra.mxu0 %v3081
        %3104 = vmatmul.bf16.gmra.mxu0 %v2954
        %v3105 = vpop.f32.mrf.mxu0
        %v3106 = vadd.f32 0.0, %v3105
        %v3107 = vpop.f32.mrf.mxu0
        %3108 = vdwg.mxu0
        %3110 = vst [vmem:[#allocation1] ss:$2 sm:$0xff] %v2936
        %v3111 = vld.sshfl [vmem:[#allocation1] sm:$0xff pattern:$0x75316420]
        %v3112 = vld.sshfl [vmem:[#allocation1 + $0x8] sm:$0xff pattern:$0x75316420]
        %v3115 = vpack.c.bf16 %v3111, %v3111
        %v3116 = vpack.c.bf16 %v3112, %v3112
        %v3118 = vsel %vm2956, %v3115, 0
        %v3121 = vsel %vm2956, %v3116, 0
        %3123 = vmatpush.bf16.msra.mxu0 0
        %3124 = vmatpush.bf16.msra.mxu0 0
        %3125 = vmatpush.bf16.msra.mxu0 0
        %3126 = vmatpush.bf16.msra.mxu0 0
        %3127 = vmatpush.bf16.msra.mxu0 0
        %3128 = vmatpush.bf16.msra.mxu0 0
        %3129 = vmatpush.bf16.msra.mxu0 0
        %3130 = vmatpush.bf16.msra.mxu0 %v3118
        %3131 = vmatmul.bf16.gmra.mxu0 %v2954
        %v3132 = vpop.f32.mrf.mxu0
        %v3133 = vadd.f32 0.0, %v3132
        %v3134 = vpop.f32.mrf.mxu0
        %3135 = vdwg.mxu0
        %3136 = vmatpush.bf16.msra.mxu0 0
        %3137 = vmatpush.bf16.msra.mxu0 0
        %3138 = vmatpush.bf16.msra.mxu0 0
        %3139 = vmatpush.bf16.msra.mxu0 0
        %3140 = vmatpush.bf16.msra.mxu0 0
        %3141 = vmatpush.bf16.msra.mxu0 0
        %3142 = vmatpush.bf16.msra.mxu0 0
        %3143 = vmatpush.bf16.msra.mxu0 %v3121
        %3144 = vmatmul.bf16.gmra.mxu0 %v2954
        %v3145 = vpop.f32.mrf.mxu0
        %v3146 = vadd.f32 0.0, %v3145
        %v3147 = vpop.f32.mrf.mxu0
        %3148 = vdwg.mxu0
        %3150 = vst [vmem:[#allocation1] ss:$2 sm:$0xff] %v2938
        %v3151 = vld.sshfl [vmem:[#allocation1] sm:$0xff pattern:$0x75316420]
        %v3152 = vld.sshfl [vmem:[#allocation1 + $0x8] sm:$0xff pattern:$0x75316420]
        %v3155 = vpack.c.bf16 %v3151, %v3151
        %v3156 = vpack.c.bf16 %v3152, %v3152
        %v3158 = vsel %vm2956, %v3155, 0
        %v3161 = vsel %vm2956, %v3156, 0
        %3163 = vmatpush.bf16.msra.mxu0 0
        %3164 = vmatpush.bf16.msra.mxu0 0
        %3165 = vmatpush.bf16.msra.mxu0 0
        %3166 = vmatpush.bf16.msra.mxu0 0
        %3167 = vmatpush.bf16.msra.mxu0 0
        %3168 = vmatpush.bf16.msra.mxu0 0
        %3169 = vmatpush.bf16.msra.mxu0 0
        %3170 = vmatpush.bf16.msra.mxu0 %v3158
        %3171 = vmatmul.bf16.gmra.mxu0 %v2954
        %v3172 = vpop.f32.mrf.mxu0
        %v3173 = vadd.f32 0.0, %v3172
        %v3174 = vpop.f32.mrf.mxu0
        %3175 = vdwg.mxu0
        %3176 = vmatpush.bf16.msra.mxu0 0
        %3177 = vmatpush.bf16.msra.mxu0 0
        %3178 = vmatpush.bf16.msra.mxu0 0
        %3179 = vmatpush.bf16.msra.mxu0 0
        %3180 = vmatpush.bf16.msra.mxu0 0
        %3181 = vmatpush.bf16.msra.mxu0 0
        %3182 = vmatpush.bf16.msra.mxu0 0
        %3183 = vmatpush.bf16.msra.mxu0 %v3161
        %3184 = vmatmul.bf16.gmra.mxu0 %v2954
        %v3185 = vpop.f32.mrf.mxu0
        %v3186 = vadd.f32 0.0, %v3185
        %v3187 = vpop.f32.mrf.mxu0
        %3188 = vdwg.mxu0
        %3190 = vst [vmem:[#allocation1] ss:$2 sm:$0xff] %v2940
        %v3191 = vld.sshfl [vmem:[#allocation1] sm:$0xff pattern:$0x75316420]
        %v3192 = vld.sshfl [vmem:[#allocation1 + $0x8] sm:$0xff pattern:$0x75316420]
        %v3195 = vpack.c.bf16 %v3191, %v3191
        %v3196 = vpack.c.bf16 %v3192, %v3192
        %v3198 = vsel %vm2956, %v3195, 0
        %v3201 = vsel %vm2956, %v3196, 0
        %3203 = vmatpush.bf16.msra.mxu0 0
        %3204 = vmatpush.bf16.msra.mxu0 0
        %3205 = vmatpush.bf16.msra.mxu0 0
        %3206 = vmatpush.bf16.msra.mxu0 0
        %3207 = vmatpush.bf16.msra.mxu0 0
        %3208 = vmatpush.bf16.msra.mxu0 0
        %3209 = vmatpush.bf16.msra.mxu0 0
        %3210 = vmatpush.bf16.msra.mxu0 %v3198
        %3211 = vmatmul.bf16.gmra.mxu0 %v2954
        %v3212 = vpop.f32.mrf.mxu0
        %v3213 = vadd.f32 0.0, %v3212
        %v3214 = vpop.f32.mrf.mxu0
        %3215 = vdwg.mxu0
        %3216 = vmatpush.bf16.msra.mxu0 0
        %3217 = vmatpush.bf16.msra.mxu0 0
        %3218 = vmatpush.bf16.msra.mxu0 0
        %3219 = vmatpush.bf16.msra.mxu0 0
        %3220 = vmatpush.bf16.msra.mxu0 0
        %3221 = vmatpush.bf16.msra.mxu0 0
        %3222 = vmatpush.bf16.msra.mxu0 0
        %3223 = vmatpush.bf16.msra.mxu0 %v3201
        %3224 = vmatmul.bf16.gmra.mxu0 %v2954
        %v3225 = vpop.f32.mrf.mxu0
        %v3226 = vadd.f32 0.0, %v3225
        %v3227 = vpop.f32.mrf.mxu0
        %3228 = vdwg.mxu0
        %3230 = vst [vmem:[#allocation1] ss:$2 sm:$0xff] %v2942
        %v3231 = vld.sshfl [vmem:[#allocation1] sm:$0xff pattern:$0x75316420]
        %v3232 = vld.sshfl [vmem:[#allocation1 + $0x8] sm:$0xff pattern:$0x75316420]
        %v3235 = vpack.c.bf16 %v3231, %v3231
        %v3236 = vpack.c.bf16 %v3232, %v3232
        %v3238 = vsel %vm2956, %v3235, 0
        %v3241 = vsel %vm2956, %v3236, 0
        %3243 = vmatpush.bf16.msra.mxu0 0
        %3244 = vmatpush.bf16.msra.mxu0 0
        %3245 = vmatpush.bf16.msra.mxu0 0
        %3246 = vmatpush.bf16.msra.mxu0 0
        %3247 = vmatpush.bf16.msra.mxu0 0
        %3248 = vmatpush.bf16.msra.mxu0 0
        %3249 = vmatpush.bf16.msra.mxu0 0
        %3250 = vmatpush.bf16.msra.mxu0 %v3238
        %3251 = vmatmul.bf16.gmra.mxu0 %v2954
        %v3252 = vpop.f32.mrf.mxu0
        %v3253 = vadd.f32 0.0, %v3252
        %v3254 = vpop.f32.mrf.mxu0
        %3255 = vdwg.mxu0
        %3256 = vmatpush.bf16.msra.mxu0 0
        %3257 = vmatpush.bf16.msra.mxu0 0
        %3258 = vmatpush.bf16.msra.mxu0 0
        %3259 = vmatpush.bf16.msra.mxu0 0
        %3260 = vmatpush.bf16.msra.mxu0 0
        %3261 = vmatpush.bf16.msra.mxu0 0
        %3262 = vmatpush.bf16.msra.mxu0 0
        %3263 = vmatpush.bf16.msra.mxu0 %v3241
        %3264 = vmatmul.bf16.gmra.mxu0 %v2954
        %v3265 = vpop.f32.mrf.mxu0
        %v3266 = vadd.f32 0.0, %v3265
        %v3267 = vpop.f32.mrf.mxu0
        %3268 = vdwg.mxu0
        %v3269 = vadd.f32 %v2973, 0.0
        %v3270 = vadd.f32 %v2986, 0.0
        %v3271 = vadd.f32 %v3013, 0.0
        %v3272 = vadd.f32 %v3026, 0.0
        %v3273 = vadd.f32 %v3053, 0.0
        %v3274 = vadd.f32 %v3066, 0.0
        %v3275 = vadd.f32 %v3093, 0.0
        %v3276 = vadd.f32 %v3106, 0.0
        %v3277 = vadd.f32 %v3133, 0.0
        %v3278 = vadd.f32 %v3146, 0.0
        %v3279 = vadd.f32 %v3173, 0.0
        %v3280 = vadd.f32 %v3186, 0.0
        %v3281 = vadd.f32 %v3213, 0.0
        %v3282 = vadd.f32 %v3226, 0.0
        %v3283 = vadd.f32 %v3253, 0.0
        %v3284 = vadd.f32 %v3266, 0.0
        %v3293 = vrot.slane %v1345, 4
        %v3294 = vrot.slane %v1346, 4
        %v3295 = vrot.slane %v1347, 4
        %v3296 = vrot.slane %v1348, 4
        %v3297 = vrot.slane %v1349, 4
        %v3298 = vrot.slane %v1350, 4
        %v3299 = vrot.slane %v1351, 4
        %v3300 = vrot.slane %v1352, 4
        %v3309 = vrot.slane %v3295, 4
        %v3310 = vsel %vm2294, %v3309, %v3293
        %v3312 = vunpack.c.l.s4 1983009808
        %v3313 = vunpack.c.0.s8 %v3312
        %v3314 = vperm.slane %v3310, %v3313
        %v3315 = vrot.slane %v3296, 4
        %v3316 = vsel %vm2294, %v3315, %v3294
        %v3318 = vunpack.c.l.s4 1983009808
        %v3319 = vunpack.c.0.s8 %v3318
        %v3320 = vperm.slane %v3316, %v3319
        %v3321 = vrot.slane %v3299, 4
        %v3322 = vsel %vm2294, %v3321, %v3297
        %v3324 = vunpack.c.l.s4 1983009808
        %v3325 = vunpack.c.0.s8 %v3324
        %v3326 = vperm.slane %v3322, %v3325
        %v3327 = vrot.slane %v3300, 4
        %v3328 = vsel %vm2294, %v3327, %v3298
        %v3330 = vunpack.c.l.s4 1983009808
        %v3331 = vunpack.c.0.s8 %v3330
        %v3332 = vperm.slane %v3328, %v3331
        %v3333 = vrot.slane %v3320, 4
        %v3334 = vsel %vm2294, %v3333, %v3314
        %v3335 = vrot.slane %v3314, 4
        %v3336 = vsel %vm2294, %v3320, %v3335
        %v3338 = vunpack.c.l.s4 1934713408
        %v3339 = vunpack.c.0.s8 %v3338
        %v3340 = vperm.slane %v3334, %v3339
        %v3342 = vunpack.c.l.s4 1934713408
        %v3343 = vunpack.c.0.s8 %v3342
        %v3344 = vperm.slane %v3336, %v3343
        %v3345 = vrot.slane %v3332, 4
        %v3346 = vsel %vm2294, %v3345, %v3326
        %v3347 = vrot.slane %v3326, 4
        %v3348 = vsel %vm2294, %v3332, %v3347
        %v3350 = vunpack.c.l.s4 1934713408
        %v3351 = vunpack.c.0.s8 %v3350
        %v3352 = vperm.slane %v3346, %v3351
        %v3354 = vunpack.c.l.s4 1934713408
        %v3355 = vunpack.c.0.s8 %v3354
        %v3356 = vperm.slane %v3348, %v3355
        %v3357 = vrot.slane %v3352, 4
        %v3358 = vsel %vm2294, %v3357, %v3340
        %v3359 = vrot.slane %v3340, 4
        %v3360 = vsel %vm2294, %v3352, %v3359
        %v3361 = vrot.slane %v3356, 4
        %v3362 = vsel %vm2294, %v3361, %v3344
        %v3363 = vrot.slane %v3344, 4
        %v3364 = vsel %vm2294, %v3356, %v3363
        %3366 = vrot.lane.b32.xlu0 %v3360, 16
        %v3367 = vpop.permute.xlu0 %3366
        %3370 = vrot.lane.b32.xlu0 %v3362, 32
        %v3371 = vpop.permute.xlu0 %3370
        %3374 = vrot.lane.b32.xlu0 %v3364, 48
        %v3375 = vpop.permute.xlu0 %3374
        %v3377 = vsel %vm1039, %v3358, %v3367
        %v3378 = vsel %vm2363, %v3377, %v3371
        %v3379 = vsel %vm2365, %v3378, %v3375
        %v3388 = vrot.slane %v1657, 4
        %v3389 = vrot.slane %v1658, 4
        %v3390 = vrot.slane %v1659, 4
        %v3391 = vrot.slane %v1660, 4
        %v3392 = vrot.slane %v1661, 4
        %v3393 = vrot.slane %v1662, 4
        %v3394 = vrot.slane %v1663, 4
        %v3395 = vrot.slane %v1664, 4
        %v3404 = vrot.slane %v3390, 4
        %v3405 = vsel %vm2294, %v3404, %v3388
        %v3407 = vunpack.c.l.s4 1983009808
        %v3408 = vunpack.c.0.s8 %v3407
        %v3409 = vperm.slane %v3405, %v3408
        %v3410 = vrot.slane %v3391, 4
        %v3411 = vsel %vm2294, %v3410, %v3389
        %v3413 = vunpack.c.l.s4 1983009808
        %v3414 = vunpack.c.0.s8 %v3413
        %v3415 = vperm.slane %v3411, %v3414
        %v3416 = vrot.slane %v3394, 4
        %v3417 = vsel %vm2294, %v3416, %v3392
        %v3419 = vunpack.c.l.s4 1983009808
        %v3420 = vunpack.c.0.s8 %v3419
        %v3421 = vperm.slane %v3417, %v3420
        %v3422 = vrot.slane %v3395, 4
        %v3423 = vsel %vm2294, %v3422, %v3393
        %v3425 = vunpack.c.l.s4 1983009808
        %v3426 = vunpack.c.0.s8 %v3425
        %v3427 = vperm.slane %v3423, %v3426
        %v3428 = vrot.slane %v3415, 4
        %v3429 = vsel %vm2294, %v3428, %v3409
        %v3430 = vrot.slane %v3409, 4
        %v3431 = vsel %vm2294, %v3415, %v3430
        %v3433 = vunpack.c.l.s4 1934713408
        %v3434 = vunpack.c.0.s8 %v3433
        %v3435 = vperm.slane %v3429, %v3434
        %v3437 = vunpack.c.l.s4 1934713408
        %v3438 = vunpack.c.0.s8 %v3437
        %v3439 = vperm.slane %v3431, %v3438
        %v3440 = vrot.slane %v3427, 4
        %v3441 = vsel %vm2294, %v3440, %v3421
        %v3442 = vrot.slane %v3421, 4
        %v3443 = vsel %vm2294, %v3427, %v3442
        %v3445 = vunpack.c.l.s4 1934713408
        %v3446 = vunpack.c.0.s8 %v3445
        %v3447 = vperm.slane %v3441, %v3446
        %v3449 = vunpack.c.l.s4 1934713408
        %v3450 = vunpack.c.0.s8 %v3449
        %v3451 = vperm.slane %v3443, %v3450
        %v3452 = vrot.slane %v3447, 4
        %v3453 = vsel %vm2294, %v3452, %v3435
        %v3454 = vrot.slane %v3435, 4
        %v3455 = vsel %vm2294, %v3447, %v3454
        %v3456 = vrot.slane %v3451, 4
        %v3457 = vsel %vm2294, %v3456, %v3439
        %v3458 = vrot.slane %v3439, 4
        %v3459 = vsel %vm2294, %v3451, %v3458
        %3461 = vrot.lane.b32.xlu0 %v3455, 16
        %v3462 = vpop.permute.xlu0 %3461
        %3465 = vrot.lane.b32.xlu0 %v3457, 32
        %v3466 = vpop.permute.xlu0 %3465
        %3469 = vrot.lane.b32.xlu0 %v3459, 48
        %v3470 = vpop.permute.xlu0 %3469
        %v3472 = vsel %vm1039, %v3453, %v3462
        %v3473 = vsel %vm2363, %v3472, %v3466
        %v3474 = vsel %vm2365, %v3473, %v3470
        %3475 = vst.sshfl [vmem:[#allocation1] sm:$0xff pattern:$0x75316420] %v2277
        %3476 = vst.sshfl [vmem:[#allocation1 + $0x8] sm:$0xff pattern:$0x75316420] %v2278
        %s3477 = scalar_lea.vmem [#allocation1], 1
        %v3478 = vld [vmem:[%s3477] ss:$2 sm:$0xff]
        %3479 = vst.sshfl [vmem:[#allocation1 + $0x10] sm:$0xff pattern:$0x75316420] %v2279
        %3480 = vst.sshfl [vmem:[#allocation1 + $0x18] sm:$0xff pattern:$0x75316420] %v2280
        %s3481 = scalar_lea.vmem [#allocation1], 17
        %v3482 = vld [vmem:[%s3481] ss:$2 sm:$0xff]
        %3483 = vst.sshfl [vmem:[#allocation1 + $0x20] sm:$0xff pattern:$0x75316420] %v2281
        %3484 = vst.sshfl [vmem:[#allocation1 + $0x28] sm:$0xff pattern:$0x75316420] %v2282
        %s3485 = scalar_lea.vmem [#allocation1], 33
        %v3486 = vld [vmem:[%s3485] ss:$2 sm:$0xff]
        %3487 = vst.sshfl [vmem:[#allocation1 + $0x30] sm:$0xff pattern:$0x75316420] %v2283
        %3488 = vst.sshfl [vmem:[#allocation1 + $0x38] sm:$0xff pattern:$0x75316420] %v2284
        %s3489 = scalar_lea.vmem [#allocation1], 49
        %v3490 = vld [vmem:[%s3489] ss:$2 sm:$0xff]
        %3491 = vst.sshfl [vmem:[#allocation1] sm:$0xff pattern:$0x75316420] %v2285
        %3492 = vst.sshfl [vmem:[#allocation1 + $0x8] sm:$0xff pattern:$0x75316420] %v2286
        %v3493 = vld [vmem:[%s3477] ss:$2 sm:$0xff]
        %3494 = vst.sshfl [vmem:[#allocation1 + $0x10] sm:$0xff pattern:$0x75316420] %v2287
        %3495 = vst.sshfl [vmem:[#allocation1 + $0x18] sm:$0xff pattern:$0x75316420] %v2288
        %v3496 = vld [vmem:[%s3481] ss:$2 sm:$0xff]
        %3497 = vst.sshfl [vmem:[#allocation1 + $0x20] sm:$0xff pattern:$0x75316420] %v2289
        %3498 = vst.sshfl [vmem:[#allocation1 + $0x28] sm:$0xff pattern:$0x75316420] %v2290
        %v3499 = vld [vmem:[%s3485] ss:$2 sm:$0xff]
        %3500 = vst.sshfl [vmem:[#allocation1 + $0x30] sm:$0xff pattern:$0x75316420] %v2291
        %3501 = vst.sshfl [vmem:[#allocation1 + $0x38] sm:$0xff pattern:$0x75316420] %v2292
        %v3502 = vld [vmem:[%s3489] ss:$2 sm:$0xff]
        %v3511 = vrot.slane %v3486, 4
        %v3512 = vsel %vm2294, %v3511, %v3478
        %v3513 = vrot.slane %v3478, 4
        %v3514 = vsel %vm2294, %v3486, %v3513
        %v3516 = vunpack.c.l.s4 1983009808
        %v3517 = vunpack.c.0.s8 %v3516
        %v3518 = vperm.slane %v3512, %v3517
        %v3520 = vunpack.c.l.s4 1983009808
        %v3521 = vunpack.c.0.s8 %v3520
        %v3522 = vperm.slane %v3514, %v3521
        %v3523 = vrot.slane %v3490, 4
        %v3524 = vsel %vm2294, %v3523, %v3482
        %v3525 = vrot.slane %v3482, 4
        %v3526 = vsel %vm2294, %v3490, %v3525
        %v3528 = vunpack.c.l.s4 1983009808
        %v3529 = vunpack.c.0.s8 %v3528
        %v3530 = vperm.slane %v3524, %v3529
        %v3532 = vunpack.c.l.s4 1983009808
        %v3533 = vunpack.c.0.s8 %v3532
        %v3534 = vperm.slane %v3526, %v3533
        %v3535 = vrot.slane %v3530, 4
        %v3536 = vsel %vm2294, %v3535, %v3518
        %v3537 = vrot.slane %v3518, 4
        %v3538 = vsel %vm2294, %v3530, %v3537
        %v3540 = vunpack.c.l.s4 1934713408
        %v3541 = vunpack.c.0.s8 %v3540
        %v3542 = vperm.slane %v3536, %v3541
        %v3544 = vunpack.c.l.s4 1934713408
        %v3545 = vunpack.c.0.s8 %v3544
        %v3546 = vperm.slane %v3538, %v3545
        %v3547 = vrot.slane %v3534, 4
        %v3548 = vsel %vm2294, %v3547, %v3522
        %v3549 = vrot.slane %v3522, 4
        %v3550 = vsel %vm2294, %v3534, %v3549
        %v3552 = vunpack.c.l.s4 1934713408
        %v3553 = vunpack.c.0.s8 %v3552
        %v3554 = vperm.slane %v3548, %v3553
        %v3556 = vunpack.c.l.s4 1934713408
        %v3557 = vunpack.c.0.s8 %v3556
        %v3558 = vperm.slane %v3550, %v3557
        %v3559 = vrot.slane %v3554, 4
        %v3560 = vsel %vm2294, %v3559, %v3542
        %v3561 = vrot.slane %v3542, 4
        %v3562 = vsel %vm2294, %v3554, %v3561
        %v3563 = vrot.slane %v3558, 4
        %v3564 = vsel %vm2294, %v3563, %v3546
        %v3565 = vrot.slane %v3546, 4
        %v3566 = vsel %vm2294, %v3558, %v3565
        %v3567 = vrot.slane %v3499, 4
        %v3568 = vsel %vm2294, %v3567, %v3493
        %v3569 = vrot.slane %v3493, 4
        %v3570 = vsel %vm2294, %v3499, %v3569
        %v3572 = vunpack.c.l.s4 1983009808
        %v3573 = vunpack.c.0.s8 %v3572
        %v3574 = vperm.slane %v3568, %v3573
        %v3576 = vunpack.c.l.s4 1983009808
        %v3577 = vunpack.c.0.s8 %v3576
        %v3578 = vperm.slane %v3570, %v3577
        %v3579 = vrot.slane %v3502, 4
        %v3580 = vsel %vm2294, %v3579, %v3496
        %v3581 = vrot.slane %v3496, 4
        %v3582 = vsel %vm2294, %v3502, %v3581
        %v3584 = vunpack.c.l.s4 1983009808
        %v3585 = vunpack.c.0.s8 %v3584
        %v3586 = vperm.slane %v3580, %v3585
        %v3588 = vunpack.c.l.s4 1983009808
        %v3589 = vunpack.c.0.s8 %v3588
        %v3590 = vperm.slane %v3582, %v3589
        %v3591 = vrot.slane %v3586, 4
        %v3592 = vsel %vm2294, %v3591, %v3574
        %v3593 = vrot.slane %v3574, 4
        %v3594 = vsel %vm2294, %v3586, %v3593
        %v3596 = vunpack.c.l.s4 1934713408
        %v3597 = vunpack.c.0.s8 %v3596
        %v3598 = vperm.slane %v3592, %v3597
        %v3600 = vunpack.c.l.s4 1934713408
        %v3601 = vunpack.c.0.s8 %v3600
        %v3602 = vperm.slane %v3594, %v3601
        %v3603 = vrot.slane %v3590, 4
        %v3604 = vsel %vm2294, %v3603, %v3578
        %v3605 = vrot.slane %v3578, 4
        %v3606 = vsel %vm2294, %v3590, %v3605
        %v3608 = vunpack.c.l.s4 1934713408
        %v3609 = vunpack.c.0.s8 %v3608
        %v3610 = vperm.slane %v3604, %v3609
        %v3612 = vunpack.c.l.s4 1934713408
        %v3613 = vunpack.c.0.s8 %v3612
        %v3614 = vperm.slane %v3606, %v3613
        %v3615 = vrot.slane %v3610, 4
        %v3616 = vsel %vm2294, %v3615, %v3598
        %v3617 = vrot.slane %v3598, 4
        %v3618 = vsel %vm2294, %v3610, %v3617
        %v3619 = vrot.slane %v3614, 4
        %v3620 = vsel %vm2294, %v3619, %v3602
        %v3621 = vrot.slane %v3602, 4
        %v3622 = vsel %vm2294, %v3614, %v3621
        %3625 = vst [vmem:[#allocation1] ss:$2 sm:$0xff] %v3560
        %s3626 = scalar_lea.vmem [#allocation1], 1
        %3627 = vst [vmem:[%s3626] ss:$2 sm:$0xff] %v3616
        %v3628 = vld.sshfl [vmem:[#allocation1] sm:$0xff pattern:$0x75316420]
        %v3629 = vld.sshfl [vmem:[#allocation1 + $0x8] sm:$0xff pattern:$0x75316420]
        %3634 = vst [vmem:[#allocation1] ss:$2 sm:$0xff] %v3562
        %s3635 = scalar_lea.vmem [#allocation1], 1
        %3636 = vst [vmem:[%s3635] ss:$2 sm:$0xff] %v3618
        %v3637 = vld.sshfl [vmem:[#allocation1] sm:$0xff pattern:$0x75316420]
        %v3638 = vld.sshfl [vmem:[#allocation1 + $0x8] sm:$0xff pattern:$0x75316420]
        %3643 = vst [vmem:[#allocation1] ss:$2 sm:$0xff] %v3564
        %s3644 = scalar_lea.vmem [#allocation1], 1
        %3645 = vst [vmem:[%s3644] ss:$2 sm:$0xff] %v3620
        %v3646 = vld.sshfl [vmem:[#allocation1] sm:$0xff pattern:$0x75316420]
        %v3647 = vld.sshfl [vmem:[#allocation1 + $0x8] sm:$0xff pattern:$0x75316420]
        %3652 = vst [vmem:[#allocation1] ss:$2 sm:$0xff] %v3566
        %s3653 = scalar_lea.vmem [#allocation1], 1
        %3654 = vst [vmem:[%s3653] ss:$2 sm:$0xff] %v3622
        %v3655 = vld.sshfl [vmem:[#allocation1] sm:$0xff pattern:$0x75316420]
        %v3656 = vld.sshfl [vmem:[#allocation1 + $0x8] sm:$0xff pattern:$0x75316420]
        %v3659 = vpack.c.bf16 %v3379, %v3379
        %v3660 = vpack.c.bf16 %v3474, %v3474
        %v3662 = vsel %vm2628, %v3659, 0
        %v3665 = vsel %vm2628, %v3660, 0
        %3667 = vmatpush.bf16.xpose.msra.mxu0 0
        %3668 = vmatpush.bf16.xpose.msra.mxu0 0
        %3669 = vmatpush.bf16.xpose.msra.mxu0 0
        %3670 = vmatpush.bf16.xpose.msra.mxu0 0
        %3671 = vmatpush.bf16.xpose.msra.mxu0 0
        %3672 = vmatpush.bf16.xpose.msra.mxu0 0
        %3673 = vmatpush.bf16.xpose.msra.mxu0 0
        %3674 = vmatpush.bf16.xpose.msra.mxu0 %v3665
        %3675 = vmatmul.bf16.gmra.mxu0 %v3662
        %v3676 = vpop.f32.mrf.mxu0
        %v3677 = vadd.f32 0.0, %v3676
        %v3678 = vpop.f32.mrf.mxu0
        %3679 = vdwg.mxu0
        %v3680 = vsel %vm891, %v3677, -inf
        %3681 = vmax.xlane.f32.xlu0 %v3680
        %v3682 = vpop.xlane.xlu0 %3681
        %v3683 = vsub.f32 %v3677, %v3682
        %v3684 = vmul.f32 %v3683, 1.442695
        %v3685 = vpow.pop %v3684
        %v3686 = vsel %vm891, %v3685, 0.0
        %3687 = vadd.xlane.f32.xlu0 %v3686
        %v3688 = vpop.xlane.xlu0 %3687
        %v3689 = vrcp.pop %v3688
        %v3690 = vmul.f32 %v3685, %v3689
        %v3691 = vpack.c.bf16 %v3690, %v3690
        %v3692 = vpack.c.bf16 %v3628, %v3628
        %v3693 = vpack.c.bf16 %v3629, %v3629
        %v3694 = vpack.c.bf16 %v3637, %v3637
        %v3695 = vpack.c.bf16 %v3638, %v3638
        %v3696 = vpack.c.bf16 %v3646, %v3646
        %v3697 = vpack.c.bf16 %v3647, %v3647
        %v3698 = vpack.c.bf16 %v3655, %v3655
        %v3699 = vpack.c.bf16 %v3656, %v3656
        %v3701 = vsel %vm891, %v3691, 0
        %v3704 = vsel %vm895, %v3692, 0
        %v3707 = vsel %vm895, %v3693, 0
        %v3710 = vsel %vm895, %v3694, 0
        %v3713 = vsel %vm895, %v3695, 0
        %v3716 = vsel %vm895, %v3696, 0
        %v3719 = vsel %vm895, %v3697, 0
        %v3722 = vsel %vm895, %v3698, 0
        %v3725 = vsel %vm895, %v3699, 0
        %3727 = vmatpush.bf16.msra.mxu0 0
        %3728 = vmatpush.bf16.msra.mxu0 0
        %3729 = vmatpush.bf16.msra.mxu0 0
        %3730 = vmatpush.bf16.msra.mxu0 0
        %3731 = vmatpush.bf16.msra.mxu0 0
        %3732 = vmatpush.bf16.msra.mxu0 0
        %3733 = vmatpush.bf16.msra.mxu0 0
        %3734 = vmatpush.bf16.msra.mxu0 %v3704
        %3735 = vmatmul.bf16.gmra.mxu0 %v3701
        %v3736 = vpop.f32.mrf.mxu0
        %v3737 = vadd.f32 0.0, %v3736
        %v3738 = vpop.f32.mrf.mxu0
        %3739 = vdwg.mxu0
        %3740 = vmatpush.bf16.msra.mxu0 0
        %3741 = vmatpush.bf16.msra.mxu0 0
        %3742 = vmatpush.bf16.msra.mxu0 0
        %3743 = vmatpush.bf16.msra.mxu0 0
        %3744 = vmatpush.bf16.msra.mxu0 0
        %3745 = vmatpush.bf16.msra.mxu0 0
        %3746 = vmatpush.bf16.msra.mxu0 0
        %3747 = vmatpush.bf16.msra.mxu0 %v3707
        %3748 = vmatmul.bf16.gmra.mxu0 %v3701
        %v3749 = vpop.f32.mrf.mxu0
        %v3750 = vadd.f32 0.0, %v3749
        %v3751 = vpop.f32.mrf.mxu0
        %3752 = vdwg.mxu0
        %3753 = vmatpush.bf16.msra.mxu0 0
        %3754 = vmatpush.bf16.msra.mxu0 0
        %3755 = vmatpush.bf16.msra.mxu0 0
        %3756 = vmatpush.bf16.msra.mxu0 0
        %3757 = vmatpush.bf16.msra.mxu0 0
        %3758 = vmatpush.bf16.msra.mxu0 0
        %3759 = vmatpush.bf16.msra.mxu0 0
        %3760 = vmatpush.bf16.msra.mxu0 %v3710
        %3761 = vmatmul.bf16.gmra.mxu0 %v3701
        %v3762 = vpop.f32.mrf.mxu0
        %v3763 = vadd.f32 0.0, %v3762
        %v3764 = vpop.f32.mrf.mxu0
        %3765 = vdwg.mxu0
        %3766 = vmatpush.bf16.msra.mxu0 0
        %3767 = vmatpush.bf16.msra.mxu0 0
        %3768 = vmatpush.bf16.msra.mxu0 0
        %3769 = vmatpush.bf16.msra.mxu0 0
        %3770 = vmatpush.bf16.msra.mxu0 0
        %3771 = vmatpush.bf16.msra.mxu0 0
        %3772 = vmatpush.bf16.msra.mxu0 0
        %3773 = vmatpush.bf16.msra.mxu0 %v3713
        %3774 = vmatmul.bf16.gmra.mxu0 %v3701
        %v3775 = vpop.f32.mrf.mxu0
        %v3776 = vadd.f32 0.0, %v3775
        %v3777 = vpop.f32.mrf.mxu0
        %3778 = vdwg.mxu0
        %3779 = vmatpush.bf16.msra.mxu0 0
        %3780 = vmatpush.bf16.msra.mxu0 0
        %3781 = vmatpush.bf16.msra.mxu0 0
        %3782 = vmatpush.bf16.msra.mxu0 0
        %3783 = vmatpush.bf16.msra.mxu0 0
        %3784 = vmatpush.bf16.msra.mxu0 0
        %3785 = vmatpush.bf16.msra.mxu0 0
        %3786 = vmatpush.bf16.msra.mxu0 %v3716
        %3787 = vmatmul.bf16.gmra.mxu0 %v3701
        %v3788 = vpop.f32.mrf.mxu0
        %v3789 = vadd.f32 0.0, %v3788
        %v3790 = vpop.f32.mrf.mxu0
        %3791 = vdwg.mxu0
        %3792 = vmatpush.bf16.msra.mxu0 0
        %3793 = vmatpush.bf16.msra.mxu0 0
        %3794 = vmatpush.bf16.msra.mxu0 0
        %3795 = vmatpush.bf16.msra.mxu0 0
        %3796 = vmatpush.bf16.msra.mxu0 0
        %3797 = vmatpush.bf16.msra.mxu0 0
        %3798 = vmatpush.bf16.msra.mxu0 0
        %3799 = vmatpush.bf16.msra.mxu0 %v3719
        %3800 = vmatmul.bf16.gmra.mxu0 %v3701
        %v3801 = vpop.f32.mrf.mxu0
        %v3802 = vadd.f32 0.0, %v3801
        %v3803 = vpop.f32.mrf.mxu0
        %3804 = vdwg.mxu0
        %3805 = vmatpush.bf16.msra.mxu0 0
        %3806 = vmatpush.bf16.msra.mxu0 0
        %3807 = vmatpush.bf16.msra.mxu0 0
        %3808 = vmatpush.bf16.msra.mxu0 0
        %3809 = vmatpush.bf16.msra.mxu0 0
        %3810 = vmatpush.bf16.msra.mxu0 0
        %3811 = vmatpush.bf16.msra.mxu0 0
        %3812 = vmatpush.bf16.msra.mxu0 %v3722
        %3813 = vmatmul.bf16.gmra.mxu0 %v3701
        %v3814 = vpop.f32.mrf.mxu0
        %v3815 = vadd.f32 0.0, %v3814
        %v3816 = vpop.f32.mrf.mxu0
        %3817 = vdwg.mxu0
        %3818 = vmatpush.bf16.msra.mxu0 0
        %3819 = vmatpush.bf16.msra.mxu0 0
        %3820 = vmatpush.bf16.msra.mxu0 0
        %3821 = vmatpush.bf16.msra.mxu0 0
        %3822 = vmatpush.bf16.msra.mxu0 0
        %3823 = vmatpush.bf16.msra.mxu0 0
        %3824 = vmatpush.bf16.msra.mxu0 0
        %3825 = vmatpush.bf16.msra.mxu0 %v3725
        %3826 = vmatmul.bf16.gmra.mxu0 %v3701
        %v3827 = vpop.f32.mrf.mxu0
        %v3828 = vadd.f32 0.0, %v3827
        %v3829 = vpop.f32.mrf.mxu0
        %3830 = vdwg.mxu0
        %v3839 = vrot.slane %v3750, 4
        %v3840 = vrot.slane %v3776, 4
        %v3841 = vrot.slane %v3802, 4
        %v3842 = vrot.slane %v3828, 4
        %v3843 = vsel %vm895, %v3737, %v3839
        %v3844 = vsel %vm895, %v3839, %v3737
        %v3845 = vrot.slane %v3844, 4
        %v3846 = vsel %vm895, %v3763, %v3840
        %v3847 = vsel %vm895, %v3840, %v3763
        %v3848 = vrot.slane %v3847, 4
        %v3849 = vsel %vm895, %v3789, %v3841
        %v3850 = vsel %vm895, %v3841, %v3789
        %v3851 = vrot.slane %v3850, 4
        %v3852 = vsel %vm895, %v3815, %v3842
        %v3853 = vsel %vm895, %v3842, %v3815
        %v3854 = vrot.slane %v3853, 4
        %v3863 = vrot.slane %v3849, 4
        %v3864 = vsel %vm2294, %v3863, %v3843
        %v3865 = vrot.slane %v3843, 4
        %v3866 = vsel %vm2294, %v3849, %v3865
        %v3868 = vunpack.c.l.s4 1983009808
        %v3869 = vunpack.c.0.s8 %v3868
        %v3870 = vperm.slane %v3864, %v3869
        %v3872 = vunpack.c.l.s4 1983009808
        %v3873 = vunpack.c.0.s8 %v3872
        %v3874 = vperm.slane %v3866, %v3873
        %v3875 = vrot.slane %v3852, 4
        %v3876 = vsel %vm2294, %v3875, %v3846
        %v3877 = vrot.slane %v3846, 4
        %v3878 = vsel %vm2294, %v3852, %v3877
        %v3880 = vunpack.c.l.s4 1983009808
        %v3881 = vunpack.c.0.s8 %v3880
        %v3882 = vperm.slane %v3876, %v3881
        %v3884 = vunpack.c.l.s4 1983009808
        %v3885 = vunpack.c.0.s8 %v3884
        %v3886 = vperm.slane %v3878, %v3885
        %v3887 = vrot.slane %v3882, 4
        %v3888 = vsel %vm2294, %v3887, %v3870
        %v3889 = vrot.slane %v3870, 4
        %v3890 = vsel %vm2294, %v3882, %v3889
        %v3892 = vunpack.c.l.s4 1934713408
        %v3893 = vunpack.c.0.s8 %v3892
        %v3894 = vperm.slane %v3888, %v3893
        %v3896 = vunpack.c.l.s4 1934713408
        %v3897 = vunpack.c.0.s8 %v3896
        %v3898 = vperm.slane %v3890, %v3897
        %v3899 = vrot.slane %v3886, 4
        %v3900 = vsel %vm2294, %v3899, %v3874
        %v3901 = vrot.slane %v3874, 4
        %v3902 = vsel %vm2294, %v3886, %v3901
        %v3904 = vunpack.c.l.s4 1934713408
        %v3905 = vunpack.c.0.s8 %v3904
        %v3906 = vperm.slane %v3900, %v3905
        %v3908 = vunpack.c.l.s4 1934713408
        %v3909 = vunpack.c.0.s8 %v3908
        %v3910 = vperm.slane %v3902, %v3909
        %v3911 = vrot.slane %v3906, 4
        %v3912 = vsel %vm2294, %v3911, %v3894
        %v3913 = vrot.slane %v3894, 4
        %v3914 = vsel %vm2294, %v3906, %v3913
        %v3915 = vrot.slane %v3910, 4
        %v3916 = vsel %vm2294, %v3915, %v3898
        %v3917 = vrot.slane %v3898, 4
        %v3918 = vsel %vm2294, %v3910, %v3917
        %v3919 = vrot.slane %v3851, 4
        %v3920 = vsel %vm2294, %v3919, %v3845
        %v3921 = vrot.slane %v3845, 4
        %v3922 = vsel %vm2294, %v3851, %v3921
        %v3924 = vunpack.c.l.s4 1983009808
        %v3925 = vunpack.c.0.s8 %v3924
        %v3926 = vperm.slane %v3920, %v3925
        %v3928 = vunpack.c.l.s4 1983009808
        %v3929 = vunpack.c.0.s8 %v3928
        %v3930 = vperm.slane %v3922, %v3929
        %v3931 = vrot.slane %v3854, 4
        %v3932 = vsel %vm2294, %v3931, %v3848
        %v3933 = vrot.slane %v3848, 4
        %v3934 = vsel %vm2294, %v3854, %v3933
        %v3936 = vunpack.c.l.s4 1983009808
        %v3937 = vunpack.c.0.s8 %v3936
        %v3938 = vperm.slane %v3932, %v3937
        %v3940 = vunpack.c.l.s4 1983009808
        %v3941 = vunpack.c.0.s8 %v3940
        %v3942 = vperm.slane %v3934, %v3941
        %v3943 = vrot.slane %v3938, 4
        %v3944 = vsel %vm2294, %v3943, %v3926
        %v3945 = vrot.slane %v3926, 4
        %v3946 = vsel %vm2294, %v3938, %v3945
        %v3948 = vunpack.c.l.s4 1934713408
        %v3949 = vunpack.c.0.s8 %v3948
        %v3950 = vperm.slane %v3944, %v3949
        %v3952 = vunpack.c.l.s4 1934713408
        %v3953 = vunpack.c.0.s8 %v3952
        %v3954 = vperm.slane %v3946, %v3953
        %v3955 = vrot.slane %v3942, 4
        %v3956 = vsel %vm2294, %v3955, %v3930
        %v3957 = vrot.slane %v3930, 4
        %v3958 = vsel %vm2294, %v3942, %v3957
        %v3960 = vunpack.c.l.s4 1934713408
        %v3961 = vunpack.c.0.s8 %v3960
        %v3962 = vperm.slane %v3956, %v3961
        %v3964 = vunpack.c.l.s4 1934713408
        %v3965 = vunpack.c.0.s8 %v3964
        %v3966 = vperm.slane %v3958, %v3965
        %v3967 = vrot.slane %v3962, 4
        %v3968 = vsel %vm2294, %v3967, %v3950
        %v3969 = vrot.slane %v3950, 4
        %v3970 = vsel %vm2294, %v3962, %v3969
        %v3971 = vrot.slane %v3966, 4
        %v3972 = vsel %vm2294, %v3971, %v3954
        %v3973 = vrot.slane %v3954, 4
        %v3974 = vsel %vm2294, %v3966, %v3973
        %3976 = vst [vmem:[#allocation1] ss:$2 sm:$0xff] %v3912
        %v3977 = vld.sshfl [vmem:[#allocation1] sm:$0xff pattern:$0x75316420]
        %v3978 = vld.sshfl [vmem:[#allocation1 + $0x8] sm:$0xff pattern:$0x75316420]
        %v3981 = vpack.c.bf16 %v3977, %v3977
        %v3982 = vpack.c.bf16 %v3978, %v3978
        %3984 = vrot.lane.b32.xlu0 %v2943, 124
        %v3985 = vpop.permute.xlu0 %3984
        %v3987 = vsel %vm2952, %v3985, 0
        %v3990 = vsel %vm2956, %v3981, 0
        %v3993 = vsel %vm2956, %v3982, 0
        %3995 = vmatpush.bf16.msra.mxu0 0
        %3996 = vmatpush.bf16.msra.mxu0 0
        %3997 = vmatpush.bf16.msra.mxu0 0
        %3998 = vmatpush.bf16.msra.mxu0 0
        %3999 = vmatpush.bf16.msra.mxu0 0
        %4000 = vmatpush.bf16.msra.mxu0 0
        %4001 = vmatpush.bf16.msra.mxu0 0
        %4002 = vmatpush.bf16.msra.mxu0 %v3990
        %4003 = vmatmul.bf16.gmra.mxu0 %v3987
        %v4004 = vpop.f32.mrf.mxu0
        %v4005 = vadd.f32 0.0, %v4004
        %v4006 = vpop.f32.mrf.mxu0
        %4007 = vdwg.mxu0
        %4008 = vmatpush.bf16.msra.mxu0 0
        %4009 = vmatpush.bf16.msra.mxu0 0
        %4010 = vmatpush.bf16.msra.mxu0 0
        %4011 = vmatpush.bf16.msra.mxu0 0
        %4012 = vmatpush.bf16.msra.mxu0 0
        %4013 = vmatpush.bf16.msra.mxu0 0
        %4014 = vmatpush.bf16.msra.mxu0 0
        %4015 = vmatpush.bf16.msra.mxu0 %v3993
        %4016 = vmatmul.bf16.gmra.mxu0 %v3987
        %v4017 = vpop.f32.mrf.mxu0
        %v4018 = vadd.f32 0.0, %v4017
        %v4019 = vpop.f32.mrf.mxu0
        %4020 = vdwg.mxu0
        %4022 = vst [vmem:[#allocation1] ss:$2 sm:$0xff] %v3914
        %v4023 = vld.sshfl [vmem:[#allocation1] sm:$0xff pattern:$0x75316420]
        %v4024 = vld.sshfl [vmem:[#allocation1 + $0x8] sm:$0xff pattern:$0x75316420]
        %v4027 = vpack.c.bf16 %v4023, %v4023
        %v4028 = vpack.c.bf16 %v4024, %v4024
        %v4030 = vsel %vm2956, %v4027, 0
        %v4033 = vsel %vm2956, %v4028, 0
        %4035 = vmatpush.bf16.msra.mxu0 0
        %4036 = vmatpush.bf16.msra.mxu0 0
        %4037 = vmatpush.bf16.msra.mxu0 0
        %4038 = vmatpush.bf16.msra.mxu0 0
        %4039 = vmatpush.bf16.msra.mxu0 0
        %4040 = vmatpush.bf16.msra.mxu0 0
        %4041 = vmatpush.bf16.msra.mxu0 0
        %4042 = vmatpush.bf16.msra.mxu0 %v4030
        %4043 = vmatmul.bf16.gmra.mxu0 %v3987
        %v4044 = vpop.f32.mrf.mxu0
        %v4045 = vadd.f32 0.0, %v4044
        %v4046 = vpop.f32.mrf.mxu0
        %4047 = vdwg.mxu0
        %4048 = vmatpush.bf16.msra.mxu0 0
        %4049 = vmatpush.bf16.msra.mxu0 0
        %4050 = vmatpush.bf16.msra.mxu0 0
        %4051 = vmatpush.bf16.msra.mxu0 0
        %4052 = vmatpush.bf16.msra.mxu0 0
        %4053 = vmatpush.bf16.msra.mxu0 0
        %4054 = vmatpush.bf16.msra.mxu0 0
        %4055 = vmatpush.bf16.msra.mxu0 %v4033
        %4056 = vmatmul.bf16.gmra.mxu0 %v3987
        %v4057 = vpop.f32.mrf.mxu0
        %v4058 = vadd.f32 0.0, %v4057
        %v4059 = vpop.f32.mrf.mxu0
        %4060 = vdwg.mxu0
        %4062 = vst [vmem:[#allocation1] ss:$2 sm:$0xff] %v3916
        %v4063 = vld.sshfl [vmem:[#allocation1] sm:$0xff pattern:$0x75316420]
        %v4064 = vld.sshfl [vmem:[#allocation1 + $0x8] sm:$0xff pattern:$0x75316420]
        %v4067 = vpack.c.bf16 %v4063, %v4063
        %v4068 = vpack.c.bf16 %v4064, %v4064
        %v4070 = vsel %vm2956, %v4067, 0
        %v4073 = vsel %vm2956, %v4068, 0
        %4075 = vmatpush.bf16.msra.mxu0 0
        %4076 = vmatpush.bf16.msra.mxu0 0
        %4077 = vmatpush.bf16.msra.mxu0 0
        %4078 = vmatpush.bf16.msra.mxu0 0
        %4079 = vmatpush.bf16.msra.mxu0 0
        %4080 = vmatpush.bf16.msra.mxu0 0
        %4081 = vmatpush.bf16.msra.mxu0 0
        %4082 = vmatpush.bf16.msra.mxu0 %v4070
        %4083 = vmatmul.bf16.gmra.mxu0 %v3987
        %v4084 = vpop.f32.mrf.mxu0
        %v4085 = vadd.f32 0.0, %v4084
        %v4086 = vpop.f32.mrf.mxu0
        %4087 = vdwg.mxu0
        %4088 = vmatpush.bf16.msra.mxu0 0
        %4089 = vmatpush.bf16.msra.mxu0 0
        %4090 = vmatpush.bf16.msra.mxu0 0
        %4091 = vmatpush.bf16.msra.mxu0 0
        %4092 = vmatpush.bf16.msra.mxu0 0
        %4093 = vmatpush.bf16.msra.mxu0 0
        %4094 = vmatpush.bf16.msra.mxu0 0
        %4095 = vmatpush.bf16.msra.mxu0 %v4073
        %4096 = vmatmul.bf16.gmra.mxu0 %v3987
        %v4097 = vpop.f32.mrf.mxu0
        %v4098 = vadd.f32 0.0, %v4097
        %v4099 = vpop.f32.mrf.mxu0
        %4100 = vdwg.mxu0
        %4102 = vst [vmem:[#allocation1] ss:$2 sm:$0xff] %v3918
        %v4103 = vld.sshfl [vmem:[#allocation1] sm:$0xff pattern:$0x75316420]
        %v4104 = vld.sshfl [vmem:[#allocation1 + $0x8] sm:$0xff pattern:$0x75316420]
        %v4107 = vpack.c.bf16 %v4103, %v4103
        %v4108 = vpack.c.bf16 %v4104, %v4104
        %v4110 = vsel %vm2956, %v4107, 0
        %v4113 = vsel %vm2956, %v4108, 0
        %4115 = vmatpush.bf16.msra.mxu0 0
        %4116 = vmatpush.bf16.msra.mxu0 0
        %4117 = vmatpush.bf16.msra.mxu0 0
        %4118 = vmatpush.bf16.msra.mxu0 0
        %4119 = vmatpush.bf16.msra.mxu0 0
        %4120 = vmatpush.bf16.msra.mxu0 0
        %4121 = vmatpush.bf16.msra.mxu0 0
        %4122 = vmatpush.bf16.msra.mxu0 %v4110
        %4123 = vmatmul.bf16.gmra.mxu0 %v3987
        %v4124 = vpop.f32.mrf.mxu0
        %v4125 = vadd.f32 0.0, %v4124
        %v4126 = vpop.f32.mrf.mxu0
        %4127 = vdwg.mxu0
        %4128 = vmatpush.bf16.msra.mxu0 0
        %4129 = vmatpush.bf16.msra.mxu0 0
        %4130 = vmatpush.bf16.msra.mxu0 0
        %4131 = vmatpush.bf16.msra.mxu0 0
        %4132 = vmatpush.bf16.msra.mxu0 0
        %4133 = vmatpush.bf16.msra.mxu0 0
        %4134 = vmatpush.bf16.msra.mxu0 0
        %4135 = vmatpush.bf16.msra.mxu0 %v4113
        %4136 = vmatmul.bf16.gmra.mxu0 %v3987
        %v4137 = vpop.f32.mrf.mxu0
        %v4138 = vadd.f32 0.0, %v4137
        %v4139 = vpop.f32.mrf.mxu0
        %4140 = vdwg.mxu0
        %4142 = vst [vmem:[#allocation1] ss:$2 sm:$0xff] %v3968
        %v4143 = vld.sshfl [vmem:[#allocation1] sm:$0xff pattern:$0x75316420]
        %v4144 = vld.sshfl [vmem:[#allocation1 + $0x8] sm:$0xff pattern:$0x75316420]
        %v4147 = vpack.c.bf16 %v4143, %v4143
        %v4148 = vpack.c.bf16 %v4144, %v4144
        %v4150 = vsel %vm2956, %v4147, 0
        %v4153 = vsel %vm2956, %v4148, 0
        %4155 = vmatpush.bf16.msra.mxu0 0
        %4156 = vmatpush.bf16.msra.mxu0 0
        %4157 = vmatpush.bf16.msra.mxu0 0
        %4158 = vmatpush.bf16.msra.mxu0 0
        %4159 = vmatpush.bf16.msra.mxu0 0
        %4160 = vmatpush.bf16.msra.mxu0 0
        %4161 = vmatpush.bf16.msra.mxu0 0
        %4162 = vmatpush.bf16.msra.mxu0 %v4150
        %4163 = vmatmul.bf16.gmra.mxu0 %v3987
        %v4164 = vpop.f32.mrf.mxu0
        %v4165 = vadd.f32 0.0, %v4164
        %v4166 = vpop.f32.mrf.mxu0
        %4167 = vdwg.mxu0
        %4168 = vmatpush.bf16.msra.mxu0 0
        %4169 = vmatpush.bf16.msra.mxu0 0
        %4170 = vmatpush.bf16.msra.mxu0 0
        %4171 = vmatpush.bf16.msra.mxu0 0
        %4172 = vmatpush.bf16.msra.mxu0 0
        %4173 = vmatpush.bf16.msra.mxu0 0
        %4174 = vmatpush.bf16.msra.mxu0 0
        %4175 = vmatpush.bf16.msra.mxu0 %v4153
        %4176 = vmatmul.bf16.gmra.mxu0 %v3987
        %v4177 = vpop.f32.mrf.mxu0
        %v4178 = vadd.f32 0.0, %v4177
        %v4179 = vpop.f32.mrf.mxu0
        %4180 = vdwg.mxu0
        %4182 = vst [vmem:[#allocation1] ss:$2 sm:$0xff] %v3970
        %v4183 = vld.sshfl [vmem:[#allocation1] sm:$0xff pattern:$0x75316420]
        %v4184 = vld.sshfl [vmem:[#allocation1 + $0x8] sm:$0xff pattern:$0x75316420]
        %v4187 = vpack.c.bf16 %v4183, %v4183
        %v4188 = vpack.c.bf16 %v4184, %v4184
        %v4190 = vsel %vm2956, %v4187, 0
        %v4193 = vsel %vm2956, %v4188, 0
        %4195 = vmatpush.bf16.msra.mxu0 0
        %4196 = vmatpush.bf16.msra.mxu0 0
        %4197 = vmatpush.bf16.msra.mxu0 0
        %4198 = vmatpush.bf16.msra.mxu0 0
        %4199 = vmatpush.bf16.msra.mxu0 0
        %4200 = vmatpush.bf16.msra.mxu0 0
        %4201 = vmatpush.bf16.msra.mxu0 0
        %4202 = vmatpush.bf16.msra.mxu0 %v4190
        %4203 = vmatmul.bf16.gmra.mxu0 %v3987
        %v4204 = vpop.f32.mrf.mxu0
        %v4205 = vadd.f32 0.0, %v4204
        %v4206 = vpop.f32.mrf.mxu0
        %4207 = vdwg.mxu0
        %4208 = vmatpush.bf16.msra.mxu0 0
        %4209 = vmatpush.bf16.msra.mxu0 0
        %4210 = vmatpush.bf16.msra.mxu0 0
        %4211 = vmatpush.bf16.msra.mxu0 0
        %4212 = vmatpush.bf16.msra.mxu0 0
        %4213 = vmatpush.bf16.msra.mxu0 0
        %4214 = vmatpush.bf16.msra.mxu0 0
        %4215 = vmatpush.bf16.msra.mxu0 %v4193
        %4216 = vmatmul.bf16.gmra.mxu0 %v3987
        %v4217 = vpop.f32.mrf.mxu0
        %v4218 = vadd.f32 0.0, %v4217
        %v4219 = vpop.f32.mrf.mxu0
        %4220 = vdwg.mxu0
        %4222 = vst [vmem:[#allocation1] ss:$2 sm:$0xff] %v3972
        %v4223 = vld.sshfl [vmem:[#allocation1] sm:$0xff pattern:$0x75316420]
        %v4224 = vld.sshfl [vmem:[#allocation1 + $0x8] sm:$0xff pattern:$0x75316420]
        %v4227 = vpack.c.bf16 %v4223, %v4223
        %v4228 = vpack.c.bf16 %v4224, %v4224
        %v4230 = vsel %vm2956, %v4227, 0
        %v4233 = vsel %vm2956, %v4228, 0
        %4235 = vmatpush.bf16.msra.mxu0 0
        %4236 = vmatpush.bf16.msra.mxu0 0
        %4237 = vmatpush.bf16.msra.mxu0 0
        %4238 = vmatpush.bf16.msra.mxu0 0
        %4239 = vmatpush.bf16.msra.mxu0 0
        %4240 = vmatpush.bf16.msra.mxu0 0
        %4241 = vmatpush.bf16.msra.mxu0 0
        %4242 = vmatpush.bf16.msra.mxu0 %v4230
        %4243 = vmatmul.bf16.gmra.mxu0 %v3987
        %v4244 = vpop.f32.mrf.mxu0
        %v4245 = vadd.f32 0.0, %v4244
        %v4246 = vpop.f32.mrf.mxu0
        %4247 = vdwg.mxu0
        %4248 = vmatpush.bf16.msra.mxu0 0
        %4249 = vmatpush.bf16.msra.mxu0 0
        %4250 = vmatpush.bf16.msra.mxu0 0
        %4251 = vmatpush.bf16.msra.mxu0 0
        %4252 = vmatpush.bf16.msra.mxu0 0
        %4253 = vmatpush.bf16.msra.mxu0 0
        %4254 = vmatpush.bf16.msra.mxu0 0
        %4255 = vmatpush.bf16.msra.mxu0 %v4233
        %4256 = vmatmul.bf16.gmra.mxu0 %v3987
        %v4257 = vpop.f32.mrf.mxu0
        %v4258 = vadd.f32 0.0, %v4257
        %v4259 = vpop.f32.mrf.mxu0
        %4260 = vdwg.mxu0
        %4262 = vst [vmem:[#allocation1] ss:$2 sm:$0xff] %v3974
        %v4263 = vld.sshfl [vmem:[#allocation1] sm:$0xff pattern:$0x75316420]
        %v4264 = vld.sshfl [vmem:[#allocation1 + $0x8] sm:$0xff pattern:$0x75316420]
        %v4267 = vpack.c.bf16 %v4263, %v4263
        %v4268 = vpack.c.bf16 %v4264, %v4264
        %v4270 = vsel %vm2956, %v4267, 0
        %v4273 = vsel %vm2956, %v4268, 0
        %4275 = vmatpush.bf16.msra.mxu0 0
        %4276 = vmatpush.bf16.msra.mxu0 0
        %4277 = vmatpush.bf16.msra.mxu0 0
        %4278 = vmatpush.bf16.msra.mxu0 0
        %4279 = vmatpush.bf16.msra.mxu0 0
        %4280 = vmatpush.bf16.msra.mxu0 0
        %4281 = vmatpush.bf16.msra.mxu0 0
        %4282 = vmatpush.bf16.msra.mxu0 %v4270
        %4283 = vmatmul.bf16.gmra.mxu0 %v3987
        %v4284 = vpop.f32.mrf.mxu0
        %v4285 = vadd.f32 0.0, %v4284
        %v4286 = vpop.f32.mrf.mxu0
        %4287 = vdwg.mxu0
        %4288 = vmatpush.bf16.msra.mxu0 0
        %4289 = vmatpush.bf16.msra.mxu0 0
        %4290 = vmatpush.bf16.msra.mxu0 0
        %4291 = vmatpush.bf16.msra.mxu0 0
        %4292 = vmatpush.bf16.msra.mxu0 0
        %4293 = vmatpush.bf16.msra.mxu0 0
        %4294 = vmatpush.bf16.msra.mxu0 0
        %4295 = vmatpush.bf16.msra.mxu0 %v4273
        %4296 = vmatmul.bf16.gmra.mxu0 %v3987
        %v4297 = vpop.f32.mrf.mxu0
        %v4298 = vadd.f32 0.0, %v4297
        %v4299 = vpop.f32.mrf.mxu0
        %4300 = vdwg.mxu0
        %v4301 = vadd.f32 %v3269, %v4005
        %v4302 = vadd.f32 %v3270, %v4018
        %v4303 = vadd.f32 %v3271, %v4045
        %v4304 = vadd.f32 %v3272, %v4058
        %v4305 = vadd.f32 %v3273, %v4085
        %v4306 = vadd.f32 %v3274, %v4098
        %v4307 = vadd.f32 %v3275, %v4125
        %v4308 = vadd.f32 %v3276, %v4138
        %v4309 = vadd.f32 %v3277, %v4165
        %v4310 = vadd.f32 %v3278, %v4178
        %v4311 = vadd.f32 %v3279, %v4205
        %v4312 = vadd.f32 %v3280, %v4218
        %v4313 = vadd.f32 %v3281, %v4245
        %v4314 = vadd.f32 %v3282, %v4258
        %v4315 = vadd.f32 %v3283, %v4285
        %v4316 = vadd.f32 %v3284, %v4298
        %v4317 = vadd.f32 %v4301, %v4302
        %4318 = vadd.xlane.f32.xlu0 %v4317
        %v4319 = vpop.xlane.xlu0 %4318
        %v4320 = vadd.f32 %v4303, %v4304
        %4321 = vadd.xlane.f32.xlu0 %v4320
        %v4322 = vpop.xlane.xlu0 %4321
        %v4323 = vadd.f32 %v4305, %v4306
        %4324 = vadd.xlane.f32.xlu0 %v4323
        %v4325 = vpop.xlane.xlu0 %4324
        %v4326 = vadd.f32 %v4307, %v4308
        %4327 = vadd.xlane.f32.xlu0 %v4326
        %v4328 = vpop.xlane.xlu0 %4327
        %v4329 = vadd.f32 %v4309, %v4310
        %4330 = vadd.xlane.f32.xlu0 %v4329
        %v4331 = vpop.xlane.xlu0 %4330
        %v4332 = vadd.f32 %v4311, %v4312
        %4333 = vadd.xlane.f32.xlu0 %v4332
        %v4334 = vpop.xlane.xlu0 %4333
        %v4335 = vadd.f32 %v4313, %v4314
        %4336 = vadd.xlane.f32.xlu0 %v4335
        %v4337 = vpop.xlane.xlu0 %4336
        %v4338 = vadd.f32 %v4315, %v4316
        %4339 = vadd.xlane.f32.xlu0 %v4338
        %v4340 = vpop.xlane.xlu0 %4339
        %v4341 = vrot.slane %v4319, 4
        %v4342 = vadd.f32 %v4319, %v4341
        %v4343 = vrot.slane %v4342, 2
        %v4344 = vadd.f32 %v4342, %v4343
        %v4345 = vrot.slane %v4344, 1
        %v4346 = vadd.f32 %v4344, %v4345
        %v4347 = vrot.slane %v4322, 4
        %v4348 = vadd.f32 %v4322, %v4347
        %v4349 = vrot.slane %v4348, 2
        %v4350 = vadd.f32 %v4348, %v4349
        %v4351 = vrot.slane %v4350, 1
        %v4352 = vadd.f32 %v4350, %v4351
        %v4353 = vrot.slane %v4325, 4
        %v4354 = vadd.f32 %v4325, %v4353
        %v4355 = vrot.slane %v4354, 2
        %v4356 = vadd.f32 %v4354, %v4355
        %v4357 = vrot.slane %v4356, 1
        %v4358 = vadd.f32 %v4356, %v4357
        %v4359 = vrot.slane %v4328, 4
        %v4360 = vadd.f32 %v4328, %v4359
        %v4361 = vrot.slane %v4360, 2
        %v4362 = vadd.f32 %v4360, %v4361
        %v4363 = vrot.slane %v4362, 1
        %v4364 = vadd.f32 %v4362, %v4363
        %v4365 = vrot.slane %v4331, 4
        %v4366 = vadd.f32 %v4331, %v4365
        %v4367 = vrot.slane %v4366, 2
        %v4368 = vadd.f32 %v4366, %v4367
        %v4369 = vrot.slane %v4368, 1
        %v4370 = vadd.f32 %v4368, %v4369
        %v4371 = vrot.slane %v4334, 4
        %v4372 = vadd.f32 %v4334, %v4371
        %v4373 = vrot.slane %v4372, 2
        %v4374 = vadd.f32 %v4372, %v4373
        %v4375 = vrot.slane %v4374, 1
        %v4376 = vadd.f32 %v4374, %v4375
        %v4377 = vrot.slane %v4337, 4
        %v4378 = vadd.f32 %v4337, %v4377
        %v4379 = vrot.slane %v4378, 2
        %v4380 = vadd.f32 %v4378, %v4379
        %v4381 = vrot.slane %v4380, 1
        %v4382 = vadd.f32 %v4380, %v4381
        %v4383 = vrot.slane %v4340, 4
        %v4384 = vadd.f32 %v4340, %v4383
        %v4385 = vrot.slane %v4384, 2
        %v4386 = vadd.f32 %v4384, %v4385
        %v4387 = vrot.slane %v4386, 1
        %v4388 = vadd.f32 %v4386, %v4387
        %v4389 = vmul.f32 %v4301, %v4301
        %v4390 = vmul.f32 %v4302, %v4302
        %v4391 = vmul.f32 %v4303, %v4303
        %v4392 = vmul.f32 %v4304, %v4304
        %v4393 = vmul.f32 %v4305, %v4305
        %v4394 = vmul.f32 %v4306, %v4306
        %v4395 = vmul.f32 %v4307, %v4307
        %v4396 = vmul.f32 %v4308, %v4308
        %v4397 = vmul.f32 %v4309, %v4309
        %v4398 = vmul.f32 %v4310, %v4310
        %v4399 = vmul.f32 %v4311, %v4311
        %v4400 = vmul.f32 %v4312, %v4312
        %v4401 = vmul.f32 %v4313, %v4313
        %v4402 = vmul.f32 %v4314, %v4314
        %v4403 = vmul.f32 %v4315, %v4315
        %v4404 = vmul.f32 %v4316, %v4316
        %v4405 = vadd.f32 %v4389, %v4390
        %4406 = vadd.xlane.f32.xlu0 %v4405
        %v4407 = vpop.xlane.xlu0 %4406
        %v4408 = vadd.f32 %v4391, %v4392
        %4409 = vadd.xlane.f32.xlu0 %v4408
        %v4410 = vpop.xlane.xlu0 %4409
        %v4411 = vadd.f32 %v4393, %v4394
        %4412 = vadd.xlane.f32.xlu0 %v4411
        %v4413 = vpop.xlane.xlu0 %4412
        %v4414 = vadd.f32 %v4395, %v4396
        %4415 = vadd.xlane.f32.xlu0 %v4414
        %v4416 = vpop.xlane.xlu0 %4415
        %v4417 = vadd.f32 %v4397, %v4398
        %4418 = vadd.xlane.f32.xlu0 %v4417
        %v4419 = vpop.xlane.xlu0 %4418
        %v4420 = vadd.f32 %v4399, %v4400
        %4421 = vadd.xlane.f32.xlu0 %v4420
        %v4422 = vpop.xlane.xlu0 %4421
        %v4423 = vadd.f32 %v4401, %v4402
        %4424 = vadd.xlane.f32.xlu0 %v4423
        %v4425 = vpop.xlane.xlu0 %4424
        %v4426 = vadd.f32 %v4403, %v4404
        %4427 = vadd.xlane.f32.xlu0 %v4426
        %v4428 = vpop.xlane.xlu0 %4427
        %v4429 = vrot.slane %v4407, 4
        %v4430 = vadd.f32 %v4407, %v4429
        %v4431 = vrot.slane %v4430, 2
        %v4432 = vadd.f32 %v4430, %v4431
        %v4433 = vrot.slane %v4432, 1
        %v4434 = vadd.f32 %v4432, %v4433
        %v4435 = vrot.slane %v4410, 4
        %v4436 = vadd.f32 %v4410, %v4435
        %v4437 = vrot.slane %v4436, 2
        %v4438 = vadd.f32 %v4436, %v4437
        %v4439 = vrot.slane %v4438, 1
        %v4440 = vadd.f32 %v4438, %v4439
        %v4441 = vrot.slane %v4413, 4
        %v4442 = vadd.f32 %v4413, %v4441
        %v4443 = vrot.slane %v4442, 2
        %v4444 = vadd.f32 %v4442, %v4443
        %v4445 = vrot.slane %v4444, 1
        %v4446 = vadd.f32 %v4444, %v4445
        %v4447 = vrot.slane %v4416, 4
        %v4448 = vadd.f32 %v4416, %v4447
        %v4449 = vrot.slane %v4448, 2
        %v4450 = vadd.f32 %v4448, %v4449
        %v4451 = vrot.slane %v4450, 1
        %v4452 = vadd.f32 %v4450, %v4451
        %v4453 = vrot.slane %v4419, 4
        %v4454 = vadd.f32 %v4419, %v4453
        %v4455 = vrot.slane %v4454, 2
        %v4456 = vadd.f32 %v4454, %v4455
        %v4457 = vrot.slane %v4456, 1
        %v4458 = vadd.f32 %v4456, %v4457
        %v4459 = vrot.slane %v4422, 4
        %v4460 = vadd.f32 %v4422, %v4459
        %v4461 = vrot.slane %v4460, 2
        %v4462 = vadd.f32 %v4460, %v4461
        %v4463 = vrot.slane %v4462, 1
        %v4464 = vadd.f32 %v4462, %v4463
        %v4465 = vrot.slane %v4425, 4
        %v4466 = vadd.f32 %v4425, %v4465
        %v4467 = vrot.slane %v4466, 2
        %v4468 = vadd.f32 %v4466, %v4467
        %v4469 = vrot.slane %v4468, 1
        %v4470 = vadd.f32 %v4468, %v4469
        %v4471 = vrot.slane %v4428, 4
        %v4472 = vadd.f32 %v4428, %v4471
        %v4473 = vrot.slane %v4472, 2
        %v4474 = vadd.f32 %v4472, %v4473
        %v4475 = vrot.slane %v4474, 1
        %v4476 = vadd.f32 %v4474, %v4475
        %v4477 = vmul.f32 %v4346, 0.00048828125
        %v4478 = vmul.f32 %v4352, 0.00048828125
        %v4479 = vmul.f32 %v4358, 0.00048828125
        %v4480 = vmul.f32 %v4364, 0.00048828125
        %v4481 = vmul.f32 %v4370, 0.00048828125
        %v4482 = vmul.f32 %v4376, 0.00048828125
        %v4483 = vmul.f32 %v4382, 0.00048828125
        %v4484 = vmul.f32 %v4388, 0.00048828125
        %v4485 = vmul.f32 %v4434, 0.00048828125
        %v4486 = vmul.f32 %v4440, 0.00048828125
        %v4487 = vmul.f32 %v4446, 0.00048828125
        %v4488 = vmul.f32 %v4452, 0.00048828125
        %v4489 = vmul.f32 %v4458, 0.00048828125
        %v4490 = vmul.f32 %v4464, 0.00048828125
        %v4491 = vmul.f32 %v4470, 0.00048828125
        %v4492 = vmul.f32 %v4476, 0.00048828125
        %v4493 = vmul.f32 %v4477, %v4477
        %v4494 = vmul.f32 %v4478, %v4478
        %v4495 = vmul.f32 %v4479, %v4479
        %v4496 = vmul.f32 %v4480, %v4480
        %v4497 = vmul.f32 %v4481, %v4481
        %v4498 = vmul.f32 %v4482, %v4482
        %v4499 = vmul.f32 %v4483, %v4483
        %v4500 = vmul.f32 %v4484, %v4484
        %v4501 = vsub.f32 %v4485, %v4493
        %v4502 = vsub.f32 %v4486, %v4494
        %v4503 = vsub.f32 %v4487, %v4495
        %v4504 = vsub.f32 %v4488, %v4496
        %v4505 = vsub.f32 %v4489, %v4497
        %v4506 = vsub.f32 %v4490, %v4498
        %v4507 = vsub.f32 %v4491, %v4499
        %v4508 = vsub.f32 %v4492, %v4500
        %v4509 = vsub.f32 %v4301, %v4477
        %v4510 = vsub.f32 %v4302, %v4477
        %v4511 = vsub.f32 %v4303, %v4478
        %v4512 = vsub.f32 %v4304, %v4478
        %v4513 = vsub.f32 %v4305, %v4479
        %v4514 = vsub.f32 %v4306, %v4479
        %v4515 = vsub.f32 %v4307, %v4480
        %v4516 = vsub.f32 %v4308, %v4480
        %v4517 = vsub.f32 %v4309, %v4481
        %v4518 = vsub.f32 %v4310, %v4481
        %v4519 = vsub.f32 %v4311, %v4482
        %v4520 = vsub.f32 %v4312, %v4482
        %v4521 = vsub.f32 %v4313, %v4483
        %v4522 = vsub.f32 %v4314, %v4483
        %v4523 = vsub.f32 %v4315, %v4484
        %v4524 = vsub.f32 %v4316, %v4484
        %v4525 = vadd.f32 %v4501, 1e-05
        %v4526 = vadd.f32 %v4502, 1e-05
        %v4527 = vadd.f32 %v4503, 1e-05
        %v4528 = vadd.f32 %v4504, 1e-05
        %v4529 = vadd.f32 %v4505, 1e-05
        %v4530 = vadd.f32 %v4506, 1e-05
        %v4531 = vadd.f32 %v4507, 1e-05
        %v4532 = vadd.f32 %v4508, 1e-05
        %v4533 = vrsqrt.pop %v4525
        %v4534 = vmul.f32 %v4533, %v4525
        %v4535 = vmul.f32 %v4534, %v4533
        %v4536 = vmul.f32 0.5, %v4535
        %v4537 = vsub.f32 1.5, %v4536
        %v4538 = vmul.f32 %v4533, %v4537
        %vm4539 = vweird.f32 %v4525
        %vm4540 = vweird.f32 %v4533
        %vm4541 = vmor %vm4539, %vm4540
        %v4542 = vsel %vm4541, %v4533, %v4538
        %v4543 = vrsqrt.pop %v4526
        %v4544 = vmul.f32 %v4543, %v4526
        %v4545 = vmul.f32 %v4544, %v4543
        %v4546 = vmul.f32 0.5, %v4545
        %v4547 = vsub.f32 1.5, %v4546
        %v4548 = vmul.f32 %v4543, %v4547
        %vm4549 = vweird.f32 %v4526
        %vm4550 = vweird.f32 %v4543
        %vm4551 = vmor %vm4549, %vm4550
        %v4552 = vsel %vm4551, %v4543, %v4548
        %v4553 = vrsqrt.pop %v4527
        %v4554 = vmul.f32 %v4553, %v4527
        %v4555 = vmul.f32 %v4554, %v4553
        %v4556 = vmul.f32 0.5, %v4555
        %v4557 = vsub.f32 1.5, %v4556
        %v4558 = vmul.f32 %v4553, %v4557
        %vm4559 = vweird.f32 %v4527
        %vm4560 = vweird.f32 %v4553
        %vm4561 = vmor %vm4559, %vm4560
        %v4562 = vsel %vm4561, %v4553, %v4558
        %v4563 = vrsqrt.pop %v4528
        %v4564 = vmul.f32 %v4563, %v4528
        %v4565 = vmul.f32 %v4564, %v4563
        %v4566 = vmul.f32 0.5, %v4565
        %v4567 = vsub.f32 1.5, %v4566
        %v4568 = vmul.f32 %v4563, %v4567
        %vm4569 = vweird.f32 %v4528
        %vm4570 = vweird.f32 %v4563
        %vm4571 = vmor %vm4569, %vm4570
        %v4572 = vsel %vm4571, %v4563, %v4568
        %v4573 = vrsqrt.pop %v4529
        %v4574 = vmul.f32 %v4573, %v4529
        %v4575 = vmul.f32 %v4574, %v4573
        %v4576 = vmul.f32 0.5, %v4575
        %v4577 = vsub.f32 1.5, %v4576
        %v4578 = vmul.f32 %v4573, %v4577
        %vm4579 = vweird.f32 %v4529
        %vm4580 = vweird.f32 %v4573
        %vm4581 = vmor %vm4579, %vm4580
        %v4582 = vsel %vm4581, %v4573, %v4578
        %v4583 = vrsqrt.pop %v4530
        %v4584 = vmul.f32 %v4583, %v4530
        %v4585 = vmul.f32 %v4584, %v4583
        %v4586 = vmul.f32 0.5, %v4585
        %v4587 = vsub.f32 1.5, %v4586
        %v4588 = vmul.f32 %v4583, %v4587
        %vm4589 = vweird.f32 %v4530
        %vm4590 = vweird.f32 %v4583
        %vm4591 = vmor %vm4589, %vm4590
        %v4592 = vsel %vm4591, %v4583, %v4588
        %v4593 = vrsqrt.pop %v4531
        %v4594 = vmul.f32 %v4593, %v4531
        %v4595 = vmul.f32 %v4594, %v4593
        %v4596 = vmul.f32 0.5, %v4595
        %v4597 = vsub.f32 1.5, %v4596
        %v4598 = vmul.f32 %v4593, %v4597
        %vm4599 = vweird.f32 %v4531
        %vm4600 = vweird.f32 %v4593
        %vm4601 = vmor %vm4599, %vm4600
        %v4602 = vsel %vm4601, %v4593, %v4598
        %v4603 = vrsqrt.pop %v4532
        %v4604 = vmul.f32 %v4603, %v4532
        %v4605 = vmul.f32 %v4604, %v4603
        %v4606 = vmul.f32 0.5, %v4605
        %v4607 = vsub.f32 1.5, %v4606
        %v4608 = vmul.f32 %v4603, %v4607
        %vm4609 = vweird.f32 %v4532
        %vm4610 = vweird.f32 %v4603
        %vm4611 = vmor %vm4609, %vm4610
        %v4612 = vsel %vm4611, %v4603, %v4608
        %v4613 = vmul.f32 %v4509, %v4542
        %v4614 = vmul.f32 %v4510, %v4542
        %v4615 = vmul.f32 %v4511, %v4552
        %v4616 = vmul.f32 %v4512, %v4552
        %v4617 = vmul.f32 %v4513, %v4562
        %v4618 = vmul.f32 %v4514, %v4562
        %v4619 = vmul.f32 %v4515, %v4572
        %v4620 = vmul.f32 %v4516, %v4572
        %v4621 = vmul.f32 %v4517, %v4582
        %v4622 = vmul.f32 %v4518, %v4582
        %v4623 = vmul.f32 %v4519, %v4592
        %v4624 = vmul.f32 %v4520, %v4592
        %v4625 = vmul.f32 %v4521, %v4602
        %v4626 = vmul.f32 %v4522, %v4602
        %v4627 = vmul.f32 %v4523, %v4612
        %v4628 = vmul.f32 %v4524, %v4612
        %4629 = vset.pattern.permute.xlu0 6
        %4630 = vperm.xlu0 %4629, %v774
        %v4631 = vpop.permute.xlu0 %4630
        %v4633 = vmul.f32 %v4613, %v4631
        %v4634 = vmul.f32 %v4614, %v4631
        %v4635 = vmul.f32 %v4615, %v4631
        %v4636 = vmul.f32 %v4616, %v4631
        %v4637 = vmul.f32 %v4617, %v4631
        %v4638 = vmul.f32 %v4618, %v4631
        %v4639 = vmul.f32 %v4619, %v4631
        %v4640 = vmul.f32 %v4620, %v4631
        %v4641 = vmul.f32 %v4621, %v4631
        %v4642 = vmul.f32 %v4622, %v4631
        %v4643 = vmul.f32 %v4623, %v4631
        %v4644 = vmul.f32 %v4624, %v4631
        %v4645 = vmul.f32 %v4625, %v4631
        %v4646 = vmul.f32 %v4626, %v4631
        %v4647 = vmul.f32 %v4627, %v4631
        %v4648 = vmul.f32 %v4628, %v4631
        %4649 = vset.pattern.permute.xlu0 7
        %4650 = vperm.xlu0 %4649, %v774
        %v4651 = vpop.permute.xlu0 %4650
        %v4653 = vadd.f32 %v4633, %v4651
        %v4654 = vadd.f32 %v4634, %v4651
        %v4655 = vadd.f32 %v4635, %v4651
        %v4656 = vadd.f32 %v4636, %v4651
        %v4657 = vadd.f32 %v4637, %v4651
        %v4658 = vadd.f32 %v4638, %v4651
        %v4659 = vadd.f32 %v4639, %v4651
        %v4660 = vadd.f32 %v4640, %v4651
        %v4661 = vadd.f32 %v4641, %v4651
        %v4662 = vadd.f32 %v4642, %v4651
        %v4663 = vadd.f32 %v4643, %v4651
        %v4664 = vadd.f32 %v4644, %v4651
        %v4665 = vadd.f32 %v4645, %v4651
        %v4666 = vadd.f32 %v4646, %v4651
        %v4667 = vadd.f32 %v4647, %v4651
        %v4668 = vadd.f32 %v4648, %v4651
        %v4669 = vxor.u32 %v4653, 2147483648
        %v4670 = vxor.u32 %v4654, 2147483648
        %v4671 = vxor.u32 %v4655, 2147483648
        %v4672 = vxor.u32 %v4656, 2147483648
        %v4673 = vxor.u32 %v4657, 2147483648
        %v4674 = vxor.u32 %v4658, 2147483648
        %v4675 = vxor.u32 %v4659, 2147483648
        %v4676 = vxor.u32 %v4660, 2147483648
        %v4677 = vxor.u32 %v4661, 2147483648
        %v4678 = vxor.u32 %v4662, 2147483648
        %v4679 = vxor.u32 %v4663, 2147483648
        %v4680 = vxor.u32 %v4664, 2147483648
        %v4681 = vxor.u32 %v4665, 2147483648
        %v4682 = vxor.u32 %v4666, 2147483648
        %v4683 = vxor.u32 %v4667, 2147483648
        %v4684 = vxor.u32 %v4668, 2147483648
        %v4685 = vmul.f32 %v4669, 1.442695
        %v4686 = vpow.pop %v4685
        %v4687 = vmul.f32 %v4670, 1.442695
        %v4688 = vpow.pop %v4687
        %v4689 = vmul.f32 %v4671, 1.442695
        %v4690 = vpow.pop %v4689
        %v4691 = vmul.f32 %v4672, 1.442695
        %v4692 = vpow.pop %v4691
        %v4693 = vmul.f32 %v4673, 1.442695
        %v4694 = vpow.pop %v4693
        %v4695 = vmul.f32 %v4674, 1.442695
        %v4696 = vpow.pop %v4695
        %v4697 = vmul.f32 %v4675, 1.442695
        %v4698 = vpow.pop %v4697
        %v4699 = vmul.f32 %v4676, 1.442695
        %v4700 = vpow.pop %v4699
        %v4701 = vmul.f32 %v4677, 1.442695
        %v4702 = vpow.pop %v4701
        %v4703 = vmul.f32 %v4678, 1.442695
        %v4704 = vpow.pop %v4703
        %v4705 = vmul.f32 %v4679, 1.442695
        %v4706 = vpow.pop %v4705
        %v4707 = vmul.f32 %v4680, 1.442695
        %v4708 = vpow.pop %v4707
        %v4709 = vmul.f32 %v4681, 1.442695
        %v4710 = vpow.pop %v4709
        %v4711 = vmul.f32 %v4682, 1.442695
        %v4712 = vpow.pop %v4711
        %v4713 = vmul.f32 %v4683, 1.442695
        %v4714 = vpow.pop %v4713
        %v4715 = vmul.f32 %v4684, 1.442695
        %v4716 = vpow.pop %v4715
        %v4717 = vadd.f32 %v4686, 1.0
        %v4718 = vadd.f32 %v4688, 1.0
        %v4719 = vadd.f32 %v4690, 1.0
        %v4720 = vadd.f32 %v4692, 1.0
        %v4721 = vadd.f32 %v4694, 1.0
        %v4722 = vadd.f32 %v4696, 1.0
        %v4723 = vadd.f32 %v4698, 1.0
        %v4724 = vadd.f32 %v4700, 1.0
        %v4725 = vadd.f32 %v4702, 1.0
        %v4726 = vadd.f32 %v4704, 1.0
        %v4727 = vadd.f32 %v4706, 1.0
        %v4728 = vadd.f32 %v4708, 1.0
        %v4729 = vadd.f32 %v4710, 1.0
        %v4730 = vadd.f32 %v4712, 1.0
        %v4731 = vadd.f32 %v4714, 1.0
        %v4732 = vadd.f32 %v4716, 1.0
        %v4733 = vrcp.pop %v4717
        %v4734 = vmul.f32 %v4717, %v4733
        %v4735 = vsub.f32 1.0, %v4734
        %v4736 = vmul.f32 %v4733, %v4735
        %v4737 = vadd.f32 %v4733, %v4736
        %vm4738 = vweird.f32 %v4717
        %vm4739 = vweird.f32 %v4733
        %vm4740 = vmor %vm4738, %vm4739
        %v4741 = vsel %vm4740, %v4733, %v4737
        %v4742 = vand.u32 2147483647, %v4717
        %vm4743 = vcmp.eq.f32.partialorder %v4742, 8.507059e+37
        %v4744 = vand.u32 %v4717, 2147483648
        %v4745 = vor.u32 1.1754944e-38, %v4744
        %v4746 = vsel %vm4743, %v4745, %v4741
        %v4747 = vmul.f32 1.0, %v4746
        %v4748 = vrcp.pop %v4718
        %v4749 = vmul.f32 %v4718, %v4748
        %v4750 = vsub.f32 1.0, %v4749
        %v4751 = vmul.f32 %v4748, %v4750
        %v4752 = vadd.f32 %v4748, %v4751
        %vm4753 = vweird.f32 %v4718
        %vm4754 = vweird.f32 %v4748
        %vm4755 = vmor %vm4753, %vm4754
        %v4756 = vsel %vm4755, %v4748, %v4752
        %v4757 = vand.u32 2147483647, %v4718
        %vm4758 = vcmp.eq.f32.partialorder %v4757, 8.507059e+37
        %v4759 = vand.u32 %v4718, 2147483648
        %v4760 = vor.u32 1.1754944e-38, %v4759
        %v4761 = vsel %vm4758, %v4760, %v4756
        %v4762 = vmul.f32 1.0, %v4761
        %v4763 = vrcp.pop %v4719
        %v4764 = vmul.f32 %v4719, %v4763
        %v4765 = vsub.f32 1.0, %v4764
        %v4766 = vmul.f32 %v4763, %v4765
        %v4767 = vadd.f32 %v4763, %v4766
        %vm4768 = vweird.f32 %v4719
        %vm4769 = vweird.f32 %v4763
        %vm4770 = vmor %vm4768, %vm4769
        %v4771 = vsel %vm4770, %v4763, %v4767
        %v4772 = vand.u32 2147483647, %v4719
        %vm4773 = vcmp.eq.f32.partialorder %v4772, 8.507059e+37
        %v4774 = vand.u32 %v4719, 2147483648
        %v4775 = vor.u32 1.1754944e-38, %v4774
        %v4776 = vsel %vm4773, %v4775, %v4771
        %v4777 = vmul.f32 1.0, %v4776
        %v4778 = vrcp.pop %v4720
        %v4779 = vmul.f32 %v4720, %v4778
        %v4780 = vsub.f32 1.0, %v4779
        %v4781 = vmul.f32 %v4778, %v4780
        %v4782 = vadd.f32 %v4778, %v4781
        %vm4783 = vweird.f32 %v4720
        %vm4784 = vweird.f32 %v4778
        %vm4785 = vmor %vm4783, %vm4784
        %v4786 = vsel %vm4785, %v4778, %v4782
        %v4787 = vand.u32 2147483647, %v4720
        %vm4788 = vcmp.eq.f32.partialorder %v4787, 8.507059e+37
        %v4789 = vand.u32 %v4720, 2147483648
        %v4790 = vor.u32 1.1754944e-38, %v4789
        %v4791 = vsel %vm4788, %v4790, %v4786
        %v4792 = vmul.f32 1.0, %v4791
        %v4793 = vrcp.pop %v4721
        %v4794 = vmul.f32 %v4721, %v4793
        %v4795 = vsub.f32 1.0, %v4794
        %v4796 = vmul.f32 %v4793, %v4795
        %v4797 = vadd.f32 %v4793, %v4796
        %vm4798 = vweird.f32 %v4721
        %vm4799 = vweird.f32 %v4793
        %vm4800 = vmor %vm4798, %vm4799
        %v4801 = vsel %vm4800, %v4793, %v4797
        %v4802 = vand.u32 2147483647, %v4721
        %vm4803 = vcmp.eq.f32.partialorder %v4802, 8.507059e+37
        %v4804 = vand.u32 %v4721, 2147483648
        %v4805 = vor.u32 1.1754944e-38, %v4804
        %v4806 = vsel %vm4803, %v4805, %v4801
        %v4807 = vmul.f32 1.0, %v4806
        %v4808 = vrcp.pop %v4722
        %v4809 = vmul.f32 %v4722, %v4808
        %v4810 = vsub.f32 1.0, %v4809
        %v4811 = vmul.f32 %v4808, %v4810
        %v4812 = vadd.f32 %v4808, %v4811
        %vm4813 = vweird.f32 %v4722
        %vm4814 = vweird.f32 %v4808
        %vm4815 = vmor %vm4813, %vm4814
        %v4816 = vsel %vm4815, %v4808, %v4812
        %v4817 = vand.u32 2147483647, %v4722
        %vm4818 = vcmp.eq.f32.partialorder %v4817, 8.507059e+37
        %v4819 = vand.u32 %v4722, 2147483648
        %v4820 = vor.u32 1.1754944e-38, %v4819
        %v4821 = vsel %vm4818, %v4820, %v4816
        %v4822 = vmul.f32 1.0, %v4821
        %v4823 = vrcp.pop %v4723
        %v4824 = vmul.f32 %v4723, %v4823
        %v4825 = vsub.f32 1.0, %v4824
        %v4826 = vmul.f32 %v4823, %v4825
        %v4827 = vadd.f32 %v4823, %v4826
        %vm4828 = vweird.f32 %v4723
        %vm4829 = vweird.f32 %v4823
        %vm4830 = vmor %vm4828, %vm4829
        %v4831 = vsel %vm4830, %v4823, %v4827
        %v4832 = vand.u32 2147483647, %v4723
        %vm4833 = vcmp.eq.f32.partialorder %v4832, 8.507059e+37
        %v4834 = vand.u32 %v4723, 2147483648
        %v4835 = vor.u32 1.1754944e-38, %v4834
        %v4836 = vsel %vm4833, %v4835, %v4831
        %v4837 = vmul.f32 1.0, %v4836
        %v4838 = vrcp.pop %v4724
        %v4839 = vmul.f32 %v4724, %v4838
        %v4840 = vsub.f32 1.0, %v4839
        %v4841 = vmul.f32 %v4838, %v4840
        %v4842 = vadd.f32 %v4838, %v4841
        %vm4843 = vweird.f32 %v4724
        %vm4844 = vweird.f32 %v4838
        %vm4845 = vmor %vm4843, %vm4844
        %v4846 = vsel %vm4845, %v4838, %v4842
        %v4847 = vand.u32 2147483647, %v4724
        %vm4848 = vcmp.eq.f32.partialorder %v4847, 8.507059e+37
        %v4849 = vand.u32 %v4724, 2147483648
        %v4850 = vor.u32 1.1754944e-38, %v4849
        %v4851 = vsel %vm4848, %v4850, %v4846
        %v4852 = vmul.f32 1.0, %v4851
        %v4853 = vrcp.pop %v4725
        %v4854 = vmul.f32 %v4725, %v4853
        %v4855 = vsub.f32 1.0, %v4854
        %v4856 = vmul.f32 %v4853, %v4855
        %v4857 = vadd.f32 %v4853, %v4856
        %vm4858 = vweird.f32 %v4725
        %vm4859 = vweird.f32 %v4853
        %vm4860 = vmor %vm4858, %vm4859
        %v4861 = vsel %vm4860, %v4853, %v4857
        %v4862 = vand.u32 2147483647, %v4725
        %vm4863 = vcmp.eq.f32.partialorder %v4862, 8.507059e+37
        %v4864 = vand.u32 %v4725, 2147483648
        %v4865 = vor.u32 1.1754944e-38, %v4864
        %v4866 = vsel %vm4863, %v4865, %v4861
        %v4867 = vmul.f32 1.0, %v4866
        %v4868 = vrcp.pop %v4726
        %v4869 = vmul.f32 %v4726, %v4868
        %v4870 = vsub.f32 1.0, %v4869
        %v4871 = vmul.f32 %v4868, %v4870
        %v4872 = vadd.f32 %v4868, %v4871
        %vm4873 = vweird.f32 %v4726
        %vm4874 = vweird.f32 %v4868
        %vm4875 = vmor %vm4873, %vm4874
        %v4876 = vsel %vm4875, %v4868, %v4872
        %v4877 = vand.u32 2147483647, %v4726
        %vm4878 = vcmp.eq.f32.partialorder %v4877, 8.507059e+37
        %v4879 = vand.u32 %v4726, 2147483648
        %v4880 = vor.u32 1.1754944e-38, %v4879
        %v4881 = vsel %vm4878, %v4880, %v4876
        %v4882 = vmul.f32 1.0, %v4881
        %v4883 = vrcp.pop %v4727
        %v4884 = vmul.f32 %v4727, %v4883
        %v4885 = vsub.f32 1.0, %v4884
        %v4886 = vmul.f32 %v4883, %v4885
        %v4887 = vadd.f32 %v4883, %v4886
        %vm4888 = vweird.f32 %v4727
        %vm4889 = vweird.f32 %v4883
        %vm4890 = vmor %vm4888, %vm4889
        %v4891 = vsel %vm4890, %v4883, %v4887
        %v4892 = vand.u32 2147483647, %v4727
        %vm4893 = vcmp.eq.f32.partialorder %v4892, 8.507059e+37
        %v4894 = vand.u32 %v4727, 2147483648
        %v4895 = vor.u32 1.1754944e-38, %v4894
        %v4896 = vsel %vm4893, %v4895, %v4891
        %v4897 = vmul.f32 1.0, %v4896
        %v4898 = vrcp.pop %v4728
        %v4899 = vmul.f32 %v4728, %v4898
        %v4900 = vsub.f32 1.0, %v4899
        %v4901 = vmul.f32 %v4898, %v4900
        %v4902 = vadd.f32 %v4898, %v4901
        %vm4903 = vweird.f32 %v4728
        %vm4904 = vweird.f32 %v4898
        %vm4905 = vmor %vm4903, %vm4904
        %v4906 = vsel %vm4905, %v4898, %v4902
        %v4907 = vand.u32 2147483647, %v4728
        %vm4908 = vcmp.eq.f32.partialorder %v4907, 8.507059e+37
        %v4909 = vand.u32 %v4728, 2147483648
        %v4910 = vor.u32 1.1754944e-38, %v4909
        %v4911 = vsel %vm4908, %v4910, %v4906
        %v4912 = vmul.f32 1.0, %v4911
        %v4913 = vrcp.pop %v4729
        %v4914 = vmul.f32 %v4729, %v4913
        %v4915 = vsub.f32 1.0, %v4914
        %v4916 = vmul.f32 %v4913, %v4915
        %v4917 = vadd.f32 %v4913, %v4916
        %vm4918 = vweird.f32 %v4729
        %vm4919 = vweird.f32 %v4913
        %vm4920 = vmor %vm4918, %vm4919
        %v4921 = vsel %vm4920, %v4913, %v4917
        %v4922 = vand.u32 2147483647, %v4729
        %vm4923 = vcmp.eq.f32.partialorder %v4922, 8.507059e+37
        %v4924 = vand.u32 %v4729, 2147483648
        %v4925 = vor.u32 1.1754944e-38, %v4924
        %v4926 = vsel %vm4923, %v4925, %v4921
        %v4927 = vmul.f32 1.0, %v4926
        %v4928 = vrcp.pop %v4730
        %v4929 = vmul.f32 %v4730, %v4928
        %v4930 = vsub.f32 1.0, %v4929
        %v4931 = vmul.f32 %v4928, %v4930
        %v4932 = vadd.f32 %v4928, %v4931
        %vm4933 = vweird.f32 %v4730
        %vm4934 = vweird.f32 %v4928
        %vm4935 = vmor %vm4933, %vm4934
        %v4936 = vsel %vm4935, %v4928, %v4932
        %v4937 = vand.u32 2147483647, %v4730
        %vm4938 = vcmp.eq.f32.partialorder %v4937, 8.507059e+37
        %v4939 = vand.u32 %v4730, 2147483648
        %v4940 = vor.u32 1.1754944e-38, %v4939
        %v4941 = vsel %vm4938, %v4940, %v4936
        %v4942 = vmul.f32 1.0, %v4941
        %v4943 = vrcp.pop %v4731
        %v4944 = vmul.f32 %v4731, %v4943
        %v4945 = vsub.f32 1.0, %v4944
        %v4946 = vmul.f32 %v4943, %v4945
        %v4947 = vadd.f32 %v4943, %v4946
        %vm4948 = vweird.f32 %v4731
        %vm4949 = vweird.f32 %v4943
        %vm4950 = vmor %vm4948, %vm4949
        %v4951 = vsel %vm4950, %v4943, %v4947
        %v4952 = vand.u32 2147483647, %v4731
        %vm4953 = vcmp.eq.f32.partialorder %v4952, 8.507059e+37
        %v4954 = vand.u32 %v4731, 2147483648
        %v4955 = vor.u32 1.1754944e-38, %v4954
        %v4956 = vsel %vm4953, %v4955, %v4951
        %v4957 = vmul.f32 1.0, %v4956
        %v4958 = vrcp.pop %v4732
        %v4959 = vmul.f32 %v4732, %v4958
        %v4960 = vsub.f32 1.0, %v4959
        %v4961 = vmul.f32 %v4958, %v4960
        %v4962 = vadd.f32 %v4958, %v4961
        %vm4963 = vweird.f32 %v4732
        %vm4964 = vweird.f32 %v4958
        %vm4965 = vmor %vm4963, %vm4964
        %v4966 = vsel %vm4965, %v4958, %v4962
        %v4967 = vand.u32 2147483647, %v4732
        %vm4968 = vcmp.eq.f32.partialorder %v4967, 8.507059e+37
        %v4969 = vand.u32 %v4732, 2147483648
        %v4970 = vor.u32 1.1754944e-38, %v4969
        %v4971 = vsel %vm4968, %v4970, %v4966
        %v4972 = vmul.f32 1.0, %v4971
        %v4973 = vmul.f32 %v4653, %v4747
        %v4974 = vmul.f32 %v4654, %v4762
        %v4975 = vmul.f32 %v4655, %v4777
        %v4976 = vmul.f32 %v4656, %v4792
        %v4977 = vmul.f32 %v4657, %v4807
        %v4978 = vmul.f32 %v4658, %v4822
        %v4979 = vmul.f32 %v4659, %v4837
        %v4980 = vmul.f32 %v4660, %v4852
        %v4981 = vmul.f32 %v4661, %v4867
        %v4982 = vmul.f32 %v4662, %v4882
        %v4983 = vmul.f32 %v4663, %v4897
        %v4984 = vmul.f32 %v4664, %v4912
        %v4985 = vmul.f32 %v4665, %v4927
        %v4986 = vmul.f32 %v4666, %v4942
        %v4987 = vmul.f32 %v4667, %v4957
        %v4988 = vmul.f32 %v4668, %v4972
        %v4989 = vadd.f32 %v754, %v4973
        %v4990 = vadd.f32 %v755, %v4974
        %v4991 = vadd.f32 %v756, %v4975
        %v4992 = vadd.f32 %v757, %v4976
        %v4993 = vadd.f32 %v758, %v4977
        %v4994 = vadd.f32 %v759, %v4978
        %v4995 = vadd.f32 %v760, %v4979
        %v4996 = vadd.f32 %v761, %v4980
        %v4997 = vadd.f32 %v762, %v4981
        %v4998 = vadd.f32 %v763, %v4982
        %v4999 = vadd.f32 %v764, %v4983
        %v5000 = vadd.f32 %v765, %v4984
        %v5001 = vadd.f32 %v766, %v4985
        %v5002 = vadd.f32 %v767, %v4986
        %v5003 = vadd.f32 %v768, %v4987
        %v5004 = vadd.f32 %v769, %v4988
        %v5005 = vadd.f32 %v4989, %v4990
        %5006 = vadd.xlane.f32.xlu0 %v5005
        %v5007 = vpop.xlane.xlu0 %5006
        %v5008 = vadd.f32 %v4991, %v4992
        %5009 = vadd.xlane.f32.xlu0 %v5008
        %v5010 = vpop.xlane.xlu0 %5009
        %v5011 = vadd.f32 %v4993, %v4994
        %5012 = vadd.xlane.f32.xlu0 %v5011
        %v5013 = vpop.xlane.xlu0 %5012
        %v5014 = vadd.f32 %v4995, %v4996
        %5015 = vadd.xlane.f32.xlu0 %v5014
        %v5016 = vpop.xlane.xlu0 %5015
        %v5017 = vadd.f32 %v4997, %v4998
        %5018 = vadd.xlane.f32.xlu0 %v5017
        %v5019 = vpop.xlane.xlu0 %5018
        %v5020 = vadd.f32 %v4999, %v5000
        %5021 = vadd.xlane.f32.xlu0 %v5020
        %v5022 = vpop.xlane.xlu0 %5021
        %v5023 = vadd.f32 %v5001, %v5002
        %5024 = vadd.xlane.f32.xlu0 %v5023
        %v5025 = vpop.xlane.xlu0 %5024
        %v5026 = vadd.f32 %v5003, %v5004
        %5027 = vadd.xlane.f32.xlu0 %v5026
        %v5028 = vpop.xlane.xlu0 %5027
        %v5029 = vrot.slane %v5007, 4
        %v5030 = vadd.f32 %v5007, %v5029
        %v5031 = vrot.slane %v5030, 2
        %v5032 = vadd.f32 %v5030, %v5031
        %v5033 = vrot.slane %v5032, 1
        %v5034 = vadd.f32 %v5032, %v5033
        %v5035 = vrot.slane %v5010, 4
        %v5036 = vadd.f32 %v5010, %v5035
        %v5037 = vrot.slane %v5036, 2
        %v5038 = vadd.f32 %v5036, %v5037
        %v5039 = vrot.slane %v5038, 1
        %v5040 = vadd.f32 %v5038, %v5039
        %v5041 = vrot.slane %v5013, 4
        %v5042 = vadd.f32 %v5013, %v5041
        %v5043 = vrot.slane %v5042, 2
        %v5044 = vadd.f32 %v5042, %v5043
        %v5045 = vrot.slane %v5044, 1
        %v5046 = vadd.f32 %v5044, %v5045
        %v5047 = vrot.slane %v5016, 4
        %v5048 = vadd.f32 %v5016, %v5047
        %v5049 = vrot.slane %v5048, 2
        %v5050 = vadd.f32 %v5048, %v5049
        %v5051 = vrot.slane %v5050, 1
        %v5052 = vadd.f32 %v5050, %v5051
        %v5053 = vrot.slane %v5019, 4
        %v5054 = vadd.f32 %v5019, %v5053
        %v5055 = vrot.slane %v5054, 2
        %v5056 = vadd.f32 %v5054, %v5055
        %v5057 = vrot.slane %v5056, 1
        %v5058 = vadd.f32 %v5056, %v5057
        %v5059 = vrot.slane %v5022, 4
        %v5060 = vadd.f32 %v5022, %v5059
        %v5061 = vrot.slane %v5060, 2
        %v5062 = vadd.f32 %v5060, %v5061
        %v5063 = vrot.slane %v5062, 1
        %v5064 = vadd.f32 %v5062, %v5063
        %v5065 = vrot.slane %v5025, 4
        %v5066 = vadd.f32 %v5025, %v5065
        %v5067 = vrot.slane %v5066, 2
        %v5068 = vadd.f32 %v5066, %v5067
        %v5069 = vrot.slane %v5068, 1
        %v5070 = vadd.f32 %v5068, %v5069
        %v5071 = vrot.slane %v5028, 4
        %v5072 = vadd.f32 %v5028, %v5071
        %v5073 = vrot.slane %v5072, 2
        %v5074 = vadd.f32 %v5072, %v5073
        %v5075 = vrot.slane %v5074, 1
        %v5076 = vadd.f32 %v5074, %v5075
        %v5077 = vmul.f32 %v4989, %v4989
        %v5078 = vmul.f32 %v4990, %v4990
        %v5079 = vmul.f32 %v4991, %v4991
        %v5080 = vmul.f32 %v4992, %v4992
        %v5081 = vmul.f32 %v4993, %v4993
        %v5082 = vmul.f32 %v4994, %v4994
        %v5083 = vmul.f32 %v4995, %v4995
        %v5084 = vmul.f32 %v4996, %v4996
        %v5085 = vmul.f32 %v4997, %v4997
        %v5086 = vmul.f32 %v4998, %v4998
        %v5087 = vmul.f32 %v4999, %v4999
        %v5088 = vmul.f32 %v5000, %v5000
        %v5089 = vmul.f32 %v5001, %v5001
        %v5090 = vmul.f32 %v5002, %v5002
        %v5091 = vmul.f32 %v5003, %v5003
        %v5092 = vmul.f32 %v5004, %v5004
        %v5093 = vadd.f32 %v5077, %v5078
        %5094 = vadd.xlane.f32.xlu0 %v5093
        %v5095 = vpop.xlane.xlu0 %5094
        %v5096 = vadd.f32 %v5079, %v5080
        %5097 = vadd.xlane.f32.xlu0 %v5096
        %v5098 = vpop.xlane.xlu0 %5097
        %v5099 = vadd.f32 %v5081, %v5082
        %5100 = vadd.xlane.f32.xlu0 %v5099
        %v5101 = vpop.xlane.xlu0 %5100
        %v5102 = vadd.f32 %v5083, %v5084
        %5103 = vadd.xlane.f32.xlu0 %v5102
        %v5104 = vpop.xlane.xlu0 %5103
        %v5105 = vadd.f32 %v5085, %v5086
        %5106 = vadd.xlane.f32.xlu0 %v5105
        %v5107 = vpop.xlane.xlu0 %5106
        %v5108 = vadd.f32 %v5087, %v5088
        %5109 = vadd.xlane.f32.xlu0 %v5108
        %v5110 = vpop.xlane.xlu0 %5109
        %v5111 = vadd.f32 %v5089, %v5090
        %5112 = vadd.xlane.f32.xlu0 %v5111
        %v5113 = vpop.xlane.xlu0 %5112
        %v5114 = vadd.f32 %v5091, %v5092
        %5115 = vadd.xlane.f32.xlu0 %v5114
        %v5116 = vpop.xlane.xlu0 %5115
        %v5117 = vrot.slane %v5095, 4
        %v5118 = vadd.f32 %v5095, %v5117
        %v5119 = vrot.slane %v5118, 2
        %v5120 = vadd.f32 %v5118, %v5119
        %v5121 = vrot.slane %v5120, 1
        %v5122 = vadd.f32 %v5120, %v5121
        %v5123 = vrot.slane %v5098, 4
        %v5124 = vadd.f32 %v5098, %v5123
        %v5125 = vrot.slane %v5124, 2
        %v5126 = vadd.f32 %v5124, %v5125
        %v5127 = vrot.slane %v5126, 1
        %v5128 = vadd.f32 %v5126, %v5127
        %v5129 = vrot.slane %v5101, 4
        %v5130 = vadd.f32 %v5101, %v5129
        %v5131 = vrot.slane %v5130, 2
        %v5132 = vadd.f32 %v5130, %v5131
        %v5133 = vrot.slane %v5132, 1
        %v5134 = vadd.f32 %v5132, %v5133
        %v5135 = vrot.slane %v5104, 4
        %v5136 = vadd.f32 %v5104, %v5135
        %v5137 = vrot.slane %v5136, 2
        %v5138 = vadd.f32 %v5136, %v5137
        %v5139 = vrot.slane %v5138, 1
        %v5140 = vadd.f32 %v5138, %v5139
        %v5141 = vrot.slane %v5107, 4
        %v5142 = vadd.f32 %v5107, %v5141
        %v5143 = vrot.slane %v5142, 2
        %v5144 = vadd.f32 %v5142, %v5143
        %v5145 = vrot.slane %v5144, 1
        %v5146 = vadd.f32 %v5144, %v5145
        %v5147 = vrot.slane %v5110, 4
        %v5148 = vadd.f32 %v5110, %v5147
        %v5149 = vrot.slane %v5148, 2
        %v5150 = vadd.f32 %v5148, %v5149
        %v5151 = vrot.slane %v5150, 1
        %v5152 = vadd.f32 %v5150, %v5151
        %v5153 = vrot.slane %v5113, 4
        %v5154 = vadd.f32 %v5113, %v5153
        %v5155 = vrot.slane %v5154, 2
        %v5156 = vadd.f32 %v5154, %v5155
        %v5157 = vrot.slane %v5156, 1
        %v5158 = vadd.f32 %v5156, %v5157
        %v5159 = vrot.slane %v5116, 4
        %v5160 = vadd.f32 %v5116, %v5159
        %v5161 = vrot.slane %v5160, 2
        %v5162 = vadd.f32 %v5160, %v5161
        %v5163 = vrot.slane %v5162, 1
        %v5164 = vadd.f32 %v5162, %v5163
        %v5165 = vmul.f32 %v5034, 0.00048828125
        %v5166 = vmul.f32 %v5040, 0.00048828125
        %v5167 = vmul.f32 %v5046, 0.00048828125
        %v5168 = vmul.f32 %v5052, 0.00048828125
        %v5169 = vmul.f32 %v5058, 0.00048828125
        %v5170 = vmul.f32 %v5064, 0.00048828125
        %v5171 = vmul.f32 %v5070, 0.00048828125
        %v5172 = vmul.f32 %v5076, 0.00048828125
        %v5173 = vmul.f32 %v5122, 0.00048828125
        %v5174 = vmul.f32 %v5128, 0.00048828125
        %v5175 = vmul.f32 %v5134, 0.00048828125
        %v5176 = vmul.f32 %v5140, 0.00048828125
        %v5177 = vmul.f32 %v5146, 0.00048828125
        %v5178 = vmul.f32 %v5152, 0.00048828125
        %v5179 = vmul.f32 %v5158, 0.00048828125
        %v5180 = vmul.f32 %v5164, 0.00048828125
        %v5181 = vmul.f32 %v5165, %v5165
        %v5182 = vmul.f32 %v5166, %v5166
        %v5183 = vmul.f32 %v5167, %v5167
        %v5184 = vmul.f32 %v5168, %v5168
        %v5185 = vmul.f32 %v5169, %v5169
        %v5186 = vmul.f32 %v5170, %v5170
        %v5187 = vmul.f32 %v5171, %v5171
        %v5188 = vmul.f32 %v5172, %v5172
        %v5189 = vsub.f32 %v5173, %v5181
        %v5190 = vsub.f32 %v5174, %v5182
        %v5191 = vsub.f32 %v5175, %v5183
        %v5192 = vsub.f32 %v5176, %v5184
        %v5193 = vsub.f32 %v5177, %v5185
        %v5194 = vsub.f32 %v5178, %v5186
        %v5195 = vsub.f32 %v5179, %v5187
        %v5196 = vsub.f32 %v5180, %v5188
        %v5197 = vsub.f32 %v4989, %v5165
        %v5198 = vsub.f32 %v4990, %v5165
        %v5199 = vsub.f32 %v4991, %v5166
        %v5200 = vsub.f32 %v4992, %v5166
        %v5201 = vsub.f32 %v4993, %v5167
        %v5202 = vsub.f32 %v4994, %v5167
        %v5203 = vsub.f32 %v4995, %v5168
        %v5204 = vsub.f32 %v4996, %v5168
        %v5205 = vsub.f32 %v4997, %v5169
        %v5206 = vsub.f32 %v4998, %v5169
        %v5207 = vsub.f32 %v4999, %v5170
        %v5208 = vsub.f32 %v5000, %v5170
        %v5209 = vsub.f32 %v5001, %v5171
        %v5210 = vsub.f32 %v5002, %v5171
        %v5211 = vsub.f32 %v5003, %v5172
        %v5212 = vsub.f32 %v5004, %v5172
        %v5213 = vadd.f32 %v5189, 1e-05
        %v5214 = vadd.f32 %v5190, 1e-05
        %v5215 = vadd.f32 %v5191, 1e-05
        %v5216 = vadd.f32 %v5192, 1e-05
        %v5217 = vadd.f32 %v5193, 1e-05
        %v5218 = vadd.f32 %v5194, 1e-05
        %v5219 = vadd.f32 %v5195, 1e-05
        %v5220 = vadd.f32 %v5196, 1e-05
        %v5221 = vrsqrt.pop %v5213
        %v5222 = vmul.f32 %v5221, %v5213
        %v5223 = vmul.f32 %v5222, %v5221
        %v5224 = vmul.f32 0.5, %v5223
        %v5225 = vsub.f32 1.5, %v5224
        %v5226 = vmul.f32 %v5221, %v5225
        %vm5227 = vweird.f32 %v5213
        %vm5228 = vweird.f32 %v5221
        %vm5229 = vmor %vm5227, %vm5228
        %v5230 = vsel %vm5229, %v5221, %v5226
        %v5231 = vrsqrt.pop %v5214
        %v5232 = vmul.f32 %v5231, %v5214
        %v5233 = vmul.f32 %v5232, %v5231
        %v5234 = vmul.f32 0.5, %v5233
        %v5235 = vsub.f32 1.5, %v5234
        %v5236 = vmul.f32 %v5231, %v5235
        %vm5237 = vweird.f32 %v5214
        %vm5238 = vweird.f32 %v5231
        %vm5239 = vmor %vm5237, %vm5238
        %v5240 = vsel %vm5239, %v5231, %v5236
        %v5241 = vrsqrt.pop %v5215
        %v5242 = vmul.f32 %v5241, %v5215
        %v5243 = vmul.f32 %v5242, %v5241
        %v5244 = vmul.f32 0.5, %v5243
        %v5245 = vsub.f32 1.5, %v5244
        %v5246 = vmul.f32 %v5241, %v5245
        %vm5247 = vweird.f32 %v5215
        %vm5248 = vweird.f32 %v5241
        %vm5249 = vmor %vm5247, %vm5248
        %v5250 = vsel %vm5249, %v5241, %v5246
        %v5251 = vrsqrt.pop %v5216
        %v5252 = vmul.f32 %v5251, %v5216
        %v5253 = vmul.f32 %v5252, %v5251
        %v5254 = vmul.f32 0.5, %v5253
        %v5255 = vsub.f32 1.5, %v5254
        %v5256 = vmul.f32 %v5251, %v5255
        %vm5257 = vweird.f32 %v5216
        %vm5258 = vweird.f32 %v5251
        %vm5259 = vmor %vm5257, %vm5258
        %v5260 = vsel %vm5259, %v5251, %v5256
        %v5261 = vrsqrt.pop %v5217
        %v5262 = vmul.f32 %v5261, %v5217
        %v5263 = vmul.f32 %v5262, %v5261
        %v5264 = vmul.f32 0.5, %v5263
        %v5265 = vsub.f32 1.5, %v5264
        %v5266 = vmul.f32 %v5261, %v5265
        %vm5267 = vweird.f32 %v5217
        %vm5268 = vweird.f32 %v5261
        %vm5269 = vmor %vm5267, %vm5268
        %v5270 = vsel %vm5269, %v5261, %v5266
        %v5271 = vrsqrt.pop %v5218
        %v5272 = vmul.f32 %v5271, %v5218
        %v5273 = vmul.f32 %v5272, %v5271
        %v5274 = vmul.f32 0.5, %v5273
        %v5275 = vsub.f32 1.5, %v5274
        %v5276 = vmul.f32 %v5271, %v5275
        %vm5277 = vweird.f32 %v5218
        %vm5278 = vweird.f32 %v5271
        %vm5279 = vmor %vm5277, %vm5278
        %v5280 = vsel %vm5279, %v5271, %v5276
        %v5281 = vrsqrt.pop %v5219
        %v5282 = vmul.f32 %v5281, %v5219
        %v5283 = vmul.f32 %v5282, %v5281
        %v5284 = vmul.f32 0.5, %v5283
        %v5285 = vsub.f32 1.5, %v5284
        %v5286 = vmul.f32 %v5281, %v5285
        %vm5287 = vweird.f32 %v5219
        %vm5288 = vweird.f32 %v5281
        %vm5289 = vmor %vm5287, %vm5288
        %v5290 = vsel %vm5289, %v5281, %v5286
        %v5291 = vrsqrt.pop %v5220
        %v5292 = vmul.f32 %v5291, %v5220
        %v5293 = vmul.f32 %v5292, %v5291
        %v5294 = vmul.f32 0.5, %v5293
        %v5295 = vsub.f32 1.5, %v5294
        %v5296 = vmul.f32 %v5291, %v5295
        %vm5297 = vweird.f32 %v5220
        %vm5298 = vweird.f32 %v5291
        %vm5299 = vmor %vm5297, %vm5298
        %v5300 = vsel %vm5299, %v5291, %v5296
        %v5301 = vmul.f32 %v5197, %v5230
        %v5302 = vmul.f32 %v5198, %v5230
        %v5303 = vmul.f32 %v5199, %v5240
        %v5304 = vmul.f32 %v5200, %v5240
        %v5305 = vmul.f32 %v5201, %v5250
        %v5306 = vmul.f32 %v5202, %v5250
        %v5307 = vmul.f32 %v5203, %v5260
        %v5308 = vmul.f32 %v5204, %v5260
        %v5309 = vmul.f32 %v5205, %v5270
        %v5310 = vmul.f32 %v5206, %v5270
        %v5311 = vmul.f32 %v5207, %v5280
        %v5312 = vmul.f32 %v5208, %v5280
        %v5313 = vmul.f32 %v5209, %v5290
        %v5314 = vmul.f32 %v5210, %v5290
        %v5315 = vmul.f32 %v5211, %v5300
        %v5316 = vmul.f32 %v5212, %v5300
        %5317 = vset.pattern.permute.xlu0 8
        %5318 = vperm.xlu0 %5317, %v774
        %v5319 = vpop.permute.xlu0 %5318
        %v5321 = vmul.f32 %v5301, %v5319
        %v5322 = vmul.f32 %v5302, %v5319
        %v5323 = vmul.f32 %v5303, %v5319
        %v5324 = vmul.f32 %v5304, %v5319
        %v5325 = vmul.f32 %v5305, %v5319
        %v5326 = vmul.f32 %v5306, %v5319
        %v5327 = vmul.f32 %v5307, %v5319
        %v5328 = vmul.f32 %v5308, %v5319
        %v5329 = vmul.f32 %v5309, %v5319
        %v5330 = vmul.f32 %v5310, %v5319
        %v5331 = vmul.f32 %v5311, %v5319
        %v5332 = vmul.f32 %v5312, %v5319
        %v5333 = vmul.f32 %v5313, %v5319
        %v5334 = vmul.f32 %v5314, %v5319
        %v5335 = vmul.f32 %v5315, %v5319
        %v5336 = vmul.f32 %v5316, %v5319
        %5337 = vset.pattern.permute.xlu0 9
        %5338 = vperm.xlu0 %5337, %v774
        %v5339 = vpop.permute.xlu0 %5338
        %v5341 = vadd.f32 %v5321, %v5339
        %v5342 = vadd.f32 %v5322, %v5339
        %v5343 = vadd.f32 %v5323, %v5339
        %v5344 = vadd.f32 %v5324, %v5339
        %v5345 = vadd.f32 %v5325, %v5339
        %v5346 = vadd.f32 %v5326, %v5339
        %v5347 = vadd.f32 %v5327, %v5339
        %v5348 = vadd.f32 %v5328, %v5339
        %v5349 = vadd.f32 %v5329, %v5339
        %v5350 = vadd.f32 %v5330, %v5339
        %v5351 = vadd.f32 %v5331, %v5339
        %v5352 = vadd.f32 %v5332, %v5339
        %v5353 = vadd.f32 %v5333, %v5339
        %v5354 = vadd.f32 %v5334, %v5339
        %v5355 = vadd.f32 %v5335, %v5339
        %v5356 = vadd.f32 %v5336, %v5339
        %v5357 = vadd.f32 %v5341, %v5341
        %v5358 = vadd.f32 %v5342, %v5342
        %v5359 = vadd.f32 %v5343, %v5343
        %v5360 = vadd.f32 %v5344, %v5344
        %v5361 = vadd.f32 %v5345, %v5345
        %v5362 = vadd.f32 %v5346, %v5346
        %v5363 = vadd.f32 %v5347, %v5347
        %v5364 = vadd.f32 %v5348, %v5348
        %v5365 = vadd.f32 %v5349, %v5349
        %v5366 = vadd.f32 %v5350, %v5350
        %v5367 = vadd.f32 %v5351, %v5351
        %v5368 = vadd.f32 %v5352, %v5352
        %v5369 = vadd.f32 %v5353, %v5353
        %v5370 = vadd.f32 %v5354, %v5354
        %v5371 = vadd.f32 %v5355, %v5355
        %v5372 = vadd.f32 %v5356, %v5356
        %v5373 = vadd.f32 %v5357, %v5358
        %5374 = vadd.xlane.f32.xlu0 %v5373
        %v5375 = vpop.xlane.xlu0 %5374
        %v5376 = vadd.f32 %v5359, %v5360
        %5377 = vadd.xlane.f32.xlu0 %v5376
        %v5378 = vpop.xlane.xlu0 %5377
        %v5379 = vadd.f32 %v5361, %v5362
        %5380 = vadd.xlane.f32.xlu0 %v5379
        %v5381 = vpop.xlane.xlu0 %5380
        %v5382 = vadd.f32 %v5363, %v5364
        %5383 = vadd.xlane.f32.xlu0 %v5382
        %v5384 = vpop.xlane.xlu0 %5383
        %v5385 = vadd.f32 %v5365, %v5366
        %5386 = vadd.xlane.f32.xlu0 %v5385
        %v5387 = vpop.xlane.xlu0 %5386
        %v5388 = vadd.f32 %v5367, %v5368
        %5389 = vadd.xlane.f32.xlu0 %v5388
        %v5390 = vpop.xlane.xlu0 %5389
        %v5391 = vadd.f32 %v5369, %v5370
        %5392 = vadd.xlane.f32.xlu0 %v5391
        %v5393 = vpop.xlane.xlu0 %5392
        %v5394 = vadd.f32 %v5371, %v5372
        %5395 = vadd.xlane.f32.xlu0 %v5394
        %v5396 = vpop.xlane.xlu0 %5395
        %v5397 = vrot.slane %v5375, 4
        %v5398 = vadd.f32 %v5375, %v5397
        %v5399 = vrot.slane %v5398, 2
        %v5400 = vadd.f32 %v5398, %v5399
        %v5401 = vrot.slane %v5400, 1
        %v5402 = vadd.f32 %v5400, %v5401
        %v5403 = vrot.slane %v5378, 4
        %v5404 = vadd.f32 %v5378, %v5403
        %v5405 = vrot.slane %v5404, 2
        %v5406 = vadd.f32 %v5404, %v5405
        %v5407 = vrot.slane %v5406, 1
        %v5408 = vadd.f32 %v5406, %v5407
        %v5409 = vrot.slane %v5381, 4
        %v5410 = vadd.f32 %v5381, %v5409
        %v5411 = vrot.slane %v5410, 2
        %v5412 = vadd.f32 %v5410, %v5411
        %v5413 = vrot.slane %v5412, 1
        %v5414 = vadd.f32 %v5412, %v5413
        %v5415 = vrot.slane %v5384, 4
        %v5416 = vadd.f32 %v5384, %v5415
        %v5417 = vrot.slane %v5416, 2
        %v5418 = vadd.f32 %v5416, %v5417
        %v5419 = vrot.slane %v5418, 1
        %v5420 = vadd.f32 %v5418, %v5419
        %v5421 = vrot.slane %v5387, 4
        %v5422 = vadd.f32 %v5387, %v5421
        %v5423 = vrot.slane %v5422, 2
        %v5424 = vadd.f32 %v5422, %v5423
        %v5425 = vrot.slane %v5424, 1
        %v5426 = vadd.f32 %v5424, %v5425
        %v5427 = vrot.slane %v5390, 4
        %v5428 = vadd.f32 %v5390, %v5427
        %v5429 = vrot.slane %v5428, 2
        %v5430 = vadd.f32 %v5428, %v5429
        %v5431 = vrot.slane %v5430, 1
        %v5432 = vadd.f32 %v5430, %v5431
        %v5433 = vrot.slane %v5393, 4
        %v5434 = vadd.f32 %v5393, %v5433
        %v5435 = vrot.slane %v5434, 2
        %v5436 = vadd.f32 %v5434, %v5435
        %v5437 = vrot.slane %v5436, 1
        %v5438 = vadd.f32 %v5436, %v5437
        %v5439 = vrot.slane %v5396, 4
        %v5440 = vadd.f32 %v5396, %v5439
        %v5441 = vrot.slane %v5440, 2
        %v5442 = vadd.f32 %v5440, %v5441
        %v5443 = vrot.slane %v5442, 1
        %v5444 = vadd.f32 %v5442, %v5443
        %v5445 = vmul.f32 %v5357, %v5357
        %v5446 = vmul.f32 %v5358, %v5358
        %v5447 = vmul.f32 %v5359, %v5359
        %v5448 = vmul.f32 %v5360, %v5360
        %v5449 = vmul.f32 %v5361, %v5361
        %v5450 = vmul.f32 %v5362, %v5362
        %v5451 = vmul.f32 %v5363, %v5363
        %v5452 = vmul.f32 %v5364, %v5364
        %v5453 = vmul.f32 %v5365, %v5365
        %v5454 = vmul.f32 %v5366, %v5366
        %v5455 = vmul.f32 %v5367, %v5367
        %v5456 = vmul.f32 %v5368, %v5368
        %v5457 = vmul.f32 %v5369, %v5369
        %v5458 = vmul.f32 %v5370, %v5370
        %v5459 = vmul.f32 %v5371, %v5371
        %v5460 = vmul.f32 %v5372, %v5372
        %v5461 = vadd.f32 %v5445, %v5446
        %5462 = vadd.xlane.f32.xlu0 %v5461
        %v5463 = vpop.xlane.xlu0 %5462
        %v5464 = vadd.f32 %v5447, %v5448
        %5465 = vadd.xlane.f32.xlu0 %v5464
        %v5466 = vpop.xlane.xlu0 %5465
        %v5467 = vadd.f32 %v5449, %v5450
        %5468 = vadd.xlane.f32.xlu0 %v5467
        %v5469 = vpop.xlane.xlu0 %5468
        %v5470 = vadd.f32 %v5451, %v5452
        %5471 = vadd.xlane.f32.xlu0 %v5470
        %v5472 = vpop.xlane.xlu0 %5471
        %v5473 = vadd.f32 %v5453, %v5454
        %5474 = vadd.xlane.f32.xlu0 %v5473
        %v5475 = vpop.xlane.xlu0 %5474
        %v5476 = vadd.f32 %v5455, %v5456
        %5477 = vadd.xlane.f32.xlu0 %v5476
        %v5478 = vpop.xlane.xlu0 %5477
        %v5479 = vadd.f32 %v5457, %v5458
        %5480 = vadd.xlane.f32.xlu0 %v5479
        %v5481 = vpop.xlane.xlu0 %5480
        %v5482 = vadd.f32 %v5459, %v5460
        %5483 = vadd.xlane.f32.xlu0 %v5482
        %v5484 = vpop.xlane.xlu0 %5483
        %v5485 = vrot.slane %v5463, 4
        %v5486 = vadd.f32 %v5463, %v5485
        %v5487 = vrot.slane %v5486, 2
        %v5488 = vadd.f32 %v5486, %v5487
        %v5489 = vrot.slane %v5488, 1
        %v5490 = vadd.f32 %v5488, %v5489
        %v5491 = vrot.slane %v5466, 4
        %v5492 = vadd.f32 %v5466, %v5491
        %v5493 = vrot.slane %v5492, 2
        %v5494 = vadd.f32 %v5492, %v5493
        %v5495 = vrot.slane %v5494, 1
        %v5496 = vadd.f32 %v5494, %v5495
        %v5497 = vrot.slane %v5469, 4
        %v5498 = vadd.f32 %v5469, %v5497
        %v5499 = vrot.slane %v5498, 2
        %v5500 = vadd.f32 %v5498, %v5499
        %v5501 = vrot.slane %v5500, 1
        %v5502 = vadd.f32 %v5500, %v5501
        %v5503 = vrot.slane %v5472, 4
        %v5504 = vadd.f32 %v5472, %v5503
        %v5505 = vrot.slane %v5504, 2
        %v5506 = vadd.f32 %v5504, %v5505
        %v5507 = vrot.slane %v5506, 1
        %v5508 = vadd.f32 %v5506, %v5507
        %v5509 = vrot.slane %v5475, 4
        %v5510 = vadd.f32 %v5475, %v5509
        %v5511 = vrot.slane %v5510, 2
        %v5512 = vadd.f32 %v5510, %v5511
        %v5513 = vrot.slane %v5512, 1
        %v5514 = vadd.f32 %v5512, %v5513
        %v5515 = vrot.slane %v5478, 4
        %v5516 = vadd.f32 %v5478, %v5515
        %v5517 = vrot.slane %v5516, 2
        %v5518 = vadd.f32 %v5516, %v5517
        %v5519 = vrot.slane %v5518, 1
        %v5520 = vadd.f32 %v5518, %v5519
        %v5521 = vrot.slane %v5481, 4
        %v5522 = vadd.f32 %v5481, %v5521
        %v5523 = vrot.slane %v5522, 2
        %v5524 = vadd.f32 %v5522, %v5523
        %v5525 = vrot.slane %v5524, 1
        %v5526 = vadd.f32 %v5524, %v5525
        %v5527 = vrot.slane %v5484, 4
        %v5528 = vadd.f32 %v5484, %v5527
        %v5529 = vrot.slane %v5528, 2
        %v5530 = vadd.f32 %v5528, %v5529
        %v5531 = vrot.slane %v5530, 1
        %v5532 = vadd.f32 %v5530, %v5531
        %v5533 = vmul.f32 %v5402, 0.00048828125
        %v5534 = vmul.f32 %v5408, 0.00048828125
        %v5535 = vmul.f32 %v5414, 0.00048828125
        %v5536 = vmul.f32 %v5420, 0.00048828125
        %v5537 = vmul.f32 %v5426, 0.00048828125
        %v5538 = vmul.f32 %v5432, 0.00048828125
        %v5539 = vmul.f32 %v5438, 0.00048828125
        %v5540 = vmul.f32 %v5444, 0.00048828125
        %v5541 = vmul.f32 %v5490, 0.00048828125
        %v5542 = vmul.f32 %v5496, 0.00048828125
        %v5543 = vmul.f32 %v5502, 0.00048828125
        %v5544 = vmul.f32 %v5508, 0.00048828125
        %v5545 = vmul.f32 %v5514, 0.00048828125
        %v5546 = vmul.f32 %v5520, 0.00048828125
        %v5547 = vmul.f32 %v5526, 0.00048828125
        %v5548 = vmul.f32 %v5532, 0.00048828125
        %v5549 = vmul.f32 %v5533, %v5533
        %v5550 = vmul.f32 %v5534, %v5534
        %v5551 = vmul.f32 %v5535, %v5535
        %v5552 = vmul.f32 %v5536, %v5536
        %v5553 = vmul.f32 %v5537, %v5537
        %v5554 = vmul.f32 %v5538, %v5538
        %v5555 = vmul.f32 %v5539, %v5539
        %v5556 = vmul.f32 %v5540, %v5540
        %v5557 = vsub.f32 %v5541, %v5549
        %v5558 = vsub.f32 %v5542, %v5550
        %v5559 = vsub.f32 %v5543, %v5551
        %v5560 = vsub.f32 %v5544, %v5552
        %v5561 = vsub.f32 %v5545, %v5553
        %v5562 = vsub.f32 %v5546, %v5554
        %v5563 = vsub.f32 %v5547, %v5555
        %v5564 = vsub.f32 %v5548, %v5556
        %v5565 = vsub.f32 %v5357, %v5533
        %v5566 = vsub.f32 %v5358, %v5533
        %v5567 = vsub.f32 %v5359, %v5534
        %v5568 = vsub.f32 %v5360, %v5534
        %v5569 = vsub.f32 %v5361, %v5535
        %v5570 = vsub.f32 %v5362, %v5535
        %v5571 = vsub.f32 %v5363, %v5536
        %v5572 = vsub.f32 %v5364, %v5536
        %v5573 = vsub.f32 %v5365, %v5537
        %v5574 = vsub.f32 %v5366, %v5537
        %v5575 = vsub.f32 %v5367, %v5538
        %v5576 = vsub.f32 %v5368, %v5538
        %v5577 = vsub.f32 %v5369, %v5539
        %v5578 = vsub.f32 %v5370, %v5539
        %v5579 = vsub.f32 %v5371, %v5540
        %v5580 = vsub.f32 %v5372, %v5540
        %v5581 = vadd.f32 %v5557, 1e-05
        %v5582 = vadd.f32 %v5558, 1e-05
        %v5583 = vadd.f32 %v5559, 1e-05
        %v5584 = vadd.f32 %v5560, 1e-05
        %v5585 = vadd.f32 %v5561, 1e-05
        %v5586 = vadd.f32 %v5562, 1e-05
        %v5587 = vadd.f32 %v5563, 1e-05
        %v5588 = vadd.f32 %v5564, 1e-05
        %v5589 = vrsqrt.pop %v5581
        %v5590 = vmul.f32 %v5589, %v5581
        %v5591 = vmul.f32 %v5590, %v5589
        %v5592 = vmul.f32 0.5, %v5591
        %v5593 = vsub.f32 1.5, %v5592
        %v5594 = vmul.f32 %v5589, %v5593
        %vm5595 = vweird.f32 %v5581
        %vm5596 = vweird.f32 %v5589
        %vm5597 = vmor %vm5595, %vm5596
        %v5598 = vsel %vm5597, %v5589, %v5594
        %v5599 = vrsqrt.pop %v5582
        %v5600 = vmul.f32 %v5599, %v5582
        %v5601 = vmul.f32 %v5600, %v5599
        %v5602 = vmul.f32 0.5, %v5601
        %v5603 = vsub.f32 1.5, %v5602
        %v5604 = vmul.f32 %v5599, %v5603
        %vm5605 = vweird.f32 %v5582
        %vm5606 = vweird.f32 %v5599
        %vm5607 = vmor %vm5605, %vm5606
        %v5608 = vsel %vm5607, %v5599, %v5604
        %v5609 = vrsqrt.pop %v5583
        %v5610 = vmul.f32 %v5609, %v5583
        %v5611 = vmul.f32 %v5610, %v5609
        %v5612 = vmul.f32 0.5, %v5611
        %v5613 = vsub.f32 1.5, %v5612
        %v5614 = vmul.f32 %v5609, %v5613
        %vm5615 = vweird.f32 %v5583
        %vm5616 = vweird.f32 %v5609
        %vm5617 = vmor %vm5615, %vm5616
        %v5618 = vsel %vm5617, %v5609, %v5614
        %v5619 = vrsqrt.pop %v5584
        %v5620 = vmul.f32 %v5619, %v5584
        %v5621 = vmul.f32 %v5620, %v5619
        %v5622 = vmul.f32 0.5, %v5621
        %v5623 = vsub.f32 1.5, %v5622
        %v5624 = vmul.f32 %v5619, %v5623
        %vm5625 = vweird.f32 %v5584
        %vm5626 = vweird.f32 %v5619
        %vm5627 = vmor %vm5625, %vm5626
        %v5628 = vsel %vm5627, %v5619, %v5624
        %v5629 = vrsqrt.pop %v5585
        %v5630 = vmul.f32 %v5629, %v5585
        %v5631 = vmul.f32 %v5630, %v5629
        %v5632 = vmul.f32 0.5, %v5631
        %v5633 = vsub.f32 1.5, %v5632
        %v5634 = vmul.f32 %v5629, %v5633
        %vm5635 = vweird.f32 %v5585
        %vm5636 = vweird.f32 %v5629
        %vm5637 = vmor %vm5635, %vm5636
        %v5638 = vsel %vm5637, %v5629, %v5634
        %v5639 = vrsqrt.pop %v5586
        %v5640 = vmul.f32 %v5639, %v5586
        %v5641 = vmul.f32 %v5640, %v5639
        %v5642 = vmul.f32 0.5, %v5641
        %v5643 = vsub.f32 1.5, %v5642
        %v5644 = vmul.f32 %v5639, %v5643
        %vm5645 = vweird.f32 %v5586
        %vm5646 = vweird.f32 %v5639
        %vm5647 = vmor %vm5645, %vm5646
        %v5648 = vsel %vm5647, %v5639, %v5644
        %v5649 = vrsqrt.pop %v5587
        %v5650 = vmul.f32 %v5649, %v5587
        %v5651 = vmul.f32 %v5650, %v5649
        %v5652 = vmul.f32 0.5, %v5651
        %v5653 = vsub.f32 1.5, %v5652
        %v5654 = vmul.f32 %v5649, %v5653
        %vm5655 = vweird.f32 %v5587
        %vm5656 = vweird.f32 %v5649
        %vm5657 = vmor %vm5655, %vm5656
        %v5658 = vsel %vm5657, %v5649, %v5654
        %v5659 = vrsqrt.pop %v5588
        %v5660 = vmul.f32 %v5659, %v5588
        %v5661 = vmul.f32 %v5660, %v5659
        %v5662 = vmul.f32 0.5, %v5661
        %v5663 = vsub.f32 1.5, %v5662
        %v5664 = vmul.f32 %v5659, %v5663
        %vm5665 = vweird.f32 %v5588
        %vm5666 = vweird.f32 %v5659
        %vm5667 = vmor %vm5665, %vm5666
        %v5668 = vsel %vm5667, %v5659, %v5664
        %v5669 = vmul.f32 %v5565, %v5598
        %v5670 = vmul.f32 %v5566, %v5598
        %v5671 = vmul.f32 %v5567, %v5608
        %v5672 = vmul.f32 %v5568, %v5608
        %v5673 = vmul.f32 %v5569, %v5618
        %v5674 = vmul.f32 %v5570, %v5618
        %v5675 = vmul.f32 %v5571, %v5628
        %v5676 = vmul.f32 %v5572, %v5628
        %v5677 = vmul.f32 %v5573, %v5638
        %v5678 = vmul.f32 %v5574, %v5638
        %v5679 = vmul.f32 %v5575, %v5648
        %v5680 = vmul.f32 %v5576, %v5648
        %v5681 = vmul.f32 %v5577, %v5658
        %v5682 = vmul.f32 %v5578, %v5658
        %v5683 = vmul.f32 %v5579, %v5668
        %v5684 = vmul.f32 %v5580, %v5668
        %5685 = vset.pattern.permute.xlu0 10
        %5686 = vperm.xlu0 %5685, %v774
        %v5687 = vpop.permute.xlu0 %5686
        %v5689 = vmul.f32 %v5669, %v5687
        %v5690 = vmul.f32 %v5670, %v5687
        %v5691 = vmul.f32 %v5671, %v5687
        %v5692 = vmul.f32 %v5672, %v5687
        %v5693 = vmul.f32 %v5673, %v5687
        %v5694 = vmul.f32 %v5674, %v5687
        %v5695 = vmul.f32 %v5675, %v5687
        %v5696 = vmul.f32 %v5676, %v5687
        %v5697 = vmul.f32 %v5677, %v5687
        %v5698 = vmul.f32 %v5678, %v5687
        %v5699 = vmul.f32 %v5679, %v5687
        %v5700 = vmul.f32 %v5680, %v5687
        %v5701 = vmul.f32 %v5681, %v5687
        %v5702 = vmul.f32 %v5682, %v5687
        %v5703 = vmul.f32 %v5683, %v5687
        %v5704 = vmul.f32 %v5684, %v5687
        %5705 = vset.pattern.permute.xlu0 11
        %5706 = vperm.xlu0 %5705, %v774
        %v5707 = vpop.permute.xlu0 %5706
        %v5709 = vadd.f32 %v5689, %v5707
        %v5710 = vadd.f32 %v5690, %v5707
        %v5711 = vadd.f32 %v5691, %v5707
        %v5712 = vadd.f32 %v5692, %v5707
        %v5713 = vadd.f32 %v5693, %v5707
        %v5714 = vadd.f32 %v5694, %v5707
        %v5715 = vadd.f32 %v5695, %v5707
        %v5716 = vadd.f32 %v5696, %v5707
        %v5717 = vadd.f32 %v5697, %v5707
        %v5718 = vadd.f32 %v5698, %v5707
        %v5719 = vadd.f32 %v5699, %v5707
        %v5720 = vadd.f32 %v5700, %v5707
        %v5721 = vadd.f32 %v5701, %v5707
        %v5722 = vadd.f32 %v5702, %v5707
        %v5723 = vadd.f32 %v5703, %v5707
        %v5724 = vadd.f32 %v5704, %v5707
        %5725 = vst [vmem:[#allocation2] sm:$0xff] %v5709
        %5726 = vst [vmem:[#allocation2 + $0x8] sm:$0xff] %v5710
        %5727 = vst [vmem:[#allocation2 + $0x10] sm:$0xff] %v5711
        %5728 = vst [vmem:[#allocation2 + $0x18] sm:$0xff] %v5712
        %5729 = vst [vmem:[#allocation2 + $0x20] sm:$0xff] %v5713
        %5730 = vst [vmem:[#allocation2 + $0x28] sm:$0xff] %v5714
        %5731 = vst [vmem:[#allocation2 + $0x30] sm:$0xff] %v5715
        %5732 = vst [vmem:[#allocation2 + $0x38] sm:$0xff] %v5716
        %5733 = vst [vmem:[#allocation2 + $0x40] sm:$0xff] %v5717
        %5734 = vst [vmem:[#allocation2 + $0x48] sm:$0xff] %v5718
        %5735 = vst [vmem:[#allocation2 + $0x50] sm:$0xff] %v5719
        %5736 = vst [vmem:[#allocation2 + $0x58] sm:$0xff] %v5720
        %5737 = vst [vmem:[#allocation2 + $0x60] sm:$0xff] %v5721
        %5738 = vst [vmem:[#allocation2 + $0x68] sm:$0xff] %v5722
        %5739 = vst [vmem:[#allocation2 + $0x70] sm:$0xff] %v5723
        %5740 = vst [vmem:[#allocation2 + $0x78] sm:$0xff] %v5724
      $region52: #{cimidnet_forward.1} parent=43 // pred_fallthru
        _
      %p5741 = scmp.eq.s32.totalorder %s22, 3
      // Predicated region
      $region53: #{cimidnet_forward.1} parent=43 // pred_check
        %p5742 = pneg %p5741
      $region54: #{cimidnet_forward.1} parent=43 // pred_check_branch
        %5744 = sbr.rel (%p5742) target = $region56
      $region55: #{cimidnet_forward.1} parent=43 // pred_region
        %v5745 = vld [vmem:[#allocation2] sm:$0xff]
        %v5746 = vld [vmem:[#allocation2 + $0x8] sm:$0xff]
        %v5747 = vld [vmem:[#allocation2 + $0x10] sm:$0xff]
        %v5748 = vld [vmem:[#allocation2 + $0x18] sm:$0xff]
        %v5749 = vld [vmem:[#allocation2 + $0x20] sm:$0xff]
        %v5750 = vld [vmem:[#allocation2 + $0x28] sm:$0xff]
        %v5751 = vld [vmem:[#allocation2 + $0x30] sm:$0xff]
        %v5752 = vld [vmem:[#allocation2 + $0x38] sm:$0xff]
        %v5753 = vld [vmem:[#allocation2 + $0x40] sm:$0xff]
        %v5754 = vld [vmem:[#allocation2 + $0x48] sm:$0xff]
        %v5755 = vld [vmem:[#allocation2 + $0x50] sm:$0xff]
        %v5756 = vld [vmem:[#allocation2 + $0x58] sm:$0xff]
        %v5757 = vld [vmem:[#allocation2 + $0x60] sm:$0xff]
        %v5758 = vld [vmem:[#allocation2 + $0x68] sm:$0xff]
        %v5759 = vld [vmem:[#allocation2 + $0x70] sm:$0xff]
        %v5760 = vld [vmem:[#allocation2 + $0x78] sm:$0xff]
        %v5761 = vld [vmem:[%s2] sm:$0xf]
        %v5762 = vpack.c.bf16 %v5761, %v5761
        %v5763 = vpack.c.bf16 %v5745, %v5745
        %v5764 = vpack.c.bf16 %v5746, %v5746
        %vm5765 = vcmask 64512
        %v5767 = vsel %vm5765, %v5762, 0
        %vm5769 = vcmask 1043456
        %v5771 = vsel %vm5769, %v5763, 0
        %v5774 = vsel %vm5769, %v5764, 0
        %5776 = vmatpush.bf16.msra.mxu0 0
        %5777 = vmatpush.bf16.msra.mxu0 0
        %5778 = vmatpush.bf16.msra.mxu0 0
        %5779 = vmatpush.bf16.msra.mxu0 0
        %5780 = vmatpush.bf16.msra.mxu0 0
        %5781 = vmatpush.bf16.msra.mxu0 0
        %5782 = vmatpush.bf16.msra.mxu0 0
        %5783 = vmatpush.bf16.msra.mxu0 %v5771
        %5784 = vmatmul.bf16.gmra.mxu0 %v5767
        %v5785 = vpop.f32.mrf.mxu0
        %v5786 = vadd.f32 0.0, %v5785
        %v5787 = vpop.f32.mrf.mxu0
        %5788 = vdwg.mxu0
        %5789 = vmatpush.bf16.msra.mxu0 0
        %5790 = vmatpush.bf16.msra.mxu0 0
        %5791 = vmatpush.bf16.msra.mxu0 0
        %5792 = vmatpush.bf16.msra.mxu0 0
        %5793 = vmatpush.bf16.msra.mxu0 0
        %5794 = vmatpush.bf16.msra.mxu0 0
        %5795 = vmatpush.bf16.msra.mxu0 0
        %5796 = vmatpush.bf16.msra.mxu0 %v5774
        %5797 = vmatmul.bf16.gmra.mxu0 %v5767
        %v5798 = vpop.f32.mrf.mxu0
        %v5799 = vadd.f32 0.0, %v5798
        %v5800 = vpop.f32.mrf.mxu0
        %5801 = vdwg.mxu0
        %v5802 = vpack.c.bf16 %v5747, %v5747
        %v5803 = vpack.c.bf16 %v5748, %v5748
        %v5805 = vsel %vm5769, %v5802, 0
        %v5808 = vsel %vm5769, %v5803, 0
        %5810 = vmatpush.bf16.msra.mxu0 0
        %5811 = vmatpush.bf16.msra.mxu0 0
        %5812 = vmatpush.bf16.msra.mxu0 0
        %5813 = vmatpush.bf16.msra.mxu0 0
        %5814 = vmatpush.bf16.msra.mxu0 0
        %5815 = vmatpush.bf16.msra.mxu0 0
        %5816 = vmatpush.bf16.msra.mxu0 0
        %5817 = vmatpush.bf16.msra.mxu0 %v5805
        %5818 = vmatmul.bf16.gmra.mxu0 %v5767
        %v5819 = vpop.f32.mrf.mxu0
        %v5820 = vadd.f32 0.0, %v5819
        %v5821 = vpop.f32.mrf.mxu0
        %5822 = vdwg.mxu0
        %5823 = vmatpush.bf16.msra.mxu0 0
        %5824 = vmatpush.bf16.msra.mxu0 0
        %5825 = vmatpush.bf16.msra.mxu0 0
        %5826 = vmatpush.bf16.msra.mxu0 0
        %5827 = vmatpush.bf16.msra.mxu0 0
        %5828 = vmatpush.bf16.msra.mxu0 0
        %5829 = vmatpush.bf16.msra.mxu0 0
        %5830 = vmatpush.bf16.msra.mxu0 %v5808
        %5831 = vmatmul.bf16.gmra.mxu0 %v5767
        %v5832 = vpop.f32.mrf.mxu0
        %v5833 = vadd.f32 0.0, %v5832
        %v5834 = vpop.f32.mrf.mxu0
        %5835 = vdwg.mxu0
        %v5836 = vpack.c.bf16 %v5749, %v5749
        %v5837 = vpack.c.bf16 %v5750, %v5750
        %v5839 = vsel %vm5769, %v5836, 0
        %v5842 = vsel %vm5769, %v5837, 0
        %5844 = vmatpush.bf16.msra.mxu0 0
        %5845 = vmatpush.bf16.msra.mxu0 0
        %5846 = vmatpush.bf16.msra.mxu0 0
        %5847 = vmatpush.bf16.msra.mxu0 0
        %5848 = vmatpush.bf16.msra.mxu0 0
        %5849 = vmatpush.bf16.msra.mxu0 0
        %5850 = vmatpush.bf16.msra.mxu0 0
        %5851 = vmatpush.bf16.msra.mxu0 %v5839
        %5852 = vmatmul.bf16.gmra.mxu0 %v5767
        %v5853 = vpop.f32.mrf.mxu0
        %v5854 = vadd.f32 0.0, %v5853
        %v5855 = vpop.f32.mrf.mxu0
        %5856 = vdwg.mxu0
        %5857 = vmatpush.bf16.msra.mxu0 0
        %5858 = vmatpush.bf16.msra.mxu0 0
        %5859 = vmatpush.bf16.msra.mxu0 0
        %5860 = vmatpush.bf16.msra.mxu0 0
        %5861 = vmatpush.bf16.msra.mxu0 0
        %5862 = vmatpush.bf16.msra.mxu0 0
        %5863 = vmatpush.bf16.msra.mxu0 0
        %5864 = vmatpush.bf16.msra.mxu0 %v5842
        %5865 = vmatmul.bf16.gmra.mxu0 %v5767
        %v5866 = vpop.f32.mrf.mxu0
        %v5867 = vadd.f32 0.0, %v5866
        %v5868 = vpop.f32.mrf.mxu0
        %5869 = vdwg.mxu0
        %v5870 = vpack.c.bf16 %v5751, %v5751
        %v5871 = vpack.c.bf16 %v5752, %v5752
        %v5873 = vsel %vm5769, %v5870, 0
        %v5876 = vsel %vm5769, %v5871, 0
        %5878 = vmatpush.bf16.msra.mxu0 0
        %5879 = vmatpush.bf16.msra.mxu0 0
        %5880 = vmatpush.bf16.msra.mxu0 0
        %5881 = vmatpush.bf16.msra.mxu0 0
        %5882 = vmatpush.bf16.msra.mxu0 0
        %5883 = vmatpush.bf16.msra.mxu0 0
        %5884 = vmatpush.bf16.msra.mxu0 0
        %5885 = vmatpush.bf16.msra.mxu0 %v5873
        %5886 = vmatmul.bf16.gmra.mxu0 %v5767
        %v5887 = vpop.f32.mrf.mxu0
        %v5888 = vadd.f32 0.0, %v5887
        %v5889 = vpop.f32.mrf.mxu0
        %5890 = vdwg.mxu0
        %5891 = vmatpush.bf16.msra.mxu0 0
        %5892 = vmatpush.bf16.msra.mxu0 0
        %5893 = vmatpush.bf16.msra.mxu0 0
        %5894 = vmatpush.bf16.msra.mxu0 0
        %5895 = vmatpush.bf16.msra.mxu0 0
        %5896 = vmatpush.bf16.msra.mxu0 0
        %5897 = vmatpush.bf16.msra.mxu0 0
        %5898 = vmatpush.bf16.msra.mxu0 %v5876
        %5899 = vmatmul.bf16.gmra.mxu0 %v5767
        %v5900 = vpop.f32.mrf.mxu0
        %v5901 = vadd.f32 0.0, %v5900
        %v5902 = vpop.f32.mrf.mxu0
        %5903 = vdwg.mxu0
        %v5904 = vpack.c.bf16 %v5753, %v5753
        %v5905 = vpack.c.bf16 %v5754, %v5754
        %v5907 = vsel %vm5769, %v5904, 0
        %v5910 = vsel %vm5769, %v5905, 0
        %5912 = vmatpush.bf16.msra.mxu0 0
        %5913 = vmatpush.bf16.msra.mxu0 0
        %5914 = vmatpush.bf16.msra.mxu0 0
        %5915 = vmatpush.bf16.msra.mxu0 0
        %5916 = vmatpush.bf16.msra.mxu0 0
        %5917 = vmatpush.bf16.msra.mxu0 0
        %5918 = vmatpush.bf16.msra.mxu0 0
        %5919 = vmatpush.bf16.msra.mxu0 %v5907
        %5920 = vmatmul.bf16.gmra.mxu0 %v5767
        %v5921 = vpop.f32.mrf.mxu0
        %v5922 = vadd.f32 0.0, %v5921
        %v5923 = vpop.f32.mrf.mxu0
        %5924 = vdwg.mxu0
        %5925 = vmatpush.bf16.msra.mxu0 0
        %5926 = vmatpush.bf16.msra.mxu0 0
        %5927 = vmatpush.bf16.msra.mxu0 0
        %5928 = vmatpush.bf16.msra.mxu0 0
        %5929 = vmatpush.bf16.msra.mxu0 0
        %5930 = vmatpush.bf16.msra.mxu0 0
        %5931 = vmatpush.bf16.msra.mxu0 0
        %5932 = vmatpush.bf16.msra.mxu0 %v5910
        %5933 = vmatmul.bf16.gmra.mxu0 %v5767
        %v5934 = vpop.f32.mrf.mxu0
        %v5935 = vadd.f32 0.0, %v5934
        %v5936 = vpop.f32.mrf.mxu0
        %5937 = vdwg.mxu0
        %v5938 = vpack.c.bf16 %v5755, %v5755
        %v5939 = vpack.c.bf16 %v5756, %v5756
        %v5941 = vsel %vm5769, %v5938, 0
        %v5944 = vsel %vm5769, %v5939, 0
        %5946 = vmatpush.bf16.msra.mxu0 0
        %5947 = vmatpush.bf16.msra.mxu0 0
        %5948 = vmatpush.bf16.msra.mxu0 0
        %5949 = vmatpush.bf16.msra.mxu0 0
        %5950 = vmatpush.bf16.msra.mxu0 0
        %5951 = vmatpush.bf16.msra.mxu0 0
        %5952 = vmatpush.bf16.msra.mxu0 0
        %5953 = vmatpush.bf16.msra.mxu0 %v5941
        %5954 = vmatmul.bf16.gmra.mxu0 %v5767
        %v5955 = vpop.f32.mrf.mxu0
        %v5956 = vadd.f32 0.0, %v5955
        %v5957 = vpop.f32.mrf.mxu0
        %5958 = vdwg.mxu0
        %5959 = vmatpush.bf16.msra.mxu0 0
        %5960 = vmatpush.bf16.msra.mxu0 0
        %5961 = vmatpush.bf16.msra.mxu0 0
        %5962 = vmatpush.bf16.msra.mxu0 0
        %5963 = vmatpush.bf16.msra.mxu0 0
        %5964 = vmatpush.bf16.msra.mxu0 0
        %5965 = vmatpush.bf16.msra.mxu0 0
        %5966 = vmatpush.bf16.msra.mxu0 %v5944
        %5967 = vmatmul.bf16.gmra.mxu0 %v5767
        %v5968 = vpop.f32.mrf.mxu0
        %v5969 = vadd.f32 0.0, %v5968
        %v5970 = vpop.f32.mrf.mxu0
        %5971 = vdwg.mxu0
        %v5972 = vpack.c.bf16 %v5757, %v5757
        %v5973 = vpack.c.bf16 %v5758, %v5758
        %v5975 = vsel %vm5769, %v5972, 0
        %v5978 = vsel %vm5769, %v5973, 0
        %5980 = vmatpush.bf16.msra.mxu0 0
        %5981 = vmatpush.bf16.msra.mxu0 0
        %5982 = vmatpush.bf16.msra.mxu0 0
        %5983 = vmatpush.bf16.msra.mxu0 0
        %5984 = vmatpush.bf16.msra.mxu0 0
        %5985 = vmatpush.bf16.msra.mxu0 0
        %5986 = vmatpush.bf16.msra.mxu0 0
        %5987 = vmatpush.bf16.msra.mxu0 %v5975
        %5988 = vmatmul.bf16.gmra.mxu0 %v5767
        %v5989 = vpop.f32.mrf.mxu0
        %v5990 = vadd.f32 0.0, %v5989
        %v5991 = vpop.f32.mrf.mxu0
        %5992 = vdwg.mxu0
        %5993 = vmatpush.bf16.msra.mxu0 0
        %5994 = vmatpush.bf16.msra.mxu0 0
        %5995 = vmatpush.bf16.msra.mxu0 0
        %5996 = vmatpush.bf16.msra.mxu0 0
        %5997 = vmatpush.bf16.msra.mxu0 0
        %5998 = vmatpush.bf16.msra.mxu0 0
        %5999 = vmatpush.bf16.msra.mxu0 0
        %6000 = vmatpush.bf16.msra.mxu0 %v5978
        %6001 = vmatmul.bf16.gmra.mxu0 %v5767
        %v6002 = vpop.f32.mrf.mxu0
        %v6003 = vadd.f32 0.0, %v6002
        %v6004 = vpop.f32.mrf.mxu0
        %6005 = vdwg.mxu0
        %v6006 = vpack.c.bf16 %v5759, %v5759
        %v6007 = vpack.c.bf16 %v5760, %v5760
        %v6009 = vsel %vm5769, %v6006, 0
        %v6012 = vsel %vm5769, %v6007, 0
        %6014 = vmatpush.bf16.msra.mxu0 0
        %6015 = vmatpush.bf16.msra.mxu0 0
        %6016 = vmatpush.bf16.msra.mxu0 0
        %6017 = vmatpush.bf16.msra.mxu0 0
        %6018 = vmatpush.bf16.msra.mxu0 0
        %6019 = vmatpush.bf16.msra.mxu0 0
        %6020 = vmatpush.bf16.msra.mxu0 0
        %6021 = vmatpush.bf16.msra.mxu0 %v6009
        %6022 = vmatmul.bf16.gmra.mxu0 %v5767
        %v6023 = vpop.f32.mrf.mxu0
        %v6024 = vadd.f32 0.0, %v6023
        %v6025 = vpop.f32.mrf.mxu0
        %6026 = vdwg.mxu0
        %6027 = vmatpush.bf16.msra.mxu0 0
        %6028 = vmatpush.bf16.msra.mxu0 0
        %6029 = vmatpush.bf16.msra.mxu0 0
        %6030 = vmatpush.bf16.msra.mxu0 0
        %6031 = vmatpush.bf16.msra.mxu0 0
        %6032 = vmatpush.bf16.msra.mxu0 0
        %6033 = vmatpush.bf16.msra.mxu0 0
        %6034 = vmatpush.bf16.msra.mxu0 %v6012
        %6035 = vmatmul.bf16.gmra.mxu0 %v5767
        %v6036 = vpop.f32.mrf.mxu0
        %v6037 = vadd.f32 0.0, %v6036
        %v6038 = vpop.f32.mrf.mxu0
        %6039 = vdwg.mxu0
        %6041 = vset.pattern.permute.xlu0 8
        %6042 = vperm.xlu0 %6041, %v5761
        %v6043 = vpop.permute.xlu0 %6042
        %v6045 = vadd.f32 %v5786, %v6043
        %v6046 = vadd.f32 %v5799, %v6043
        %v6047 = vadd.f32 %v5820, %v6043
        %v6048 = vadd.f32 %v5833, %v6043
        %v6049 = vadd.f32 %v5854, %v6043
        %v6050 = vadd.f32 %v5867, %v6043
        %v6051 = vadd.f32 %v5888, %v6043
        %v6052 = vadd.f32 %v5901, %v6043
        %v6053 = vadd.f32 %v5922, %v6043
        %v6054 = vadd.f32 %v5935, %v6043
        %v6055 = vadd.f32 %v5956, %v6043
        %v6056 = vadd.f32 %v5969, %v6043
        %v6057 = vadd.f32 %v5990, %v6043
        %v6058 = vadd.f32 %v6003, %v6043
        %v6059 = vadd.f32 %v6024, %v6043
        %v6060 = vadd.f32 %v6037, %v6043
        %v6077 = vrot.slane %v6046, 4
        %v6078 = vrot.slane %v6048, 4
        %v6079 = vrot.slane %v6050, 4
        %v6080 = vrot.slane %v6052, 4
        %v6081 = vrot.slane %v6054, 4
        %v6082 = vrot.slane %v6056, 4
        %v6083 = vrot.slane %v6058, 4
        %v6084 = vrot.slane %v6060, 4
        %v6085 = vsel %vm5769, %v6045, %v6077
        %v6086 = vsel %vm5769, %v6047, %v6078
        %v6087 = vsel %vm5769, %v6049, %v6079
        %v6088 = vsel %vm5769, %v6051, %v6080
        %v6089 = vsel %vm5769, %v6053, %v6081
        %v6090 = vsel %vm5769, %v6055, %v6082
        %v6091 = vsel %vm5769, %v6057, %v6083
        %v6092 = vsel %vm5769, %v6059, %v6084
        %6101 = vst [vmem:[%s370] sm:$0xff] %v6085
        %6102 = vst [vmem:[%s370 + $0x8] sm:$0xff] %v6086
        %6103 = vst [vmem:[%s370 + $0x10] sm:$0xff] %v6087
        %6104 = vst [vmem:[%s370 + $0x18] sm:$0xff] %v6088
        %6105 = vst [vmem:[%s370 + $0x20] sm:$0xff] %v6089
        %6106 = vst [vmem:[%s370 + $0x28] sm:$0xff] %v6090
        %6107 = vst [vmem:[%s370 + $0x30] sm:$0xff] %v6091
        %6108 = vst [vmem:[%s370 + $0x38] sm:$0xff] %v6092
      $region56: #{cimidnet_forward.1} parent=43 // pred_fallthru
        _
      %p6109 = scmp.lt.s32.totalorder %s21, 1
      %s6110 = scalar_select %p6109, %s21, 1
      %s6111 = smul.addr %s6110, 16
      %s6112 = smul.addr %s6111, 4
      %s6113 = scalar_lea.vmem %s6, %s6112
      // Predicated region
      $region57: #{cimidnet_forward.1} parent=43 // pred_check
        %p6114 = pneg %p208
      $region58: #{cimidnet_forward.1} parent=43 // pred_check_branch
        %6116 = sbr.rel (%p6114) target = $region60
      $region59: #{cimidnet_forward.1} parent=43 // pred_region
        _
      $region60: #{cimidnet_forward.1} parent=43 // pred_fallthru
        _
    $region44: #{cimidnet_forward.1} parent=5 // pred_fallthru
      _
    %p6117 = scmp.le.s32.totalorder 2, %s12
    // Predicated region
    $region61: #{cimidnet_forward.1} parent=5 // pred_check
      %p6118 = pneg %p6117
    $region62: #{cimidnet_forward.1} parent=5 // pred_check_branch
      %6120 = sbr.rel (%p6118) target = $region64
    $region63: #{cimidnet_forward.1} parent=5 // pred_region
      %s6121 = ssub.s32 %s12, 2
      // Predicated region
      $region65: #{cimidnet_forward.1} parent=63 // pred_check
        %p6122 = pneg %p214
      $region66: #{cimidnet_forward.1} parent=63 // pred_check_branch
        %6124 = sbr.rel (%p6122) target = $region68
      $region67: #{cimidnet_forward.1} parent=63 // pred_region
        %p6125 = scmp.lt.s32.totalorder %s23, 1
        %s6126 = scalar_select %p6125, %s23, 1
        %s6127 = smul.addr %s6126, 16
        %s6128 = smul.addr %s6127, 4
        %s6129 = scalar_lea.vmem %s6, %s6128
      $region68: #{cimidnet_forward.1} parent=63 // pred_fallthru
        _
    $region64: #{cimidnet_forward.1} parent=5 // pred_fallthru
      _
  $region6: #{cimidnet_forward.1} parent=0 // loop_footer
    %s16 = sadd.s32 1, %s12
  $region7: #{cimidnet_forward.1} parent=0 // loop_footer_branch
    %11 = sbr.rel target = $region3
  $region8: #{cimidnet_forward.1} parent=0 // loop_exit
    _

</llo_original>
